<compile_context>
chip_gen: v7x
topology: tpu7x:2x2x1
jax: 0.10.0
libtpu: 0.0.40
codegen_flags: <defaults>
</compile_context>

<pallas_src>
import math

import jax
import jax.numpy as jnp
from jax import lax
from jax.experimental import pallas as pl
from jax.experimental.pallas import tpu as pltpu


_LANE = 128      # vreg lane width
_SUBLANE = 8     # f32 sublane tile


def _round_up(x, m):
    return (x + m - 1) // m * m


# ------------------------------- Pallas kernel ------------------------------ #

def _char_lstm_kernel(x_ref, wih_ref, whh_ref, b_ref, h0_ref, c0_ref,
                      fcw_ref, fcb_ref,
                      o_ref, hn_ref, cn_ref,
                      xbuf_ref, gx_ref):
    """Fused multi-layer LSTM + FC head for one batch tile.

    x_ref    (T, Bt, Hp)    embedded inputs, time-major, f32
    wih_ref  (L, Hp, 4*Hp)  gate-aligned W_ih^T per layer (matmul dtype)
    whh_ref  (L, Hp, 4*Hp)  gate-aligned W_hh^T per layer (matmul dtype)
    b_ref    (L, 1, 4*Hp)   b_ih + b_hh, gate-aligned, f32
    h0_ref / c0_ref (L, Bt, Hp) f32
    fcw_ref  (Hp, Vp)       W_fc^T (matmul dtype);  fcb_ref (1, Vp) f32
    o_ref    (Bt, T, Vp)    batch-first logits (f32)
    hn_ref / cn_ref (L, Bt, Hp) final states (f32)
    xbuf_ref (T, Bt, Hp)    f32 scratch: per-layer output sequence
    gx_ref   (T, Bt, 4*Hp)  f32 scratch: hoisted input-gate pre-activations
    PyTorch gate order: i, f, g, o.
    """
    T, Bt, Hp = xbuf_ref.shape
    L = wih_ref.shape[0]
    G = 4 * Hp
    mm_dtype = wih_ref.dtype
    unroll = True if T <= 32 else 8

    for l in range(L):                              # static, fused layer loop
        # Hoisted input projection + bias: one big MXU GEMM over the whole
        # sequence, outside the serial recurrence. Layer 0 reads straight from
        # the input ref (no slab copy); later layers read the previous layer's
        # outputs from VMEM scratch. Bias broadcast happens once here.
        src_ref = x_ref if l == 0 else xbuf_ref
        x_flat = src_ref[...].reshape(T * Bt, Hp).astype(mm_dtype)
        gx = jnp.dot(x_flat, wih_ref[l], preferred_element_type=jnp.float32)
        gx = gx + b_ref[l]
        gx_ref[...] = gx.reshape(T, Bt, G)

        def step(t, carry, l=l):
            h, c = carry                            # (Bt, Hp) f32
            gates = gx_ref[t] + jnp.dot(h.astype(mm_dtype), whh_ref[l],
                                        preferred_element_type=jnp.float32)
            # Gate slices are 128-lane aligned (Hp is a multiple of 128).
            i_g = jax.nn.sigmoid(gates[:, 0 * Hp:1 * Hp])
            f_g = jax.nn.sigmoid(gates[:, 1 * Hp:2 * Hp])
            g_g = jnp.tanh(gates[:, 2 * Hp:3 * Hp])
            o_g = jax.nn.sigmoid(gates[:, 3 * Hp:4 * Hp])
            c_new = f_g * c + i_g * g_g
            h_new = o_g * jnp.tanh(c_new)
            xbuf_ref[t] = h_new                     # becomes next layer's input
            return (h_new, c_new)

        h_fin, c_fin = lax.fori_loop(0, T, step, (h0_ref[l], c0_ref[l]),
                                     unroll=unroll)
        hn_ref[l] = h_fin
        cn_ref[l] = c_fin

    # Fused FC head: one lane-dense GEMM over all T*Bt rows (Vp multiple of 128).
    y_flat = xbuf_ref[...].reshape(T * Bt, Hp).astype(mm_dtype)
    logits = jnp.dot(y_flat, fcw_ref[...], preferred_element_type=jnp.float32)
    logits = (logits + fcb_ref[...]).reshape(T, Bt, -1)
    # Write batch-first directly (static time loop), no wrapper-side transpose.
    for t in range(T):
        o_ref[:, t, :] = logits[t]


# ------------------------------ Parameter prep ------------------------------ #

def init_params(key, vocab_size, hidden_size, num_layers):
    # PyTorch defaults: Embedding ~ N(0,1); LSTM/Linear ~ U(-1/sqrt(H), 1/sqrt(H))
    ks = jax.random.split(key, 3 + 4 * num_layers)
    it = iter(ks)
    params = {"embedding": jax.random.normal(next(it), (vocab_size, hidden_size),
                                             jnp.float32)}
    bound = 1.0 / math.sqrt(hidden_size)
    layers = []
    for _ in range(num_layers):
        w_ih = jax.random.uniform(next(it), (4 * hidden_size, hidden_size),
                                  jnp.float32, -bound, bound)
        w_hh = jax.random.uniform(next(it), (4 * hidden_size, hidden_size),
                                  jnp.float32, -bound, bound)
        b_ih = jax.random.uniform(next(it), (4 * hidden_size,),
                                  jnp.float32, -bound, bound)
        b_hh = jax.random.uniform(next(it), (4 * hidden_size,),
                                  jnp.float32, -bound, bound)
        layers.append((w_ih, w_hh, b_ih, b_hh))
    params["lstm"] = layers
    params["fc_w"] = jax.random.uniform(next(it), (vocab_size, hidden_size),
                                        jnp.float32, -bound, bound)
    params["fc_b"] = jax.random.uniform(next(it), (vocab_size,),
                                        jnp.float32, -bound, bound)
    return params


def prepare_params(params, matmul_dtype=jnp.float32):
    """One-time weight prep: transpose, combine biases, pad/gate-align to the
    128-lane vreg grid, and stack layers. Done once, not per forward call."""
    emb = params["embedding"]
    V, H = emb.shape
    L = len(params["lstm"])
    Hp = _round_up(H, _LANE)
    Vp = _round_up(V, _LANE)

    emb_p = jnp.zeros((V, Hp), jnp.float32).at[:, :H].set(emb)

    wih_all, whh_all, b_all = [], [], []
    for (w_ih, w_hh, b_ih, b_hh) in params["lstm"]:
        wih_p = jnp.zeros((Hp, 4 * Hp), jnp.float32)
        whh_p = jnp.zeros((Hp, 4 * Hp), jnp.float32)
        b_p = jnp.zeros((1, 4 * Hp), jnp.float32)
        b_sum = (b_ih + b_hh).astype(jnp.float32)
        for k in range(4):  # gate-aligned placement: gate k at cols [k*Hp, k*Hp+H)
            wih_p = wih_p.at[:H, k * Hp:k * Hp + H].set(w_ih[k * H:(k + 1) * H, :].T)
            whh_p = whh_p.at[:H, k * Hp:k * Hp + H].set(w_hh[k * H:(k + 1) * H, :].T)
            b_p = b_p.at[0, k * Hp:k * Hp + H].set(b_sum[k * H:(k + 1) * H])
        wih_all.append(wih_p)
        whh_all.append(whh_p)
        b_all.append(b_p)

    fcw_p = jnp.zeros((Hp, Vp), jnp.float32).at[:H, :V].set(params["fc_w"].T)
    fcb_p = jnp.zeros((1, Vp), jnp.float32).at[0, :V].set(params["fc_b"])

    return {
        "emb": emb_p,
        "wih": jnp.stack(wih_all).astype(matmul_dtype),
        "whh": jnp.stack(whh_all).astype(matmul_dtype),
        "b": jnp.stack(b_all),
        "fcw": fcw_p.astype(matmul_dtype),
        "fcb": fcb_p,
        "H": H, "V": V, "Hp": Hp, "Vp": Vp, "L": L,
    }


# ------------------------------ Model wrapper -------------------------------- #

def char_lstm_forward(prep, tokens, hidden, batch_tile=8):
    """tokens: (B, T) int32; hidden = (h_0, c_0) each (num_layers, B, H).

    Returns (logits (B, T, V), (h_n, c_n)) — PyTorch CharLSTM semantics."""
    h0, c0 = hidden
    B, T = tokens.shape
    H, V, Hp, Vp, L = prep["H"], prep["V"], prep["Hp"], prep["Vp"], prep["L"]
    Bt = batch_tile
    Bp = _round_up(max(B, Bt), Bt)
    nb = Bp // Bt

    # Embedding gather (data-dependent gather glue, in plain JAX) directly into
    # the kernel's time-major padded layout — no activation-slab transpose.
    tok_p = jnp.pad(tokens, ((0, Bp - B), (0, 0)))
    x = jnp.take(prep["emb"], tok_p.T, axis=0)                  # (T, Bp, Hp) f32

    h0_p = jnp.pad(h0.astype(jnp.float32), ((0, 0), (0, Bp - B), (0, Hp - H)))
    c0_p = jnp.pad(c0.astype(jnp.float32), ((0, 0), (0, Bp - B), (0, Hp - H)))

    # Explicit VMEM budget so the same kernel stays portable to v7x (64 MiB).
    wsz = prep["wih"].dtype.itemsize
    w_bytes = 2 * L * Hp * 4 * Hp * wsz + Hp * Vp * wsz
    io_bytes = (T * Bt * Hp * 4 + L * 4 * Hp * 4 + 2 * L * Bt * Hp * 4 + Vp * 4
                + Bt * T * Vp * 4 + 2 * L * Bt * Hp * 4)
    scratch_bytes = T * Bt * Hp * 4 + T * Bt * 4 * Hp * 4
    vmem_est = 2 * (w_bytes + io_bytes) + scratch_bytes          # 2x double-buffer
    vmem_limit = int(min(64 * 2 ** 20, max(4 * vmem_est, 16 * 2 ** 20)))

    # TODO(synk): for long sequences, tile the time axis with a pipelined
    # ("arbitrary") grid dimension and carry h/c in scratch instead of holding
    # the whole (T, B, H) slab in VMEM.
    grid_spec = pltpu.PrefetchScalarGridSpec(
        num_scalar_prefetch=0,
        grid=(nb,),                              # batch tiles: parallel across TCs
        in_specs=[
            pl.BlockSpec((T, Bt, Hp), lambda b: (0, b, 0)),        # x
            pl.BlockSpec((L, Hp, 4 * Hp), lambda b: (0, 0, 0)),    # W_ih^T stacked
            pl.BlockSpec((L, Hp, 4 * Hp), lambda b: (0, 0, 0)),    # W_hh^T stacked
            pl.BlockSpec((L, 1, 4 * Hp), lambda b: (0, 0, 0)),     # combined bias
            pl.BlockSpec((L, Bt, Hp), lambda b: (0, b, 0)),        # h_0
            pl.BlockSpec((L, Bt, Hp), lambda b: (0, b, 0)),        # c_0
            pl.BlockSpec((Hp, Vp), lambda b: (0, 0)),              # W_fc^T
            pl.BlockSpec((1, Vp), lambda b: (0, 0)),               # b_fc
        ],
        out_specs=(
            pl.BlockSpec((Bt, T, Vp), lambda b: (b, 0, 0)),        # logits (batch-first)
            pl.BlockSpec((L, Bt, Hp), lambda b: (0, b, 0)),        # h_n
            pl.BlockSpec((L, Bt, Hp), lambda b: (0, b, 0)),        # c_n
        ),
        scratch_shapes=[
            pltpu.VMEM((T, Bt, Hp), jnp.float32),       # current layer activations
            pltpu.VMEM((T, Bt, 4 * Hp), jnp.float32),   # hoisted gate pre-acts
        ],
    )
    logits_p, hn_p, cn_p = pl.pallas_call(
        _char_lstm_kernel,
        out_shape=(
            jax.ShapeDtypeStruct((Bp, T, Vp), jnp.float32),
            jax.ShapeDtypeStruct((L, Bp, Hp), jnp.float32),
            jax.ShapeDtypeStruct((L, Bp, Hp), jnp.float32),
        ),
        grid_spec=grid_spec,
        compiler_params=pltpu.CompilerParams(
            dimension_semantics=("parallel",),
            vmem_limit_bytes=vmem_limit),
    )(x, prep["wih"], prep["whh"], prep["b"], h0_p, c0_p,
      prep["fcw"], prep["fcb"])

    logits = logits_p[:B, :, :V]
    h_n = hn_p[:, :B, :H]
    c_n = cn_p[:, :B, :H]
    return logits, (h_n, c_n)


# ---------------------------- Pure-JAX reference ----------------------------- #

def _ref_forward(params, tokens, hidden):
    h0_all, c0_all = hidden
    x = jnp.take(params["embedding"], tokens, axis=0)    # (B, T, H)
    H = h0_all.shape[-1]
    h_n, c_n = [], []
    for layer_idx, (w_ih, w_hh, b_ih, b_hh) in enumerate(params["lstm"]):
        h = h0_all[layer_idx]
        c = c0_all[layer_idx]
        outs = []
        for t in range(x.shape[1]):
            g = x[:, t, :] @ w_ih.T + b_ih + h @ w_hh.T + b_hh
            i = jax.nn.sigmoid(g[:, 0 * H:1 * H])
            f = jax.nn.sigmoid(g[:, 1 * H:2 * H])
            gg = jnp.tanh(g[:, 2 * H:3 * H])
            o = jax.nn.sigmoid(g[:, 3 * H:4 * H])
            c = f * c + i * gg
            h = o * jnp.tanh(c)
            outs.append(h)
        x = jnp.stack(outs, axis=1)
        h_n.append(h)
        c_n.append(c)
    logits = x @ params["fc_w"].T + params["fc_b"]
    return logits, (jnp.stack(h_n), jnp.stack(c_n))


# ------------------------------------ Main ----------------------------------- #

if __name__ == "__main__":
    vocab_size, hidden_size, num_layers = 16, 32, 2
    B, T = 2, 8

    key = jax.random.PRNGKey(0)
    k_params, k_tok = jax.random.split(key)
    params = init_params(k_params, vocab_size, hidden_size, num_layers)
    tokens = jax.random.randint(k_tok, (B, T), 0, vocab_size, dtype=jnp.int32)

    # init_hidden equivalent
    hidden = (jnp.zeros((num_layers, B, hidden_size), jnp.float32),
              jnp.zeros((num_layers, B, hidden_size), jnp.float32))

    ref_logits, (ref_hn, ref_cn) = _ref_forward(params, tokens, hidden)

    # --- f32 MXU path (tight correctness check) ---
    prep_f32 = prepare_params(params, jnp.float32)
    logits, (h_n, c_n) = char_lstm_forward(prep_f32, tokens, hidden)
    jax.block_until_ready((logits, h_n, c_n))
    assert logits.shape == (B, T, vocab_size)
    assert h_n.shape == (num_layers, B, hidden_size)
    assert c_n.shape == (num_layers, B, hidden_size)
    assert jnp.allclose(logits, ref_logits, rtol=1e-4, atol=1e-4)
    assert jnp.allclose(h_n, ref_hn, rtol=1e-4, atol=1e-4)
    assert jnp.allclose(c_n, ref_cn, rtol=1e-4, atol=1e-4)

    # --- bf16 MXU-input path (v6e/v7x perf mode; f32 accumulate + gate math) ---
    prep_bf16 = prepare_params(params, jnp.bfloat16)
    logits_bf, (hn_bf, cn_bf) = char_lstm_forward(prep_bf16, tokens, hidden)
    jax.block_until_ready((logits_bf, hn_bf, cn_bf))
    assert jnp.allclose(logits_bf, ref_logits, rtol=5e-2, atol=5e-2)

    print("KERNEL_OK")
</pallas_src>

<mosaic_0001>
module attributes {stable_mosaic.version = 11 : i64} {
  func.func @_char_lstm_kernel(%arg0: i32, %arg1: memref<8x8x128xf32, #tpu.memory_space<vmem>>, %arg2: memref<2x128x512xf32, #tpu.memory_space<vmem>>, %arg3: memref<2x128x512xf32, #tpu.memory_space<vmem>>, %arg4: memref<2x1x512xf32, #tpu.memory_space<vmem>>, %arg5: memref<2x8x128xf32, #tpu.memory_space<vmem>>, %arg6: memref<2x8x128xf32, #tpu.memory_space<vmem>>, %arg7: memref<128x128xf32, #tpu.memory_space<vmem>>, %arg8: memref<1x128xf32, #tpu.memory_space<vmem>>, %arg9: memref<8x8x128xf32, #tpu.memory_space<vmem>>, %arg10: memref<2x8x128xf32, #tpu.memory_space<vmem>>, %arg11: memref<2x8x128xf32, #tpu.memory_space<vmem>>, %arg12: memref<8x8x128xf32, #tpu.memory_space<vmem>>, %arg13: memref<8x8x512xf32, #tpu.memory_space<vmem>>) attributes {dimension_semantics = [#tpu.dimension_semantics<parallel>], iteration_bounds = array<i64: 1>, scalar_prefetch = 0 : i64, scratch_operands = 2 : i64, tpu.core_type = #tpu.core_type<tc>, window_params = [{transform_indices = @transform_0, window_bounds = array<i64: 8, 8, 128>}, {pipeline_mode = #tpu.pipeline_mode<synchronous>, transform_indices = @transform_1, window_bounds = array<i64: 2, 128, 512>}, {pipeline_mode = #tpu.pipeline_mode<synchronous>, transform_indices = @transform_2, window_bounds = array<i64: 2, 128, 512>}, {pipeline_mode = #tpu.pipeline_mode<synchronous>, transform_indices = @transform_3, window_bounds = array<i64: 2, 1, 512>}, {transform_indices = @transform_4, window_bounds = array<i64: 2, 8, 128>}, {transform_indices = @transform_5, window_bounds = array<i64: 2, 8, 128>}, {pipeline_mode = #tpu.pipeline_mode<synchronous>, transform_indices = @transform_6, window_bounds = array<i64: 128, 128>}, {pipeline_mode = #tpu.pipeline_mode<synchronous>, transform_indices = @transform_7, window_bounds = array<i64: 1, 128>}, {transform_indices = @transform_8, window_bounds = array<i64: 8, 8, 128>}, {transform_indices = @transform_9, window_bounds = array<i64: 2, 8, 128>}, {transform_indices = @transform_10, window_bounds = array<i64: 2, 8, 128>}]} {
    %c0 = arith.constant 0 : index
    %c0_0 = arith.constant 0 : index
    %c0_1 = arith.constant 0 : index
    %0 = vector.load %arg1[%c0, %c0_0, %c0_1] : memref<8x8x128xf32, #tpu.memory_space<vmem>>, vector<8x8x128xf32>
    %1 = vector.shape_cast %0 : vector<8x8x128xf32> to vector<64x128xf32>
    %c0_2 = arith.constant 0 : index
    %c0_3 = arith.constant 0 : index
    %c0_4 = arith.constant 0 : index
    %2 = vector.load %arg2[%c0_2, %c0_3, %c0_4] : memref<2x128x512xf32, #tpu.memory_space<vmem>>, vector<1x128x512xf32>
    %3 = vector.shape_cast %2 : vector<1x128x512xf32> to vector<128x512xf32>
    %cst = arith.constant dense<0.000000e+00> : vector<64x512xf32>
    %4 = tpu.matmul %1, %3, %cst {dimension_numbers = #tpu.dot_dimension_numbers<[1], [0], [0], [1], [0, 0, 1, 1], [], []>} : vector<64x128xf32>, vector<128x512xf32>, vector<64x512xf32> -> vector<64x512xf32>
    %c0_5 = arith.constant 0 : index
    %c0_6 = arith.constant 0 : index
    %c0_7 = arith.constant 0 : index
    %5 = vector.load %arg4[%c0_5, %c0_6, %c0_7] : memref<2x1x512xf32, #tpu.memory_space<vmem>>, vector<1x1x512xf32>
    %6 = vector.shape_cast %5 : vector<1x1x512xf32> to vector<1x512xf32>
    %7 = vector.broadcast %6 : vector<1x512xf32> to vector<64x512xf32>
    %8 = arith.addf %4, %7 : vector<64x512xf32>
    %9 = vector.shape_cast %8 : vector<64x512xf32> to vector<8x8x512xf32>
    %c0_8 = arith.constant 0 : index
    %c0_9 = arith.constant 0 : index
    %c0_10 = arith.constant 0 : index
    %10 = vector.load %arg13[%c0_8, %c0_9, %c0_10] : memref<8x8x512xf32, #tpu.memory_space<vmem>>, vector<8x8x512xf32>
    tpu.vector_store %arg13[%c0_8, %c0_9, %c0_10], %9 {strides = array<i32>} : memref<8x8x512xf32, #tpu.memory_space<vmem>>, vector<8x8x512xf32>,
    %c0_11 = arith.constant 0 : index
    %c0_12 = arith.constant 0 : index
    %c0_13 = arith.constant 0 : index
    %11 = vector.load %arg5[%c0_11, %c0_12, %c0_13] : memref<2x8x128xf32, #tpu.memory_space<vmem>>, vector<1x8x128xf32>
    %12 = vector.shape_cast %11 : vector<1x8x128xf32> to vector<8x128xf32>
    %c0_14 = arith.constant 0 : index
    %c0_15 = arith.constant 0 : index
    %c0_16 = arith.constant 0 : index
    %13 = vector.load %arg6[%c0_14, %c0_15, %c0_16] : memref<2x8x128xf32, #tpu.memory_space<vmem>>, vector<1x8x128xf32>
    %14 = vector.shape_cast %13 : vector<1x8x128xf32> to vector<8x128xf32>
    %c0_i32 = arith.constant 0 : i32
    %15 = arith.index_cast %c0_i32 : i32 to index
    %c0_17 = arith.constant 0 : index
    %c0_18 = arith.constant 0 : index
    %16 = vector.load %arg13[%15, %c0_17, %c0_18] : memref<8x8x512xf32, #tpu.memory_space<vmem>>, vector<1x8x512xf32>
    %17 = vector.shape_cast %16 : vector<1x8x512xf32> to vector<8x512xf32>
    %c0_19 = arith.constant 0 : index
    %c0_20 = arith.constant 0 : index
    %c0_21 = arith.constant 0 : index
    %18 = vector.load %arg3[%c0_19, %c0_20, %c0_21] : memref<2x128x512xf32, #tpu.memory_space<vmem>>, vector<1x128x512xf32>
    %19 = vector.shape_cast %18 : vector<1x128x512xf32> to vector<128x512xf32>
    %cst_22 = arith.constant dense<0.000000e+00> : vector<8x512xf32>
    %20 = tpu.matmul %12, %19, %cst_22 {dimension_numbers = #tpu.dot_dimension_numbers<[1], [0], [0], [1], [0, 0, 1, 1], [], []>} : vector<8x128xf32>, vector<128x512xf32>, vector<8x512xf32> -> vector<8x512xf32>
    %21 = arith.addf %17, %20 : vector<8x512xf32>
    %22 = vector.extract_strided_slice %21 {offsets = [0, 0], sizes = [8, 128], strides = [1, 1]} : vector<8x512xf32> to vector<8x128xf32>
    %23 = arith.negf %22 : vector<8x128xf32>
    %24 = math.exp %23 : vector<8x128xf32>
    %cst_23 = arith.constant 1.000000e+00 : f32
    %25 = vector.broadcast %cst_23 : f32 to vector<8x128xf32>
    %26 = arith.addf %25, %24 : vector<8x128xf32>
    %27 = arith.divf %25, %26 : vector<8x128xf32>
    %28 = vector.extract_strided_slice %21 {offsets = [0, 128], sizes = [8, 128], strides = [1, 1]} : vector<8x512xf32> to vector<8x128xf32>
    %29 = arith.negf %28 : vector<8x128xf32>
    %30 = math.exp %29 : vector<8x128xf32>
    %cst_24 = arith.constant 1.000000e+00 : f32
    %31 = vector.broadcast %cst_24 : f32 to vector<8x128xf32>
    %32 = arith.addf %31, %30 : vector<8x128xf32>
    %33 = arith.divf %31, %32 : vector<8x128xf32>
    %34 = vector.extract_strided_slice %21 {offsets = [0, 256], sizes = [8, 128], strides = [1, 1]} : vector<8x512xf32> to vector<8x128xf32>
    %35 = math.tanh %34 : vector<8x128xf32>
    %36 = vector.extract_strided_slice %21 {offsets = [0, 384], sizes = [8, 128], strides = [1, 1]} : vector<8x512xf32> to vector<8x128xf32>
    %37 = arith.negf %36 : vector<8x128xf32>
    %38 = math.exp %37 : vector<8x128xf32>
    %cst_25 = arith.constant 1.000000e+00 : f32
    %39 = vector.broadcast %cst_25 : f32 to vector<8x128xf32>
    %40 = arith.addf %39, %38 : vector<8x128xf32>
    %41 = arith.divf %39, %40 : vector<8x128xf32>
    %42 = arith.mulf %33, %14 : vector<8x128xf32>
    %43 = arith.mulf %27, %35 : vector<8x128xf32>
    %44 = arith.addf %42, %43 : vector<8x128xf32>
    %45 = math.tanh %44 : vector<8x128xf32>
    %46 = arith.mulf %41, %45 : vector<8x128xf32>
    %47 = arith.index_cast %c0_i32 : i32 to index
    %c0_26 = arith.constant 0 : index
    %c0_27 = arith.constant 0 : index
    %48 = vector.load %arg12[%47, %c0_26, %c0_27] : memref<8x8x128xf32, #tpu.memory_space<vmem>>, vector<1x8x128xf32>
    %49 = vector.shape_cast %48 : vector<1x8x128xf32> to vector<8x128xf32>
    %50 = vector.shape_cast %46 : vector<8x128xf32> to vector<1x8x128xf32>
    tpu.vector_store %arg12[%47, %c0_26, %c0_27], %50 {strides = array<i32>} : memref<8x8x128xf32, #tpu.memory_space<vmem>>, vector<1x8x128xf32>,
    %c1_i32 = arith.constant 1 : i32
    %51 = arith.index_cast %c1_i32 : i32 to index
    %c0_28 = arith.constant 0 : index
    %c0_29 = arith.constant 0 : index
    %52 = vector.load %arg13[%51, %c0_28, %c0_29] : memref<8x8x512xf32, #tpu.memory_space<vmem>>, vector<1x8x512xf32>
    %53 = vector.shape_cast %52 : vector<1x8x512xf32> to vector<8x512xf32>
    %c0_30 = arith.constant 0 : index
    %c0_31 = arith.constant 0 : index
    %c0_32 = arith.constant 0 : index
    %54 = vector.load %arg3[%c0_30, %c0_31, %c0_32] : memref<2x128x512xf32, #tpu.memory_space<vmem>>, vector<1x128x512xf32>
    %55 = vector.shape_cast %54 : vector<1x128x512xf32> to vector<128x512xf32>
    %cst_33 = arith.constant dense<0.000000e+00> : vector<8x512xf32>
    %56 = tpu.matmul %46, %55, %cst_33 {dimension_numbers = #tpu.dot_dimension_numbers<[1], [0], [0], [1], [0, 0, 1, 1], [], []>} : vector<8x128xf32>, vector<128x512xf32>, vector<8x512xf32> -> vector<8x512xf32>
    %57 = arith.addf %53, %56 : vector<8x512xf32>
    %58 = vector.extract_strided_slice %57 {offsets = [0, 0], sizes = [8, 128], strides = [1, 1]} : vector<8x512xf32> to vector<8x128xf32>
    %59 = arith.negf %58 : vector<8x128xf32>
    %60 = math.exp %59 : vector<8x128xf32>
    %cst_34 = arith.constant 1.000000e+00 : f32
    %61 = vector.broadcast %cst_34 : f32 to vector<8x128xf32>
    %62 = arith.addf %61, %60 : vector<8x128xf32>
    %63 = arith.divf %61, %62 : vector<8x128xf32>
    %64 = vector.extract_strided_slice %57 {offsets = [0, 128], sizes = [8, 128], strides = [1, 1]} : vector<8x512xf32> to vector<8x128xf32>
    %65 = arith.negf %64 : vector<8x128xf32>
    %66 = math.exp %65 : vector<8x128xf32>
    %cst_35 = arith.constant 1.000000e+00 : f32
    %67 = vector.broadcast %cst_35 : f32 to vector<8x128xf32>
    %68 = arith.addf %67, %66 : vector<8x128xf32>
    %69 = arith.divf %67, %68 : vector<8x128xf32>
    %70 = vector.extract_strided_slice %57 {offsets = [0, 256], sizes = [8, 128], strides = [1, 1]} : vector<8x512xf32> to vector<8x128xf32>
    %71 = math.tanh %70 : vector<8x128xf32>
    %72 = vector.extract_strided_slice %57 {offsets = [0, 384], sizes = [8, 128], strides = [1, 1]} : vector<8x512xf32> to vector<8x128xf32>
    %73 = arith.negf %72 : vector<8x128xf32>
    %74 = math.exp %73 : vector<8x128xf32>
    %cst_36 = arith.constant 1.000000e+00 : f32
    %75 = vector.broadcast %cst_36 : f32 to vector<8x128xf32>
    %76 = arith.addf %75, %74 : vector<8x128xf32>
    %77 = arith.divf %75, %76 : vector<8x128xf32>
    %78 = arith.mulf %69, %44 : vector<8x128xf32>
    %79 = arith.mulf %63, %71 : vector<8x128xf32>
    %80 = arith.addf %78, %79 : vector<8x128xf32>
    %81 = math.tanh %80 : vector<8x128xf32>
    %82 = arith.mulf %77, %81 : vector<8x128xf32>
    %83 = arith.index_cast %c1_i32 : i32 to index
    %c0_37 = arith.constant 0 : index
    %c0_38 = arith.constant 0 : index
    %84 = vector.load %arg12[%83, %c0_37, %c0_38] : memref<8x8x128xf32, #tpu.memory_space<vmem>>, vector<1x8x128xf32>
    %85 = vector.shape_cast %84 : vector<1x8x128xf32> to vector<8x128xf32>
    %86 = vector.shape_cast %82 : vector<8x128xf32> to vector<1x8x128xf32>
    tpu.vector_store %arg12[%83, %c0_37, %c0_38], %86 {strides = array<i32>} : memref<8x8x128xf32, #tpu.memory_space<vmem>>, vector<1x8x128xf32>,
    %c2_i32 = arith.constant 2 : i32
    %87 = arith.index_cast %c2_i32 : i32 to index
    %c0_39 = arith.constant 0 : index
    %c0_40 = arith.constant 0 : index
    %88 = vector.load %arg13[%87, %c0_39, %c0_40] : memref<8x8x512xf32, #tpu.memory_space<vmem>>, vector<1x8x512xf32>
    %89 = vector.shape_cast %88 : vector<1x8x512xf32> to vector<8x512xf32>
    %c0_41 = arith.constant 0 : index
    %c0_42 = arith.constant 0 : index
    %c0_43 = arith.constant 0 : index
    %90 = vector.load %arg3[%c0_41, %c0_42, %c0_43] : memref<2x128x512xf32, #tpu.memory_space<vmem>>, vector<1x128x512xf32>
    %91 = vector.shape_cast %90 : vector<1x128x512xf32> to vector<128x512xf32>
    %cst_44 = arith.constant dense<0.000000e+00> : vector<8x512xf32>
    %92 = tpu.matmul %82, %91, %cst_44 {dimension_numbers = #tpu.dot_dimension_numbers<[1], [0], [0], [1], [0, 0, 1, 1], [], []>} : vector<8x128xf32>, vector<128x512xf32>, vector<8x512xf32> -> vector<8x512xf32>
    %93 = arith.addf %89, %92 : vector<8x512xf32>
    %94 = vector.extract_strided_slice %93 {offsets = [0, 0], sizes = [8, 128], strides = [1, 1]} : vector<8x512xf32> to vector<8x128xf32>
    %95 = arith.negf %94 : vector<8x128xf32>
    %96 = math.exp %95 : vector<8x128xf32>
    %cst_45 = arith.constant 1.000000e+00 : f32
    %97 = vector.broadcast %cst_45 : f32 to vector<8x128xf32>
    %98 = arith.addf %97, %96 : vector<8x128xf32>
    %99 = arith.divf %97, %98 : vector<8x128xf32>
    %100 = vector.extract_strided_slice %93 {offsets = [0, 128], sizes = [8, 128], strides = [1, 1]} : vector<8x512xf32> to vector<8x128xf32>
    %101 = arith.negf %100 : vector<8x128xf32>
    %102 = math.exp %101 : vector<8x128xf32>
    %cst_46 = arith.constant 1.000000e+00 : f32
    %103 = vector.broadcast %cst_46 : f32 to vector<8x128xf32>
    %104 = arith.addf %103, %102 : vector<8x128xf32>
    %105 = arith.divf %103, %104 : vector<8x128xf32>
    %106 = vector.extract_strided_slice %93 {offsets = [0, 256], sizes = [8, 128], strides = [1, 1]} : vector<8x512xf32> to vector<8x128xf32>
    %107 = math.tanh %106 : vector<8x128xf32>
    %108 = vector.extract_strided_slice %93 {offsets = [0, 384], sizes = [8, 128], strides = [1, 1]} : vector<8x512xf32> to vector<8x128xf32>
    %109 = arith.negf %108 : vector<8x128xf32>
    %110 = math.exp %109 : vector<8x128xf32>
    %cst_47 = arith.constant 1.000000e+00 : f32
    %111 = vector.broadcast %cst_47 : f32 to vector<8x128xf32>
    %112 = arith.addf %111, %110 : vector<8x128xf32>
    %113 = arith.divf %111, %112 : vector<8x128xf32>
    %114 = arith.mulf %105, %80 : vector<8x128xf32>
    %115 = arith.mulf %99, %107 : vector<8x128xf32>
    %116 = arith.addf %114, %115 : vector<8x128xf32>
    %117 = math.tanh %116 : vector<8x128xf32>
    %118 = arith.mulf %113, %117 : vector<8x128xf32>
    %119 = arith.index_cast %c2_i32 : i32 to index
    %c0_48 = arith.constant 0 : index
    %c0_49 = arith.constant 0 : index
    %120 = vector.load %arg12[%119, %c0_48, %c0_49] : memref<8x8x128xf32, #tpu.memory_space<vmem>>, vector<1x8x128xf32>
    %121 = vector.shape_cast %120 : vector<1x8x128xf32> to vector<8x128xf32>
    %122 = vector.shape_cast %118 : vector<8x128xf32> to vector<1x8x128xf32>
    tpu.vector_store %arg12[%119, %c0_48, %c0_49], %122 {strides = array<i32>} : memref<8x8x128xf32, #tpu.memory_space<vmem>>, vector<1x8x128xf32>,
    %c3_i32 = arith.constant 3 : i32
    %123 = arith.index_cast %c3_i32 : i32 to index
    %c0_50 = arith.constant 0 : index
    %c0_51 = arith.constant 0 : index
    %124 = vector.load %arg13[%123, %c0_50, %c0_51] : memref<8x8x512xf32, #tpu.memory_space<vmem>>, vector<1x8x512xf32>
    %125 = vector.shape_cast %124 : vector<1x8x512xf32> to vector<8x512xf32>
    %c0_52 = arith.constant 0 : index
    %c0_53 = arith.constant 0 : index
    %c0_54 = arith.constant 0 : index
    %126 = vector.load %arg3[%c0_52, %c0_53, %c0_54] : memref<2x128x512xf32, #tpu.memory_space<vmem>>, vector<1x128x512xf32>
    %127 = vector.shape_cast %126 : vector<1x128x512xf32> to vector<128x512xf32>
    %cst_55 = arith.constant dense<0.000000e+00> : vector<8x512xf32>
    %128 = tpu.matmul %118, %127, %cst_55 {dimension_numbers = #tpu.dot_dimension_numbers<[1], [0], [0], [1], [0, 0, 1, 1], [], []>} : vector<8x128xf32>, vector<128x512xf32>, vector<8x512xf32> -> vector<8x512xf32>
    %129 = arith.addf %125, %128 : vector<8x512xf32>
    %130 = vector.extract_strided_slice %129 {offsets = [0, 0], sizes = [8, 128], strides = [1, 1]} : vector<8x512xf32> to vector<8x128xf32>
    %131 = arith.negf %130 : vector<8x128xf32>
    %132 = math.exp %131 : vector<8x128xf32>
    %cst_56 = arith.constant 1.000000e+00 : f32
    %133 = vector.broadcast %cst_56 : f32 to vector<8x128xf32>
    %134 = arith.addf %133, %132 : vector<8x128xf32>
    %135 = arith.divf %133, %134 : vector<8x128xf32>
    %136 = vector.extract_strided_slice %129 {offsets = [0, 128], sizes = [8, 128], strides = [1, 1]} : vector<8x512xf32> to vector<8x128xf32>
    %137 = arith.negf %136 : vector<8x128xf32>
    %138 = math.exp %137 : vector<8x128xf32>
    %cst_57 = arith.constant 1.000000e+00 : f32
    %139 = vector.broadcast %cst_57 : f32 to vector<8x128xf32>
    %140 = arith.addf %139, %138 : vector<8x128xf32>
    %141 = arith.divf %139, %140 : vector<8x128xf32>
    %142 = vector.extract_strided_slice %129 {offsets = [0, 256], sizes = [8, 128], strides = [1, 1]} : vector<8x512xf32> to vector<8x128xf32>
    %143 = math.tanh %142 : vector<8x128xf32>
    %144 = vector.extract_strided_slice %129 {offsets = [0, 384], sizes = [8, 128], strides = [1, 1]} : vector<8x512xf32> to vector<8x128xf32>
    %145 = arith.negf %144 : vector<8x128xf32>
    %146 = math.exp %145 : vector<8x128xf32>
    %cst_58 = arith.constant 1.000000e+00 : f32
    %147 = vector.broadcast %cst_58 : f32 to vector<8x128xf32>
    %148 = arith.addf %147, %146 : vector<8x128xf32>
    %149 = arith.divf %147, %148 : vector<8x128xf32>
    %150 = arith.mulf %141, %116 : vector<8x128xf32>
    %151 = arith.mulf %135, %143 : vector<8x128xf32>
    %152 = arith.addf %150, %151 : vector<8x128xf32>
    %153 = math.tanh %152 : vector<8x128xf32>
    %154 = arith.mulf %149, %153 : vector<8x128xf32>
    %155 = arith.index_cast %c3_i32 : i32 to index
    %c0_59 = arith.constant 0 : index
    %c0_60 = arith.constant 0 : index
    %156 = vector.load %arg12[%155, %c0_59, %c0_60] : memref<8x8x128xf32, #tpu.memory_space<vmem>>, vector<1x8x128xf32>
    %157 = vector.shape_cast %156 : vector<1x8x128xf32> to vector<8x128xf32>
    %158 = vector.shape_cast %154 : vector<8x128xf32> to vector<1x8x128xf32>
    tpu.vector_store %arg12[%155, %c0_59, %c0_60], %158 {strides = array<i32>} : memref<8x8x128xf32, #tpu.memory_space<vmem>>, vector<1x8x128xf32>,
    %c4_i32 = arith.constant 4 : i32
    %159 = arith.index_cast %c4_i32 : i32 to index
    %c0_61 = arith.constant 0 : index
    %c0_62 = arith.constant 0 : index
    %160 = vector.load %arg13[%159, %c0_61, %c0_62] : memref<8x8x512xf32, #tpu.memory_space<vmem>>, vector<1x8x512xf32>
    %161 = vector.shape_cast %160 : vector<1x8x512xf32> to vector<8x512xf32>
    %c0_63 = arith.constant 0 : index
    %c0_64 = arith.constant 0 : index
    %c0_65 = arith.constant 0 : index
    %162 = vector.load %arg3[%c0_63, %c0_64, %c0_65] : memref<2x128x512xf32, #tpu.memory_space<vmem>>, vector<1x128x512xf32>
    %163 = vector.shape_cast %162 : vector<1x128x512xf32> to vector<128x512xf32>
    %cst_66 = arith.constant dense<0.000000e+00> : vector<8x512xf32>
    %164 = tpu.matmul %154, %163, %cst_66 {dimension_numbers = #tpu.dot_dimension_numbers<[1], [0], [0], [1], [0, 0, 1, 1], [], []>} : vector<8x128xf32>, vector<128x512xf32>, vector<8x512xf32> -> vector<8x512xf32>
    %165 = arith.addf %161, %164 : vector<8x512xf32>
    %166 = vector.extract_strided_slice %165 {offsets = [0, 0], sizes = [8, 128], strides = [1, 1]} : vector<8x512xf32> to vector<8x128xf32>
    %167 = arith.negf %166 : vector<8x128xf32>
    %168 = math.exp %167 : vector<8x128xf32>
    %cst_67 = arith.constant 1.000000e+00 : f32
    %169 = vector.broadcast %cst_67 : f32 to vector<8x128xf32>
    %170 = arith.addf %169, %168 : vector<8x128xf32>
    %171 = arith.divf %169, %170 : vector<8x128xf32>
    %172 = vector.extract_strided_slice %165 {offsets = [0, 128], sizes = [8, 128], strides = [1, 1]} : vector<8x512xf32> to vector<8x128xf32>
    %173 = arith.negf %172 : vector<8x128xf32>
    %174 = math.exp %173 : vector<8x128xf32>
    %cst_68 = arith.constant 1.000000e+00 : f32
    %175 = vector.broadcast %cst_68 : f32 to vector<8x128xf32>
    %176 = arith.addf %175, %174 : vector<8x128xf32>
    %177 = arith.divf %175, %176 : vector<8x128xf32>
    %178 = vector.extract_strided_slice %165 {offsets = [0, 256], sizes = [8, 128], strides = [1, 1]} : vector<8x512xf32> to vector<8x128xf32>
    %179 = math.tanh %178 : vector<8x128xf32>
    %180 = vector.extract_strided_slice %165 {offsets = [0, 384], sizes = [8, 128], strides = [1, 1]} : vector<8x512xf32> to vector<8x128xf32>
    %181 = arith.negf %180 : vector<8x128xf32>
    %182 = math.exp %181 : vector<8x128xf32>
    %cst_69 = arith.constant 1.000000e+00 : f32
    %183 = vector.broadcast %cst_69 : f32 to vector<8x128xf32>
    %184 = arith.addf %183, %182 : vector<8x128xf32>
    %185 = arith.divf %183, %184 : vector<8x128xf32>
    %186 = arith.mulf %177, %152 : vector<8x128xf32>
    %187 = arith.mulf %171, %179 : vector<8x128xf32>
    %188 = arith.addf %186, %187 : vector<8x128xf32>
    %189 = math.tanh %188 : vector<8x128xf32>
    %190 = arith.mulf %185, %189 : vector<8x128xf32>
    %191 = arith.index_cast %c4_i32 : i32 to index
    %c0_70 = arith.constant 0 : index
    %c0_71 = arith.constant 0 : index
    %192 = vector.load %arg12[%191, %c0_70, %c0_71] : memref<8x8x128xf32, #tpu.memory_space<vmem>>, vector<1x8x128xf32>
    %193 = vector.shape_cast %192 : vector<1x8x128xf32> to vector<8x128xf32>
    %194 = vector.shape_cast %190 : vector<8x128xf32> to vector<1x8x128xf32>
    tpu.vector_store %arg12[%191, %c0_70, %c0_71], %194 {strides = array<i32>} : memref<8x8x128xf32, #tpu.memory_space<vmem>>, vector<1x8x128xf32>,
    %c5_i32 = arith.constant 5 : i32
    %195 = arith.index_cast %c5_i32 : i32 to index
    %c0_72 = arith.constant 0 : index
    %c0_73 = arith.constant 0 : index
    %196 = vector.load %arg13[%195, %c0_72, %c0_73] : memref<8x8x512xf32, #tpu.memory_space<vmem>>, vector<1x8x512xf32>
    %197 = vector.shape_cast %196 : vector<1x8x512xf32> to vector<8x512xf32>
    %c0_74 = arith.constant 0 : index
    %c0_75 = arith.constant 0 : index
    %c0_76 = arith.constant 0 : index
    %198 = vector.load %arg3[%c0_74, %c0_75, %c0_76] : memref<2x128x512xf32, #tpu.memory_space<vmem>>, vector<1x128x512xf32>
    %199 = vector.shape_cast %198 : vector<1x128x512xf32> to vector<128x512xf32>
    %cst_77 = arith.constant dense<0.000000e+00> : vector<8x512xf32>
    %200 = tpu.matmul %190, %199, %cst_77 {dimension_numbers = #tpu.dot_dimension_numbers<[1], [0], [0], [1], [0, 0, 1, 1], [], []>} : vector<8x128xf32>, vector<128x512xf32>, vector<8x512xf32> -> vector<8x512xf32>
    %201 = arith.addf %197, %200 : vector<8x512xf32>
    %202 = vector.extract_strided_slice %201 {offsets = [0, 0], sizes = [8, 128], strides = [1, 1]} : vector<8x512xf32> to vector<8x128xf32>
    %203 = arith.negf %202 : vector<8x128xf32>
    %204 = math.exp %203 : vector<8x128xf32>
    %cst_78 = arith.constant 1.000000e+00 : f32
    %205 = vector.broadcast %cst_78 : f32 to vector<8x128xf32>
    %206 = arith.addf %205, %204 : vector<8x128xf32>
    %207 = arith.divf %205, %206 : vector<8x128xf32>
    %208 = vector.extract_strided_slice %201 {offsets = [0, 128], sizes = [8, 128], strides = [1, 1]} : vector<8x512xf32> to vector<8x128xf32>
    %209 = arith.negf %208 : vector<8x128xf32>
    %210 = math.exp %209 : vector<8x128xf32>
    %cst_79 = arith.constant 1.000000e+00 : f32
    %211 = vector.broadcast %cst_79 : f32 to vector<8x128xf32>
    %212 = arith.addf %211, %210 : vector<8x128xf32>
    %213 = arith.divf %211, %212 : vector<8x128xf32>
    %214 = vector.extract_strided_slice %201 {offsets = [0, 256], sizes = [8, 128], strides = [1, 1]} : vector<8x512xf32> to vector<8x128xf32>
    %215 = math.tanh %214 : vector<8x128xf32>
    %216 = vector.extract_strided_slice %201 {offsets = [0, 384], sizes = [8, 128], strides = [1, 1]} : vector<8x512xf32> to vector<8x128xf32>
    %217 = arith.negf %216 : vector<8x128xf32>
    %218 = math.exp %217 : vector<8x128xf32>
    %cst_80 = arith.constant 1.000000e+00 : f32
    %219 = vector.broadcast %cst_80 : f32 to vector<8x128xf32>
    %220 = arith.addf %219, %218 : vector<8x128xf32>
    %221 = arith.divf %219, %220 : vector<8x128xf32>
    %222 = arith.mulf %213, %188 : vector<8x128xf32>
    %223 = arith.mulf %207, %215 : vector<8x128xf32>
    %224 = arith.addf %222, %223 : vector<8x128xf32>
    %225 = math.tanh %224 : vector<8x128xf32>
    %226 = arith.mulf %221, %225 : vector<8x128xf32>
    %227 = arith.index_cast %c5_i32 : i32 to index
    %c0_81 = arith.constant 0 : index
    %c0_82 = arith.constant 0 : index
    %228 = vector.load %arg12[%227, %c0_81, %c0_82] : memref<8x8x128xf32, #tpu.memory_space<vmem>>, vector<1x8x128xf32>
    %229 = vector.shape_cast %228 : vector<1x8x128xf32> to vector<8x128xf32>
    %230 = vector.shape_cast %226 : vector<8x128xf32> to vector<1x8x128xf32>
    tpu.vector_store %arg12[%227, %c0_81, %c0_82], %230 {strides = array<i32>} : memref<8x8x128xf32, #tpu.memory_space<vmem>>, vector<1x8x128xf32>,
    %c6_i32 = arith.constant 6 : i32
    %231 = arith.index_cast %c6_i32 : i32 to index
    %c0_83 = arith.constant 0 : index
    %c0_84 = arith.constant 0 : index
    %232 = vector.load %arg13[%231, %c0_83, %c0_84] : memref<8x8x512xf32, #tpu.memory_space<vmem>>, vector<1x8x512xf32>
    %233 = vector.shape_cast %232 : vector<1x8x512xf32> to vector<8x512xf32>
    %c0_85 = arith.constant 0 : index
    %c0_86 = arith.constant 0 : index
    %c0_87 = arith.constant 0 : index
    %234 = vector.load %arg3[%c0_85, %c0_86, %c0_87] : memref<2x128x512xf32, #tpu.memory_space<vmem>>, vector<1x128x512xf32>
    %235 = vector.shape_cast %234 : vector<1x128x512xf32> to vector<128x512xf32>
    %cst_88 = arith.constant dense<0.000000e+00> : vector<8x512xf32>
    %236 = tpu.matmul %226, %235, %cst_88 {dimension_numbers = #tpu.dot_dimension_numbers<[1], [0], [0], [1], [0, 0, 1, 1], [], []>} : vector<8x128xf32>, vector<128x512xf32>, vector<8x512xf32> -> vector<8x512xf32>
    %237 = arith.addf %233, %236 : vector<8x512xf32>
    %238 = vector.extract_strided_slice %237 {offsets = [0, 0], sizes = [8, 128], strides = [1, 1]} : vector<8x512xf32> to vector<8x128xf32>
    %239 = arith.negf %238 : vector<8x128xf32>
    %240 = math.exp %239 : vector<8x128xf32>
    %cst_89 = arith.constant 1.000000e+00 : f32
    %241 = vector.broadcast %cst_89 : f32 to vector<8x128xf32>
    %242 = arith.addf %241, %240 : vector<8x128xf32>
    %243 = arith.divf %241, %242 : vector<8x128xf32>
    %244 = vector.extract_strided_slice %237 {offsets = [0, 128], sizes = [8, 128], strides = [1, 1]} : vector<8x512xf32> to vector<8x128xf32>
    %245 = arith.negf %244 : vector<8x128xf32>
    %246 = math.exp %245 : vector<8x128xf32>
    %cst_90 = arith.constant 1.000000e+00 : f32
    %247 = vector.broadcast %cst_90 : f32 to vector<8x128xf32>
    %248 = arith.addf %247, %246 : vector<8x128xf32>
    %249 = arith.divf %247, %248 : vector<8x128xf32>
    %250 = vector.extract_strided_slice %237 {offsets = [0, 256], sizes = [8, 128], strides = [1, 1]} : vector<8x512xf32> to vector<8x128xf32>
    %251 = math.tanh %250 : vector<8x128xf32>
    %252 = vector.extract_strided_slice %237 {offsets = [0, 384], sizes = [8, 128], strides = [1, 1]} : vector<8x512xf32> to vector<8x128xf32>
    %253 = arith.negf %252 : vector<8x128xf32>
    %254 = math.exp %253 : vector<8x128xf32>
    %cst_91 = arith.constant 1.000000e+00 : f32
    %255 = vector.broadcast %cst_91 : f32 to vector<8x128xf32>
    %256 = arith.addf %255, %254 : vector<8x128xf32>
    %257 = arith.divf %255, %256 : vector<8x128xf32>
    %258 = arith.mulf %249, %224 : vector<8x128xf32>
    %259 = arith.mulf %243, %251 : vector<8x128xf32>
    %260 = arith.addf %258, %259 : vector<8x128xf32>
    %261 = math.tanh %260 : vector<8x128xf32>
    %262 = arith.mulf %257, %261 : vector<8x128xf32>
    %263 = arith.index_cast %c6_i32 : i32 to index
    %c0_92 = arith.constant 0 : index
    %c0_93 = arith.constant 0 : index
    %264 = vector.load %arg12[%263, %c0_92, %c0_93] : memref<8x8x128xf32, #tpu.memory_space<vmem>>, vector<1x8x128xf32>
    %265 = vector.shape_cast %264 : vector<1x8x128xf32> to vector<8x128xf32>
    %266 = vector.shape_cast %262 : vector<8x128xf32> to vector<1x8x128xf32>
    tpu.vector_store %arg12[%263, %c0_92, %c0_93], %266 {strides = array<i32>} : memref<8x8x128xf32, #tpu.memory_space<vmem>>, vector<1x8x128xf32>,
    %c7_i32 = arith.constant 7 : i32
    %267 = arith.index_cast %c7_i32 : i32 to index
    %c0_94 = arith.constant 0 : index
    %c0_95 = arith.constant 0 : index
    %268 = vector.load %arg13[%267, %c0_94, %c0_95] : memref<8x8x512xf32, #tpu.memory_space<vmem>>, vector<1x8x512xf32>
    %269 = vector.shape_cast %268 : vector<1x8x512xf32> to vector<8x512xf32>
    %c0_96 = arith.constant 0 : index
    %c0_97 = arith.constant 0 : index
    %c0_98 = arith.constant 0 : index
    %270 = vector.load %arg3[%c0_96, %c0_97, %c0_98] : memref<2x128x512xf32, #tpu.memory_space<vmem>>, vector<1x128x512xf32>
    %271 = vector.shape_cast %270 : vector<1x128x512xf32> to vector<128x512xf32>
    %cst_99 = arith.constant dense<0.000000e+00> : vector<8x512xf32>
    %272 = tpu.matmul %262, %271, %cst_99 {dimension_numbers = #tpu.dot_dimension_numbers<[1], [0], [0], [1], [0, 0, 1, 1], [], []>} : vector<8x128xf32>, vector<128x512xf32>, vector<8x512xf32> -> vector<8x512xf32>
    %273 = arith.addf %269, %272 : vector<8x512xf32>
    %274 = vector.extract_strided_slice %273 {offsets = [0, 0], sizes = [8, 128], strides = [1, 1]} : vector<8x512xf32> to vector<8x128xf32>
    %275 = arith.negf %274 : vector<8x128xf32>
    %276 = math.exp %275 : vector<8x128xf32>
    %cst_100 = arith.constant 1.000000e+00 : f32
    %277 = vector.broadcast %cst_100 : f32 to vector<8x128xf32>
    %278 = arith.addf %277, %276 : vector<8x128xf32>
    %279 = arith.divf %277, %278 : vector<8x128xf32>
    %280 = vector.extract_strided_slice %273 {offsets = [0, 128], sizes = [8, 128], strides = [1, 1]} : vector<8x512xf32> to vector<8x128xf32>
    %281 = arith.negf %280 : vector<8x128xf32>
    %282 = math.exp %281 : vector<8x128xf32>
    %cst_101 = arith.constant 1.000000e+00 : f32
    %283 = vector.broadcast %cst_101 : f32 to vector<8x128xf32>
    %284 = arith.addf %283, %282 : vector<8x128xf32>
    %285 = arith.divf %283, %284 : vector<8x128xf32>
    %286 = vector.extract_strided_slice %273 {offsets = [0, 256], sizes = [8, 128], strides = [1, 1]} : vector<8x512xf32> to vector<8x128xf32>
    %287 = math.tanh %286 : vector<8x128xf32>
    %288 = vector.extract_strided_slice %273 {offsets = [0, 384], sizes = [8, 128], strides = [1, 1]} : vector<8x512xf32> to vector<8x128xf32>
    %289 = arith.negf %288 : vector<8x128xf32>
    %290 = math.exp %289 : vector<8x128xf32>
    %cst_102 = arith.constant 1.000000e+00 : f32
    %291 = vector.broadcast %cst_102 : f32 to vector<8x128xf32>
    %292 = arith.addf %291, %290 : vector<8x128xf32>
    %293 = arith.divf %291, %292 : vector<8x128xf32>
    %294 = arith.mulf %285, %260 : vector<8x128xf32>
    %295 = arith.mulf %279, %287 : vector<8x128xf32>
    %296 = arith.addf %294, %295 : vector<8x128xf32>
    %297 = math.tanh %296 : vector<8x128xf32>
    %298 = arith.mulf %293, %297 : vector<8x128xf32>
    %299 = arith.index_cast %c7_i32 : i32 to index
    %c0_103 = arith.constant 0 : index
    %c0_104 = arith.constant 0 : index
    %300 = vector.load %arg12[%299, %c0_103, %c0_104] : memref<8x8x128xf32, #tpu.memory_space<vmem>>, vector<1x8x128xf32>
    %301 = vector.shape_cast %300 : vector<1x8x128xf32> to vector<8x128xf32>
    %302 = vector.shape_cast %298 : vector<8x128xf32> to vector<1x8x128xf32>
    tpu.vector_store %arg12[%299, %c0_103, %c0_104], %302 {strides = array<i32>} : memref<8x8x128xf32, #tpu.memory_space<vmem>>, vector<1x8x128xf32>,
    %c8_i32 = arith.constant 8 : i32
    %c0_105 = arith.constant 0 : index
    %c0_106 = arith.constant 0 : index
    %c0_107 = arith.constant 0 : index
    %303 = vector.load %arg10[%c0_105, %c0_106, %c0_107] : memref<2x8x128xf32, #tpu.memory_space<vmem>>, vector<1x8x128xf32>
    %304 = vector.shape_cast %303 : vector<1x8x128xf32> to vector<8x128xf32>
    %305 = vector.shape_cast %298 : vector<8x128xf32> to vector<1x8x128xf32>
    tpu.vector_store %arg10[%c0_105, %c0_106, %c0_107], %305 {strides = array<i32>} : memref<2x8x128xf32, #tpu.memory_space<vmem>>, vector<1x8x128xf32>,
    %c0_108 = arith.constant 0 : index
    %c0_109 = arith.constant 0 : index
    %c0_110 = arith.constant 0 : index
    %306 = vector.load %arg11[%c0_108, %c0_109, %c0_110] : memref<2x8x128xf32, #tpu.memory_space<vmem>>, vector<1x8x128xf32>
    %307 = vector.shape_cast %306 : vector<1x8x128xf32> to vector<8x128xf32>
    %308 = vector.shape_cast %296 : vector<8x128xf32> to vector<1x8x128xf32>
    tpu.vector_store %arg11[%c0_108, %c0_109, %c0_110], %308 {strides = array<i32>} : memref<2x8x128xf32, #tpu.memory_space<vmem>>, vector<1x8x128xf32>,
    %c0_111 = arith.constant 0 : index
    %c0_112 = arith.constant 0 : index
    %c0_113 = arith.constant 0 : index
    %309 = vector.load %arg12[%c0_111, %c0_112, %c0_113] : memref<8x8x128xf32, #tpu.memory_space<vmem>>, vector<8x8x128xf32>
    %310 = vector.shape_cast %309 : vector<8x8x128xf32> to vector<64x128xf32>
    %c1 = arith.constant 1 : index
    %c0_114 = arith.constant 0 : index
    %c0_115 = arith.constant 0 : index
    %311 = vector.load %arg2[%c1, %c0_114, %c0_115] : memref<2x128x512xf32, #tpu.memory_space<vmem>>, vector<1x128x512xf32>
    %312 = vector.shape_cast %311 : vector<1x128x512xf32> to vector<128x512xf32>
    %cst_116 = arith.constant dense<0.000000e+00> : vector<64x512xf32>
    %313 = tpu.matmul %310, %312, %cst_116 {dimension_numbers = #tpu.dot_dimension_numbers<[1], [0], [0], [1], [0, 0, 1, 1], [], []>} : vector<64x128xf32>, vector<128x512xf32>, vector<64x512xf32> -> vector<64x512xf32>
    %c1_117 = arith.constant 1 : index
    %c0_118 = arith.constant 0 : index
    %c0_119 = arith.constant 0 : index
    %314 = vector.load %arg4[%c1_117, %c0_118, %c0_119] : memref<2x1x512xf32, #tpu.memory_space<vmem>>, vector<1x1x512xf32>
    %315 = vector.shape_cast %314 : vector<1x1x512xf32> to vector<1x512xf32>
    %316 = vector.broadcast %315 : vector<1x512xf32> to vector<64x512xf32>
    %317 = arith.addf %313, %316 : vector<64x512xf32>
    %318 = vector.shape_cast %317 : vector<64x512xf32> to vector<8x8x512xf32>
    %c0_120 = arith.constant 0 : index
    %c0_121 = arith.constant 0 : index
    %c0_122 = arith.constant 0 : index
    %319 = vector.load %arg13[%c0_120, %c0_121, %c0_122] : memref<8x8x512xf32, #tpu.memory_space<vmem>>, vector<8x8x512xf32>
    tpu.vector_store %arg13[%c0_120, %c0_121, %c0_122], %318 {strides = array<i32>} : memref<8x8x512xf32, #tpu.memory_space<vmem>>, vector<8x8x512xf32>,
    %c1_123 = arith.constant 1 : index
    %c0_124 = arith.constant 0 : index
    %c0_125 = arith.constant 0 : index
    %320 = vector.load %arg5[%c1_123, %c0_124, %c0_125] : memref<2x8x128xf32, #tpu.memory_space<vmem>>, vector<1x8x128xf32>
    %321 = vector.shape_cast %320 : vector<1x8x128xf32> to vector<8x128xf32>
    %c1_126 = arith.constant 1 : index
    %c0_127 = arith.constant 0 : index
    %c0_128 = arith.constant 0 : index
    %322 = vector.load %arg6[%c1_126, %c0_127, %c0_128] : memref<2x8x128xf32, #tpu.memory_space<vmem>>, vector<1x8x128xf32>
    %323 = vector.shape_cast %322 : vector<1x8x128xf32> to vector<8x128xf32>
    %c0_i32_129 = arith.constant 0 : i32
    %324 = arith.index_cast %c0_i32_129 : i32 to index
    %c0_130 = arith.constant 0 : index
    %c0_131 = arith.constant 0 : index
    %325 = vector.load %arg13[%324, %c0_130, %c0_131] : memref<8x8x512xf32, #tpu.memory_space<vmem>>, vector<1x8x512xf32>
    %326 = vector.shape_cast %325 : vector<1x8x512xf32> to vector<8x512xf32>
    %c1_132 = arith.constant 1 : index
    %c0_133 = arith.constant 0 : index
    %c0_134 = arith.constant 0 : index
    %327 = vector.load %arg3[%c1_132, %c0_133, %c0_134] : memref<2x128x512xf32, #tpu.memory_space<vmem>>, vector<1x128x512xf32>
    %328 = vector.shape_cast %327 : vector<1x128x512xf32> to vector<128x512xf32>
    %cst_135 = arith.constant dense<0.000000e+00> : vector<8x512xf32>
    %329 = tpu.matmul %321, %328, %cst_135 {dimension_numbers = #tpu.dot_dimension_numbers<[1], [0], [0], [1], [0, 0, 1, 1], [], []>} : vector<8x128xf32>, vector<128x512xf32>, vector<8x512xf32> -> vector<8x512xf32>
    %330 = arith.addf %326, %329 : vector<8x512xf32>
    %331 = vector.extract_strided_slice %330 {offsets = [0, 0], sizes = [8, 128], strides = [1, 1]} : vector<8x512xf32> to vector<8x128xf32>
    %332 = arith.negf %331 : vector<8x128xf32>
    %333 = math.exp %332 : vector<8x128xf32>
    %cst_136 = arith.constant 1.000000e+00 : f32
    %334 = vector.broadcast %cst_136 : f32 to vector<8x128xf32>
    %335 = arith.addf %334, %333 : vector<8x128xf32>
    %336 = arith.divf %334, %335 : vector<8x128xf32>
    %337 = vector.extract_strided_slice %330 {offsets = [0, 128], sizes = [8, 128], strides = [1, 1]} : vector<8x512xf32> to vector<8x128xf32>
    %338 = arith.negf %337 : vector<8x128xf32>
    %339 = math.exp %338 : vector<8x128xf32>
    %cst_137 = arith.constant 1.000000e+00 : f32
    %340 = vector.broadcast %cst_137 : f32 to vector<8x128xf32>
    %341 = arith.addf %340, %339 : vector<8x128xf32>
    %342 = arith.divf %340, %341 : vector<8x128xf32>
    %343 = vector.extract_strided_slice %330 {offsets = [0, 256], sizes = [8, 128], strides = [1, 1]} : vector<8x512xf32> to vector<8x128xf32>
    %344 = math.tanh %343 : vector<8x128xf32>
    %345 = vector.extract_strided_slice %330 {offsets = [0, 384], sizes = [8, 128], strides = [1, 1]} : vector<8x512xf32> to vector<8x128xf32>
    %346 = arith.negf %345 : vector<8x128xf32>
    %347 = math.exp %346 : vector<8x128xf32>
    %cst_138 = arith.constant 1.000000e+00 : f32
    %348 = vector.broadcast %cst_138 : f32 to vector<8x128xf32>
    %349 = arith.addf %348, %347 : vector<8x128xf32>
    %350 = arith.divf %348, %349 : vector<8x128xf32>
    %351 = arith.mulf %342, %323 : vector<8x128xf32>
    %352 = arith.mulf %336, %344 : vector<8x128xf32>
    %353 = arith.addf %351, %352 : vector<8x128xf32>
    %354 = math.tanh %353 : vector<8x128xf32>
    %355 = arith.mulf %350, %354 : vector<8x128xf32>
    %356 = arith.index_cast %c0_i32_129 : i32 to index
    %c0_139 = arith.constant 0 : index
    %c0_140 = arith.constant 0 : index
    %357 = vector.load %arg12[%356, %c0_139, %c0_140] : memref<8x8x128xf32, #tpu.memory_space<vmem>>, vector<1x8x128xf32>
    %358 = vector.shape_cast %357 : vector<1x8x128xf32> to vector<8x128xf32>
    %359 = vector.shape_cast %355 : vector<8x128xf32> to vector<1x8x128xf32>
    tpu.vector_store %arg12[%356, %c0_139, %c0_140], %359 {strides = array<i32>} : memref<8x8x128xf32, #tpu.memory_space<vmem>>, vector<1x8x128xf32>,
    %c1_i32_141 = arith.constant 1 : i32
    %360 = arith.index_cast %c1_i32_141 : i32 to index
    %c0_142 = arith.constant 0 : index
    %c0_143 = arith.constant 0 : index
    %361 = vector.load %arg13[%360, %c0_142, %c0_143] : memref<8x8x512xf32, #tpu.memory_space<vmem>>, vector<1x8x512xf32>
    %362 = vector.shape_cast %361 : vector<1x8x512xf32> to vector<8x512xf32>
    %c1_144 = arith.constant 1 : index
    %c0_145 = arith.constant 0 : index
    %c0_146 = arith.constant 0 : index
    %363 = vector.load %arg3[%c1_144, %c0_145, %c0_146] : memref<2x128x512xf32, #tpu.memory_space<vmem>>, vector<1x128x512xf32>
    %364 = vector.shape_cast %363 : vector<1x128x512xf32> to vector<128x512xf32>
    %cst_147 = arith.constant dense<0.000000e+00> : vector<8x512xf32>
    %365 = tpu.matmul %355, %364, %cst_147 {dimension_numbers = #tpu.dot_dimension_numbers<[1], [0], [0], [1], [0, 0, 1, 1], [], []>} : vector<8x128xf32>, vector<128x512xf32>, vector<8x512xf32> -> vector<8x512xf32>
    %366 = arith.addf %362, %365 : vector<8x512xf32>
    %367 = vector.extract_strided_slice %366 {offsets = [0, 0], sizes = [8, 128], strides = [1, 1]} : vector<8x512xf32> to vector<8x128xf32>
    %368 = arith.negf %367 : vector<8x128xf32>
    %369 = math.exp %368 : vector<8x128xf32>
    %cst_148 = arith.constant 1.000000e+00 : f32
    %370 = vector.broadcast %cst_148 : f32 to vector<8x128xf32>
    %371 = arith.addf %370, %369 : vector<8x128xf32>
    %372 = arith.divf %370, %371 : vector<8x128xf32>
    %373 = vector.extract_strided_slice %366 {offsets = [0, 128], sizes = [8, 128], strides = [1, 1]} : vector<8x512xf32> to vector<8x128xf32>
    %374 = arith.negf %373 : vector<8x128xf32>
    %375 = math.exp %374 : vector<8x128xf32>
    %cst_149 = arith.constant 1.000000e+00 : f32
    %376 = vector.broadcast %cst_149 : f32 to vector<8x128xf32>
    %377 = arith.addf %376, %375 : vector<8x128xf32>
    %378 = arith.divf %376, %377 : vector<8x128xf32>
    %379 = vector.extract_strided_slice %366 {offsets = [0, 256], sizes = [8, 128], strides = [1, 1]} : vector<8x512xf32> to vector<8x128xf32>
    %380 = math.tanh %379 : vector<8x128xf32>
    %381 = vector.extract_strided_slice %366 {offsets = [0, 384], sizes = [8, 128], strides = [1, 1]} : vector<8x512xf32> to vector<8x128xf32>
    %382 = arith.negf %381 : vector<8x128xf32>
    %383 = math.exp %382 : vector<8x128xf32>
    %cst_150 = arith.constant 1.000000e+00 : f32
    %384 = vector.broadcast %cst_150 : f32 to vector<8x128xf32>
    %385 = arith.addf %384, %383 : vector<8x128xf32>
    %386 = arith.divf %384, %385 : vector<8x128xf32>
    %387 = arith.mulf %378, %353 : vector<8x128xf32>
    %388 = arith.mulf %372, %380 : vector<8x128xf32>
    %389 = arith.addf %387, %388 : vector<8x128xf32>
    %390 = math.tanh %389 : vector<8x128xf32>
    %391 = arith.mulf %386, %390 : vector<8x128xf32>
    %392 = arith.index_cast %c1_i32_141 : i32 to index
    %c0_151 = arith.constant 0 : index
    %c0_152 = arith.constant 0 : index
    %393 = vector.load %arg12[%392, %c0_151, %c0_152] : memref<8x8x128xf32, #tpu.memory_space<vmem>>, vector<1x8x128xf32>
    %394 = vector.shape_cast %393 : vector<1x8x128xf32> to vector<8x128xf32>
    %395 = vector.shape_cast %391 : vector<8x128xf32> to vector<1x8x128xf32>
    tpu.vector_store %arg12[%392, %c0_151, %c0_152], %395 {strides = array<i32>} : memref<8x8x128xf32, #tpu.memory_space<vmem>>, vector<1x8x128xf32>,
    %c2_i32_153 = arith.constant 2 : i32
    %396 = arith.index_cast %c2_i32_153 : i32 to index
    %c0_154 = arith.constant 0 : index
    %c0_155 = arith.constant 0 : index
    %397 = vector.load %arg13[%396, %c0_154, %c0_155] : memref<8x8x512xf32, #tpu.memory_space<vmem>>, vector<1x8x512xf32>
    %398 = vector.shape_cast %397 : vector<1x8x512xf32> to vector<8x512xf32>
    %c1_156 = arith.constant 1 : index
    %c0_157 = arith.constant 0 : index
    %c0_158 = arith.constant 0 : index
    %399 = vector.load %arg3[%c1_156, %c0_157, %c0_158] : memref<2x128x512xf32, #tpu.memory_space<vmem>>, vector<1x128x512xf32>
    %400 = vector.shape_cast %399 : vector<1x128x512xf32> to vector<128x512xf32>
    %cst_159 = arith.constant dense<0.000000e+00> : vector<8x512xf32>
    %401 = tpu.matmul %391, %400, %cst_159 {dimension_numbers = #tpu.dot_dimension_numbers<[1], [0], [0], [1], [0, 0, 1, 1], [], []>} : vector<8x128xf32>, vector<128x512xf32>, vector<8x512xf32> -> vector<8x512xf32>
    %402 = arith.addf %398, %401 : vector<8x512xf32>
    %403 = vector.extract_strided_slice %402 {offsets = [0, 0], sizes = [8, 128], strides = [1, 1]} : vector<8x512xf32> to vector<8x128xf32>
    %404 = arith.negf %403 : vector<8x128xf32>
    %405 = math.exp %404 : vector<8x128xf32>
    %cst_160 = arith.constant 1.000000e+00 : f32
    %406 = vector.broadcast %cst_160 : f32 to vector<8x128xf32>
    %407 = arith.addf %406, %405 : vector<8x128xf32>
    %408 = arith.divf %406, %407 : vector<8x128xf32>
    %409 = vector.extract_strided_slice %402 {offsets = [0, 128], sizes = [8, 128], strides = [1, 1]} : vector<8x512xf32> to vector<8x128xf32>
    %410 = arith.negf %409 : vector<8x128xf32>
    %411 = math.exp %410 : vector<8x128xf32>
    %cst_161 = arith.constant 1.000000e+00 : f32
    %412 = vector.broadcast %cst_161 : f32 to vector<8x128xf32>
    %413 = arith.addf %412, %411 : vector<8x128xf32>
    %414 = arith.divf %412, %413 : vector<8x128xf32>
    %415 = vector.extract_strided_slice %402 {offsets = [0, 256], sizes = [8, 128], strides = [1, 1]} : vector<8x512xf32> to vector<8x128xf32>
    %416 = math.tanh %415 : vector<8x128xf32>
    %417 = vector.extract_strided_slice %402 {offsets = [0, 384], sizes = [8, 128], strides = [1, 1]} : vector<8x512xf32> to vector<8x128xf32>
    %418 = arith.negf %417 : vector<8x128xf32>
    %419 = math.exp %418 : vector<8x128xf32>
    %cst_162 = arith.constant 1.000000e+00 : f32
    %420 = vector.broadcast %cst_162 : f32 to vector<8x128xf32>
    %421 = arith.addf %420, %419 : vector<8x128xf32>
    %422 = arith.divf %420, %421 : vector<8x128xf32>
    %423 = arith.mulf %414, %389 : vector<8x128xf32>
    %424 = arith.mulf %408, %416 : vector<8x128xf32>
    %425 = arith.addf %423, %424 : vector<8x128xf32>
    %426 = math.tanh %425 : vector<8x128xf32>
    %427 = arith.mulf %422, %426 : vector<8x128xf32>
    %428 = arith.index_cast %c2_i32_153 : i32 to index
    %c0_163 = arith.constant 0 : index
    %c0_164 = arith.constant 0 : index
    %429 = vector.load %arg12[%428, %c0_163, %c0_164] : memref<8x8x128xf32, #tpu.memory_space<vmem>>, vector<1x8x128xf32>
    %430 = vector.shape_cast %429 : vector<1x8x128xf32> to vector<8x128xf32>
    %431 = vector.shape_cast %427 : vector<8x128xf32> to vector<1x8x128xf32>
    tpu.vector_store %arg12[%428, %c0_163, %c0_164], %431 {strides = array<i32>} : memref<8x8x128xf32, #tpu.memory_space<vmem>>, vector<1x8x128xf32>,
    %c3_i32_165 = arith.constant 3 : i32
    %432 = arith.index_cast %c3_i32_165 : i32 to index
    %c0_166 = arith.constant 0 : index
    %c0_167 = arith.constant 0 : index
    %433 = vector.load %arg13[%432, %c0_166, %c0_167] : memref<8x8x512xf32, #tpu.memory_space<vmem>>, vector<1x8x512xf32>
    %434 = vector.shape_cast %433 : vector<1x8x512xf32> to vector<8x512xf32>
    %c1_168 = arith.constant 1 : index
    %c0_169 = arith.constant 0 : index
    %c0_170 = arith.constant 0 : index
    %435 = vector.load %arg3[%c1_168, %c0_169, %c0_170] : memref<2x128x512xf32, #tpu.memory_space<vmem>>, vector<1x128x512xf32>
    %436 = vector.shape_cast %435 : vector<1x128x512xf32> to vector<128x512xf32>
    %cst_171 = arith.constant dense<0.000000e+00> : vector<8x512xf32>
    %437 = tpu.matmul %427, %436, %cst_171 {dimension_numbers = #tpu.dot_dimension_numbers<[1], [0], [0], [1], [0, 0, 1, 1], [], []>} : vector<8x128xf32>, vector<128x512xf32>, vector<8x512xf32> -> vector<8x512xf32>
    %438 = arith.addf %434, %437 : vector<8x512xf32>
    %439 = vector.extract_strided_slice %438 {offsets = [0, 0], sizes = [8, 128], strides = [1, 1]} : vector<8x512xf32> to vector<8x128xf32>
    %440 = arith.negf %439 : vector<8x128xf32>
    %441 = math.exp %440 : vector<8x128xf32>
    %cst_172 = arith.constant 1.000000e+00 : f32
    %442 = vector.broadcast %cst_172 : f32 to vector<8x128xf32>
    %443 = arith.addf %442, %441 : vector<8x128xf32>
    %444 = arith.divf %442, %443 : vector<8x128xf32>
    %445 = vector.extract_strided_slice %438 {offsets = [0, 128], sizes = [8, 128], strides = [1, 1]} : vector<8x512xf32> to vector<8x128xf32>
    %446 = arith.negf %445 : vector<8x128xf32>
    %447 = math.exp %446 : vector<8x128xf32>
    %cst_173 = arith.constant 1.000000e+00 : f32
    %448 = vector.broadcast %cst_173 : f32 to vector<8x128xf32>
    %449 = arith.addf %448, %447 : vector<8x128xf32>
    %450 = arith.divf %448, %449 : vector<8x128xf32>
    %451 = vector.extract_strided_slice %438 {offsets = [0, 256], sizes = [8, 128], strides = [1, 1]} : vector<8x512xf32> to vector<8x128xf32>
    %452 = math.tanh %451 : vector<8x128xf32>
    %453 = vector.extract_strided_slice %438 {offsets = [0, 384], sizes = [8, 128], strides = [1, 1]} : vector<8x512xf32> to vector<8x128xf32>
    %454 = arith.negf %453 : vector<8x128xf32>
    %455 = math.exp %454 : vector<8x128xf32>
    %cst_174 = arith.constant 1.000000e+00 : f32
    %456 = vector.broadcast %cst_174 : f32 to vector<8x128xf32>
    %457 = arith.addf %456, %455 : vector<8x128xf32>
    %458 = arith.divf %456, %457 : vector<8x128xf32>
    %459 = arith.mulf %450, %425 : vector<8x128xf32>
    %460 = arith.mulf %444, %452 : vector<8x128xf32>
    %461 = arith.addf %459, %460 : vector<8x128xf32>
    %462 = math.tanh %461 : vector<8x128xf32>
    %463 = arith.mulf %458, %462 : vector<8x128xf32>
    %464 = arith.index_cast %c3_i32_165 : i32 to index
    %c0_175 = arith.constant 0 : index
    %c0_176 = arith.constant 0 : index
    %465 = vector.load %arg12[%464, %c0_175, %c0_176] : memref<8x8x128xf32, #tpu.memory_space<vmem>>, vector<1x8x128xf32>
    %466 = vector.shape_cast %465 : vector<1x8x128xf32> to vector<8x128xf32>
    %467 = vector.shape_cast %463 : vector<8x128xf32> to vector<1x8x128xf32>
    tpu.vector_store %arg12[%464, %c0_175, %c0_176], %467 {strides = array<i32>} : memref<8x8x128xf32, #tpu.memory_space<vmem>>, vector<1x8x128xf32>,
    %c4_i32_177 = arith.constant 4 : i32
    %468 = arith.index_cast %c4_i32_177 : i32 to index
    %c0_178 = arith.constant 0 : index
    %c0_179 = arith.constant 0 : index
    %469 = vector.load %arg13[%468, %c0_178, %c0_179] : memref<8x8x512xf32, #tpu.memory_space<vmem>>, vector<1x8x512xf32>
    %470 = vector.shape_cast %469 : vector<1x8x512xf32> to vector<8x512xf32>
    %c1_180 = arith.constant 1 : index
    %c0_181 = arith.constant 0 : index
    %c0_182 = arith.constant 0 : index
    %471 = vector.load %arg3[%c1_180, %c0_181, %c0_182] : memref<2x128x512xf32, #tpu.memory_space<vmem>>, vector<1x128x512xf32>
    %472 = vector.shape_cast %471 : vector<1x128x512xf32> to vector<128x512xf32>
    %cst_183 = arith.constant dense<0.000000e+00> : vector<8x512xf32>
    %473 = tpu.matmul %463, %472, %cst_183 {dimension_numbers = #tpu.dot_dimension_numbers<[1], [0], [0], [1], [0, 0, 1, 1], [], []>} : vector<8x128xf32>, vector<128x512xf32>, vector<8x512xf32> -> vector<8x512xf32>
    %474 = arith.addf %470, %473 : vector<8x512xf32>
    %475 = vector.extract_strided_slice %474 {offsets = [0, 0], sizes = [8, 128], strides = [1, 1]} : vector<8x512xf32> to vector<8x128xf32>
    %476 = arith.negf %475 : vector<8x128xf32>
    %477 = math.exp %476 : vector<8x128xf32>
    %cst_184 = arith.constant 1.000000e+00 : f32
    %478 = vector.broadcast %cst_184 : f32 to vector<8x128xf32>
    %479 = arith.addf %478, %477 : vector<8x128xf32>
    %480 = arith.divf %478, %479 : vector<8x128xf32>
    %481 = vector.extract_strided_slice %474 {offsets = [0, 128], sizes = [8, 128], strides = [1, 1]} : vector<8x512xf32> to vector<8x128xf32>
    %482 = arith.negf %481 : vector<8x128xf32>
    %483 = math.exp %482 : vector<8x128xf32>
    %cst_185 = arith.constant 1.000000e+00 : f32
    %484 = vector.broadcast %cst_185 : f32 to vector<8x128xf32>
    %485 = arith.addf %484, %483 : vector<8x128xf32>
    %486 = arith.divf %484, %485 : vector<8x128xf32>
    %487 = vector.extract_strided_slice %474 {offsets = [0, 256], sizes = [8, 128], strides = [1, 1]} : vector<8x512xf32> to vector<8x128xf32>
    %488 = math.tanh %487 : vector<8x128xf32>
    %489 = vector.extract_strided_slice %474 {offsets = [0, 384], sizes = [8, 128], strides = [1, 1]} : vector<8x512xf32> to vector<8x128xf32>
    %490 = arith.negf %489 : vector<8x128xf32>
    %491 = math.exp %490 : vector<8x128xf32>
    %cst_186 = arith.constant 1.000000e+00 : f32
    %492 = vector.broadcast %cst_186 : f32 to vector<8x128xf32>
    %493 = arith.addf %492, %491 : vector<8x128xf32>
    %494 = arith.divf %492, %493 : vector<8x128xf32>
    %495 = arith.mulf %486, %461 : vector<8x128xf32>
    %496 = arith.mulf %480, %488 : vector<8x128xf32>
    %497 = arith.addf %495, %496 : vector<8x128xf32>
    %498 = math.tanh %497 : vector<8x128xf32>
    %499 = arith.mulf %494, %498 : vector<8x128xf32>
    %500 = arith.index_cast %c4_i32_177 : i32 to index
    %c0_187 = arith.constant 0 : index
    %c0_188 = arith.constant 0 : index
    %501 = vector.load %arg12[%500, %c0_187, %c0_188] : memref<8x8x128xf32, #tpu.memory_space<vmem>>, vector<1x8x128xf32>
    %502 = vector.shape_cast %501 : vector<1x8x128xf32> to vector<8x128xf32>
    %503 = vector.shape_cast %499 : vector<8x128xf32> to vector<1x8x128xf32>
    tpu.vector_store %arg12[%500, %c0_187, %c0_188], %503 {strides = array<i32>} : memref<8x8x128xf32, #tpu.memory_space<vmem>>, vector<1x8x128xf32>,
    %c5_i32_189 = arith.constant 5 : i32
    %504 = arith.index_cast %c5_i32_189 : i32 to index
    %c0_190 = arith.constant 0 : index
    %c0_191 = arith.constant 0 : index
    %505 = vector.load %arg13[%504, %c0_190, %c0_191] : memref<8x8x512xf32, #tpu.memory_space<vmem>>, vector<1x8x512xf32>
    %506 = vector.shape_cast %505 : vector<1x8x512xf32> to vector<8x512xf32>
    %c1_192 = arith.constant 1 : index
    %c0_193 = arith.constant 0 : index
    %c0_194 = arith.constant 0 : index
    %507 = vector.load %arg3[%c1_192, %c0_193, %c0_194] : memref<2x128x512xf32, #tpu.memory_space<vmem>>, vector<1x128x512xf32>
    %508 = vector.shape_cast %507 : vector<1x128x512xf32> to vector<128x512xf32>
    %cst_195 = arith.constant dense<0.000000e+00> : vector<8x512xf32>
    %509 = tpu.matmul %499, %508, %cst_195 {dimension_numbers = #tpu.dot_dimension_numbers<[1], [0], [0], [1], [0, 0, 1, 1], [], []>} : vector<8x128xf32>, vector<128x512xf32>, vector<8x512xf32> -> vector<8x512xf32>
    %510 = arith.addf %506, %509 : vector<8x512xf32>
    %511 = vector.extract_strided_slice %510 {offsets = [0, 0], sizes = [8, 128], strides = [1, 1]} : vector<8x512xf32> to vector<8x128xf32>
    %512 = arith.negf %511 : vector<8x128xf32>
    %513 = math.exp %512 : vector<8x128xf32>
    %cst_196 = arith.constant 1.000000e+00 : f32
    %514 = vector.broadcast %cst_196 : f32 to vector<8x128xf32>
    %515 = arith.addf %514, %513 : vector<8x128xf32>
    %516 = arith.divf %514, %515 : vector<8x128xf32>
    %517 = vector.extract_strided_slice %510 {offsets = [0, 128], sizes = [8, 128], strides = [1, 1]} : vector<8x512xf32> to vector<8x128xf32>
    %518 = arith.negf %517 : vector<8x128xf32>
    %519 = math.exp %518 : vector<8x128xf32>
    %cst_197 = arith.constant 1.000000e+00 : f32
    %520 = vector.broadcast %cst_197 : f32 to vector<8x128xf32>
    %521 = arith.addf %520, %519 : vector<8x128xf32>
    %522 = arith.divf %520, %521 : vector<8x128xf32>
    %523 = vector.extract_strided_slice %510 {offsets = [0, 256], sizes = [8, 128], strides = [1, 1]} : vector<8x512xf32> to vector<8x128xf32>
    %524 = math.tanh %523 : vector<8x128xf32>
    %525 = vector.extract_strided_slice %510 {offsets = [0, 384], sizes = [8, 128], strides = [1, 1]} : vector<8x512xf32> to vector<8x128xf32>
    %526 = arith.negf %525 : vector<8x128xf32>
    %527 = math.exp %526 : vector<8x128xf32>
    %cst_198 = arith.constant 1.000000e+00 : f32
    %528 = vector.broadcast %cst_198 : f32 to vector<8x128xf32>
    %529 = arith.addf %528, %527 : vector<8x128xf32>
    %530 = arith.divf %528, %529 : vector<8x128xf32>
    %531 = arith.mulf %522, %497 : vector<8x128xf32>
    %532 = arith.mulf %516, %524 : vector<8x128xf32>
    %533 = arith.addf %531, %532 : vector<8x128xf32>
    %534 = math.tanh %533 : vector<8x128xf32>
    %535 = arith.mulf %530, %534 : vector<8x128xf32>
    %536 = arith.index_cast %c5_i32_189 : i32 to index
    %c0_199 = arith.constant 0 : index
    %c0_200 = arith.constant 0 : index
    %537 = vector.load %arg12[%536, %c0_199, %c0_200] : memref<8x8x128xf32, #tpu.memory_space<vmem>>, vector<1x8x128xf32>
    %538 = vector.shape_cast %537 : vector<1x8x128xf32> to vector<8x128xf32>
    %539 = vector.shape_cast %535 : vector<8x128xf32> to vector<1x8x128xf32>
    tpu.vector_store %arg12[%536, %c0_199, %c0_200], %539 {strides = array<i32>} : memref<8x8x128xf32, #tpu.memory_space<vmem>>, vector<1x8x128xf32>,
    %c6_i32_201 = arith.constant 6 : i32
    %540 = arith.index_cast %c6_i32_201 : i32 to index
    %c0_202 = arith.constant 0 : index
    %c0_203 = arith.constant 0 : index
    %541 = vector.load %arg13[%540, %c0_202, %c0_203] : memref<8x8x512xf32, #tpu.memory_space<vmem>>, vector<1x8x512xf32>
    %542 = vector.shape_cast %541 : vector<1x8x512xf32> to vector<8x512xf32>
    %c1_204 = arith.constant 1 : index
    %c0_205 = arith.constant 0 : index
    %c0_206 = arith.constant 0 : index
    %543 = vector.load %arg3[%c1_204, %c0_205, %c0_206] : memref<2x128x512xf32, #tpu.memory_space<vmem>>, vector<1x128x512xf32>
    %544 = vector.shape_cast %543 : vector<1x128x512xf32> to vector<128x512xf32>
    %cst_207 = arith.constant dense<0.000000e+00> : vector<8x512xf32>
    %545 = tpu.matmul %535, %544, %cst_207 {dimension_numbers = #tpu.dot_dimension_numbers<[1], [0], [0], [1], [0, 0, 1, 1], [], []>} : vector<8x128xf32>, vector<128x512xf32>, vector<8x512xf32> -> vector<8x512xf32>
    %546 = arith.addf %542, %545 : vector<8x512xf32>
    %547 = vector.extract_strided_slice %546 {offsets = [0, 0], sizes = [8, 128], strides = [1, 1]} : vector<8x512xf32> to vector<8x128xf32>
    %548 = arith.negf %547 : vector<8x128xf32>
    %549 = math.exp %548 : vector<8x128xf32>
    %cst_208 = arith.constant 1.000000e+00 : f32
    %550 = vector.broadcast %cst_208 : f32 to vector<8x128xf32>
    %551 = arith.addf %550, %549 : vector<8x128xf32>
    %552 = arith.divf %550, %551 : vector<8x128xf32>
    %553 = vector.extract_strided_slice %546 {offsets = [0, 128], sizes = [8, 128], strides = [1, 1]} : vector<8x512xf32> to vector<8x128xf32>
    %554 = arith.negf %553 : vector<8x128xf32>
    %555 = math.exp %554 : vector<8x128xf32>
    %cst_209 = arith.constant 1.000000e+00 : f32
    %556 = vector.broadcast %cst_209 : f32 to vector<8x128xf32>
    %557 = arith.addf %556, %555 : vector<8x128xf32>
    %558 = arith.divf %556, %557 : vector<8x128xf32>
    %559 = vector.extract_strided_slice %546 {offsets = [0, 256], sizes = [8, 128], strides = [1, 1]} : vector<8x512xf32> to vector<8x128xf32>
    %560 = math.tanh %559 : vector<8x128xf32>
    %561 = vector.extract_strided_slice %546 {offsets = [0, 384], sizes = [8, 128], strides = [1, 1]} : vector<8x512xf32> to vector<8x128xf32>
    %562 = arith.negf %561 : vector<8x128xf32>
    %563 = math.exp %562 : vector<8x128xf32>
    %cst_210 = arith.constant 1.000000e+00 : f32
    %564 = vector.broadcast %cst_210 : f32 to vector<8x128xf32>
    %565 = arith.addf %564, %563 : vector<8x128xf32>
    %566 = arith.divf %564, %565 : vector<8x128xf32>
    %567 = arith.mulf %558, %533 : vector<8x128xf32>
    %568 = arith.mulf %552, %560 : vector<8x128xf32>
    %569 = arith.addf %567, %568 : vector<8x128xf32>
    %570 = math.tanh %569 : vector<8x128xf32>
    %571 = arith.mulf %566, %570 : vector<8x128xf32>
    %572 = arith.index_cast %c6_i32_201 : i32 to index
    %c0_211 = arith.constant 0 : index
    %c0_212 = arith.constant 0 : index
    %573 = vector.load %arg12[%572, %c0_211, %c0_212] : memref<8x8x128xf32, #tpu.memory_space<vmem>>, vector<1x8x128xf32>
    %574 = vector.shape_cast %573 : vector<1x8x128xf32> to vector<8x128xf32>
    %575 = vector.shape_cast %571 : vector<8x128xf32> to vector<1x8x128xf32>
    tpu.vector_store %arg12[%572, %c0_211, %c0_212], %575 {strides = array<i32>} : memref<8x8x128xf32, #tpu.memory_space<vmem>>, vector<1x8x128xf32>,
    %c7_i32_213 = arith.constant 7 : i32
    %576 = arith.index_cast %c7_i32_213 : i32 to index
    %c0_214 = arith.constant 0 : index
    %c0_215 = arith.constant 0 : index
    %577 = vector.load %arg13[%576, %c0_214, %c0_215] : memref<8x8x512xf32, #tpu.memory_space<vmem>>, vector<1x8x512xf32>
    %578 = vector.shape_cast %577 : vector<1x8x512xf32> to vector<8x512xf32>
    %c1_216 = arith.constant 1 : index
    %c0_217 = arith.constant 0 : index
    %c0_218 = arith.constant 0 : index
    %579 = vector.load %arg3[%c1_216, %c0_217, %c0_218] : memref<2x128x512xf32, #tpu.memory_space<vmem>>, vector<1x128x512xf32>
    %580 = vector.shape_cast %579 : vector<1x128x512xf32> to vector<128x512xf32>
    %cst_219 = arith.constant dense<0.000000e+00> : vector<8x512xf32>
    %581 = tpu.matmul %571, %580, %cst_219 {dimension_numbers = #tpu.dot_dimension_numbers<[1], [0], [0], [1], [0, 0, 1, 1], [], []>} : vector<8x128xf32>, vector<128x512xf32>, vector<8x512xf32> -> vector<8x512xf32>
    %582 = arith.addf %578, %581 : vector<8x512xf32>
    %583 = vector.extract_strided_slice %582 {offsets = [0, 0], sizes = [8, 128], strides = [1, 1]} : vector<8x512xf32> to vector<8x128xf32>
    %584 = arith.negf %583 : vector<8x128xf32>
    %585 = math.exp %584 : vector<8x128xf32>
    %cst_220 = arith.constant 1.000000e+00 : f32
    %586 = vector.broadcast %cst_220 : f32 to vector<8x128xf32>
    %587 = arith.addf %586, %585 : vector<8x128xf32>
    %588 = arith.divf %586, %587 : vector<8x128xf32>
    %589 = vector.extract_strided_slice %582 {offsets = [0, 128], sizes = [8, 128], strides = [1, 1]} : vector<8x512xf32> to vector<8x128xf32>
    %590 = arith.negf %589 : vector<8x128xf32>
    %591 = math.exp %590 : vector<8x128xf32>
    %cst_221 = arith.constant 1.000000e+00 : f32
    %592 = vector.broadcast %cst_221 : f32 to vector<8x128xf32>
    %593 = arith.addf %592, %591 : vector<8x128xf32>
    %594 = arith.divf %592, %593 : vector<8x128xf32>
    %595 = vector.extract_strided_slice %582 {offsets = [0, 256], sizes = [8, 128], strides = [1, 1]} : vector<8x512xf32> to vector<8x128xf32>
    %596 = math.tanh %595 : vector<8x128xf32>
    %597 = vector.extract_strided_slice %582 {offsets = [0, 384], sizes = [8, 128], strides = [1, 1]} : vector<8x512xf32> to vector<8x128xf32>
    %598 = arith.negf %597 : vector<8x128xf32>
    %599 = math.exp %598 : vector<8x128xf32>
    %cst_222 = arith.constant 1.000000e+00 : f32
    %600 = vector.broadcast %cst_222 : f32 to vector<8x128xf32>
    %601 = arith.addf %600, %599 : vector<8x128xf32>
    %602 = arith.divf %600, %601 : vector<8x128xf32>
    %603 = arith.mulf %594, %569 : vector<8x128xf32>
    %604 = arith.mulf %588, %596 : vector<8x128xf32>
    %605 = arith.addf %603, %604 : vector<8x128xf32>
    %606 = math.tanh %605 : vector<8x128xf32>
    %607 = arith.mulf %602, %606 : vector<8x128xf32>
    %608 = arith.index_cast %c7_i32_213 : i32 to index
    %c0_223 = arith.constant 0 : index
    %c0_224 = arith.constant 0 : index
    %609 = vector.load %arg12[%608, %c0_223, %c0_224] : memref<8x8x128xf32, #tpu.memory_space<vmem>>, vector<1x8x128xf32>
    %610 = vector.shape_cast %609 : vector<1x8x128xf32> to vector<8x128xf32>
    %611 = vector.shape_cast %607 : vector<8x128xf32> to vector<1x8x128xf32>
    tpu.vector_store %arg12[%608, %c0_223, %c0_224], %611 {strides = array<i32>} : memref<8x8x128xf32, #tpu.memory_space<vmem>>, vector<1x8x128xf32>,
    %c8_i32_225 = arith.constant 8 : i32
    %c1_226 = arith.constant 1 : index
    %c0_227 = arith.constant 0 : index
    %c0_228 = arith.constant 0 : index
    %612 = vector.load %arg10[%c1_226, %c0_227, %c0_228] : memref<2x8x128xf32, #tpu.memory_space<vmem>>, vector<1x8x128xf32>
    %613 = vector.shape_cast %612 : vector<1x8x128xf32> to vector<8x128xf32>
    %614 = vector.shape_cast %607 : vector<8x128xf32> to vector<1x8x128xf32>
    tpu.vector_store %arg10[%c1_226, %c0_227, %c0_228], %614 {strides = array<i32>} : memref<2x8x128xf32, #tpu.memory_space<vmem>>, vector<1x8x128xf32>,
    %c1_229 = arith.constant 1 : index
    %c0_230 = arith.constant 0 : index
    %c0_231 = arith.constant 0 : index
    %615 = vector.load %arg11[%c1_229, %c0_230, %c0_231] : memref<2x8x128xf32, #tpu.memory_space<vmem>>, vector<1x8x128xf32>
    %616 = vector.shape_cast %615 : vector<1x8x128xf32> to vector<8x128xf32>
    %617 = vector.shape_cast %605 : vector<8x128xf32> to vector<1x8x128xf32>
    tpu.vector_store %arg11[%c1_229, %c0_230, %c0_231], %617 {strides = array<i32>} : memref<2x8x128xf32, #tpu.memory_space<vmem>>, vector<1x8x128xf32>,
    %c0_232 = arith.constant 0 : index
    %c0_233 = arith.constant 0 : index
    %c0_234 = arith.constant 0 : index
    %618 = vector.load %arg12[%c0_232, %c0_233, %c0_234] : memref<8x8x128xf32, #tpu.memory_space<vmem>>, vector<8x8x128xf32>
    %619 = vector.shape_cast %618 : vector<8x8x128xf32> to vector<64x128xf32>
    %c0_235 = arith.constant 0 : index
    %c0_236 = arith.constant 0 : index
    %620 = vector.load %arg7[%c0_235, %c0_236] : memref<128x128xf32, #tpu.memory_space<vmem>>, vector<128x128xf32>
    %cst_237 = arith.constant dense<0.000000e+00> : vector<64x128xf32>
    %621 = tpu.matmul %619, %620, %cst_237 {dimension_numbers = #tpu.dot_dimension_numbers<[1], [0], [0], [1], [0, 0, 1, 1], [], []>} : vector<64x128xf32>, vector<128x128xf32>, vector<64x128xf32> -> vector<64x128xf32>
    %c0_238 = arith.constant 0 : index
    %c0_239 = arith.constant 0 : index
    %622 = vector.load %arg8[%c0_238, %c0_239] : memref<1x128xf32, #tpu.memory_space<vmem>>, vector<1x128xf32>
    %623 = vector.broadcast %622 : vector<1x128xf32> to vector<64x128xf32>
    %624 = arith.addf %621, %623 : vector<64x128xf32>
    %625 = vector.shape_cast %624 : vector<64x128xf32> to vector<8x8x128xf32>
    %626 = vector.extract_strided_slice %625 {offsets = [0, 0, 0], sizes = [1, 8, 128], strides = [1, 1, 1]} : vector<8x8x128xf32> to vector<1x8x128xf32>
    %627 = vector.shape_cast %626 : vector<1x8x128xf32> to vector<8x128xf32>
    %c0_240 = arith.constant 0 : index
    %c0_241 = arith.constant 0 : index
    %c0_242 = arith.constant 0 : index
    %628 = vector.load %arg9[%c0_240, %c0_241, %c0_242] : memref<8x8x128xf32, #tpu.memory_space<vmem>>, vector<8x1x128xf32>
    %629 = vector.shape_cast %628 : vector<8x1x128xf32> to vector<8x128xf32>
    %630 = vector.shape_cast %627 : vector<8x128xf32> to vector<8x1x128xf32>
    tpu.vector_store %arg9[%c0_240, %c0_241, %c0_242], %630 {strides = array<i32>} : memref<8x8x128xf32, #tpu.memory_space<vmem>>, vector<8x1x128xf32>,
    %631 = vector.extract_strided_slice %625 {offsets = [1, 0, 0], sizes = [1, 8, 128], strides = [1, 1, 1]} : vector<8x8x128xf32> to vector<1x8x128xf32>
    %632 = vector.shape_cast %631 : vector<1x8x128xf32> to vector<8x128xf32>
    %c0_243 = arith.constant 0 : index
    %c1_244 = arith.constant 1 : index
    %c0_245 = arith.constant 0 : index
    %633 = vector.load %arg9[%c0_243, %c1_244, %c0_245] : memref<8x8x128xf32, #tpu.memory_space<vmem>>, vector<8x1x128xf32>
    %634 = vector.shape_cast %633 : vector<8x1x128xf32> to vector<8x128xf32>
    %635 = vector.shape_cast %632 : vector<8x128xf32> to vector<8x1x128xf32>
    tpu.vector_store %arg9[%c0_243, %c1_244, %c0_245], %635 {strides = array<i32>} : memref<8x8x128xf32, #tpu.memory_space<vmem>>, vector<8x1x128xf32>,
    %636 = vector.extract_strided_slice %625 {offsets = [2, 0, 0], sizes = [1, 8, 128], strides = [1, 1, 1]} : vector<8x8x128xf32> to vector<1x8x128xf32>
    %637 = vector.shape_cast %636 : vector<1x8x128xf32> to vector<8x128xf32>
    %c0_246 = arith.constant 0 : index
    %c2 = arith.constant 2 : index
    %c0_247 = arith.constant 0 : index
    %638 = vector.load %arg9[%c0_246, %c2, %c0_247] : memref<8x8x128xf32, #tpu.memory_space<vmem>>, vector<8x1x128xf32>
    %639 = vector.shape_cast %638 : vector<8x1x128xf32> to vector<8x128xf32>
    %640 = vector.shape_cast %637 : vector<8x128xf32> to vector<8x1x128xf32>
    tpu.vector_store %arg9[%c0_246, %c2, %c0_247], %640 {strides = array<i32>} : memref<8x8x128xf32, #tpu.memory_space<vmem>>, vector<8x1x128xf32>,
    %641 = vector.extract_strided_slice %625 {offsets = [3, 0, 0], sizes = [1, 8, 128], strides = [1, 1, 1]} : vector<8x8x128xf32> to vector<1x8x128xf32>
    %642 = vector.shape_cast %641 : vector<1x8x128xf32> to vector<8x128xf32>
    %c0_248 = arith.constant 0 : index
    %c3 = arith.constant 3 : index
    %c0_249 = arith.constant 0 : index
    %643 = vector.load %arg9[%c0_248, %c3, %c0_249] : memref<8x8x128xf32, #tpu.memory_space<vmem>>, vector<8x1x128xf32>
    %644 = vector.shape_cast %643 : vector<8x1x128xf32> to vector<8x128xf32>
    %645 = vector.shape_cast %642 : vector<8x128xf32> to vector<8x1x128xf32>
    tpu.vector_store %arg9[%c0_248, %c3, %c0_249], %645 {strides = array<i32>} : memref<8x8x128xf32, #tpu.memory_space<vmem>>, vector<8x1x128xf32>,
    %646 = vector.extract_strided_slice %625 {offsets = [4, 0, 0], sizes = [1, 8, 128], strides = [1, 1, 1]} : vector<8x8x128xf32> to vector<1x8x128xf32>
    %647 = vector.shape_cast %646 : vector<1x8x128xf32> to vector<8x128xf32>
    %c0_250 = arith.constant 0 : index
    %c4 = arith.constant 4 : index
    %c0_251 = arith.constant 0 : index
    %648 = vector.load %arg9[%c0_250, %c4, %c0_251] : memref<8x8x128xf32, #tpu.memory_space<vmem>>, vector<8x1x128xf32>
    %649 = vector.shape_cast %648 : vector<8x1x128xf32> to vector<8x128xf32>
    %650 = vector.shape_cast %647 : vector<8x128xf32> to vector<8x1x128xf32>
    tpu.vector_store %arg9[%c0_250, %c4, %c0_251], %650 {strides = array<i32>} : memref<8x8x128xf32, #tpu.memory_space<vmem>>, vector<8x1x128xf32>,
    %651 = vector.extract_strided_slice %625 {offsets = [5, 0, 0], sizes = [1, 8, 128], strides = [1, 1, 1]} : vector<8x8x128xf32> to vector<1x8x128xf32>
    %652 = vector.shape_cast %651 : vector<1x8x128xf32> to vector<8x128xf32>
    %c0_252 = arith.constant 0 : index
    %c5 = arith.constant 5 : index
    %c0_253 = arith.constant 0 : index
    %653 = vector.load %arg9[%c0_252, %c5, %c0_253] : memref<8x8x128xf32, #tpu.memory_space<vmem>>, vector<8x1x128xf32>
    %654 = vector.shape_cast %653 : vector<8x1x128xf32> to vector<8x128xf32>
    %655 = vector.shape_cast %652 : vector<8x128xf32> to vector<8x1x128xf32>
    tpu.vector_store %arg9[%c0_252, %c5, %c0_253], %655 {strides = array<i32>} : memref<8x8x128xf32, #tpu.memory_space<vmem>>, vector<8x1x128xf32>,
    %656 = vector.extract_strided_slice %625 {offsets = [6, 0, 0], sizes = [1, 8, 128], strides = [1, 1, 1]} : vector<8x8x128xf32> to vector<1x8x128xf32>
    %657 = vector.shape_cast %656 : vector<1x8x128xf32> to vector<8x128xf32>
    %c0_254 = arith.constant 0 : index
    %c6 = arith.constant 6 : index
    %c0_255 = arith.constant 0 : index
    %658 = vector.load %arg9[%c0_254, %c6, %c0_255] : memref<8x8x128xf32, #tpu.memory_space<vmem>>, vector<8x1x128xf32>
    %659 = vector.shape_cast %658 : vector<8x1x128xf32> to vector<8x128xf32>
    %660 = vector.shape_cast %657 : vector<8x128xf32> to vector<8x1x128xf32>
    tpu.vector_store %arg9[%c0_254, %c6, %c0_255], %660 {strides = array<i32>} : memref<8x8x128xf32, #tpu.memory_space<vmem>>, vector<8x1x128xf32>,
    %661 = vector.extract_strided_slice %625 {offsets = [7, 0, 0], sizes = [1, 8, 128], strides = [1, 1, 1]} : vector<8x8x128xf32> to vector<1x8x128xf32>
    %662 = vector.shape_cast %661 : vector<1x8x128xf32> to vector<8x128xf32>
    %c0_256 = arith.constant 0 : index
    %c7 = arith.constant 7 : index
    %c0_257 = arith.constant 0 : index
    %663 = vector.load %arg9[%c0_256, %c7, %c0_257] : memref<8x8x128xf32, #tpu.memory_space<vmem>>, vector<8x1x128xf32>
    %664 = vector.shape_cast %663 : vector<8x1x128xf32> to vector<8x128xf32>
    %665 = vector.shape_cast %662 : vector<8x128xf32> to vector<8x1x128xf32>
    tpu.vector_store %arg9[%c0_256, %c7, %c0_257], %665 {strides = array<i32>} : memref<8x8x128xf32, #tpu.memory_space<vmem>>, vector<8x1x128xf32>,
    return
  }
  func.func @transform_0(%arg0: i32) -> (i32, i32, i32) {
    %c0_i32 = arith.constant 0 : i32
    %c0_i32_0 = arith.constant 0 : i32
    %c0_i32_1 = arith.constant 0 : i32
    return %c0_i32, %arg0, %c0_i32_0 : i32, i32, i32
  }
  func.func @transform_1(%arg0: i32) -> (i32, i32, i32) {
    %c0_i32 = arith.constant 0 : i32
    %c0_i32_0 = arith.constant 0 : i32
    %c0_i32_1 = arith.constant 0 : i32
    %c0_i32_2 = arith.constant 0 : i32
    return %c0_i32, %c0_i32_0, %c0_i32_1 : i32, i32, i32
  }
  func.func @transform_2(%arg0: i32) -> (i32, i32, i32) {
    %c0_i32 = arith.constant 0 : i32
    %c0_i32_0 = arith.constant 0 : i32
    %c0_i32_1 = arith.constant 0 : i32
    %c0_i32_2 = arith.constant 0 : i32
    return %c0_i32, %c0_i32_0, %c0_i32_1 : i32, i32, i32
  }
  func.func @transform_3(%arg0: i32) -> (i32, i32, i32) {
    %c0_i32 = arith.constant 0 : i32
    %c0_i32_0 = arith.constant 0 : i32
    %c0_i32_1 = arith.constant 0 : i32
    %c0_i32_2 = arith.constant 0 : i32
    return %c0_i32, %c0_i32_0, %c0_i32_1 : i32, i32, i32
  }
  func.func @transform_4(%arg0: i32) -> (i32, i32, i32) {
    %c0_i32 = arith.constant 0 : i32
    %c0_i32_0 = arith.constant 0 : i32
    %c0_i32_1 = arith.constant 0 : i32
    return %c0_i32, %arg0, %c0_i32_0 : i32, i32, i32
  }
  func.func @transform_5(%arg0: i32) -> (i32, i32, i32) {
    %c0_i32 = arith.constant 0 : i32
    %c0_i32_0 = arith.constant 0 : i32
    %c0_i32_1 = arith.constant 0 : i32
    return %c0_i32, %arg0, %c0_i32_0 : i32, i32, i32
  }
  func.func @transform_6(%arg0: i32) -> (i32, i32) {
    %c0_i32 = arith.constant 0 : i32
    %c0_i32_0 = arith.constant 0 : i32
    %c0_i32_1 = arith.constant 0 : i32
    return %c0_i32, %c0_i32_0 : i32, i32
  }
  func.func @transform_7(%arg0: i32) -> (i32, i32) {
    %c0_i32 = arith.constant 0 : i32
    %c0_i32_0 = arith.constant 0 : i32
    %c0_i32_1 = arith.constant 0 : i32
    return %c0_i32, %c0_i32_0 : i32, i32
  }
  func.func @transform_8(%arg0: i32) -> (i32, i32, i32) {
    %c0_i32 = arith.constant 0 : i32
    %c0_i32_0 = arith.constant 0 : i32
    %c0_i32_1 = arith.constant 0 : i32
    return %arg0, %c0_i32, %c0_i32_0 : i32, i32, i32
  }
  func.func @transform_9(%arg0: i32) -> (i32, i32, i32) {
    %c0_i32 = arith.constant 0 : i32
    %c0_i32_0 = arith.constant 0 : i32
    %c0_i32_1 = arith.constant 0 : i32
    return %c0_i32, %arg0, %c0_i32_0 : i32, i32, i32
  }
  func.func @transform_10(%arg0: i32) -> (i32, i32, i32) {
    %c0_i32 = arith.constant 0 : i32
    %c0_i32_0 = arith.constant 0 : i32
    %c0_i32_1 = arith.constant 0 : i32
    return %c0_i32, %arg0, %c0_i32_0 : i32, i32, i32
  }
}

</mosaic_0001>

<llo_original>
// kernel: tpu_custom_call.1
$region0: #{tpu_custom_call.1}
  #allocation0 [shape = 'u32[]', space=smem, size = 0x4, offset = 0x4, fixed_abs, tag = 'smem constant byte address 0x4 - core index']
  #allocation1 [shape = 'u32[144,128]{1,0:T(1,128)}', space=vmem, size = 0x12000, scoped, tag = 'internal scratch']
  #allocation2 [shape = 'f32[8,8,128]{2,1,0:T(8,128)}', space=vmem, size = 0x8000, scoped, tag = 'scratch operand']
  #allocation3 [shape = 'f32[8,8,512]{2,1,0:T(8,128)}', space=vmem, size = 0x20000, scoped, tag = 'scratch operand']
  %s0 = inlined_call_operand.hbm [shape: f32[8,8,128], index: 0, kind: input, shape index: {}]
  %s1 = inlined_call_operand.hbm [shape: f32[2,128,512], index: 1, kind: input, shape index: {}]
  %s2 = inlined_call_operand.hbm [shape: f32[2,128,512], index: 2, kind: input, shape index: {}]
  %s3 = inlined_call_operand.hbm [shape: f32[2,1,512], index: 3, kind: input, shape index: {}]
  %s4 = inlined_call_operand.hbm [shape: f32[2,8,128], index: 4, kind: input, shape index: {}]
  %s5 = inlined_call_operand.vmem [shape: f32[2,8,128], index: 5, kind: input, shape index: {}]
  %s6 = inlined_call_operand.hbm [shape: f32[128,128], index: 6, kind: input, shape index: {}]
  %s7 = inlined_call_operand.vmem [shape: f32[1,128], index: 7, kind: input, shape index: {}]
  %s8 = inlined_call_operand.hbm [shape: f32[8,8,128], index: 8, kind: output, shape index: {0}]
  %s9 = inlined_call_operand.hbm [shape: f32[2,8,128], index: 9, kind: output, shape index: {1}]
  %s10 = inlined_call_operand.hbm [shape: f32[2,8,128], index: 10, kind: output, shape index: {2}]
  %11 = xla_tuple %s8, %s9, %s10
  %s12 = sld [smem:[#allocation0]]
  $region82: #{tpu_custom_call.1} parent=0
    _
  %s14 = ssub.s32 1, %s12
  %s15 = scalar_select 0, %s14, %s12
  $region1: #{tpu_custom_call.1} parent=0
    #allocation4 [shape = 'u8[32768]{0}', space=vmem, size = 0x8000, scoped, tag = 'input window, operand 0, single buffered']
    #allocation5 [shape = 's32[1]{0}', space=sflag, size = 0x4, scoped, tag = 'scoped memory for tpu_custom_call.1']
    #allocation6 [shape = 's32[1]{0}', space=sflag, size = 0x4, scoped, tag = 'scoped memory for tpu_custom_call.1']
    #allocation7 [shape = 'u8[524288]{0}', space=vmem, size = 0x80000, scoped, tag = 'input window, operand 1, single buffered']
    #allocation8 [shape = 's32[1]{0}', space=sflag, size = 0x4, scoped, tag = 'scoped memory for tpu_custom_call.1']
    #allocation9 [shape = 'u8[524288]{0}', space=vmem, size = 0x80000, scoped, tag = 'input window, operand 2, single buffered']
    #allocation10 [shape = 'u8[4096]{0}', space=vmem, size = 0x1000, scoped, tag = 'input window, operand 3, single buffered']
    #allocation11 [shape = 's32[1]{0}', space=sflag, size = 0x4, scoped, tag = 'scoped memory for tpu_custom_call.1']
    #allocation12 [shape = 'u8[8192]{0}', space=vmem, size = 0x2000, scoped, tag = 'input window, operand 4, single buffered']
    #allocation13 [shape = 'u8[65536]{0}', space=vmem, size = 0x10000, scoped, tag = 'input window, operand 6, single buffered']
    #allocation14 [shape = 's32[1]{0}', space=sflag, size = 0x4, scoped, tag = 'scoped memory for tpu_custom_call.1']
    #allocation15 [shape = 'u8[32768]{0}', space=vmem, size = 0x8000, scoped, tag = 'output window, operand 0, single buffered']
    #allocation16 [shape = 'u8[8192]{0}', space=vmem, size = 0x2000, scoped, tag = 'output window, operand 1, single buffered']
    #allocation17 [shape = 's32[1]{0}', space=sflag, size = 0x4, scoped, tag = 'scoped memory for tpu_custom_call.1']
    #allocation18 [shape = 'u8[8192]{0}', space=vmem, size = 0x2000, scoped, tag = 'output window, operand 2, single buffered']
    %16 = vsyncpa [#allocation5], 0
    %17 = vsyncpa [#allocation8], 0
    %18 = vsyncpa [#allocation11], 0
    %19 = vsyncpa [#allocation14], 0
    %20 = vsyncpa [#allocation6], 0
    %21 = vsyncpa [#allocation17], 0
    // Predicated region
    $region2: #{tpu_custom_call.1} parent=1 // pred_check
      _
    $region3: #{tpu_custom_call.1} parent=1 // pred_check_branch
      %23 = sbr.rel (0) target = $region5
    $region4: #{tpu_custom_call.1} parent=1 // pred_region
      %s25 = ssub.s32 1024, 1024
      %26 = vsyncadd [#allocation5], %s25
      %s27 = sshll.u32 [#allocation4], 4
      %s28 = int_to_ptr.vmem [resolvable:$true] %s27
      %33 = dma.hbm_to_vmem [thread:$0]  %s0, 1024, %s28, [#allocation5], 128, 128, 8
    $region5: #{tpu_custom_call.1} parent=1 // pred_fallthru
      _
    // Predicated region
    $region6: #{tpu_custom_call.1} parent=1 // pred_check
      _
    $region7: #{tpu_custom_call.1} parent=1 // pred_check_branch
      %35 = sbr.rel (0) target = $region9
    $region8: #{tpu_custom_call.1} parent=1 // pred_region
      %s37 = ssub.s32 16384, 16384
      %38 = vsyncadd [#allocation8], %s37
      %s39 = sshll.u32 [#allocation7], 4
      %s40 = int_to_ptr.vmem [resolvable:$true] %s39
      %45 = dma.hbm_to_vmem [thread:$0]  %s1, 16384, %s40, [#allocation8], 512, 512, 32
    $region9: #{tpu_custom_call.1} parent=1 // pred_fallthru
      _
    // Predicated region
    $region10: #{tpu_custom_call.1} parent=1 // pred_check
      _
    $region11: #{tpu_custom_call.1} parent=1 // pred_check_branch
      %47 = sbr.rel (0) target = $region13
    $region12: #{tpu_custom_call.1} parent=1 // pred_region
      %s49 = ssub.s32 16384, 16384
      %50 = vsyncadd [#allocation8], %s49
      %s51 = sshll.u32 [#allocation9], 4
      %s52 = int_to_ptr.vmem [resolvable:$true] %s51
      %57 = dma.hbm_to_vmem [thread:$0]  %s2, 16384, %s52, [#allocation8], 512, 512, 32
    $region13: #{tpu_custom_call.1} parent=1 // pred_fallthru
      _
    // Predicated region
    $region14: #{tpu_custom_call.1} parent=1 // pred_check
      _
    $region15: #{tpu_custom_call.1} parent=1 // pred_check_branch
      %59 = sbr.rel (0) target = $region17
    $region16: #{tpu_custom_call.1} parent=1 // pred_region
      %s61 = ssub.s32 128, 128
      %62 = vsyncadd [#allocation11], %s61
      %s63 = sshll.u32 [#allocation10], 4
      %s64 = int_to_ptr.vmem [resolvable:$true] %s63
      %69 = dma.hbm_to_vmem [thread:$0]  %s3, 128, %s64, [#allocation11], 64, 64, 4
    $region17: #{tpu_custom_call.1} parent=1 // pred_fallthru
      _
    // Predicated region
    $region18: #{tpu_custom_call.1} parent=1 // pred_check
      _
    $region19: #{tpu_custom_call.1} parent=1 // pred_check_branch
      %71 = sbr.rel (0) target = $region21
    $region20: #{tpu_custom_call.1} parent=1 // pred_region
      %s73 = ssub.s32 256, 256
      %74 = vsyncadd [#allocation11], %s73
      %s75 = sshll.u32 [#allocation12], 4
      %s76 = int_to_ptr.vmem [resolvable:$true] %s75
      %81 = dma.hbm_to_vmem [thread:$0]  %s4, 256, %s76, [#allocation11], 128, 128, 8
    $region21: #{tpu_custom_call.1} parent=1 // pred_fallthru
      _
    // Predicated region
    $region22: #{tpu_custom_call.1} parent=1 // pred_check
      _
    $region23: #{tpu_custom_call.1} parent=1 // pred_check_branch
      %83 = sbr.rel (0) target = $region25
    $region24: #{tpu_custom_call.1} parent=1 // pred_region
      _
    $region25: #{tpu_custom_call.1} parent=1 // pred_fallthru
      _
    // Predicated region
    $region26: #{tpu_custom_call.1} parent=1 // pred_check
      _
    $region27: #{tpu_custom_call.1} parent=1 // pred_check_branch
      %85 = sbr.rel (0) target = $region29
    $region28: #{tpu_custom_call.1} parent=1 // pred_region
      %s87 = ssub.s32 2048, 2048
      %88 = vsyncadd [#allocation14], %s87
      %s89 = sshll.u32 [#allocation13], 4
      %s90 = int_to_ptr.vmem [resolvable:$true] %s89
      %95 = dma.hbm_to_vmem [thread:$0]  %s6, 2048, %s90, [#allocation14], 128, 128, 8
    $region29: #{tpu_custom_call.1} parent=1 // pred_fallthru
      _
    // Predicated region
    $region30: #{tpu_custom_call.1} parent=1 // pred_check
      _
    $region31: #{tpu_custom_call.1} parent=1 // pred_check_branch
      %97 = sbr.rel (0) target = $region33
    $region32: #{tpu_custom_call.1} parent=1 // pred_region
      _
    $region33: #{tpu_custom_call.1} parent=1 // pred_fallthru
      _
    // Predicated region
    $region34: #{tpu_custom_call.1} parent=1 // pred_check
      _
    $region35: #{tpu_custom_call.1} parent=1 // pred_check_branch
      %99 = sbr.rel (0) target = $region37
    $region36: #{tpu_custom_call.1} parent=1 // pred_region
      %100 = dma.done [#allocation5], 1024
    $region37: #{tpu_custom_call.1} parent=1 // pred_fallthru
      _
    // Predicated region
    $region38: #{tpu_custom_call.1} parent=1 // pred_check
      _
    $region39: #{tpu_custom_call.1} parent=1 // pred_check_branch
      %102 = sbr.rel (0) target = $region41
    $region40: #{tpu_custom_call.1} parent=1 // pred_region
      %103 = dma.done [#allocation8], 16384
    $region41: #{tpu_custom_call.1} parent=1 // pred_fallthru
      _
    // Predicated region
    $region42: #{tpu_custom_call.1} parent=1 // pred_check
      _
    $region43: #{tpu_custom_call.1} parent=1 // pred_check_branch
      %105 = sbr.rel (0) target = $region45
    $region44: #{tpu_custom_call.1} parent=1 // pred_region
      %106 = dma.done [#allocation8], 16384
    $region45: #{tpu_custom_call.1} parent=1 // pred_fallthru
      _
    // Predicated region
    $region46: #{tpu_custom_call.1} parent=1 // pred_check
      _
    $region47: #{tpu_custom_call.1} parent=1 // pred_check_branch
      %108 = sbr.rel (0) target = $region49
    $region48: #{tpu_custom_call.1} parent=1 // pred_region
      %109 = dma.done [#allocation11], 128
    $region49: #{tpu_custom_call.1} parent=1 // pred_fallthru
      _
    // Predicated region
    $region50: #{tpu_custom_call.1} parent=1 // pred_check
      _
    $region51: #{tpu_custom_call.1} parent=1 // pred_check_branch
      %111 = sbr.rel (0) target = $region53
    $region52: #{tpu_custom_call.1} parent=1 // pred_region
      %112 = dma.done [#allocation11], 256
    $region53: #{tpu_custom_call.1} parent=1 // pred_fallthru
      _
    // Predicated region
    $region54: #{tpu_custom_call.1} parent=1 // pred_check
      _
    $region55: #{tpu_custom_call.1} parent=1 // pred_check_branch
      %114 = sbr.rel (0) target = $region57
    $region56: #{tpu_custom_call.1} parent=1 // pred_region
      %115 = dma.done [#allocation14], 2048
    $region57: #{tpu_custom_call.1} parent=1 // pred_fallthru
      _
    %v116 = vld [vmem:[#allocation4] sm:$0xff]
    %v117 = vld [vmem:[#allocation4 + $0x8] sm:$0xff]
    %v118 = vld [vmem:[#allocation4 + $0x10] sm:$0xff]
    %v119 = vld [vmem:[#allocation4 + $0x18] sm:$0xff]
    %v120 = vld [vmem:[#allocation4 + $0x20] sm:$0xff]
    %v121 = vld [vmem:[#allocation4 + $0x28] sm:$0xff]
    %v122 = vld [vmem:[#allocation4 + $0x30] sm:$0xff]
    %v123 = vld [vmem:[#allocation4 + $0x38] sm:$0xff]
    %v124 = vld [vmem:[#allocation7] sm:$0xff]
    %v125 = vld [vmem:[#allocation7 + $0x8] sm:$0xff]
    %v126 = vld [vmem:[#allocation7 + $0x10] sm:$0xff]
    %v127 = vld [vmem:[#allocation7 + $0x18] sm:$0xff]
    %v128 = vld [vmem:[#allocation7 + $0x20] sm:$0xff]
    %v129 = vld [vmem:[#allocation7 + $0x28] sm:$0xff]
    %v130 = vld [vmem:[#allocation7 + $0x30] sm:$0xff]
    %v131 = vld [vmem:[#allocation7 + $0x38] sm:$0xff]
    %v132 = vld [vmem:[#allocation7 + $0x40] sm:$0xff]
    %v133 = vld [vmem:[#allocation7 + $0x48] sm:$0xff]
    %v134 = vld [vmem:[#allocation7 + $0x50] sm:$0xff]
    %v135 = vld [vmem:[#allocation7 + $0x58] sm:$0xff]
    %v136 = vld [vmem:[#allocation7 + $0x60] sm:$0xff]
    %v137 = vld [vmem:[#allocation7 + $0x68] sm:$0xff]
    %v138 = vld [vmem:[#allocation7 + $0x70] sm:$0xff]
    %v139 = vld [vmem:[#allocation7 + $0x78] sm:$0xff]
    %v140 = vld [vmem:[#allocation7 + $0x80] sm:$0xff]
    %v141 = vld [vmem:[#allocation7 + $0x88] sm:$0xff]
    %v142 = vld [vmem:[#allocation7 + $0x90] sm:$0xff]
    %v143 = vld [vmem:[#allocation7 + $0x98] sm:$0xff]
    %v144 = vld [vmem:[#allocation7 + $0xa0] sm:$0xff]
    %v145 = vld [vmem:[#allocation7 + $0xa8] sm:$0xff]
    %v146 = vld [vmem:[#allocation7 + $0xb0] sm:$0xff]
    %v147 = vld [vmem:[#allocation7 + $0xb8] sm:$0xff]
    %v148 = vld [vmem:[#allocation7 + $0xc0] sm:$0xff]
    %v149 = vld [vmem:[#allocation7 + $0xc8] sm:$0xff]
    %v150 = vld [vmem:[#allocation7 + $0xd0] sm:$0xff]
    %v151 = vld [vmem:[#allocation7 + $0xd8] sm:$0xff]
    %v152 = vld [vmem:[#allocation7 + $0xe0] sm:$0xff]
    %v153 = vld [vmem:[#allocation7 + $0xe8] sm:$0xff]
    %v154 = vld [vmem:[#allocation7 + $0xf0] sm:$0xff]
    %v155 = vld [vmem:[#allocation7 + $0xf8] sm:$0xff]
    %v156 = vld [vmem:[#allocation7 + $0x100] sm:$0xff]
    %v157 = vld [vmem:[#allocation7 + $0x108] sm:$0xff]
    %v158 = vld [vmem:[#allocation7 + $0x110] sm:$0xff]
    %v159 = vld [vmem:[#allocation7 + $0x118] sm:$0xff]
    %v160 = vld [vmem:[#allocation7 + $0x120] sm:$0xff]
    %v161 = vld [vmem:[#allocation7 + $0x128] sm:$0xff]
    %v162 = vld [vmem:[#allocation7 + $0x130] sm:$0xff]
    %v163 = vld [vmem:[#allocation7 + $0x138] sm:$0xff]
    %v164 = vld [vmem:[#allocation7 + $0x140] sm:$0xff]
    %v165 = vld [vmem:[#allocation7 + $0x148] sm:$0xff]
    %v166 = vld [vmem:[#allocation7 + $0x150] sm:$0xff]
    %v167 = vld [vmem:[#allocation7 + $0x158] sm:$0xff]
    %v168 = vld [vmem:[#allocation7 + $0x160] sm:$0xff]
    %v169 = vld [vmem:[#allocation7 + $0x168] sm:$0xff]
    %v170 = vld [vmem:[#allocation7 + $0x170] sm:$0xff]
    %v171 = vld [vmem:[#allocation7 + $0x178] sm:$0xff]
    %v172 = vld [vmem:[#allocation7 + $0x180] sm:$0xff]
    %v173 = vld [vmem:[#allocation7 + $0x188] sm:$0xff]
    %v174 = vld [vmem:[#allocation7 + $0x190] sm:$0xff]
    %v175 = vld [vmem:[#allocation7 + $0x198] sm:$0xff]
    %v176 = vld [vmem:[#allocation7 + $0x1a0] sm:$0xff]
    %v177 = vld [vmem:[#allocation7 + $0x1a8] sm:$0xff]
    %v178 = vld [vmem:[#allocation7 + $0x1b0] sm:$0xff]
    %v179 = vld [vmem:[#allocation7 + $0x1b8] sm:$0xff]
    %v180 = vld [vmem:[#allocation7 + $0x1c0] sm:$0xff]
    %v181 = vld [vmem:[#allocation7 + $0x1c8] sm:$0xff]
    %v182 = vld [vmem:[#allocation7 + $0x1d0] sm:$0xff]
    %v183 = vld [vmem:[#allocation7 + $0x1d8] sm:$0xff]
    %v184 = vld [vmem:[#allocation7 + $0x1e0] sm:$0xff]
    %v185 = vld [vmem:[#allocation7 + $0x1e8] sm:$0xff]
    %v186 = vld [vmem:[#allocation7 + $0x1f0] sm:$0xff]
    %v187 = vld [vmem:[#allocation7 + $0x1f8] sm:$0xff]
    %v188 = vld [vmem:[#allocation10] sm:$0xf]
    %v190 = vlaneseq
    %v191 = vshrl.u32 %v190, 7
    %v192 = vsub.s32 0, %v191
    %v193 = vrot.slane %v188, %v192
    %v194 = vlaneseq
    %v195 = vshrl.u32 %v194, 7
    %v196 = vsub.s32 1, %v195
    %v197 = vrot.slane %v188, %v196
    %v198 = vlaneseq
    %v199 = vshrl.u32 %v198, 7
    %v200 = vsub.s32 2, %v199
    %v201 = vrot.slane %v188, %v200
    %v202 = vlaneseq
    %v203 = vshrl.u32 %v202, 7
    %v204 = vsub.s32 3, %v203
    %v205 = vrot.slane %v188, %v204
    %210 = vmatprep.subr.mxu0 %v125
    %211 = vmatpush1.msra.mxu0 %v124
    %212 = vmatprep.subr.mxu0 %v129
    %213 = vmatpush1.msra.mxu0 %v128
    %214 = vmatprep.subr.mxu0 %v133
    %215 = vmatpush1.msra.mxu0 %v132
    %216 = vmatprep.subr.mxu0 %v137
    %217 = vmatpush1.msra.mxu0 %v136
    %218 = vmatprep.subr.mxu0 %v141
    %219 = vmatpush1.msra.mxu0 %v140
    %220 = vmatprep.subr.mxu0 %v145
    %221 = vmatpush1.msra.mxu0 %v144
    %222 = vmatprep.subr.mxu0 %v149
    %223 = vmatpush1.msra.mxu0 %v148
    %224 = vmatprep.subr.mxu0 %v153
    %225 = vmatpush1.msra.mxu0 %v152
    %226 = vmatprep.subr.mxu0 %v157
    %227 = vmatpush1.msra.mxu0 %v156
    %228 = vmatprep.subr.mxu0 %v161
    %229 = vmatpush1.msra.mxu0 %v160
    %230 = vmatprep.subr.mxu0 %v165
    %231 = vmatpush1.msra.mxu0 %v164
    %232 = vmatprep.subr.mxu0 %v169
    %233 = vmatpush1.msra.mxu0 %v168
    %234 = vmatprep.subr.mxu0 %v173
    %235 = vmatpush1.msra.mxu0 %v172
    %236 = vmatprep.subr.mxu0 %v177
    %237 = vmatpush1.msra.mxu0 %v176
    %238 = vmatprep.subr.mxu0 %v181
    %239 = vmatpush1.msra.mxu0 %v180
    %240 = vmatprep.subr.mxu0 %v185
    %241 = vmatpush1.msra.mxu0 %v184
    %242 = vmatprep.subr.mxu0 0.0
    %243 = vmatpush1.msra.mxu0 0.0
    %244 = vmatprep.subr.mxu0 0.0
    %245 = vmatpush1.msra.mxu0 0.0
    %246 = vmatprep.subr.mxu0 0.0
    %247 = vmatpush1.msra.mxu0 0.0
    %248 = vmatprep.subr.mxu0 0.0
    %249 = vmatpush1.msra.mxu0 0.0
    %250 = vmatprep.subr.mxu0 0.0
    %251 = vmatpush1.msra.mxu0 0.0
    %252 = vmatprep.subr.mxu0 0.0
    %253 = vmatpush1.msra.mxu0 0.0
    %254 = vmatprep.subr.mxu0 0.0
    %255 = vmatpush1.msra.mxu0 0.0
    %256 = vmatprep.subr.mxu0 0.0
    %257 = vmatpush1.msra.mxu0 0.0
    %258 = vmatprep.subr.mxu0 0.0
    %259 = vmatpush1.msra.mxu0 0.0
    %260 = vmatprep.subr.mxu0 0.0
    %261 = vmatpush1.msra.mxu0 0.0
    %262 = vmatprep.subr.mxu0 0.0
    %263 = vmatpush1.msra.mxu0 0.0
    %264 = vmatprep.subr.mxu0 0.0
    %265 = vmatpush1.msra.mxu0 0.0
    %266 = vmatprep.subr.mxu0 0.0
    %267 = vmatpush1.msra.mxu0 0.0
    %268 = vmatprep.subr.mxu0 0.0
    %269 = vmatpush1.msra.mxu0 0.0
    %270 = vmatprep.subr.mxu0 0.0
    %271 = vmatpush1.msra.mxu0 0.0
    %272 = vmatprep.subr.mxu0 0.0
    %273 = vmatpush1.msra.mxu0 0.0
    %274 = vmatprep.mubr.f32.mxu0 0.0
    %275 = vmatmul.mubr.f32.gmra.mrb[0].mxu0 %v116
    %v276 = vpop.f32.mrb[0].mxu0
    %v277 = vadd.f32 %v193, %v276
    %v278 = vpop.f32.mrb[0].mxu0
    %v279 = vadd.f32 %v197, %v278
    %280 = vmatprep.mubr.f32.mxu0 0.0
    %281 = vmatmul.mubr.f32.gmra.mrb[0].mxu0 %v117
    %v282 = vpop.f32.mrb[0].mxu0
    %v283 = vadd.f32 %v193, %v282
    %v284 = vpop.f32.mrb[0].mxu0
    %v285 = vadd.f32 %v197, %v284
    %286 = vmatprep.mubr.f32.mxu0 0.0
    %287 = vmatmul.mubr.f32.gmra.mrb[0].mxu0 %v118
    %v288 = vpop.f32.mrb[0].mxu0
    %v289 = vadd.f32 %v193, %v288
    %v290 = vpop.f32.mrb[0].mxu0
    %v291 = vadd.f32 %v197, %v290
    %292 = vmatprep.mubr.f32.mxu0 0.0
    %293 = vmatmul.mubr.f32.gmra.mrb[0].mxu0 %v119
    %v294 = vpop.f32.mrb[0].mxu0
    %v295 = vadd.f32 %v193, %v294
    %v296 = vpop.f32.mrb[0].mxu0
    %v297 = vadd.f32 %v197, %v296
    %298 = vmatprep.mubr.f32.mxu0 0.0
    %299 = vmatmul.mubr.f32.gmra.mrb[0].mxu0 %v120
    %v300 = vpop.f32.mrb[0].mxu0
    %v301 = vadd.f32 %v193, %v300
    %v302 = vpop.f32.mrb[0].mxu0
    %v303 = vadd.f32 %v197, %v302
    %304 = vmatprep.mubr.f32.mxu0 0.0
    %305 = vmatmul.mubr.f32.gmra.mrb[0].mxu0 %v121
    %v306 = vpop.f32.mrb[0].mxu0
    %v307 = vadd.f32 %v193, %v306
    %v308 = vpop.f32.mrb[0].mxu0
    %v309 = vadd.f32 %v197, %v308
    %310 = vmatprep.mubr.f32.mxu0 0.0
    %311 = vmatmul.mubr.f32.gmra.mrb[0].mxu0 %v122
    %v312 = vpop.f32.mrb[0].mxu0
    %v313 = vadd.f32 %v193, %v312
    %v314 = vpop.f32.mrb[0].mxu0
    %v315 = vadd.f32 %v197, %v314
    %316 = vmatprep.mubr.f32.mxu0 0.0
    %317 = vmatmul.mubr.f32.gmra.mrb[0].mxu0 %v123
    %v318 = vpop.f32.mrb[0].mxu0
    %v319 = vadd.f32 %v193, %v318
    %v320 = vpop.f32.mrb[0].mxu0
    %v321 = vadd.f32 %v197, %v320
    %322 = vdwg.mxu0
    %323 = vmatprep.subr.mxu0 %v127
    %324 = vmatpush1.msra.mxu0 %v126
    %325 = vmatprep.subr.mxu0 %v131
    %326 = vmatpush1.msra.mxu0 %v130
    %327 = vmatprep.subr.mxu0 %v135
    %328 = vmatpush1.msra.mxu0 %v134
    %329 = vmatprep.subr.mxu0 %v139
    %330 = vmatpush1.msra.mxu0 %v138
    %331 = vmatprep.subr.mxu0 %v143
    %332 = vmatpush1.msra.mxu0 %v142
    %333 = vmatprep.subr.mxu0 %v147
    %334 = vmatpush1.msra.mxu0 %v146
    %335 = vmatprep.subr.mxu0 %v151
    %336 = vmatpush1.msra.mxu0 %v150
    %337 = vmatprep.subr.mxu0 %v155
    %338 = vmatpush1.msra.mxu0 %v154
    %339 = vmatprep.subr.mxu0 %v159
    %340 = vmatpush1.msra.mxu0 %v158
    %341 = vmatprep.subr.mxu0 %v163
    %342 = vmatpush1.msra.mxu0 %v162
    %343 = vmatprep.subr.mxu0 %v167
    %344 = vmatpush1.msra.mxu0 %v166
    %345 = vmatprep.subr.mxu0 %v171
    %346 = vmatpush1.msra.mxu0 %v170
    %347 = vmatprep.subr.mxu0 %v175
    %348 = vmatpush1.msra.mxu0 %v174
    %349 = vmatprep.subr.mxu0 %v179
    %350 = vmatpush1.msra.mxu0 %v178
    %351 = vmatprep.subr.mxu0 %v183
    %352 = vmatpush1.msra.mxu0 %v182
    %353 = vmatprep.subr.mxu0 %v187
    %354 = vmatpush1.msra.mxu0 %v186
    %355 = vmatprep.subr.mxu0 0.0
    %356 = vmatpush1.msra.mxu0 0.0
    %357 = vmatprep.subr.mxu0 0.0
    %358 = vmatpush1.msra.mxu0 0.0
    %359 = vmatprep.subr.mxu0 0.0
    %360 = vmatpush1.msra.mxu0 0.0
    %361 = vmatprep.subr.mxu0 0.0
    %362 = vmatpush1.msra.mxu0 0.0
    %363 = vmatprep.subr.mxu0 0.0
    %364 = vmatpush1.msra.mxu0 0.0
    %365 = vmatprep.subr.mxu0 0.0
    %366 = vmatpush1.msra.mxu0 0.0
    %367 = vmatprep.subr.mxu0 0.0
    %368 = vmatpush1.msra.mxu0 0.0
    %369 = vmatprep.subr.mxu0 0.0
    %370 = vmatpush1.msra.mxu0 0.0
    %371 = vmatprep.subr.mxu0 0.0
    %372 = vmatpush1.msra.mxu0 0.0
    %373 = vmatprep.subr.mxu0 0.0
    %374 = vmatpush1.msra.mxu0 0.0
    %375 = vmatprep.subr.mxu0 0.0
    %376 = vmatpush1.msra.mxu0 0.0
    %377 = vmatprep.subr.mxu0 0.0
    %378 = vmatpush1.msra.mxu0 0.0
    %379 = vmatprep.subr.mxu0 0.0
    %380 = vmatpush1.msra.mxu0 0.0
    %381 = vmatprep.subr.mxu0 0.0
    %382 = vmatpush1.msra.mxu0 0.0
    %383 = vmatprep.subr.mxu0 0.0
    %384 = vmatpush1.msra.mxu0 0.0
    %385 = vmatprep.subr.mxu0 0.0
    %386 = vmatpush1.msra.mxu0 0.0
    %387 = vmatprep.mubr.f32.mxu0 0.0
    %388 = vmatmul.mubr.f32.gmra.mrb[0].mxu0 %v116
    %v389 = vpop.f32.mrb[0].mxu0
    %v390 = vadd.f32 %v201, %v389
    %v391 = vpop.f32.mrb[0].mxu0
    %v392 = vadd.f32 %v205, %v391
    %393 = vmatprep.mubr.f32.mxu0 0.0
    %394 = vmatmul.mubr.f32.gmra.mrb[0].mxu0 %v117
    %v395 = vpop.f32.mrb[0].mxu0
    %v396 = vadd.f32 %v201, %v395
    %v397 = vpop.f32.mrb[0].mxu0
    %v398 = vadd.f32 %v205, %v397
    %399 = vmatprep.mubr.f32.mxu0 0.0
    %400 = vmatmul.mubr.f32.gmra.mrb[0].mxu0 %v118
    %v401 = vpop.f32.mrb[0].mxu0
    %v402 = vadd.f32 %v201, %v401
    %v403 = vpop.f32.mrb[0].mxu0
    %v404 = vadd.f32 %v205, %v403
    %405 = vmatprep.mubr.f32.mxu0 0.0
    %406 = vmatmul.mubr.f32.gmra.mrb[0].mxu0 %v119
    %v407 = vpop.f32.mrb[0].mxu0
    %v408 = vadd.f32 %v201, %v407
    %v409 = vpop.f32.mrb[0].mxu0
    %v410 = vadd.f32 %v205, %v409
    %411 = vmatprep.mubr.f32.mxu0 0.0
    %412 = vmatmul.mubr.f32.gmra.mrb[0].mxu0 %v120
    %v413 = vpop.f32.mrb[0].mxu0
    %v414 = vadd.f32 %v201, %v413
    %v415 = vpop.f32.mrb[0].mxu0
    %v416 = vadd.f32 %v205, %v415
    %417 = vmatprep.mubr.f32.mxu0 0.0
    %418 = vmatmul.mubr.f32.gmra.mrb[0].mxu0 %v121
    %v419 = vpop.f32.mrb[0].mxu0
    %v420 = vadd.f32 %v201, %v419
    %v421 = vpop.f32.mrb[0].mxu0
    %v422 = vadd.f32 %v205, %v421
    %423 = vmatprep.mubr.f32.mxu0 0.0
    %424 = vmatmul.mubr.f32.gmra.mrb[0].mxu0 %v122
    %v425 = vpop.f32.mrb[0].mxu0
    %v426 = vadd.f32 %v201, %v425
    %v427 = vpop.f32.mrb[0].mxu0
    %v428 = vadd.f32 %v205, %v427
    %429 = vmatprep.mubr.f32.mxu0 0.0
    %430 = vmatmul.mubr.f32.gmra.mrb[0].mxu0 %v123
    %v431 = vpop.f32.mrb[0].mxu0
    %v432 = vadd.f32 %v201, %v431
    %v433 = vpop.f32.mrb[0].mxu0
    %v434 = vadd.f32 %v205, %v433
    %435 = vdwg.mxu0
    %436 = vst [vmem:[#allocation3] sm:$0xff] %v277
    %437 = vst [vmem:[#allocation3 + $0x8] sm:$0xff] %v279
    %438 = vst [vmem:[#allocation3 + $0x10] sm:$0xff] %v390
    %439 = vst [vmem:[#allocation3 + $0x18] sm:$0xff] %v392
    %440 = vst [vmem:[#allocation3 + $0x20] sm:$0xff] %v283
    %441 = vst [vmem:[#allocation3 + $0x28] sm:$0xff] %v285
    %442 = vst [vmem:[#allocation3 + $0x30] sm:$0xff] %v396
    %443 = vst [vmem:[#allocation3 + $0x38] sm:$0xff] %v398
    %444 = vst [vmem:[#allocation3 + $0x40] sm:$0xff] %v289
    %445 = vst [vmem:[#allocation3 + $0x48] sm:$0xff] %v291
    %446 = vst [vmem:[#allocation3 + $0x50] sm:$0xff] %v402
    %447 = vst [vmem:[#allocation3 + $0x58] sm:$0xff] %v404
    %448 = vst [vmem:[#allocation3 + $0x60] sm:$0xff] %v295
    %449 = vst [vmem:[#allocation3 + $0x68] sm:$0xff] %v297
    %450 = vst [vmem:[#allocation3 + $0x70] sm:$0xff] %v408
    %451 = vst [vmem:[#allocation3 + $0x78] sm:$0xff] %v410
    %452 = vst [vmem:[#allocation3 + $0x80] sm:$0xff] %v301
    %453 = vst [vmem:[#allocation3 + $0x88] sm:$0xff] %v303
    %454 = vst [vmem:[#allocation3 + $0x90] sm:$0xff] %v414
    %455 = vst [vmem:[#allocation3 + $0x98] sm:$0xff] %v416
    %456 = vst [vmem:[#allocation3 + $0xa0] sm:$0xff] %v307
    %457 = vst [vmem:[#allocation3 + $0xa8] sm:$0xff] %v309
    %458 = vst [vmem:[#allocation3 + $0xb0] sm:$0xff] %v420
    %459 = vst [vmem:[#allocation3 + $0xb8] sm:$0xff] %v422
    %460 = vst [vmem:[#allocation3 + $0xc0] sm:$0xff] %v313
    %461 = vst [vmem:[#allocation3 + $0xc8] sm:$0xff] %v315
    %462 = vst [vmem:[#allocation3 + $0xd0] sm:$0xff] %v426
    %463 = vst [vmem:[#allocation3 + $0xd8] sm:$0xff] %v428
    %464 = vst [vmem:[#allocation3 + $0xe0] sm:$0xff] %v319
    %465 = vst [vmem:[#allocation3 + $0xe8] sm:$0xff] %v321
    %466 = vst [vmem:[#allocation3 + $0xf0] sm:$0xff] %v432
    %467 = vst [vmem:[#allocation3 + $0xf8] sm:$0xff] %v434
    %v468 = vld [vmem:[#allocation12] sm:$0xff]
    %v469 = vld [vmem:[%s5] sm:$0xff]
    %v470 = vld [vmem:[#allocation3] sm:$0xff]
    %v471 = vld [vmem:[#allocation3 + $0x8] sm:$0xff]
    %v472 = vld [vmem:[#allocation3 + $0x10] sm:$0xff]
    %v473 = vld [vmem:[#allocation3 + $0x18] sm:$0xff]
    %v474 = vld [vmem:[#allocation9] sm:$0xff]
    %v475 = vld [vmem:[#allocation9 + $0x8] sm:$0xff]
    %v476 = vld [vmem:[#allocation9 + $0x10] sm:$0xff]
    %v477 = vld [vmem:[#allocation9 + $0x18] sm:$0xff]
    %v478 = vld [vmem:[#allocation9 + $0x20] sm:$0xff]
    %v479 = vld [vmem:[#allocation9 + $0x28] sm:$0xff]
    %v480 = vld [vmem:[#allocation9 + $0x30] sm:$0xff]
    %v481 = vld [vmem:[#allocation9 + $0x38] sm:$0xff]
    %v482 = vld [vmem:[#allocation9 + $0x40] sm:$0xff]
    %v483 = vld [vmem:[#allocation9 + $0x48] sm:$0xff]
    %v484 = vld [vmem:[#allocation9 + $0x50] sm:$0xff]
    %v485 = vld [vmem:[#allocation9 + $0x58] sm:$0xff]
    %v486 = vld [vmem:[#allocation9 + $0x60] sm:$0xff]
    %v487 = vld [vmem:[#allocation9 + $0x68] sm:$0xff]
    %v488 = vld [vmem:[#allocation9 + $0x70] sm:$0xff]
    %v489 = vld [vmem:[#allocation9 + $0x78] sm:$0xff]
    %v490 = vld [vmem:[#allocation9 + $0x80] sm:$0xff]
    %v491 = vld [vmem:[#allocation9 + $0x88] sm:$0xff]
    %v492 = vld [vmem:[#allocation9 + $0x90] sm:$0xff]
    %v493 = vld [vmem:[#allocation9 + $0x98] sm:$0xff]
    %v494 = vld [vmem:[#allocation9 + $0xa0] sm:$0xff]
    %v495 = vld [vmem:[#allocation9 + $0xa8] sm:$0xff]
    %v496 = vld [vmem:[#allocation9 + $0xb0] sm:$0xff]
    %v497 = vld [vmem:[#allocation9 + $0xb8] sm:$0xff]
    %v498 = vld [vmem:[#allocation9 + $0xc0] sm:$0xff]
    %v499 = vld [vmem:[#allocation9 + $0xc8] sm:$0xff]
    %v500 = vld [vmem:[#allocation9 + $0xd0] sm:$0xff]
    %v501 = vld [vmem:[#allocation9 + $0xd8] sm:$0xff]
    %v502 = vld [vmem:[#allocation9 + $0xe0] sm:$0xff]
    %v503 = vld [vmem:[#allocation9 + $0xe8] sm:$0xff]
    %v504 = vld [vmem:[#allocation9 + $0xf0] sm:$0xff]
    %v505 = vld [vmem:[#allocation9 + $0xf8] sm:$0xff]
    %v506 = vld [vmem:[#allocation9 + $0x100] sm:$0xff]
    %v507 = vld [vmem:[#allocation9 + $0x108] sm:$0xff]
    %v508 = vld [vmem:[#allocation9 + $0x110] sm:$0xff]
    %v509 = vld [vmem:[#allocation9 + $0x118] sm:$0xff]
    %v510 = vld [vmem:[#allocation9 + $0x120] sm:$0xff]
    %v511 = vld [vmem:[#allocation9 + $0x128] sm:$0xff]
    %v512 = vld [vmem:[#allocation9 + $0x130] sm:$0xff]
    %v513 = vld [vmem:[#allocation9 + $0x138] sm:$0xff]
    %v514 = vld [vmem:[#allocation9 + $0x140] sm:$0xff]
    %v515 = vld [vmem:[#allocation9 + $0x148] sm:$0xff]
    %v516 = vld [vmem:[#allocation9 + $0x150] sm:$0xff]
    %v517 = vld [vmem:[#allocation9 + $0x158] sm:$0xff]
    %v518 = vld [vmem:[#allocation9 + $0x160] sm:$0xff]
    %v519 = vld [vmem:[#allocation9 + $0x168] sm:$0xff]
    %v520 = vld [vmem:[#allocation9 + $0x170] sm:$0xff]
    %v521 = vld [vmem:[#allocation9 + $0x178] sm:$0xff]
    %v522 = vld [vmem:[#allocation9 + $0x180] sm:$0xff]
    %v523 = vld [vmem:[#allocation9 + $0x188] sm:$0xff]
    %v524 = vld [vmem:[#allocation9 + $0x190] sm:$0xff]
    %v525 = vld [vmem:[#allocation9 + $0x198] sm:$0xff]
    %v526 = vld [vmem:[#allocation9 + $0x1a0] sm:$0xff]
    %v527 = vld [vmem:[#allocation9 + $0x1a8] sm:$0xff]
    %v528 = vld [vmem:[#allocation9 + $0x1b0] sm:$0xff]
    %v529 = vld [vmem:[#allocation9 + $0x1b8] sm:$0xff]
    %v530 = vld [vmem:[#allocation9 + $0x1c0] sm:$0xff]
    %v531 = vld [vmem:[#allocation9 + $0x1c8] sm:$0xff]
    %v532 = vld [vmem:[#allocation9 + $0x1d0] sm:$0xff]
    %v533 = vld [vmem:[#allocation9 + $0x1d8] sm:$0xff]
    %v534 = vld [vmem:[#allocation9 + $0x1e0] sm:$0xff]
    %v535 = vld [vmem:[#allocation9 + $0x1e8] sm:$0xff]
    %v536 = vld [vmem:[#allocation9 + $0x1f0] sm:$0xff]
    %v537 = vld [vmem:[#allocation9 + $0x1f8] sm:$0xff]
    %538 = vmatprep.subr.mxu0 %v475
    %539 = vmatpush1.msra.mxu0 %v474
    %540 = vmatprep.subr.mxu0 %v479
    %541 = vmatpush1.msra.mxu0 %v478
    %542 = vmatprep.subr.mxu0 %v483
    %543 = vmatpush1.msra.mxu0 %v482
    %544 = vmatprep.subr.mxu0 %v487
    %545 = vmatpush1.msra.mxu0 %v486
    %546 = vmatprep.subr.mxu0 %v491
    %547 = vmatpush1.msra.mxu0 %v490
    %548 = vmatprep.subr.mxu0 %v495
    %549 = vmatpush1.msra.mxu0 %v494
    %550 = vmatprep.subr.mxu0 %v499
    %551 = vmatpush1.msra.mxu0 %v498
    %552 = vmatprep.subr.mxu0 %v503
    %553 = vmatpush1.msra.mxu0 %v502
    %554 = vmatprep.subr.mxu0 %v507
    %555 = vmatpush1.msra.mxu0 %v506
    %556 = vmatprep.subr.mxu0 %v511
    %557 = vmatpush1.msra.mxu0 %v510
    %558 = vmatprep.subr.mxu0 %v515
    %559 = vmatpush1.msra.mxu0 %v514
    %560 = vmatprep.subr.mxu0 %v519
    %561 = vmatpush1.msra.mxu0 %v518
    %562 = vmatprep.subr.mxu0 %v523
    %563 = vmatpush1.msra.mxu0 %v522
    %564 = vmatprep.subr.mxu0 %v527
    %565 = vmatpush1.msra.mxu0 %v526
    %566 = vmatprep.subr.mxu0 %v531
    %567 = vmatpush1.msra.mxu0 %v530
    %568 = vmatprep.subr.mxu0 %v535
    %569 = vmatpush1.msra.mxu0 %v534
    %570 = vmatprep.subr.mxu0 0.0
    %571 = vmatpush1.msra.mxu0 0.0
    %572 = vmatprep.subr.mxu0 0.0
    %573 = vmatpush1.msra.mxu0 0.0
    %574 = vmatprep.subr.mxu0 0.0
    %575 = vmatpush1.msra.mxu0 0.0
    %576 = vmatprep.subr.mxu0 0.0
    %577 = vmatpush1.msra.mxu0 0.0
    %578 = vmatprep.subr.mxu0 0.0
    %579 = vmatpush1.msra.mxu0 0.0
    %580 = vmatprep.subr.mxu0 0.0
    %581 = vmatpush1.msra.mxu0 0.0
    %582 = vmatprep.subr.mxu0 0.0
    %583 = vmatpush1.msra.mxu0 0.0
    %584 = vmatprep.subr.mxu0 0.0
    %585 = vmatpush1.msra.mxu0 0.0
    %586 = vmatprep.subr.mxu0 0.0
    %587 = vmatpush1.msra.mxu0 0.0
    %588 = vmatprep.subr.mxu0 0.0
    %589 = vmatpush1.msra.mxu0 0.0
    %590 = vmatprep.subr.mxu0 0.0
    %591 = vmatpush1.msra.mxu0 0.0
    %592 = vmatprep.subr.mxu0 0.0
    %593 = vmatpush1.msra.mxu0 0.0
    %594 = vmatprep.subr.mxu0 0.0
    %595 = vmatpush1.msra.mxu0 0.0
    %596 = vmatprep.subr.mxu0 0.0
    %597 = vmatpush1.msra.mxu0 0.0
    %598 = vmatprep.subr.mxu0 0.0
    %599 = vmatpush1.msra.mxu0 0.0
    %600 = vmatprep.subr.mxu0 0.0
    %601 = vmatpush1.msra.mxu0 0.0
    %602 = vmatprep.mubr.f32.mxu0 0.0
    %603 = vmatmul.mubr.f32.gmra.mrb[0].mxu0 %v468
    %v604 = vpop.f32.mrb[0].mxu0
    %v605 = vadd.f32 0.0, %v604
    %v606 = vpop.f32.mrb[0].mxu0
    %v607 = vadd.f32 0.0, %v606
    %608 = vdwg.mxu0
    %609 = vmatprep.subr.mxu0 %v477
    %610 = vmatpush1.msra.mxu0 %v476
    %611 = vmatprep.subr.mxu0 %v481
    %612 = vmatpush1.msra.mxu0 %v480
    %613 = vmatprep.subr.mxu0 %v485
    %614 = vmatpush1.msra.mxu0 %v484
    %615 = vmatprep.subr.mxu0 %v489
    %616 = vmatpush1.msra.mxu0 %v488
    %617 = vmatprep.subr.mxu0 %v493
    %618 = vmatpush1.msra.mxu0 %v492
    %619 = vmatprep.subr.mxu0 %v497
    %620 = vmatpush1.msra.mxu0 %v496
    %621 = vmatprep.subr.mxu0 %v501
    %622 = vmatpush1.msra.mxu0 %v500
    %623 = vmatprep.subr.mxu0 %v505
    %624 = vmatpush1.msra.mxu0 %v504
    %625 = vmatprep.subr.mxu0 %v509
    %626 = vmatpush1.msra.mxu0 %v508
    %627 = vmatprep.subr.mxu0 %v513
    %628 = vmatpush1.msra.mxu0 %v512
    %629 = vmatprep.subr.mxu0 %v517
    %630 = vmatpush1.msra.mxu0 %v516
    %631 = vmatprep.subr.mxu0 %v521
    %632 = vmatpush1.msra.mxu0 %v520
    %633 = vmatprep.subr.mxu0 %v525
    %634 = vmatpush1.msra.mxu0 %v524
    %635 = vmatprep.subr.mxu0 %v529
    %636 = vmatpush1.msra.mxu0 %v528
    %637 = vmatprep.subr.mxu0 %v533
    %638 = vmatpush1.msra.mxu0 %v532
    %639 = vmatprep.subr.mxu0 %v537
    %640 = vmatpush1.msra.mxu0 %v536
    %641 = vmatprep.subr.mxu0 0.0
    %642 = vmatpush1.msra.mxu0 0.0
    %643 = vmatprep.subr.mxu0 0.0
    %644 = vmatpush1.msra.mxu0 0.0
    %645 = vmatprep.subr.mxu0 0.0
    %646 = vmatpush1.msra.mxu0 0.0
    %647 = vmatprep.subr.mxu0 0.0
    %648 = vmatpush1.msra.mxu0 0.0
    %649 = vmatprep.subr.mxu0 0.0
    %650 = vmatpush1.msra.mxu0 0.0
    %651 = vmatprep.subr.mxu0 0.0
    %652 = vmatpush1.msra.mxu0 0.0
    %653 = vmatprep.subr.mxu0 0.0
    %654 = vmatpush1.msra.mxu0 0.0
    %655 = vmatprep.subr.mxu0 0.0
    %656 = vmatpush1.msra.mxu0 0.0
    %657 = vmatprep.subr.mxu0 0.0
    %658 = vmatpush1.msra.mxu0 0.0
    %659 = vmatprep.subr.mxu0 0.0
    %660 = vmatpush1.msra.mxu0 0.0
    %661 = vmatprep.subr.mxu0 0.0
    %662 = vmatpush1.msra.mxu0 0.0
    %663 = vmatprep.subr.mxu0 0.0
    %664 = vmatpush1.msra.mxu0 0.0
    %665 = vmatprep.subr.mxu0 0.0
    %666 = vmatpush1.msra.mxu0 0.0
    %667 = vmatprep.subr.mxu0 0.0
    %668 = vmatpush1.msra.mxu0 0.0
    %669 = vmatprep.subr.mxu0 0.0
    %670 = vmatpush1.msra.mxu0 0.0
    %671 = vmatprep.subr.mxu0 0.0
    %672 = vmatpush1.msra.mxu0 0.0
    %673 = vmatprep.mubr.f32.mxu0 0.0
    %674 = vmatmul.mubr.f32.gmra.mrb[0].mxu0 %v468
    %v675 = vpop.f32.mrb[0].mxu0
    %v676 = vadd.f32 0.0, %v675
    %v677 = vpop.f32.mrb[0].mxu0
    %v678 = vadd.f32 0.0, %v677
    %679 = vdwg.mxu0
    %v680 = vadd.f32 %v470, %v605
    %v681 = vadd.f32 %v471, %v607
    %v682 = vadd.f32 %v472, %v676
    %v683 = vadd.f32 %v473, %v678
    %v684 = vxor.u32 %v680, 2147483648
    %v685 = vmul.f32 %v684, 1.442695
    %v686 = vpow.pop %v685
    %v687 = vadd.f32 %v686, 1.0
    %v688 = vrcp.pop %v687
    %v689 = vmul.f32 1.0, %v688
    %v690 = vxor.u32 %v681, 2147483648
    %v691 = vmul.f32 %v690, 1.442695
    %v692 = vpow.pop %v691
    %v693 = vadd.f32 %v692, 1.0
    %v694 = vrcp.pop %v693
    %v695 = vmul.f32 1.0, %v694
    %v696 = vtanh.pop %v682
    %v697 = vxor.u32 %v683, 2147483648
    %v698 = vmul.f32 %v697, 1.442695
    %v699 = vpow.pop %v698
    %v700 = vadd.f32 %v699, 1.0
    %v701 = vrcp.pop %v700
    %v702 = vmul.f32 1.0, %v701
    %v703 = vmul.f32 %v695, %v469
    %v704 = vmul.f32 %v689, %v696
    %v705 = vadd.f32 %v703, %v704
    %v706 = vtanh.pop %v705
    %v707 = vmul.f32 %v702, %v706
    %708 = vst [vmem:[#allocation2] sm:$0xff] %v707
    %s709 = scalar_lea.vmem [#allocation3], 32
    %v710 = vld [vmem:[%s709] sm:$0xff]
    %v711 = vld [vmem:[%s709 + $0x8] sm:$0xff]
    %v712 = vld [vmem:[%s709 + $0x10] sm:$0xff]
    %v713 = vld [vmem:[%s709 + $0x18] sm:$0xff]
    %v714 = vld [vmem:[#allocation9] sm:$0xff]
    %v715 = vld [vmem:[#allocation9 + $0x8] sm:$0xff]
    %v716 = vld [vmem:[#allocation9 + $0x10] sm:$0xff]
    %v717 = vld [vmem:[#allocation9 + $0x18] sm:$0xff]
    %v718 = vld [vmem:[#allocation9 + $0x20] sm:$0xff]
    %v719 = vld [vmem:[#allocation9 + $0x28] sm:$0xff]
    %v720 = vld [vmem:[#allocation9 + $0x30] sm:$0xff]
    %v721 = vld [vmem:[#allocation9 + $0x38] sm:$0xff]
    %v722 = vld [vmem:[#allocation9 + $0x40] sm:$0xff]
    %v723 = vld [vmem:[#allocation9 + $0x48] sm:$0xff]
    %v724 = vld [vmem:[#allocation9 + $0x50] sm:$0xff]
    %v725 = vld [vmem:[#allocation9 + $0x58] sm:$0xff]
    %v726 = vld [vmem:[#allocation9 + $0x60] sm:$0xff]
    %v727 = vld [vmem:[#allocation9 + $0x68] sm:$0xff]
    %v728 = vld [vmem:[#allocation9 + $0x70] sm:$0xff]
    %v729 = vld [vmem:[#allocation9 + $0x78] sm:$0xff]
    %v730 = vld [vmem:[#allocation9 + $0x80] sm:$0xff]
    %v731 = vld [vmem:[#allocation9 + $0x88] sm:$0xff]
    %v732 = vld [vmem:[#allocation9 + $0x90] sm:$0xff]
    %v733 = vld [vmem:[#allocation9 + $0x98] sm:$0xff]
    %v734 = vld [vmem:[#allocation9 + $0xa0] sm:$0xff]
    %v735 = vld [vmem:[#allocation9 + $0xa8] sm:$0xff]
    %v736 = vld [vmem:[#allocation9 + $0xb0] sm:$0xff]
    %v737 = vld [vmem:[#allocation9 + $0xb8] sm:$0xff]
    %v738 = vld [vmem:[#allocation9 + $0xc0] sm:$0xff]
    %v739 = vld [vmem:[#allocation9 + $0xc8] sm:$0xff]
    %v740 = vld [vmem:[#allocation9 + $0xd0] sm:$0xff]
    %v741 = vld [vmem:[#allocation9 + $0xd8] sm:$0xff]
    %v742 = vld [vmem:[#allocation9 + $0xe0] sm:$0xff]
    %v743 = vld [vmem:[#allocation9 + $0xe8] sm:$0xff]
    %v744 = vld [vmem:[#allocation9 + $0xf0] sm:$0xff]
    %v745 = vld [vmem:[#allocation9 + $0xf8] sm:$0xff]
    %v746 = vld [vmem:[#allocation9 + $0x100] sm:$0xff]
    %v747 = vld [vmem:[#allocation9 + $0x108] sm:$0xff]
    %v748 = vld [vmem:[#allocation9 + $0x110] sm:$0xff]
    %v749 = vld [vmem:[#allocation9 + $0x118] sm:$0xff]
    %v750 = vld [vmem:[#allocation9 + $0x120] sm:$0xff]
    %v751 = vld [vmem:[#allocation9 + $0x128] sm:$0xff]
    %v752 = vld [vmem:[#allocation9 + $0x130] sm:$0xff]
    %v753 = vld [vmem:[#allocation9 + $0x138] sm:$0xff]
    %v754 = vld [vmem:[#allocation9 + $0x140] sm:$0xff]
    %v755 = vld [vmem:[#allocation9 + $0x148] sm:$0xff]
    %v756 = vld [vmem:[#allocation9 + $0x150] sm:$0xff]
    %v757 = vld [vmem:[#allocation9 + $0x158] sm:$0xff]
    %v758 = vld [vmem:[#allocation9 + $0x160] sm:$0xff]
    %v759 = vld [vmem:[#allocation9 + $0x168] sm:$0xff]
    %v760 = vld [vmem:[#allocation9 + $0x170] sm:$0xff]
    %v761 = vld [vmem:[#allocation9 + $0x178] sm:$0xff]
    %v762 = vld [vmem:[#allocation9 + $0x180] sm:$0xff]
    %v763 = vld [vmem:[#allocation9 + $0x188] sm:$0xff]
    %v764 = vld [vmem:[#allocation9 + $0x190] sm:$0xff]
    %v765 = vld [vmem:[#allocation9 + $0x198] sm:$0xff]
    %v766 = vld [vmem:[#allocation9 + $0x1a0] sm:$0xff]
    %v767 = vld [vmem:[#allocation9 + $0x1a8] sm:$0xff]
    %v768 = vld [vmem:[#allocation9 + $0x1b0] sm:$0xff]
    %v769 = vld [vmem:[#allocation9 + $0x1b8] sm:$0xff]
    %v770 = vld [vmem:[#allocation9 + $0x1c0] sm:$0xff]
    %v771 = vld [vmem:[#allocation9 + $0x1c8] sm:$0xff]
    %v772 = vld [vmem:[#allocation9 + $0x1d0] sm:$0xff]
    %v773 = vld [vmem:[#allocation9 + $0x1d8] sm:$0xff]
    %v774 = vld [vmem:[#allocation9 + $0x1e0] sm:$0xff]
    %v775 = vld [vmem:[#allocation9 + $0x1e8] sm:$0xff]
    %v776 = vld [vmem:[#allocation9 + $0x1f0] sm:$0xff]
    %v777 = vld [vmem:[#allocation9 + $0x1f8] sm:$0xff]
    %778 = vmatprep.subr.mxu0 %v715
    %779 = vmatpush1.msra.mxu0 %v714
    %780 = vmatprep.subr.mxu0 %v719
    %781 = vmatpush1.msra.mxu0 %v718
    %782 = vmatprep.subr.mxu0 %v723
    %783 = vmatpush1.msra.mxu0 %v722
    %784 = vmatprep.subr.mxu0 %v727
    %785 = vmatpush1.msra.mxu0 %v726
    %786 = vmatprep.subr.mxu0 %v731
    %787 = vmatpush1.msra.mxu0 %v730
    %788 = vmatprep.subr.mxu0 %v735
    %789 = vmatpush1.msra.mxu0 %v734
    %790 = vmatprep.subr.mxu0 %v739
    %791 = vmatpush1.msra.mxu0 %v738
    %792 = vmatprep.subr.mxu0 %v743
    %793 = vmatpush1.msra.mxu0 %v742
    %794 = vmatprep.subr.mxu0 %v747
    %795 = vmatpush1.msra.mxu0 %v746
    %796 = vmatprep.subr.mxu0 %v751
    %797 = vmatpush1.msra.mxu0 %v750
    %798 = vmatprep.subr.mxu0 %v755
    %799 = vmatpush1.msra.mxu0 %v754
    %800 = vmatprep.subr.mxu0 %v759
    %801 = vmatpush1.msra.mxu0 %v758
    %802 = vmatprep.subr.mxu0 %v763
    %803 = vmatpush1.msra.mxu0 %v762
    %804 = vmatprep.subr.mxu0 %v767
    %805 = vmatpush1.msra.mxu0 %v766
    %806 = vmatprep.subr.mxu0 %v771
    %807 = vmatpush1.msra.mxu0 %v770
    %808 = vmatprep.subr.mxu0 %v775
    %809 = vmatpush1.msra.mxu0 %v774
    %810 = vmatprep.subr.mxu0 0.0
    %811 = vmatpush1.msra.mxu0 0.0
    %812 = vmatprep.subr.mxu0 0.0
    %813 = vmatpush1.msra.mxu0 0.0
    %814 = vmatprep.subr.mxu0 0.0
    %815 = vmatpush1.msra.mxu0 0.0
    %816 = vmatprep.subr.mxu0 0.0
    %817 = vmatpush1.msra.mxu0 0.0
    %818 = vmatprep.subr.mxu0 0.0
    %819 = vmatpush1.msra.mxu0 0.0
    %820 = vmatprep.subr.mxu0 0.0
    %821 = vmatpush1.msra.mxu0 0.0
    %822 = vmatprep.subr.mxu0 0.0
    %823 = vmatpush1.msra.mxu0 0.0
    %824 = vmatprep.subr.mxu0 0.0
    %825 = vmatpush1.msra.mxu0 0.0
    %826 = vmatprep.subr.mxu0 0.0
    %827 = vmatpush1.msra.mxu0 0.0
    %828 = vmatprep.subr.mxu0 0.0
    %829 = vmatpush1.msra.mxu0 0.0
    %830 = vmatprep.subr.mxu0 0.0
    %831 = vmatpush1.msra.mxu0 0.0
    %832 = vmatprep.subr.mxu0 0.0
    %833 = vmatpush1.msra.mxu0 0.0
    %834 = vmatprep.subr.mxu0 0.0
    %835 = vmatpush1.msra.mxu0 0.0
    %836 = vmatprep.subr.mxu0 0.0
    %837 = vmatpush1.msra.mxu0 0.0
    %838 = vmatprep.subr.mxu0 0.0
    %839 = vmatpush1.msra.mxu0 0.0
    %840 = vmatprep.subr.mxu0 0.0
    %841 = vmatpush1.msra.mxu0 0.0
    %842 = vmatprep.mubr.f32.mxu0 0.0
    %843 = vmatmul.mubr.f32.gmra.mrb[0].mxu0 %v707
    %v844 = vpop.f32.mrb[0].mxu0
    %v845 = vadd.f32 0.0, %v844
    %v846 = vpop.f32.mrb[0].mxu0
    %v847 = vadd.f32 0.0, %v846
    %848 = vdwg.mxu0
    %849 = vmatprep.subr.mxu0 %v717
    %850 = vmatpush1.msra.mxu0 %v716
    %851 = vmatprep.subr.mxu0 %v721
    %852 = vmatpush1.msra.mxu0 %v720
    %853 = vmatprep.subr.mxu0 %v725
    %854 = vmatpush1.msra.mxu0 %v724
    %855 = vmatprep.subr.mxu0 %v729
    %856 = vmatpush1.msra.mxu0 %v728
    %857 = vmatprep.subr.mxu0 %v733
    %858 = vmatpush1.msra.mxu0 %v732
    %859 = vmatprep.subr.mxu0 %v737
    %860 = vmatpush1.msra.mxu0 %v736
    %861 = vmatprep.subr.mxu0 %v741
    %862 = vmatpush1.msra.mxu0 %v740
    %863 = vmatprep.subr.mxu0 %v745
    %864 = vmatpush1.msra.mxu0 %v744
    %865 = vmatprep.subr.mxu0 %v749
    %866 = vmatpush1.msra.mxu0 %v748
    %867 = vmatprep.subr.mxu0 %v753
    %868 = vmatpush1.msra.mxu0 %v752
    %869 = vmatprep.subr.mxu0 %v757
    %870 = vmatpush1.msra.mxu0 %v756
    %871 = vmatprep.subr.mxu0 %v761
    %872 = vmatpush1.msra.mxu0 %v760
    %873 = vmatprep.subr.mxu0 %v765
    %874 = vmatpush1.msra.mxu0 %v764
    %875 = vmatprep.subr.mxu0 %v769
    %876 = vmatpush1.msra.mxu0 %v768
    %877 = vmatprep.subr.mxu0 %v773
    %878 = vmatpush1.msra.mxu0 %v772
    %879 = vmatprep.subr.mxu0 %v777
    %880 = vmatpush1.msra.mxu0 %v776
    %881 = vmatprep.subr.mxu0 0.0
    %882 = vmatpush1.msra.mxu0 0.0
    %883 = vmatprep.subr.mxu0 0.0
    %884 = vmatpush1.msra.mxu0 0.0
    %885 = vmatprep.subr.mxu0 0.0
    %886 = vmatpush1.msra.mxu0 0.0
    %887 = vmatprep.subr.mxu0 0.0
    %888 = vmatpush1.msra.mxu0 0.0
    %889 = vmatprep.subr.mxu0 0.0
    %890 = vmatpush1.msra.mxu0 0.0
    %891 = vmatprep.subr.mxu0 0.0
    %892 = vmatpush1.msra.mxu0 0.0
    %893 = vmatprep.subr.mxu0 0.0
    %894 = vmatpush1.msra.mxu0 0.0
    %895 = vmatprep.subr.mxu0 0.0
    %896 = vmatpush1.msra.mxu0 0.0
    %897 = vmatprep.subr.mxu0 0.0
    %898 = vmatpush1.msra.mxu0 0.0
    %899 = vmatprep.subr.mxu0 0.0
    %900 = vmatpush1.msra.mxu0 0.0
    %901 = vmatprep.subr.mxu0 0.0
    %902 = vmatpush1.msra.mxu0 0.0
    %903 = vmatprep.subr.mxu0 0.0
    %904 = vmatpush1.msra.mxu0 0.0
    %905 = vmatprep.subr.mxu0 0.0
    %906 = vmatpush1.msra.mxu0 0.0
    %907 = vmatprep.subr.mxu0 0.0
    %908 = vmatpush1.msra.mxu0 0.0
    %909 = vmatprep.subr.mxu0 0.0
    %910 = vmatpush1.msra.mxu0 0.0
    %911 = vmatprep.subr.mxu0 0.0
    %912 = vmatpush1.msra.mxu0 0.0
    %913 = vmatprep.mubr.f32.mxu0 0.0
    %914 = vmatmul.mubr.f32.gmra.mrb[0].mxu0 %v707
    %v915 = vpop.f32.mrb[0].mxu0
    %v916 = vadd.f32 0.0, %v915
    %v917 = vpop.f32.mrb[0].mxu0
    %v918 = vadd.f32 0.0, %v917
    %919 = vdwg.mxu0
    %v920 = vadd.f32 %v710, %v845
    %v921 = vadd.f32 %v711, %v847
    %v922 = vadd.f32 %v712, %v916
    %v923 = vadd.f32 %v713, %v918
    %v924 = vxor.u32 %v920, 2147483648
    %v925 = vmul.f32 %v924, 1.442695
    %v926 = vpow.pop %v925
    %v927 = vadd.f32 %v926, 1.0
    %v928 = vrcp.pop %v927
    %v929 = vmul.f32 1.0, %v928
    %v930 = vxor.u32 %v921, 2147483648
    %v931 = vmul.f32 %v930, 1.442695
    %v932 = vpow.pop %v931
    %v933 = vadd.f32 %v932, 1.0
    %v934 = vrcp.pop %v933
    %v935 = vmul.f32 1.0, %v934
    %v936 = vtanh.pop %v922
    %v937 = vxor.u32 %v923, 2147483648
    %v938 = vmul.f32 %v937, 1.442695
    %v939 = vpow.pop %v938
    %v940 = vadd.f32 %v939, 1.0
    %v941 = vrcp.pop %v940
    %v942 = vmul.f32 1.0, %v941
    %v943 = vmul.f32 %v935, %v705
    %v944 = vmul.f32 %v929, %v936
    %v945 = vadd.f32 %v943, %v944
    %v946 = vtanh.pop %v945
    %v947 = vmul.f32 %v942, %v946
    %s948 = scalar_lea.vmem [#allocation2], 8
    %949 = vst [vmem:[%s948] sm:$0xff] %v947
    %s950 = scalar_lea.vmem [#allocation3], 64
    %v951 = vld [vmem:[%s950] sm:$0xff]
    %v952 = vld [vmem:[%s950 + $0x8] sm:$0xff]
    %v953 = vld [vmem:[%s950 + $0x10] sm:$0xff]
    %v954 = vld [vmem:[%s950 + $0x18] sm:$0xff]
    %v955 = vld [vmem:[#allocation9] sm:$0xff]
    %v956 = vld [vmem:[#allocation9 + $0x8] sm:$0xff]
    %v957 = vld [vmem:[#allocation9 + $0x10] sm:$0xff]
    %v958 = vld [vmem:[#allocation9 + $0x18] sm:$0xff]
    %v959 = vld [vmem:[#allocation9 + $0x20] sm:$0xff]
    %v960 = vld [vmem:[#allocation9 + $0x28] sm:$0xff]
    %v961 = vld [vmem:[#allocation9 + $0x30] sm:$0xff]
    %v962 = vld [vmem:[#allocation9 + $0x38] sm:$0xff]
    %v963 = vld [vmem:[#allocation9 + $0x40] sm:$0xff]
    %v964 = vld [vmem:[#allocation9 + $0x48] sm:$0xff]
    %v965 = vld [vmem:[#allocation9 + $0x50] sm:$0xff]
    %v966 = vld [vmem:[#allocation9 + $0x58] sm:$0xff]
    %v967 = vld [vmem:[#allocation9 + $0x60] sm:$0xff]
    %v968 = vld [vmem:[#allocation9 + $0x68] sm:$0xff]
    %v969 = vld [vmem:[#allocation9 + $0x70] sm:$0xff]
    %v970 = vld [vmem:[#allocation9 + $0x78] sm:$0xff]
    %v971 = vld [vmem:[#allocation9 + $0x80] sm:$0xff]
    %v972 = vld [vmem:[#allocation9 + $0x88] sm:$0xff]
    %v973 = vld [vmem:[#allocation9 + $0x90] sm:$0xff]
    %v974 = vld [vmem:[#allocation9 + $0x98] sm:$0xff]
    %v975 = vld [vmem:[#allocation9 + $0xa0] sm:$0xff]
    %v976 = vld [vmem:[#allocation9 + $0xa8] sm:$0xff]
    %v977 = vld [vmem:[#allocation9 + $0xb0] sm:$0xff]
    %v978 = vld [vmem:[#allocation9 + $0xb8] sm:$0xff]
    %v979 = vld [vmem:[#allocation9 + $0xc0] sm:$0xff]
    %v980 = vld [vmem:[#allocation9 + $0xc8] sm:$0xff]
    %v981 = vld [vmem:[#allocation9 + $0xd0] sm:$0xff]
    %v982 = vld [vmem:[#allocation9 + $0xd8] sm:$0xff]
    %v983 = vld [vmem:[#allocation9 + $0xe0] sm:$0xff]
    %v984 = vld [vmem:[#allocation9 + $0xe8] sm:$0xff]
    %v985 = vld [vmem:[#allocation9 + $0xf0] sm:$0xff]
    %v986 = vld [vmem:[#allocation9 + $0xf8] sm:$0xff]
    %v987 = vld [vmem:[#allocation9 + $0x100] sm:$0xff]
    %v988 = vld [vmem:[#allocation9 + $0x108] sm:$0xff]
    %v989 = vld [vmem:[#allocation9 + $0x110] sm:$0xff]
    %v990 = vld [vmem:[#allocation9 + $0x118] sm:$0xff]
    %v991 = vld [vmem:[#allocation9 + $0x120] sm:$0xff]
    %v992 = vld [vmem:[#allocation9 + $0x128] sm:$0xff]
    %v993 = vld [vmem:[#allocation9 + $0x130] sm:$0xff]
    %v994 = vld [vmem:[#allocation9 + $0x138] sm:$0xff]
    %v995 = vld [vmem:[#allocation9 + $0x140] sm:$0xff]
    %v996 = vld [vmem:[#allocation9 + $0x148] sm:$0xff]
    %v997 = vld [vmem:[#allocation9 + $0x150] sm:$0xff]
    %v998 = vld [vmem:[#allocation9 + $0x158] sm:$0xff]
    %v999 = vld [vmem:[#allocation9 + $0x160] sm:$0xff]
    %v1000 = vld [vmem:[#allocation9 + $0x168] sm:$0xff]
    %v1001 = vld [vmem:[#allocation9 + $0x170] sm:$0xff]
    %v1002 = vld [vmem:[#allocation9 + $0x178] sm:$0xff]
    %v1003 = vld [vmem:[#allocation9 + $0x180] sm:$0xff]
    %v1004 = vld [vmem:[#allocation9 + $0x188] sm:$0xff]
    %v1005 = vld [vmem:[#allocation9 + $0x190] sm:$0xff]
    %v1006 = vld [vmem:[#allocation9 + $0x198] sm:$0xff]
    %v1007 = vld [vmem:[#allocation9 + $0x1a0] sm:$0xff]
    %v1008 = vld [vmem:[#allocation9 + $0x1a8] sm:$0xff]
    %v1009 = vld [vmem:[#allocation9 + $0x1b0] sm:$0xff]
    %v1010 = vld [vmem:[#allocation9 + $0x1b8] sm:$0xff]
    %v1011 = vld [vmem:[#allocation9 + $0x1c0] sm:$0xff]
    %v1012 = vld [vmem:[#allocation9 + $0x1c8] sm:$0xff]
    %v1013 = vld [vmem:[#allocation9 + $0x1d0] sm:$0xff]
    %v1014 = vld [vmem:[#allocation9 + $0x1d8] sm:$0xff]
    %v1015 = vld [vmem:[#allocation9 + $0x1e0] sm:$0xff]
    %v1016 = vld [vmem:[#allocation9 + $0x1e8] sm:$0xff]
    %v1017 = vld [vmem:[#allocation9 + $0x1f0] sm:$0xff]
    %v1018 = vld [vmem:[#allocation9 + $0x1f8] sm:$0xff]
    %1019 = vmatprep.subr.mxu0 %v956
    %1020 = vmatpush1.msra.mxu0 %v955
    %1021 = vmatprep.subr.mxu0 %v960
    %1022 = vmatpush1.msra.mxu0 %v959
    %1023 = vmatprep.subr.mxu0 %v964
    %1024 = vmatpush1.msra.mxu0 %v963
    %1025 = vmatprep.subr.mxu0 %v968
    %1026 = vmatpush1.msra.mxu0 %v967
    %1027 = vmatprep.subr.mxu0 %v972
    %1028 = vmatpush1.msra.mxu0 %v971
    %1029 = vmatprep.subr.mxu0 %v976
    %1030 = vmatpush1.msra.mxu0 %v975
    %1031 = vmatprep.subr.mxu0 %v980
    %1032 = vmatpush1.msra.mxu0 %v979
    %1033 = vmatprep.subr.mxu0 %v984
    %1034 = vmatpush1.msra.mxu0 %v983
    %1035 = vmatprep.subr.mxu0 %v988
    %1036 = vmatpush1.msra.mxu0 %v987
    %1037 = vmatprep.subr.mxu0 %v992
    %1038 = vmatpush1.msra.mxu0 %v991
    %1039 = vmatprep.subr.mxu0 %v996
    %1040 = vmatpush1.msra.mxu0 %v995
    %1041 = vmatprep.subr.mxu0 %v1000
    %1042 = vmatpush1.msra.mxu0 %v999
    %1043 = vmatprep.subr.mxu0 %v1004
    %1044 = vmatpush1.msra.mxu0 %v1003
    %1045 = vmatprep.subr.mxu0 %v1008
    %1046 = vmatpush1.msra.mxu0 %v1007
    %1047 = vmatprep.subr.mxu0 %v1012
    %1048 = vmatpush1.msra.mxu0 %v1011
    %1049 = vmatprep.subr.mxu0 %v1016
    %1050 = vmatpush1.msra.mxu0 %v1015
    %1051 = vmatprep.subr.mxu0 0.0
    %1052 = vmatpush1.msra.mxu0 0.0
    %1053 = vmatprep.subr.mxu0 0.0
    %1054 = vmatpush1.msra.mxu0 0.0
    %1055 = vmatprep.subr.mxu0 0.0
    %1056 = vmatpush1.msra.mxu0 0.0
    %1057 = vmatprep.subr.mxu0 0.0
    %1058 = vmatpush1.msra.mxu0 0.0
    %1059 = vmatprep.subr.mxu0 0.0
    %1060 = vmatpush1.msra.mxu0 0.0
    %1061 = vmatprep.subr.mxu0 0.0
    %1062 = vmatpush1.msra.mxu0 0.0
    %1063 = vmatprep.subr.mxu0 0.0
    %1064 = vmatpush1.msra.mxu0 0.0
    %1065 = vmatprep.subr.mxu0 0.0
    %1066 = vmatpush1.msra.mxu0 0.0
    %1067 = vmatprep.subr.mxu0 0.0
    %1068 = vmatpush1.msra.mxu0 0.0
    %1069 = vmatprep.subr.mxu0 0.0
    %1070 = vmatpush1.msra.mxu0 0.0
    %1071 = vmatprep.subr.mxu0 0.0
    %1072 = vmatpush1.msra.mxu0 0.0
    %1073 = vmatprep.subr.mxu0 0.0
    %1074 = vmatpush1.msra.mxu0 0.0
    %1075 = vmatprep.subr.mxu0 0.0
    %1076 = vmatpush1.msra.mxu0 0.0
    %1077 = vmatprep.subr.mxu0 0.0
    %1078 = vmatpush1.msra.mxu0 0.0
    %1079 = vmatprep.subr.mxu0 0.0
    %1080 = vmatpush1.msra.mxu0 0.0
    %1081 = vmatprep.subr.mxu0 0.0
    %1082 = vmatpush1.msra.mxu0 0.0
    %1083 = vmatprep.mubr.f32.mxu0 0.0
    %1084 = vmatmul.mubr.f32.gmra.mrb[0].mxu0 %v947
    %v1085 = vpop.f32.mrb[0].mxu0
    %v1086 = vadd.f32 0.0, %v1085
    %v1087 = vpop.f32.mrb[0].mxu0
    %v1088 = vadd.f32 0.0, %v1087
    %1089 = vdwg.mxu0
    %1090 = vmatprep.subr.mxu0 %v958
    %1091 = vmatpush1.msra.mxu0 %v957
    %1092 = vmatprep.subr.mxu0 %v962
    %1093 = vmatpush1.msra.mxu0 %v961
    %1094 = vmatprep.subr.mxu0 %v966
    %1095 = vmatpush1.msra.mxu0 %v965
    %1096 = vmatprep.subr.mxu0 %v970
    %1097 = vmatpush1.msra.mxu0 %v969
    %1098 = vmatprep.subr.mxu0 %v974
    %1099 = vmatpush1.msra.mxu0 %v973
    %1100 = vmatprep.subr.mxu0 %v978
    %1101 = vmatpush1.msra.mxu0 %v977
    %1102 = vmatprep.subr.mxu0 %v982
    %1103 = vmatpush1.msra.mxu0 %v981
    %1104 = vmatprep.subr.mxu0 %v986
    %1105 = vmatpush1.msra.mxu0 %v985
    %1106 = vmatprep.subr.mxu0 %v990
    %1107 = vmatpush1.msra.mxu0 %v989
    %1108 = vmatprep.subr.mxu0 %v994
    %1109 = vmatpush1.msra.mxu0 %v993
    %1110 = vmatprep.subr.mxu0 %v998
    %1111 = vmatpush1.msra.mxu0 %v997
    %1112 = vmatprep.subr.mxu0 %v1002
    %1113 = vmatpush1.msra.mxu0 %v1001
    %1114 = vmatprep.subr.mxu0 %v1006
    %1115 = vmatpush1.msra.mxu0 %v1005
    %1116 = vmatprep.subr.mxu0 %v1010
    %1117 = vmatpush1.msra.mxu0 %v1009
    %1118 = vmatprep.subr.mxu0 %v1014
    %1119 = vmatpush1.msra.mxu0 %v1013
    %1120 = vmatprep.subr.mxu0 %v1018
    %1121 = vmatpush1.msra.mxu0 %v1017
    %1122 = vmatprep.subr.mxu0 0.0
    %1123 = vmatpush1.msra.mxu0 0.0
    %1124 = vmatprep.subr.mxu0 0.0
    %1125 = vmatpush1.msra.mxu0 0.0
    %1126 = vmatprep.subr.mxu0 0.0
    %1127 = vmatpush1.msra.mxu0 0.0
    %1128 = vmatprep.subr.mxu0 0.0
    %1129 = vmatpush1.msra.mxu0 0.0
    %1130 = vmatprep.subr.mxu0 0.0
    %1131 = vmatpush1.msra.mxu0 0.0
    %1132 = vmatprep.subr.mxu0 0.0
    %1133 = vmatpush1.msra.mxu0 0.0
    %1134 = vmatprep.subr.mxu0 0.0
    %1135 = vmatpush1.msra.mxu0 0.0
    %1136 = vmatprep.subr.mxu0 0.0
    %1137 = vmatpush1.msra.mxu0 0.0
    %1138 = vmatprep.subr.mxu0 0.0
    %1139 = vmatpush1.msra.mxu0 0.0
    %1140 = vmatprep.subr.mxu0 0.0
    %1141 = vmatpush1.msra.mxu0 0.0
    %1142 = vmatprep.subr.mxu0 0.0
    %1143 = vmatpush1.msra.mxu0 0.0
    %1144 = vmatprep.subr.mxu0 0.0
    %1145 = vmatpush1.msra.mxu0 0.0
    %1146 = vmatprep.subr.mxu0 0.0
    %1147 = vmatpush1.msra.mxu0 0.0
    %1148 = vmatprep.subr.mxu0 0.0
    %1149 = vmatpush1.msra.mxu0 0.0
    %1150 = vmatprep.subr.mxu0 0.0
    %1151 = vmatpush1.msra.mxu0 0.0
    %1152 = vmatprep.subr.mxu0 0.0
    %1153 = vmatpush1.msra.mxu0 0.0
    %1154 = vmatprep.mubr.f32.mxu0 0.0
    %1155 = vmatmul.mubr.f32.gmra.mrb[0].mxu0 %v947
    %v1156 = vpop.f32.mrb[0].mxu0
    %v1157 = vadd.f32 0.0, %v1156
    %v1158 = vpop.f32.mrb[0].mxu0
    %v1159 = vadd.f32 0.0, %v1158
    %1160 = vdwg.mxu0
    %v1161 = vadd.f32 %v951, %v1086
    %v1162 = vadd.f32 %v952, %v1088
    %v1163 = vadd.f32 %v953, %v1157
    %v1164 = vadd.f32 %v954, %v1159
    %v1165 = vxor.u32 %v1161, 2147483648
    %v1166 = vmul.f32 %v1165, 1.442695
    %v1167 = vpow.pop %v1166
    %v1168 = vadd.f32 %v1167, 1.0
    %v1169 = vrcp.pop %v1168
    %v1170 = vmul.f32 1.0, %v1169
    %v1171 = vxor.u32 %v1162, 2147483648
    %v1172 = vmul.f32 %v1171, 1.442695
    %v1173 = vpow.pop %v1172
    %v1174 = vadd.f32 %v1173, 1.0
    %v1175 = vrcp.pop %v1174
    %v1176 = vmul.f32 1.0, %v1175
    %v1177 = vtanh.pop %v1163
    %v1178 = vxor.u32 %v1164, 2147483648
    %v1179 = vmul.f32 %v1178, 1.442695
    %v1180 = vpow.pop %v1179
    %v1181 = vadd.f32 %v1180, 1.0
    %v1182 = vrcp.pop %v1181
    %v1183 = vmul.f32 1.0, %v1182
    %v1184 = vmul.f32 %v1176, %v945
    %v1185 = vmul.f32 %v1170, %v1177
    %v1186 = vadd.f32 %v1184, %v1185
    %v1187 = vtanh.pop %v1186
    %v1188 = vmul.f32 %v1183, %v1187
    %s1189 = scalar_lea.vmem [#allocation2], 16
    %1190 = vst [vmem:[%s1189] sm:$0xff] %v1188
    %s1191 = scalar_lea.vmem [#allocation3], 96
    %v1192 = vld [vmem:[%s1191] sm:$0xff]
    %v1193 = vld [vmem:[%s1191 + $0x8] sm:$0xff]
    %v1194 = vld [vmem:[%s1191 + $0x10] sm:$0xff]
    %v1195 = vld [vmem:[%s1191 + $0x18] sm:$0xff]
    %v1196 = vld [vmem:[#allocation9] sm:$0xff]
    %v1197 = vld [vmem:[#allocation9 + $0x8] sm:$0xff]
    %v1198 = vld [vmem:[#allocation9 + $0x10] sm:$0xff]
    %v1199 = vld [vmem:[#allocation9 + $0x18] sm:$0xff]
    %v1200 = vld [vmem:[#allocation9 + $0x20] sm:$0xff]
    %v1201 = vld [vmem:[#allocation9 + $0x28] sm:$0xff]
    %v1202 = vld [vmem:[#allocation9 + $0x30] sm:$0xff]
    %v1203 = vld [vmem:[#allocation9 + $0x38] sm:$0xff]
    %v1204 = vld [vmem:[#allocation9 + $0x40] sm:$0xff]
    %v1205 = vld [vmem:[#allocation9 + $0x48] sm:$0xff]
    %v1206 = vld [vmem:[#allocation9 + $0x50] sm:$0xff]
    %v1207 = vld [vmem:[#allocation9 + $0x58] sm:$0xff]
    %v1208 = vld [vmem:[#allocation9 + $0x60] sm:$0xff]
    %v1209 = vld [vmem:[#allocation9 + $0x68] sm:$0xff]
    %v1210 = vld [vmem:[#allocation9 + $0x70] sm:$0xff]
    %v1211 = vld [vmem:[#allocation9 + $0x78] sm:$0xff]
    %v1212 = vld [vmem:[#allocation9 + $0x80] sm:$0xff]
    %v1213 = vld [vmem:[#allocation9 + $0x88] sm:$0xff]
    %v1214 = vld [vmem:[#allocation9 + $0x90] sm:$0xff]
    %v1215 = vld [vmem:[#allocation9 + $0x98] sm:$0xff]
    %v1216 = vld [vmem:[#allocation9 + $0xa0] sm:$0xff]
    %v1217 = vld [vmem:[#allocation9 + $0xa8] sm:$0xff]
    %v1218 = vld [vmem:[#allocation9 + $0xb0] sm:$0xff]
    %v1219 = vld [vmem:[#allocation9 + $0xb8] sm:$0xff]
    %v1220 = vld [vmem:[#allocation9 + $0xc0] sm:$0xff]
    %v1221 = vld [vmem:[#allocation9 + $0xc8] sm:$0xff]
    %v1222 = vld [vmem:[#allocation9 + $0xd0] sm:$0xff]
    %v1223 = vld [vmem:[#allocation9 + $0xd8] sm:$0xff]
    %v1224 = vld [vmem:[#allocation9 + $0xe0] sm:$0xff]
    %v1225 = vld [vmem:[#allocation9 + $0xe8] sm:$0xff]
    %v1226 = vld [vmem:[#allocation9 + $0xf0] sm:$0xff]
    %v1227 = vld [vmem:[#allocation9 + $0xf8] sm:$0xff]
    %v1228 = vld [vmem:[#allocation9 + $0x100] sm:$0xff]
    %v1229 = vld [vmem:[#allocation9 + $0x108] sm:$0xff]
    %v1230 = vld [vmem:[#allocation9 + $0x110] sm:$0xff]
    %v1231 = vld [vmem:[#allocation9 + $0x118] sm:$0xff]
    %v1232 = vld [vmem:[#allocation9 + $0x120] sm:$0xff]
    %v1233 = vld [vmem:[#allocation9 + $0x128] sm:$0xff]
    %v1234 = vld [vmem:[#allocation9 + $0x130] sm:$0xff]
    %v1235 = vld [vmem:[#allocation9 + $0x138] sm:$0xff]
    %v1236 = vld [vmem:[#allocation9 + $0x140] sm:$0xff]
    %v1237 = vld [vmem:[#allocation9 + $0x148] sm:$0xff]
    %v1238 = vld [vmem:[#allocation9 + $0x150] sm:$0xff]
    %v1239 = vld [vmem:[#allocation9 + $0x158] sm:$0xff]
    %v1240 = vld [vmem:[#allocation9 + $0x160] sm:$0xff]
    %v1241 = vld [vmem:[#allocation9 + $0x168] sm:$0xff]
    %v1242 = vld [vmem:[#allocation9 + $0x170] sm:$0xff]
    %v1243 = vld [vmem:[#allocation9 + $0x178] sm:$0xff]
    %v1244 = vld [vmem:[#allocation9 + $0x180] sm:$0xff]
    %v1245 = vld [vmem:[#allocation9 + $0x188] sm:$0xff]
    %v1246 = vld [vmem:[#allocation9 + $0x190] sm:$0xff]
    %v1247 = vld [vmem:[#allocation9 + $0x198] sm:$0xff]
    %v1248 = vld [vmem:[#allocation9 + $0x1a0] sm:$0xff]
    %v1249 = vld [vmem:[#allocation9 + $0x1a8] sm:$0xff]
    %v1250 = vld [vmem:[#allocation9 + $0x1b0] sm:$0xff]
    %v1251 = vld [vmem:[#allocation9 + $0x1b8] sm:$0xff]
    %v1252 = vld [vmem:[#allocation9 + $0x1c0] sm:$0xff]
    %v1253 = vld [vmem:[#allocation9 + $0x1c8] sm:$0xff]
    %v1254 = vld [vmem:[#allocation9 + $0x1d0] sm:$0xff]
    %v1255 = vld [vmem:[#allocation9 + $0x1d8] sm:$0xff]
    %v1256 = vld [vmem:[#allocation9 + $0x1e0] sm:$0xff]
    %v1257 = vld [vmem:[#allocation9 + $0x1e8] sm:$0xff]
    %v1258 = vld [vmem:[#allocation9 + $0x1f0] sm:$0xff]
    %v1259 = vld [vmem:[#allocation9 + $0x1f8] sm:$0xff]
    %1260 = vmatprep.subr.mxu0 %v1197
    %1261 = vmatpush1.msra.mxu0 %v1196
    %1262 = vmatprep.subr.mxu0 %v1201
    %1263 = vmatpush1.msra.mxu0 %v1200
    %1264 = vmatprep.subr.mxu0 %v1205
    %1265 = vmatpush1.msra.mxu0 %v1204
    %1266 = vmatprep.subr.mxu0 %v1209
    %1267 = vmatpush1.msra.mxu0 %v1208
    %1268 = vmatprep.subr.mxu0 %v1213
    %1269 = vmatpush1.msra.mxu0 %v1212
    %1270 = vmatprep.subr.mxu0 %v1217
    %1271 = vmatpush1.msra.mxu0 %v1216
    %1272 = vmatprep.subr.mxu0 %v1221
    %1273 = vmatpush1.msra.mxu0 %v1220
    %1274 = vmatprep.subr.mxu0 %v1225
    %1275 = vmatpush1.msra.mxu0 %v1224
    %1276 = vmatprep.subr.mxu0 %v1229
    %1277 = vmatpush1.msra.mxu0 %v1228
    %1278 = vmatprep.subr.mxu0 %v1233
    %1279 = vmatpush1.msra.mxu0 %v1232
    %1280 = vmatprep.subr.mxu0 %v1237
    %1281 = vmatpush1.msra.mxu0 %v1236
    %1282 = vmatprep.subr.mxu0 %v1241
    %1283 = vmatpush1.msra.mxu0 %v1240
    %1284 = vmatprep.subr.mxu0 %v1245
    %1285 = vmatpush1.msra.mxu0 %v1244
    %1286 = vmatprep.subr.mxu0 %v1249
    %1287 = vmatpush1.msra.mxu0 %v1248
    %1288 = vmatprep.subr.mxu0 %v1253
    %1289 = vmatpush1.msra.mxu0 %v1252
    %1290 = vmatprep.subr.mxu0 %v1257
    %1291 = vmatpush1.msra.mxu0 %v1256
    %1292 = vmatprep.subr.mxu0 0.0
    %1293 = vmatpush1.msra.mxu0 0.0
    %1294 = vmatprep.subr.mxu0 0.0
    %1295 = vmatpush1.msra.mxu0 0.0
    %1296 = vmatprep.subr.mxu0 0.0
    %1297 = vmatpush1.msra.mxu0 0.0
    %1298 = vmatprep.subr.mxu0 0.0
    %1299 = vmatpush1.msra.mxu0 0.0
    %1300 = vmatprep.subr.mxu0 0.0
    %1301 = vmatpush1.msra.mxu0 0.0
    %1302 = vmatprep.subr.mxu0 0.0
    %1303 = vmatpush1.msra.mxu0 0.0
    %1304 = vmatprep.subr.mxu0 0.0
    %1305 = vmatpush1.msra.mxu0 0.0
    %1306 = vmatprep.subr.mxu0 0.0
    %1307 = vmatpush1.msra.mxu0 0.0
    %1308 = vmatprep.subr.mxu0 0.0
    %1309 = vmatpush1.msra.mxu0 0.0
    %1310 = vmatprep.subr.mxu0 0.0
    %1311 = vmatpush1.msra.mxu0 0.0
    %1312 = vmatprep.subr.mxu0 0.0
    %1313 = vmatpush1.msra.mxu0 0.0
    %1314 = vmatprep.subr.mxu0 0.0
    %1315 = vmatpush1.msra.mxu0 0.0
    %1316 = vmatprep.subr.mxu0 0.0
    %1317 = vmatpush1.msra.mxu0 0.0
    %1318 = vmatprep.subr.mxu0 0.0
    %1319 = vmatpush1.msra.mxu0 0.0
    %1320 = vmatprep.subr.mxu0 0.0
    %1321 = vmatpush1.msra.mxu0 0.0
    %1322 = vmatprep.subr.mxu0 0.0
    %1323 = vmatpush1.msra.mxu0 0.0
    %1324 = vmatprep.mubr.f32.mxu0 0.0
    %1325 = vmatmul.mubr.f32.gmra.mrb[0].mxu0 %v1188
    %v1326 = vpop.f32.mrb[0].mxu0
    %v1327 = vadd.f32 0.0, %v1326
    %v1328 = vpop.f32.mrb[0].mxu0
    %v1329 = vadd.f32 0.0, %v1328
    %1330 = vdwg.mxu0
    %1331 = vmatprep.subr.mxu0 %v1199
    %1332 = vmatpush1.msra.mxu0 %v1198
    %1333 = vmatprep.subr.mxu0 %v1203
    %1334 = vmatpush1.msra.mxu0 %v1202
    %1335 = vmatprep.subr.mxu0 %v1207
    %1336 = vmatpush1.msra.mxu0 %v1206
    %1337 = vmatprep.subr.mxu0 %v1211
    %1338 = vmatpush1.msra.mxu0 %v1210
    %1339 = vmatprep.subr.mxu0 %v1215
    %1340 = vmatpush1.msra.mxu0 %v1214
    %1341 = vmatprep.subr.mxu0 %v1219
    %1342 = vmatpush1.msra.mxu0 %v1218
    %1343 = vmatprep.subr.mxu0 %v1223
    %1344 = vmatpush1.msra.mxu0 %v1222
    %1345 = vmatprep.subr.mxu0 %v1227
    %1346 = vmatpush1.msra.mxu0 %v1226
    %1347 = vmatprep.subr.mxu0 %v1231
    %1348 = vmatpush1.msra.mxu0 %v1230
    %1349 = vmatprep.subr.mxu0 %v1235
    %1350 = vmatpush1.msra.mxu0 %v1234
    %1351 = vmatprep.subr.mxu0 %v1239
    %1352 = vmatpush1.msra.mxu0 %v1238
    %1353 = vmatprep.subr.mxu0 %v1243
    %1354 = vmatpush1.msra.mxu0 %v1242
    %1355 = vmatprep.subr.mxu0 %v1247
    %1356 = vmatpush1.msra.mxu0 %v1246
    %1357 = vmatprep.subr.mxu0 %v1251
    %1358 = vmatpush1.msra.mxu0 %v1250
    %1359 = vmatprep.subr.mxu0 %v1255
    %1360 = vmatpush1.msra.mxu0 %v1254
    %1361 = vmatprep.subr.mxu0 %v1259
    %1362 = vmatpush1.msra.mxu0 %v1258
    %1363 = vmatprep.subr.mxu0 0.0
    %1364 = vmatpush1.msra.mxu0 0.0
    %1365 = vmatprep.subr.mxu0 0.0
    %1366 = vmatpush1.msra.mxu0 0.0
    %1367 = vmatprep.subr.mxu0 0.0
    %1368 = vmatpush1.msra.mxu0 0.0
    %1369 = vmatprep.subr.mxu0 0.0
    %1370 = vmatpush1.msra.mxu0 0.0
    %1371 = vmatprep.subr.mxu0 0.0
    %1372 = vmatpush1.msra.mxu0 0.0
    %1373 = vmatprep.subr.mxu0 0.0
    %1374 = vmatpush1.msra.mxu0 0.0
    %1375 = vmatprep.subr.mxu0 0.0
    %1376 = vmatpush1.msra.mxu0 0.0
    %1377 = vmatprep.subr.mxu0 0.0
    %1378 = vmatpush1.msra.mxu0 0.0
    %1379 = vmatprep.subr.mxu0 0.0
    %1380 = vmatpush1.msra.mxu0 0.0
    %1381 = vmatprep.subr.mxu0 0.0
    %1382 = vmatpush1.msra.mxu0 0.0
    %1383 = vmatprep.subr.mxu0 0.0
    %1384 = vmatpush1.msra.mxu0 0.0
    %1385 = vmatprep.subr.mxu0 0.0
    %1386 = vmatpush1.msra.mxu0 0.0
    %1387 = vmatprep.subr.mxu0 0.0
    %1388 = vmatpush1.msra.mxu0 0.0
    %1389 = vmatprep.subr.mxu0 0.0
    %1390 = vmatpush1.msra.mxu0 0.0
    %1391 = vmatprep.subr.mxu0 0.0
    %1392 = vmatpush1.msra.mxu0 0.0
    %1393 = vmatprep.subr.mxu0 0.0
    %1394 = vmatpush1.msra.mxu0 0.0
    %1395 = vmatprep.mubr.f32.mxu0 0.0
    %1396 = vmatmul.mubr.f32.gmra.mrb[0].mxu0 %v1188
    %v1397 = vpop.f32.mrb[0].mxu0
    %v1398 = vadd.f32 0.0, %v1397
    %v1399 = vpop.f32.mrb[0].mxu0
    %v1400 = vadd.f32 0.0, %v1399
    %1401 = vdwg.mxu0
    %v1402 = vadd.f32 %v1192, %v1327
    %v1403 = vadd.f32 %v1193, %v1329
    %v1404 = vadd.f32 %v1194, %v1398
    %v1405 = vadd.f32 %v1195, %v1400
    %v1406 = vxor.u32 %v1402, 2147483648
    %v1407 = vmul.f32 %v1406, 1.442695
    %v1408 = vpow.pop %v1407
    %v1409 = vadd.f32 %v1408, 1.0
    %v1410 = vrcp.pop %v1409
    %v1411 = vmul.f32 1.0, %v1410
    %v1412 = vxor.u32 %v1403, 2147483648
    %v1413 = vmul.f32 %v1412, 1.442695
    %v1414 = vpow.pop %v1413
    %v1415 = vadd.f32 %v1414, 1.0
    %v1416 = vrcp.pop %v1415
    %v1417 = vmul.f32 1.0, %v1416
    %v1418 = vtanh.pop %v1404
    %v1419 = vxor.u32 %v1405, 2147483648
    %v1420 = vmul.f32 %v1419, 1.442695
    %v1421 = vpow.pop %v1420
    %v1422 = vadd.f32 %v1421, 1.0
    %v1423 = vrcp.pop %v1422
    %v1424 = vmul.f32 1.0, %v1423
    %v1425 = vmul.f32 %v1417, %v1186
    %v1426 = vmul.f32 %v1411, %v1418
    %v1427 = vadd.f32 %v1425, %v1426
    %v1428 = vtanh.pop %v1427
    %v1429 = vmul.f32 %v1424, %v1428
    %s1430 = scalar_lea.vmem [#allocation2], 24
    %1431 = vst [vmem:[%s1430] sm:$0xff] %v1429
    %s1432 = scalar_lea.vmem [#allocation3], 128
    %v1433 = vld [vmem:[%s1432] sm:$0xff]
    %v1434 = vld [vmem:[%s1432 + $0x8] sm:$0xff]
    %v1435 = vld [vmem:[%s1432 + $0x10] sm:$0xff]
    %v1436 = vld [vmem:[%s1432 + $0x18] sm:$0xff]
    %v1437 = vld [vmem:[#allocation9] sm:$0xff]
    %v1438 = vld [vmem:[#allocation9 + $0x8] sm:$0xff]
    %v1439 = vld [vmem:[#allocation9 + $0x10] sm:$0xff]
    %v1440 = vld [vmem:[#allocation9 + $0x18] sm:$0xff]
    %v1441 = vld [vmem:[#allocation9 + $0x20] sm:$0xff]
    %v1442 = vld [vmem:[#allocation9 + $0x28] sm:$0xff]
    %v1443 = vld [vmem:[#allocation9 + $0x30] sm:$0xff]
    %v1444 = vld [vmem:[#allocation9 + $0x38] sm:$0xff]
    %v1445 = vld [vmem:[#allocation9 + $0x40] sm:$0xff]
    %v1446 = vld [vmem:[#allocation9 + $0x48] sm:$0xff]
    %v1447 = vld [vmem:[#allocation9 + $0x50] sm:$0xff]
    %v1448 = vld [vmem:[#allocation9 + $0x58] sm:$0xff]
    %v1449 = vld [vmem:[#allocation9 + $0x60] sm:$0xff]
    %v1450 = vld [vmem:[#allocation9 + $0x68] sm:$0xff]
    %v1451 = vld [vmem:[#allocation9 + $0x70] sm:$0xff]
    %v1452 = vld [vmem:[#allocation9 + $0x78] sm:$0xff]
    %v1453 = vld [vmem:[#allocation9 + $0x80] sm:$0xff]
    %v1454 = vld [vmem:[#allocation9 + $0x88] sm:$0xff]
    %v1455 = vld [vmem:[#allocation9 + $0x90] sm:$0xff]
    %v1456 = vld [vmem:[#allocation9 + $0x98] sm:$0xff]
    %v1457 = vld [vmem:[#allocation9 + $0xa0] sm:$0xff]
    %v1458 = vld [vmem:[#allocation9 + $0xa8] sm:$0xff]
    %v1459 = vld [vmem:[#allocation9 + $0xb0] sm:$0xff]
    %v1460 = vld [vmem:[#allocation9 + $0xb8] sm:$0xff]
    %v1461 = vld [vmem:[#allocation9 + $0xc0] sm:$0xff]
    %v1462 = vld [vmem:[#allocation9 + $0xc8] sm:$0xff]
    %v1463 = vld [vmem:[#allocation9 + $0xd0] sm:$0xff]
    %v1464 = vld [vmem:[#allocation9 + $0xd8] sm:$0xff]
    %v1465 = vld [vmem:[#allocation9 + $0xe0] sm:$0xff]
    %v1466 = vld [vmem:[#allocation9 + $0xe8] sm:$0xff]
    %v1467 = vld [vmem:[#allocation9 + $0xf0] sm:$0xff]
    %v1468 = vld [vmem:[#allocation9 + $0xf8] sm:$0xff]
    %v1469 = vld [vmem:[#allocation9 + $0x100] sm:$0xff]
    %v1470 = vld [vmem:[#allocation9 + $0x108] sm:$0xff]
    %v1471 = vld [vmem:[#allocation9 + $0x110] sm:$0xff]
    %v1472 = vld [vmem:[#allocation9 + $0x118] sm:$0xff]
    %v1473 = vld [vmem:[#allocation9 + $0x120] sm:$0xff]
    %v1474 = vld [vmem:[#allocation9 + $0x128] sm:$0xff]
    %v1475 = vld [vmem:[#allocation9 + $0x130] sm:$0xff]
    %v1476 = vld [vmem:[#allocation9 + $0x138] sm:$0xff]
    %v1477 = vld [vmem:[#allocation9 + $0x140] sm:$0xff]
    %v1478 = vld [vmem:[#allocation9 + $0x148] sm:$0xff]
    %v1479 = vld [vmem:[#allocation9 + $0x150] sm:$0xff]
    %v1480 = vld [vmem:[#allocation9 + $0x158] sm:$0xff]
    %v1481 = vld [vmem:[#allocation9 + $0x160] sm:$0xff]
    %v1482 = vld [vmem:[#allocation9 + $0x168] sm:$0xff]
    %v1483 = vld [vmem:[#allocation9 + $0x170] sm:$0xff]
    %v1484 = vld [vmem:[#allocation9 + $0x178] sm:$0xff]
    %v1485 = vld [vmem:[#allocation9 + $0x180] sm:$0xff]
    %v1486 = vld [vmem:[#allocation9 + $0x188] sm:$0xff]
    %v1487 = vld [vmem:[#allocation9 + $0x190] sm:$0xff]
    %v1488 = vld [vmem:[#allocation9 + $0x198] sm:$0xff]
    %v1489 = vld [vmem:[#allocation9 + $0x1a0] sm:$0xff]
    %v1490 = vld [vmem:[#allocation9 + $0x1a8] sm:$0xff]
    %v1491 = vld [vmem:[#allocation9 + $0x1b0] sm:$0xff]
    %v1492 = vld [vmem:[#allocation9 + $0x1b8] sm:$0xff]
    %v1493 = vld [vmem:[#allocation9 + $0x1c0] sm:$0xff]
    %v1494 = vld [vmem:[#allocation9 + $0x1c8] sm:$0xff]
    %v1495 = vld [vmem:[#allocation9 + $0x1d0] sm:$0xff]
    %v1496 = vld [vmem:[#allocation9 + $0x1d8] sm:$0xff]
    %v1497 = vld [vmem:[#allocation9 + $0x1e0] sm:$0xff]
    %v1498 = vld [vmem:[#allocation9 + $0x1e8] sm:$0xff]
    %v1499 = vld [vmem:[#allocation9 + $0x1f0] sm:$0xff]
    %v1500 = vld [vmem:[#allocation9 + $0x1f8] sm:$0xff]
    %1501 = vmatprep.subr.mxu0 %v1438
    %1502 = vmatpush1.msra.mxu0 %v1437
    %1503 = vmatprep.subr.mxu0 %v1442
    %1504 = vmatpush1.msra.mxu0 %v1441
    %1505 = vmatprep.subr.mxu0 %v1446
    %1506 = vmatpush1.msra.mxu0 %v1445
    %1507 = vmatprep.subr.mxu0 %v1450
    %1508 = vmatpush1.msra.mxu0 %v1449
    %1509 = vmatprep.subr.mxu0 %v1454
    %1510 = vmatpush1.msra.mxu0 %v1453
    %1511 = vmatprep.subr.mxu0 %v1458
    %1512 = vmatpush1.msra.mxu0 %v1457
    %1513 = vmatprep.subr.mxu0 %v1462
    %1514 = vmatpush1.msra.mxu0 %v1461
    %1515 = vmatprep.subr.mxu0 %v1466
    %1516 = vmatpush1.msra.mxu0 %v1465
    %1517 = vmatprep.subr.mxu0 %v1470
    %1518 = vmatpush1.msra.mxu0 %v1469
    %1519 = vmatprep.subr.mxu0 %v1474
    %1520 = vmatpush1.msra.mxu0 %v1473
    %1521 = vmatprep.subr.mxu0 %v1478
    %1522 = vmatpush1.msra.mxu0 %v1477
    %1523 = vmatprep.subr.mxu0 %v1482
    %1524 = vmatpush1.msra.mxu0 %v1481
    %1525 = vmatprep.subr.mxu0 %v1486
    %1526 = vmatpush1.msra.mxu0 %v1485
    %1527 = vmatprep.subr.mxu0 %v1490
    %1528 = vmatpush1.msra.mxu0 %v1489
    %1529 = vmatprep.subr.mxu0 %v1494
    %1530 = vmatpush1.msra.mxu0 %v1493
    %1531 = vmatprep.subr.mxu0 %v1498
    %1532 = vmatpush1.msra.mxu0 %v1497
    %1533 = vmatprep.subr.mxu0 0.0
    %1534 = vmatpush1.msra.mxu0 0.0
    %1535 = vmatprep.subr.mxu0 0.0
    %1536 = vmatpush1.msra.mxu0 0.0
    %1537 = vmatprep.subr.mxu0 0.0
    %1538 = vmatpush1.msra.mxu0 0.0
    %1539 = vmatprep.subr.mxu0 0.0
    %1540 = vmatpush1.msra.mxu0 0.0
    %1541 = vmatprep.subr.mxu0 0.0
    %1542 = vmatpush1.msra.mxu0 0.0
    %1543 = vmatprep.subr.mxu0 0.0
    %1544 = vmatpush1.msra.mxu0 0.0
    %1545 = vmatprep.subr.mxu0 0.0
    %1546 = vmatpush1.msra.mxu0 0.0
    %1547 = vmatprep.subr.mxu0 0.0
    %1548 = vmatpush1.msra.mxu0 0.0
    %1549 = vmatprep.subr.mxu0 0.0
    %1550 = vmatpush1.msra.mxu0 0.0
    %1551 = vmatprep.subr.mxu0 0.0
    %1552 = vmatpush1.msra.mxu0 0.0
    %1553 = vmatprep.subr.mxu0 0.0
    %1554 = vmatpush1.msra.mxu0 0.0
    %1555 = vmatprep.subr.mxu0 0.0
    %1556 = vmatpush1.msra.mxu0 0.0
    %1557 = vmatprep.subr.mxu0 0.0
    %1558 = vmatpush1.msra.mxu0 0.0
    %1559 = vmatprep.subr.mxu0 0.0
    %1560 = vmatpush1.msra.mxu0 0.0
    %1561 = vmatprep.subr.mxu0 0.0
    %1562 = vmatpush1.msra.mxu0 0.0
    %1563 = vmatprep.subr.mxu0 0.0
    %1564 = vmatpush1.msra.mxu0 0.0
    %1565 = vmatprep.mubr.f32.mxu0 0.0
    %1566 = vmatmul.mubr.f32.gmra.mrb[0].mxu0 %v1429
    %v1567 = vpop.f32.mrb[0].mxu0
    %v1568 = vadd.f32 0.0, %v1567
    %v1569 = vpop.f32.mrb[0].mxu0
    %v1570 = vadd.f32 0.0, %v1569
    %1571 = vdwg.mxu0
    %1572 = vmatprep.subr.mxu0 %v1440
    %1573 = vmatpush1.msra.mxu0 %v1439
    %1574 = vmatprep.subr.mxu0 %v1444
    %1575 = vmatpush1.msra.mxu0 %v1443
    %1576 = vmatprep.subr.mxu0 %v1448
    %1577 = vmatpush1.msra.mxu0 %v1447
    %1578 = vmatprep.subr.mxu0 %v1452
    %1579 = vmatpush1.msra.mxu0 %v1451
    %1580 = vmatprep.subr.mxu0 %v1456
    %1581 = vmatpush1.msra.mxu0 %v1455
    %1582 = vmatprep.subr.mxu0 %v1460
    %1583 = vmatpush1.msra.mxu0 %v1459
    %1584 = vmatprep.subr.mxu0 %v1464
    %1585 = vmatpush1.msra.mxu0 %v1463
    %1586 = vmatprep.subr.mxu0 %v1468
    %1587 = vmatpush1.msra.mxu0 %v1467
    %1588 = vmatprep.subr.mxu0 %v1472
    %1589 = vmatpush1.msra.mxu0 %v1471
    %1590 = vmatprep.subr.mxu0 %v1476
    %1591 = vmatpush1.msra.mxu0 %v1475
    %1592 = vmatprep.subr.mxu0 %v1480
    %1593 = vmatpush1.msra.mxu0 %v1479
    %1594 = vmatprep.subr.mxu0 %v1484
    %1595 = vmatpush1.msra.mxu0 %v1483
    %1596 = vmatprep.subr.mxu0 %v1488
    %1597 = vmatpush1.msra.mxu0 %v1487
    %1598 = vmatprep.subr.mxu0 %v1492
    %1599 = vmatpush1.msra.mxu0 %v1491
    %1600 = vmatprep.subr.mxu0 %v1496
    %1601 = vmatpush1.msra.mxu0 %v1495
    %1602 = vmatprep.subr.mxu0 %v1500
    %1603 = vmatpush1.msra.mxu0 %v1499
    %1604 = vmatprep.subr.mxu0 0.0
    %1605 = vmatpush1.msra.mxu0 0.0
    %1606 = vmatprep.subr.mxu0 0.0
    %1607 = vmatpush1.msra.mxu0 0.0
    %1608 = vmatprep.subr.mxu0 0.0
    %1609 = vmatpush1.msra.mxu0 0.0
    %1610 = vmatprep.subr.mxu0 0.0
    %1611 = vmatpush1.msra.mxu0 0.0
    %1612 = vmatprep.subr.mxu0 0.0
    %1613 = vmatpush1.msra.mxu0 0.0
    %1614 = vmatprep.subr.mxu0 0.0
    %1615 = vmatpush1.msra.mxu0 0.0
    %1616 = vmatprep.subr.mxu0 0.0
    %1617 = vmatpush1.msra.mxu0 0.0
    %1618 = vmatprep.subr.mxu0 0.0
    %1619 = vmatpush1.msra.mxu0 0.0
    %1620 = vmatprep.subr.mxu0 0.0
    %1621 = vmatpush1.msra.mxu0 0.0
    %1622 = vmatprep.subr.mxu0 0.0
    %1623 = vmatpush1.msra.mxu0 0.0
    %1624 = vmatprep.subr.mxu0 0.0
    %1625 = vmatpush1.msra.mxu0 0.0
    %1626 = vmatprep.subr.mxu0 0.0
    %1627 = vmatpush1.msra.mxu0 0.0
    %1628 = vmatprep.subr.mxu0 0.0
    %1629 = vmatpush1.msra.mxu0 0.0
    %1630 = vmatprep.subr.mxu0 0.0
    %1631 = vmatpush1.msra.mxu0 0.0
    %1632 = vmatprep.subr.mxu0 0.0
    %1633 = vmatpush1.msra.mxu0 0.0
    %1634 = vmatprep.subr.mxu0 0.0
    %1635 = vmatpush1.msra.mxu0 0.0
    %1636 = vmatprep.mubr.f32.mxu0 0.0
    %1637 = vmatmul.mubr.f32.gmra.mrb[0].mxu0 %v1429
    %v1638 = vpop.f32.mrb[0].mxu0
    %v1639 = vadd.f32 0.0, %v1638
    %v1640 = vpop.f32.mrb[0].mxu0
    %v1641 = vadd.f32 0.0, %v1640
    %1642 = vdwg.mxu0
    %v1643 = vadd.f32 %v1433, %v1568
    %v1644 = vadd.f32 %v1434, %v1570
    %v1645 = vadd.f32 %v1435, %v1639
    %v1646 = vadd.f32 %v1436, %v1641
    %v1647 = vxor.u32 %v1643, 2147483648
    %v1648 = vmul.f32 %v1647, 1.442695
    %v1649 = vpow.pop %v1648
    %v1650 = vadd.f32 %v1649, 1.0
    %v1651 = vrcp.pop %v1650
    %v1652 = vmul.f32 1.0, %v1651
    %v1653 = vxor.u32 %v1644, 2147483648
    %v1654 = vmul.f32 %v1653, 1.442695
    %v1655 = vpow.pop %v1654
    %v1656 = vadd.f32 %v1655, 1.0
    %v1657 = vrcp.pop %v1656
    %v1658 = vmul.f32 1.0, %v1657
    %v1659 = vtanh.pop %v1645
    %v1660 = vxor.u32 %v1646, 2147483648
    %v1661 = vmul.f32 %v1660, 1.442695
    %v1662 = vpow.pop %v1661
    %v1663 = vadd.f32 %v1662, 1.0
    %v1664 = vrcp.pop %v1663
    %v1665 = vmul.f32 1.0, %v1664
    %v1666 = vmul.f32 %v1658, %v1427
    %v1667 = vmul.f32 %v1652, %v1659
    %v1668 = vadd.f32 %v1666, %v1667
    %v1669 = vtanh.pop %v1668
    %v1670 = vmul.f32 %v1665, %v1669
    %s1671 = scalar_lea.vmem [#allocation2], 32
    %1672 = vst [vmem:[%s1671] sm:$0xff] %v1670
    %s1673 = scalar_lea.vmem [#allocation3], 160
    %v1674 = vld [vmem:[%s1673] sm:$0xff]
    %v1675 = vld [vmem:[%s1673 + $0x8] sm:$0xff]
    %v1676 = vld [vmem:[%s1673 + $0x10] sm:$0xff]
    %v1677 = vld [vmem:[%s1673 + $0x18] sm:$0xff]
    %v1678 = vld [vmem:[#allocation9] sm:$0xff]
    %v1679 = vld [vmem:[#allocation9 + $0x8] sm:$0xff]
    %v1680 = vld [vmem:[#allocation9 + $0x10] sm:$0xff]
    %v1681 = vld [vmem:[#allocation9 + $0x18] sm:$0xff]
    %v1682 = vld [vmem:[#allocation9 + $0x20] sm:$0xff]
    %v1683 = vld [vmem:[#allocation9 + $0x28] sm:$0xff]
    %v1684 = vld [vmem:[#allocation9 + $0x30] sm:$0xff]
    %v1685 = vld [vmem:[#allocation9 + $0x38] sm:$0xff]
    %v1686 = vld [vmem:[#allocation9 + $0x40] sm:$0xff]
    %v1687 = vld [vmem:[#allocation9 + $0x48] sm:$0xff]
    %v1688 = vld [vmem:[#allocation9 + $0x50] sm:$0xff]
    %v1689 = vld [vmem:[#allocation9 + $0x58] sm:$0xff]
    %v1690 = vld [vmem:[#allocation9 + $0x60] sm:$0xff]
    %v1691 = vld [vmem:[#allocation9 + $0x68] sm:$0xff]
    %v1692 = vld [vmem:[#allocation9 + $0x70] sm:$0xff]
    %v1693 = vld [vmem:[#allocation9 + $0x78] sm:$0xff]
    %v1694 = vld [vmem:[#allocation9 + $0x80] sm:$0xff]
    %v1695 = vld [vmem:[#allocation9 + $0x88] sm:$0xff]
    %v1696 = vld [vmem:[#allocation9 + $0x90] sm:$0xff]
    %v1697 = vld [vmem:[#allocation9 + $0x98] sm:$0xff]
    %v1698 = vld [vmem:[#allocation9 + $0xa0] sm:$0xff]
    %v1699 = vld [vmem:[#allocation9 + $0xa8] sm:$0xff]
    %v1700 = vld [vmem:[#allocation9 + $0xb0] sm:$0xff]
    %v1701 = vld [vmem:[#allocation9 + $0xb8] sm:$0xff]
    %v1702 = vld [vmem:[#allocation9 + $0xc0] sm:$0xff]
    %v1703 = vld [vmem:[#allocation9 + $0xc8] sm:$0xff]
    %v1704 = vld [vmem:[#allocation9 + $0xd0] sm:$0xff]
    %v1705 = vld [vmem:[#allocation9 + $0xd8] sm:$0xff]
    %v1706 = vld [vmem:[#allocation9 + $0xe0] sm:$0xff]
    %v1707 = vld [vmem:[#allocation9 + $0xe8] sm:$0xff]
    %v1708 = vld [vmem:[#allocation9 + $0xf0] sm:$0xff]
    %v1709 = vld [vmem:[#allocation9 + $0xf8] sm:$0xff]
    %v1710 = vld [vmem:[#allocation9 + $0x100] sm:$0xff]
    %v1711 = vld [vmem:[#allocation9 + $0x108] sm:$0xff]
    %v1712 = vld [vmem:[#allocation9 + $0x110] sm:$0xff]
    %v1713 = vld [vmem:[#allocation9 + $0x118] sm:$0xff]
    %v1714 = vld [vmem:[#allocation9 + $0x120] sm:$0xff]
    %v1715 = vld [vmem:[#allocation9 + $0x128] sm:$0xff]
    %v1716 = vld [vmem:[#allocation9 + $0x130] sm:$0xff]
    %v1717 = vld [vmem:[#allocation9 + $0x138] sm:$0xff]
    %v1718 = vld [vmem:[#allocation9 + $0x140] sm:$0xff]
    %v1719 = vld [vmem:[#allocation9 + $0x148] sm:$0xff]
    %v1720 = vld [vmem:[#allocation9 + $0x150] sm:$0xff]
    %v1721 = vld [vmem:[#allocation9 + $0x158] sm:$0xff]
    %v1722 = vld [vmem:[#allocation9 + $0x160] sm:$0xff]
    %v1723 = vld [vmem:[#allocation9 + $0x168] sm:$0xff]
    %v1724 = vld [vmem:[#allocation9 + $0x170] sm:$0xff]
    %v1725 = vld [vmem:[#allocation9 + $0x178] sm:$0xff]
    %v1726 = vld [vmem:[#allocation9 + $0x180] sm:$0xff]
    %v1727 = vld [vmem:[#allocation9 + $0x188] sm:$0xff]
    %v1728 = vld [vmem:[#allocation9 + $0x190] sm:$0xff]
    %v1729 = vld [vmem:[#allocation9 + $0x198] sm:$0xff]
    %v1730 = vld [vmem:[#allocation9 + $0x1a0] sm:$0xff]
    %v1731 = vld [vmem:[#allocation9 + $0x1a8] sm:$0xff]
    %v1732 = vld [vmem:[#allocation9 + $0x1b0] sm:$0xff]
    %v1733 = vld [vmem:[#allocation9 + $0x1b8] sm:$0xff]
    %v1734 = vld [vmem:[#allocation9 + $0x1c0] sm:$0xff]
    %v1735 = vld [vmem:[#allocation9 + $0x1c8] sm:$0xff]
    %v1736 = vld [vmem:[#allocation9 + $0x1d0] sm:$0xff]
    %v1737 = vld [vmem:[#allocation9 + $0x1d8] sm:$0xff]
    %v1738 = vld [vmem:[#allocation9 + $0x1e0] sm:$0xff]
    %v1739 = vld [vmem:[#allocation9 + $0x1e8] sm:$0xff]
    %v1740 = vld [vmem:[#allocation9 + $0x1f0] sm:$0xff]
    %v1741 = vld [vmem:[#allocation9 + $0x1f8] sm:$0xff]
    %1742 = vmatprep.subr.mxu0 %v1679
    %1743 = vmatpush1.msra.mxu0 %v1678
    %1744 = vmatprep.subr.mxu0 %v1683
    %1745 = vmatpush1.msra.mxu0 %v1682
    %1746 = vmatprep.subr.mxu0 %v1687
    %1747 = vmatpush1.msra.mxu0 %v1686
    %1748 = vmatprep.subr.mxu0 %v1691
    %1749 = vmatpush1.msra.mxu0 %v1690
    %1750 = vmatprep.subr.mxu0 %v1695
    %1751 = vmatpush1.msra.mxu0 %v1694
    %1752 = vmatprep.subr.mxu0 %v1699
    %1753 = vmatpush1.msra.mxu0 %v1698
    %1754 = vmatprep.subr.mxu0 %v1703
    %1755 = vmatpush1.msra.mxu0 %v1702
    %1756 = vmatprep.subr.mxu0 %v1707
    %1757 = vmatpush1.msra.mxu0 %v1706
    %1758 = vmatprep.subr.mxu0 %v1711
    %1759 = vmatpush1.msra.mxu0 %v1710
    %1760 = vmatprep.subr.mxu0 %v1715
    %1761 = vmatpush1.msra.mxu0 %v1714
    %1762 = vmatprep.subr.mxu0 %v1719
    %1763 = vmatpush1.msra.mxu0 %v1718
    %1764 = vmatprep.subr.mxu0 %v1723
    %1765 = vmatpush1.msra.mxu0 %v1722
    %1766 = vmatprep.subr.mxu0 %v1727
    %1767 = vmatpush1.msra.mxu0 %v1726
    %1768 = vmatprep.subr.mxu0 %v1731
    %1769 = vmatpush1.msra.mxu0 %v1730
    %1770 = vmatprep.subr.mxu0 %v1735
    %1771 = vmatpush1.msra.mxu0 %v1734
    %1772 = vmatprep.subr.mxu0 %v1739
    %1773 = vmatpush1.msra.mxu0 %v1738
    %1774 = vmatprep.subr.mxu0 0.0
    %1775 = vmatpush1.msra.mxu0 0.0
    %1776 = vmatprep.subr.mxu0 0.0
    %1777 = vmatpush1.msra.mxu0 0.0
    %1778 = vmatprep.subr.mxu0 0.0
    %1779 = vmatpush1.msra.mxu0 0.0
    %1780 = vmatprep.subr.mxu0 0.0
    %1781 = vmatpush1.msra.mxu0 0.0
    %1782 = vmatprep.subr.mxu0 0.0
    %1783 = vmatpush1.msra.mxu0 0.0
    %1784 = vmatprep.subr.mxu0 0.0
    %1785 = vmatpush1.msra.mxu0 0.0
    %1786 = vmatprep.subr.mxu0 0.0
    %1787 = vmatpush1.msra.mxu0 0.0
    %1788 = vmatprep.subr.mxu0 0.0
    %1789 = vmatpush1.msra.mxu0 0.0
    %1790 = vmatprep.subr.mxu0 0.0
    %1791 = vmatpush1.msra.mxu0 0.0
    %1792 = vmatprep.subr.mxu0 0.0
    %1793 = vmatpush1.msra.mxu0 0.0
    %1794 = vmatprep.subr.mxu0 0.0
    %1795 = vmatpush1.msra.mxu0 0.0
    %1796 = vmatprep.subr.mxu0 0.0
    %1797 = vmatpush1.msra.mxu0 0.0
    %1798 = vmatprep.subr.mxu0 0.0
    %1799 = vmatpush1.msra.mxu0 0.0
    %1800 = vmatprep.subr.mxu0 0.0
    %1801 = vmatpush1.msra.mxu0 0.0
    %1802 = vmatprep.subr.mxu0 0.0
    %1803 = vmatpush1.msra.mxu0 0.0
    %1804 = vmatprep.subr.mxu0 0.0
    %1805 = vmatpush1.msra.mxu0 0.0
    %1806 = vmatprep.mubr.f32.mxu0 0.0
    %1807 = vmatmul.mubr.f32.gmra.mrb[0].mxu0 %v1670
    %v1808 = vpop.f32.mrb[0].mxu0
    %v1809 = vadd.f32 0.0, %v1808
    %v1810 = vpop.f32.mrb[0].mxu0
    %v1811 = vadd.f32 0.0, %v1810
    %1812 = vdwg.mxu0
    %1813 = vmatprep.subr.mxu0 %v1681
    %1814 = vmatpush1.msra.mxu0 %v1680
    %1815 = vmatprep.subr.mxu0 %v1685
    %1816 = vmatpush1.msra.mxu0 %v1684
    %1817 = vmatprep.subr.mxu0 %v1689
    %1818 = vmatpush1.msra.mxu0 %v1688
    %1819 = vmatprep.subr.mxu0 %v1693
    %1820 = vmatpush1.msra.mxu0 %v1692
    %1821 = vmatprep.subr.mxu0 %v1697
    %1822 = vmatpush1.msra.mxu0 %v1696
    %1823 = vmatprep.subr.mxu0 %v1701
    %1824 = vmatpush1.msra.mxu0 %v1700
    %1825 = vmatprep.subr.mxu0 %v1705
    %1826 = vmatpush1.msra.mxu0 %v1704
    %1827 = vmatprep.subr.mxu0 %v1709
    %1828 = vmatpush1.msra.mxu0 %v1708
    %1829 = vmatprep.subr.mxu0 %v1713
    %1830 = vmatpush1.msra.mxu0 %v1712
    %1831 = vmatprep.subr.mxu0 %v1717
    %1832 = vmatpush1.msra.mxu0 %v1716
    %1833 = vmatprep.subr.mxu0 %v1721
    %1834 = vmatpush1.msra.mxu0 %v1720
    %1835 = vmatprep.subr.mxu0 %v1725
    %1836 = vmatpush1.msra.mxu0 %v1724
    %1837 = vmatprep.subr.mxu0 %v1729
    %1838 = vmatpush1.msra.mxu0 %v1728
    %1839 = vmatprep.subr.mxu0 %v1733
    %1840 = vmatpush1.msra.mxu0 %v1732
    %1841 = vmatprep.subr.mxu0 %v1737
    %1842 = vmatpush1.msra.mxu0 %v1736
    %1843 = vmatprep.subr.mxu0 %v1741
    %1844 = vmatpush1.msra.mxu0 %v1740
    %1845 = vmatprep.subr.mxu0 0.0
    %1846 = vmatpush1.msra.mxu0 0.0
    %1847 = vmatprep.subr.mxu0 0.0
    %1848 = vmatpush1.msra.mxu0 0.0
    %1849 = vmatprep.subr.mxu0 0.0
    %1850 = vmatpush1.msra.mxu0 0.0
    %1851 = vmatprep.subr.mxu0 0.0
    %1852 = vmatpush1.msra.mxu0 0.0
    %1853 = vmatprep.subr.mxu0 0.0
    %1854 = vmatpush1.msra.mxu0 0.0
    %1855 = vmatprep.subr.mxu0 0.0
    %1856 = vmatpush1.msra.mxu0 0.0
    %1857 = vmatprep.subr.mxu0 0.0
    %1858 = vmatpush1.msra.mxu0 0.0
    %1859 = vmatprep.subr.mxu0 0.0
    %1860 = vmatpush1.msra.mxu0 0.0
    %1861 = vmatprep.subr.mxu0 0.0
    %1862 = vmatpush1.msra.mxu0 0.0
    %1863 = vmatprep.subr.mxu0 0.0
    %1864 = vmatpush1.msra.mxu0 0.0
    %1865 = vmatprep.subr.mxu0 0.0
    %1866 = vmatpush1.msra.mxu0 0.0
    %1867 = vmatprep.subr.mxu0 0.0
    %1868 = vmatpush1.msra.mxu0 0.0
    %1869 = vmatprep.subr.mxu0 0.0
    %1870 = vmatpush1.msra.mxu0 0.0
    %1871 = vmatprep.subr.mxu0 0.0
    %1872 = vmatpush1.msra.mxu0 0.0
    %1873 = vmatprep.subr.mxu0 0.0
    %1874 = vmatpush1.msra.mxu0 0.0
    %1875 = vmatprep.subr.mxu0 0.0
    %1876 = vmatpush1.msra.mxu0 0.0
    %1877 = vmatprep.mubr.f32.mxu0 0.0
    %1878 = vmatmul.mubr.f32.gmra.mrb[0].mxu0 %v1670
    %v1879 = vpop.f32.mrb[0].mxu0
    %v1880 = vadd.f32 0.0, %v1879
    %v1881 = vpop.f32.mrb[0].mxu0
    %v1882 = vadd.f32 0.0, %v1881
    %1883 = vdwg.mxu0
    %v1884 = vadd.f32 %v1674, %v1809
    %v1885 = vadd.f32 %v1675, %v1811
    %v1886 = vadd.f32 %v1676, %v1880
    %v1887 = vadd.f32 %v1677, %v1882
    %v1888 = vxor.u32 %v1884, 2147483648
    %v1889 = vmul.f32 %v1888, 1.442695
    %v1890 = vpow.pop %v1889
    %v1891 = vadd.f32 %v1890, 1.0
    %v1892 = vrcp.pop %v1891
    %v1893 = vmul.f32 1.0, %v1892
    %v1894 = vxor.u32 %v1885, 2147483648
    %v1895 = vmul.f32 %v1894, 1.442695
    %v1896 = vpow.pop %v1895
    %v1897 = vadd.f32 %v1896, 1.0
    %v1898 = vrcp.pop %v1897
    %v1899 = vmul.f32 1.0, %v1898
    %v1900 = vtanh.pop %v1886
    %v1901 = vxor.u32 %v1887, 2147483648
    %v1902 = vmul.f32 %v1901, 1.442695
    %v1903 = vpow.pop %v1902
    %v1904 = vadd.f32 %v1903, 1.0
    %v1905 = vrcp.pop %v1904
    %v1906 = vmul.f32 1.0, %v1905
    %v1907 = vmul.f32 %v1899, %v1668
    %v1908 = vmul.f32 %v1893, %v1900
    %v1909 = vadd.f32 %v1907, %v1908
    %v1910 = vtanh.pop %v1909
    %v1911 = vmul.f32 %v1906, %v1910
    %s1912 = scalar_lea.vmem [#allocation2], 40
    %1913 = vst [vmem:[%s1912] sm:$0xff] %v1911
    %s1914 = scalar_lea.vmem [#allocation3], 192
    %v1915 = vld [vmem:[%s1914] sm:$0xff]
    %v1916 = vld [vmem:[%s1914 + $0x8] sm:$0xff]
    %v1917 = vld [vmem:[%s1914 + $0x10] sm:$0xff]
    %v1918 = vld [vmem:[%s1914 + $0x18] sm:$0xff]
    %v1919 = vld [vmem:[#allocation9] sm:$0xff]
    %v1920 = vld [vmem:[#allocation9 + $0x8] sm:$0xff]
    %v1921 = vld [vmem:[#allocation9 + $0x10] sm:$0xff]
    %v1922 = vld [vmem:[#allocation9 + $0x18] sm:$0xff]
    %v1923 = vld [vmem:[#allocation9 + $0x20] sm:$0xff]
    %v1924 = vld [vmem:[#allocation9 + $0x28] sm:$0xff]
    %v1925 = vld [vmem:[#allocation9 + $0x30] sm:$0xff]
    %v1926 = vld [vmem:[#allocation9 + $0x38] sm:$0xff]
    %v1927 = vld [vmem:[#allocation9 + $0x40] sm:$0xff]
    %v1928 = vld [vmem:[#allocation9 + $0x48] sm:$0xff]
    %v1929 = vld [vmem:[#allocation9 + $0x50] sm:$0xff]
    %v1930 = vld [vmem:[#allocation9 + $0x58] sm:$0xff]
    %v1931 = vld [vmem:[#allocation9 + $0x60] sm:$0xff]
    %v1932 = vld [vmem:[#allocation9 + $0x68] sm:$0xff]
    %v1933 = vld [vmem:[#allocation9 + $0x70] sm:$0xff]
    %v1934 = vld [vmem:[#allocation9 + $0x78] sm:$0xff]
    %v1935 = vld [vmem:[#allocation9 + $0x80] sm:$0xff]
    %v1936 = vld [vmem:[#allocation9 + $0x88] sm:$0xff]
    %v1937 = vld [vmem:[#allocation9 + $0x90] sm:$0xff]
    %v1938 = vld [vmem:[#allocation9 + $0x98] sm:$0xff]
    %v1939 = vld [vmem:[#allocation9 + $0xa0] sm:$0xff]
    %v1940 = vld [vmem:[#allocation9 + $0xa8] sm:$0xff]
    %v1941 = vld [vmem:[#allocation9 + $0xb0] sm:$0xff]
    %v1942 = vld [vmem:[#allocation9 + $0xb8] sm:$0xff]
    %v1943 = vld [vmem:[#allocation9 + $0xc0] sm:$0xff]
    %v1944 = vld [vmem:[#allocation9 + $0xc8] sm:$0xff]
    %v1945 = vld [vmem:[#allocation9 + $0xd0] sm:$0xff]
    %v1946 = vld [vmem:[#allocation9 + $0xd8] sm:$0xff]
    %v1947 = vld [vmem:[#allocation9 + $0xe0] sm:$0xff]
    %v1948 = vld [vmem:[#allocation9 + $0xe8] sm:$0xff]
    %v1949 = vld [vmem:[#allocation9 + $0xf0] sm:$0xff]
    %v1950 = vld [vmem:[#allocation9 + $0xf8] sm:$0xff]
    %v1951 = vld [vmem:[#allocation9 + $0x100] sm:$0xff]
    %v1952 = vld [vmem:[#allocation9 + $0x108] sm:$0xff]
    %v1953 = vld [vmem:[#allocation9 + $0x110] sm:$0xff]
    %v1954 = vld [vmem:[#allocation9 + $0x118] sm:$0xff]
    %v1955 = vld [vmem:[#allocation9 + $0x120] sm:$0xff]
    %v1956 = vld [vmem:[#allocation9 + $0x128] sm:$0xff]
    %v1957 = vld [vmem:[#allocation9 + $0x130] sm:$0xff]
    %v1958 = vld [vmem:[#allocation9 + $0x138] sm:$0xff]
    %v1959 = vld [vmem:[#allocation9 + $0x140] sm:$0xff]
    %v1960 = vld [vmem:[#allocation9 + $0x148] sm:$0xff]
    %v1961 = vld [vmem:[#allocation9 + $0x150] sm:$0xff]
    %v1962 = vld [vmem:[#allocation9 + $0x158] sm:$0xff]
    %v1963 = vld [vmem:[#allocation9 + $0x160] sm:$0xff]
    %v1964 = vld [vmem:[#allocation9 + $0x168] sm:$0xff]
    %v1965 = vld [vmem:[#allocation9 + $0x170] sm:$0xff]
    %v1966 = vld [vmem:[#allocation9 + $0x178] sm:$0xff]
    %v1967 = vld [vmem:[#allocation9 + $0x180] sm:$0xff]
    %v1968 = vld [vmem:[#allocation9 + $0x188] sm:$0xff]
    %v1969 = vld [vmem:[#allocation9 + $0x190] sm:$0xff]
    %v1970 = vld [vmem:[#allocation9 + $0x198] sm:$0xff]
    %v1971 = vld [vmem:[#allocation9 + $0x1a0] sm:$0xff]
    %v1972 = vld [vmem:[#allocation9 + $0x1a8] sm:$0xff]
    %v1973 = vld [vmem:[#allocation9 + $0x1b0] sm:$0xff]
    %v1974 = vld [vmem:[#allocation9 + $0x1b8] sm:$0xff]
    %v1975 = vld [vmem:[#allocation9 + $0x1c0] sm:$0xff]
    %v1976 = vld [vmem:[#allocation9 + $0x1c8] sm:$0xff]
    %v1977 = vld [vmem:[#allocation9 + $0x1d0] sm:$0xff]
    %v1978 = vld [vmem:[#allocation9 + $0x1d8] sm:$0xff]
    %v1979 = vld [vmem:[#allocation9 + $0x1e0] sm:$0xff]
    %v1980 = vld [vmem:[#allocation9 + $0x1e8] sm:$0xff]
    %v1981 = vld [vmem:[#allocation9 + $0x1f0] sm:$0xff]
    %v1982 = vld [vmem:[#allocation9 + $0x1f8] sm:$0xff]
    %1983 = vmatprep.subr.mxu0 %v1920
    %1984 = vmatpush1.msra.mxu0 %v1919
    %1985 = vmatprep.subr.mxu0 %v1924
    %1986 = vmatpush1.msra.mxu0 %v1923
    %1987 = vmatprep.subr.mxu0 %v1928
    %1988 = vmatpush1.msra.mxu0 %v1927
    %1989 = vmatprep.subr.mxu0 %v1932
    %1990 = vmatpush1.msra.mxu0 %v1931
    %1991 = vmatprep.subr.mxu0 %v1936
    %1992 = vmatpush1.msra.mxu0 %v1935
    %1993 = vmatprep.subr.mxu0 %v1940
    %1994 = vmatpush1.msra.mxu0 %v1939
    %1995 = vmatprep.subr.mxu0 %v1944
    %1996 = vmatpush1.msra.mxu0 %v1943
    %1997 = vmatprep.subr.mxu0 %v1948
    %1998 = vmatpush1.msra.mxu0 %v1947
    %1999 = vmatprep.subr.mxu0 %v1952
    %2000 = vmatpush1.msra.mxu0 %v1951
    %2001 = vmatprep.subr.mxu0 %v1956
    %2002 = vmatpush1.msra.mxu0 %v1955
    %2003 = vmatprep.subr.mxu0 %v1960
    %2004 = vmatpush1.msra.mxu0 %v1959
    %2005 = vmatprep.subr.mxu0 %v1964
    %2006 = vmatpush1.msra.mxu0 %v1963
    %2007 = vmatprep.subr.mxu0 %v1968
    %2008 = vmatpush1.msra.mxu0 %v1967
    %2009 = vmatprep.subr.mxu0 %v1972
    %2010 = vmatpush1.msra.mxu0 %v1971
    %2011 = vmatprep.subr.mxu0 %v1976
    %2012 = vmatpush1.msra.mxu0 %v1975
    %2013 = vmatprep.subr.mxu0 %v1980
    %2014 = vmatpush1.msra.mxu0 %v1979
    %2015 = vmatprep.subr.mxu0 0.0
    %2016 = vmatpush1.msra.mxu0 0.0
    %2017 = vmatprep.subr.mxu0 0.0
    %2018 = vmatpush1.msra.mxu0 0.0
    %2019 = vmatprep.subr.mxu0 0.0
    %2020 = vmatpush1.msra.mxu0 0.0
    %2021 = vmatprep.subr.mxu0 0.0
    %2022 = vmatpush1.msra.mxu0 0.0
    %2023 = vmatprep.subr.mxu0 0.0
    %2024 = vmatpush1.msra.mxu0 0.0
    %2025 = vmatprep.subr.mxu0 0.0
    %2026 = vmatpush1.msra.mxu0 0.0
    %2027 = vmatprep.subr.mxu0 0.0
    %2028 = vmatpush1.msra.mxu0 0.0
    %2029 = vmatprep.subr.mxu0 0.0
    %2030 = vmatpush1.msra.mxu0 0.0
    %2031 = vmatprep.subr.mxu0 0.0
    %2032 = vmatpush1.msra.mxu0 0.0
    %2033 = vmatprep.subr.mxu0 0.0
    %2034 = vmatpush1.msra.mxu0 0.0
    %2035 = vmatprep.subr.mxu0 0.0
    %2036 = vmatpush1.msra.mxu0 0.0
    %2037 = vmatprep.subr.mxu0 0.0
    %2038 = vmatpush1.msra.mxu0 0.0
    %2039 = vmatprep.subr.mxu0 0.0
    %2040 = vmatpush1.msra.mxu0 0.0
    %2041 = vmatprep.subr.mxu0 0.0
    %2042 = vmatpush1.msra.mxu0 0.0
    %2043 = vmatprep.subr.mxu0 0.0
    %2044 = vmatpush1.msra.mxu0 0.0
    %2045 = vmatprep.subr.mxu0 0.0
    %2046 = vmatpush1.msra.mxu0 0.0
    %2047 = vmatprep.mubr.f32.mxu0 0.0
    %2048 = vmatmul.mubr.f32.gmra.mrb[0].mxu0 %v1911
    %v2049 = vpop.f32.mrb[0].mxu0
    %v2050 = vadd.f32 0.0, %v2049
    %v2051 = vpop.f32.mrb[0].mxu0
    %v2052 = vadd.f32 0.0, %v2051
    %2053 = vdwg.mxu0
    %2054 = vmatprep.subr.mxu0 %v1922
    %2055 = vmatpush1.msra.mxu0 %v1921
    %2056 = vmatprep.subr.mxu0 %v1926
    %2057 = vmatpush1.msra.mxu0 %v1925
    %2058 = vmatprep.subr.mxu0 %v1930
    %2059 = vmatpush1.msra.mxu0 %v1929
    %2060 = vmatprep.subr.mxu0 %v1934
    %2061 = vmatpush1.msra.mxu0 %v1933
    %2062 = vmatprep.subr.mxu0 %v1938
    %2063 = vmatpush1.msra.mxu0 %v1937
    %2064 = vmatprep.subr.mxu0 %v1942
    %2065 = vmatpush1.msra.mxu0 %v1941
    %2066 = vmatprep.subr.mxu0 %v1946
    %2067 = vmatpush1.msra.mxu0 %v1945
    %2068 = vmatprep.subr.mxu0 %v1950
    %2069 = vmatpush1.msra.mxu0 %v1949
    %2070 = vmatprep.subr.mxu0 %v1954
    %2071 = vmatpush1.msra.mxu0 %v1953
    %2072 = vmatprep.subr.mxu0 %v1958
    %2073 = vmatpush1.msra.mxu0 %v1957
    %2074 = vmatprep.subr.mxu0 %v1962
    %2075 = vmatpush1.msra.mxu0 %v1961
    %2076 = vmatprep.subr.mxu0 %v1966
    %2077 = vmatpush1.msra.mxu0 %v1965
    %2078 = vmatprep.subr.mxu0 %v1970
    %2079 = vmatpush1.msra.mxu0 %v1969
    %2080 = vmatprep.subr.mxu0 %v1974
    %2081 = vmatpush1.msra.mxu0 %v1973
    %2082 = vmatprep.subr.mxu0 %v1978
    %2083 = vmatpush1.msra.mxu0 %v1977
    %2084 = vmatprep.subr.mxu0 %v1982
    %2085 = vmatpush1.msra.mxu0 %v1981
    %2086 = vmatprep.subr.mxu0 0.0
    %2087 = vmatpush1.msra.mxu0 0.0
    %2088 = vmatprep.subr.mxu0 0.0
    %2089 = vmatpush1.msra.mxu0 0.0
    %2090 = vmatprep.subr.mxu0 0.0
    %2091 = vmatpush1.msra.mxu0 0.0
    %2092 = vmatprep.subr.mxu0 0.0
    %2093 = vmatpush1.msra.mxu0 0.0
    %2094 = vmatprep.subr.mxu0 0.0
    %2095 = vmatpush1.msra.mxu0 0.0
    %2096 = vmatprep.subr.mxu0 0.0
    %2097 = vmatpush1.msra.mxu0 0.0
    %2098 = vmatprep.subr.mxu0 0.0
    %2099 = vmatpush1.msra.mxu0 0.0
    %2100 = vmatprep.subr.mxu0 0.0
    %2101 = vmatpush1.msra.mxu0 0.0
    %2102 = vmatprep.subr.mxu0 0.0
    %2103 = vmatpush1.msra.mxu0 0.0
    %2104 = vmatprep.subr.mxu0 0.0
    %2105 = vmatpush1.msra.mxu0 0.0
    %2106 = vmatprep.subr.mxu0 0.0
    %2107 = vmatpush1.msra.mxu0 0.0
    %2108 = vmatprep.subr.mxu0 0.0
    %2109 = vmatpush1.msra.mxu0 0.0
    %2110 = vmatprep.subr.mxu0 0.0
    %2111 = vmatpush1.msra.mxu0 0.0
    %2112 = vmatprep.subr.mxu0 0.0
    %2113 = vmatpush1.msra.mxu0 0.0
    %2114 = vmatprep.subr.mxu0 0.0
    %2115 = vmatpush1.msra.mxu0 0.0
    %2116 = vmatprep.subr.mxu0 0.0
    %2117 = vmatpush1.msra.mxu0 0.0
    %2118 = vmatprep.mubr.f32.mxu0 0.0
    %2119 = vmatmul.mubr.f32.gmra.mrb[0].mxu0 %v1911
    %v2120 = vpop.f32.mrb[0].mxu0
    %v2121 = vadd.f32 0.0, %v2120
    %v2122 = vpop.f32.mrb[0].mxu0
    %v2123 = vadd.f32 0.0, %v2122
    %2124 = vdwg.mxu0
    %v2125 = vadd.f32 %v1915, %v2050
    %v2126 = vadd.f32 %v1916, %v2052
    %v2127 = vadd.f32 %v1917, %v2121
    %v2128 = vadd.f32 %v1918, %v2123
    %v2129 = vxor.u32 %v2125, 2147483648
    %v2130 = vmul.f32 %v2129, 1.442695
    %v2131 = vpow.pop %v2130
    %v2132 = vadd.f32 %v2131, 1.0
    %v2133 = vrcp.pop %v2132
    %v2134 = vmul.f32 1.0, %v2133
    %v2135 = vxor.u32 %v2126, 2147483648
    %v2136 = vmul.f32 %v2135, 1.442695
    %v2137 = vpow.pop %v2136
    %v2138 = vadd.f32 %v2137, 1.0
    %v2139 = vrcp.pop %v2138
    %v2140 = vmul.f32 1.0, %v2139
    %v2141 = vtanh.pop %v2127
    %v2142 = vxor.u32 %v2128, 2147483648
    %v2143 = vmul.f32 %v2142, 1.442695
    %v2144 = vpow.pop %v2143
    %v2145 = vadd.f32 %v2144, 1.0
    %v2146 = vrcp.pop %v2145
    %v2147 = vmul.f32 1.0, %v2146
    %v2148 = vmul.f32 %v2140, %v1909
    %v2149 = vmul.f32 %v2134, %v2141
    %v2150 = vadd.f32 %v2148, %v2149
    %v2151 = vtanh.pop %v2150
    %v2152 = vmul.f32 %v2147, %v2151
    %s2153 = scalar_lea.vmem [#allocation2], 48
    %2154 = vst [vmem:[%s2153] sm:$0xff] %v2152
    %s2155 = scalar_lea.vmem [#allocation3], 224
    %v2156 = vld [vmem:[%s2155] sm:$0xff]
    %v2157 = vld [vmem:[%s2155 + $0x8] sm:$0xff]
    %v2158 = vld [vmem:[%s2155 + $0x10] sm:$0xff]
    %v2159 = vld [vmem:[%s2155 + $0x18] sm:$0xff]
    %v2160 = vld [vmem:[#allocation9] sm:$0xff]
    %v2161 = vld [vmem:[#allocation9 + $0x8] sm:$0xff]
    %v2162 = vld [vmem:[#allocation9 + $0x10] sm:$0xff]
    %v2163 = vld [vmem:[#allocation9 + $0x18] sm:$0xff]
    %v2164 = vld [vmem:[#allocation9 + $0x20] sm:$0xff]
    %v2165 = vld [vmem:[#allocation9 + $0x28] sm:$0xff]
    %v2166 = vld [vmem:[#allocation9 + $0x30] sm:$0xff]
    %v2167 = vld [vmem:[#allocation9 + $0x38] sm:$0xff]
    %v2168 = vld [vmem:[#allocation9 + $0x40] sm:$0xff]
    %v2169 = vld [vmem:[#allocation9 + $0x48] sm:$0xff]
    %v2170 = vld [vmem:[#allocation9 + $0x50] sm:$0xff]
    %v2171 = vld [vmem:[#allocation9 + $0x58] sm:$0xff]
    %v2172 = vld [vmem:[#allocation9 + $0x60] sm:$0xff]
    %v2173 = vld [vmem:[#allocation9 + $0x68] sm:$0xff]
    %v2174 = vld [vmem:[#allocation9 + $0x70] sm:$0xff]
    %v2175 = vld [vmem:[#allocation9 + $0x78] sm:$0xff]
    %v2176 = vld [vmem:[#allocation9 + $0x80] sm:$0xff]
    %v2177 = vld [vmem:[#allocation9 + $0x88] sm:$0xff]
    %v2178 = vld [vmem:[#allocation9 + $0x90] sm:$0xff]
    %v2179 = vld [vmem:[#allocation9 + $0x98] sm:$0xff]
    %v2180 = vld [vmem:[#allocation9 + $0xa0] sm:$0xff]
    %v2181 = vld [vmem:[#allocation9 + $0xa8] sm:$0xff]
    %v2182 = vld [vmem:[#allocation9 + $0xb0] sm:$0xff]
    %v2183 = vld [vmem:[#allocation9 + $0xb8] sm:$0xff]
    %v2184 = vld [vmem:[#allocation9 + $0xc0] sm:$0xff]
    %v2185 = vld [vmem:[#allocation9 + $0xc8] sm:$0xff]
    %v2186 = vld [vmem:[#allocation9 + $0xd0] sm:$0xff]
    %v2187 = vld [vmem:[#allocation9 + $0xd8] sm:$0xff]
    %v2188 = vld [vmem:[#allocation9 + $0xe0] sm:$0xff]
    %v2189 = vld [vmem:[#allocation9 + $0xe8] sm:$0xff]
    %v2190 = vld [vmem:[#allocation9 + $0xf0] sm:$0xff]
    %v2191 = vld [vmem:[#allocation9 + $0xf8] sm:$0xff]
    %v2192 = vld [vmem:[#allocation9 + $0x100] sm:$0xff]
    %v2193 = vld [vmem:[#allocation9 + $0x108] sm:$0xff]
    %v2194 = vld [vmem:[#allocation9 + $0x110] sm:$0xff]
    %v2195 = vld [vmem:[#allocation9 + $0x118] sm:$0xff]
    %v2196 = vld [vmem:[#allocation9 + $0x120] sm:$0xff]
    %v2197 = vld [vmem:[#allocation9 + $0x128] sm:$0xff]
    %v2198 = vld [vmem:[#allocation9 + $0x130] sm:$0xff]
    %v2199 = vld [vmem:[#allocation9 + $0x138] sm:$0xff]
    %v2200 = vld [vmem:[#allocation9 + $0x140] sm:$0xff]
    %v2201 = vld [vmem:[#allocation9 + $0x148] sm:$0xff]
    %v2202 = vld [vmem:[#allocation9 + $0x150] sm:$0xff]
    %v2203 = vld [vmem:[#allocation9 + $0x158] sm:$0xff]
    %v2204 = vld [vmem:[#allocation9 + $0x160] sm:$0xff]
    %v2205 = vld [vmem:[#allocation9 + $0x168] sm:$0xff]
    %v2206 = vld [vmem:[#allocation9 + $0x170] sm:$0xff]
    %v2207 = vld [vmem:[#allocation9 + $0x178] sm:$0xff]
    %v2208 = vld [vmem:[#allocation9 + $0x180] sm:$0xff]
    %v2209 = vld [vmem:[#allocation9 + $0x188] sm:$0xff]
    %v2210 = vld [vmem:[#allocation9 + $0x190] sm:$0xff]
    %v2211 = vld [vmem:[#allocation9 + $0x198] sm:$0xff]
    %v2212 = vld [vmem:[#allocation9 + $0x1a0] sm:$0xff]
    %v2213 = vld [vmem:[#allocation9 + $0x1a8] sm:$0xff]
    %v2214 = vld [vmem:[#allocation9 + $0x1b0] sm:$0xff]
    %v2215 = vld [vmem:[#allocation9 + $0x1b8] sm:$0xff]
    %v2216 = vld [vmem:[#allocation9 + $0x1c0] sm:$0xff]
    %v2217 = vld [vmem:[#allocation9 + $0x1c8] sm:$0xff]
    %v2218 = vld [vmem:[#allocation9 + $0x1d0] sm:$0xff]
    %v2219 = vld [vmem:[#allocation9 + $0x1d8] sm:$0xff]
    %v2220 = vld [vmem:[#allocation9 + $0x1e0] sm:$0xff]
    %v2221 = vld [vmem:[#allocation9 + $0x1e8] sm:$0xff]
    %v2222 = vld [vmem:[#allocation9 + $0x1f0] sm:$0xff]
    %v2223 = vld [vmem:[#allocation9 + $0x1f8] sm:$0xff]
    %2224 = vmatprep.subr.mxu0 %v2161
    %2225 = vmatpush1.msra.mxu0 %v2160
    %2226 = vmatprep.subr.mxu0 %v2165
    %2227 = vmatpush1.msra.mxu0 %v2164
    %2228 = vmatprep.subr.mxu0 %v2169
    %2229 = vmatpush1.msra.mxu0 %v2168
    %2230 = vmatprep.subr.mxu0 %v2173
    %2231 = vmatpush1.msra.mxu0 %v2172
    %2232 = vmatprep.subr.mxu0 %v2177
    %2233 = vmatpush1.msra.mxu0 %v2176
    %2234 = vmatprep.subr.mxu0 %v2181
    %2235 = vmatpush1.msra.mxu0 %v2180
    %2236 = vmatprep.subr.mxu0 %v2185
    %2237 = vmatpush1.msra.mxu0 %v2184
    %2238 = vmatprep.subr.mxu0 %v2189
    %2239 = vmatpush1.msra.mxu0 %v2188
    %2240 = vmatprep.subr.mxu0 %v2193
    %2241 = vmatpush1.msra.mxu0 %v2192
    %2242 = vmatprep.subr.mxu0 %v2197
    %2243 = vmatpush1.msra.mxu0 %v2196
    %2244 = vmatprep.subr.mxu0 %v2201
    %2245 = vmatpush1.msra.mxu0 %v2200
    %2246 = vmatprep.subr.mxu0 %v2205
    %2247 = vmatpush1.msra.mxu0 %v2204
    %2248 = vmatprep.subr.mxu0 %v2209
    %2249 = vmatpush1.msra.mxu0 %v2208
    %2250 = vmatprep.subr.mxu0 %v2213
    %2251 = vmatpush1.msra.mxu0 %v2212
    %2252 = vmatprep.subr.mxu0 %v2217
    %2253 = vmatpush1.msra.mxu0 %v2216
    %2254 = vmatprep.subr.mxu0 %v2221
    %2255 = vmatpush1.msra.mxu0 %v2220
    %2256 = vmatprep.subr.mxu0 0.0
    %2257 = vmatpush1.msra.mxu0 0.0
    %2258 = vmatprep.subr.mxu0 0.0
    %2259 = vmatpush1.msra.mxu0 0.0
    %2260 = vmatprep.subr.mxu0 0.0
    %2261 = vmatpush1.msra.mxu0 0.0
    %2262 = vmatprep.subr.mxu0 0.0
    %2263 = vmatpush1.msra.mxu0 0.0
    %2264 = vmatprep.subr.mxu0 0.0
    %2265 = vmatpush1.msra.mxu0 0.0
    %2266 = vmatprep.subr.mxu0 0.0
    %2267 = vmatpush1.msra.mxu0 0.0
    %2268 = vmatprep.subr.mxu0 0.0
    %2269 = vmatpush1.msra.mxu0 0.0
    %2270 = vmatprep.subr.mxu0 0.0
    %2271 = vmatpush1.msra.mxu0 0.0
    %2272 = vmatprep.subr.mxu0 0.0
    %2273 = vmatpush1.msra.mxu0 0.0
    %2274 = vmatprep.subr.mxu0 0.0
    %2275 = vmatpush1.msra.mxu0 0.0
    %2276 = vmatprep.subr.mxu0 0.0
    %2277 = vmatpush1.msra.mxu0 0.0
    %2278 = vmatprep.subr.mxu0 0.0
    %2279 = vmatpush1.msra.mxu0 0.0
    %2280 = vmatprep.subr.mxu0 0.0
    %2281 = vmatpush1.msra.mxu0 0.0
    %2282 = vmatprep.subr.mxu0 0.0
    %2283 = vmatpush1.msra.mxu0 0.0
    %2284 = vmatprep.subr.mxu0 0.0
    %2285 = vmatpush1.msra.mxu0 0.0
    %2286 = vmatprep.subr.mxu0 0.0
    %2287 = vmatpush1.msra.mxu0 0.0
    %2288 = vmatprep.mubr.f32.mxu0 0.0
    %2289 = vmatmul.mubr.f32.gmra.mrb[0].mxu0 %v2152
    %v2290 = vpop.f32.mrb[0].mxu0
    %v2291 = vadd.f32 0.0, %v2290
    %v2292 = vpop.f32.mrb[0].mxu0
    %v2293 = vadd.f32 0.0, %v2292
    %2294 = vdwg.mxu0
    %2295 = vmatprep.subr.mxu0 %v2163
    %2296 = vmatpush1.msra.mxu0 %v2162
    %2297 = vmatprep.subr.mxu0 %v2167
    %2298 = vmatpush1.msra.mxu0 %v2166
    %2299 = vmatprep.subr.mxu0 %v2171
    %2300 = vmatpush1.msra.mxu0 %v2170
    %2301 = vmatprep.subr.mxu0 %v2175
    %2302 = vmatpush1.msra.mxu0 %v2174
    %2303 = vmatprep.subr.mxu0 %v2179
    %2304 = vmatpush1.msra.mxu0 %v2178
    %2305 = vmatprep.subr.mxu0 %v2183
    %2306 = vmatpush1.msra.mxu0 %v2182
    %2307 = vmatprep.subr.mxu0 %v2187
    %2308 = vmatpush1.msra.mxu0 %v2186
    %2309 = vmatprep.subr.mxu0 %v2191
    %2310 = vmatpush1.msra.mxu0 %v2190
    %2311 = vmatprep.subr.mxu0 %v2195
    %2312 = vmatpush1.msra.mxu0 %v2194
    %2313 = vmatprep.subr.mxu0 %v2199
    %2314 = vmatpush1.msra.mxu0 %v2198
    %2315 = vmatprep.subr.mxu0 %v2203
    %2316 = vmatpush1.msra.mxu0 %v2202
    %2317 = vmatprep.subr.mxu0 %v2207
    %2318 = vmatpush1.msra.mxu0 %v2206
    %2319 = vmatprep.subr.mxu0 %v2211
    %2320 = vmatpush1.msra.mxu0 %v2210
    %2321 = vmatprep.subr.mxu0 %v2215
    %2322 = vmatpush1.msra.mxu0 %v2214
    %2323 = vmatprep.subr.mxu0 %v2219
    %2324 = vmatpush1.msra.mxu0 %v2218
    %2325 = vmatprep.subr.mxu0 %v2223
    %2326 = vmatpush1.msra.mxu0 %v2222
    %2327 = vmatprep.subr.mxu0 0.0
    %2328 = vmatpush1.msra.mxu0 0.0
    %2329 = vmatprep.subr.mxu0 0.0
    %2330 = vmatpush1.msra.mxu0 0.0
    %2331 = vmatprep.subr.mxu0 0.0
    %2332 = vmatpush1.msra.mxu0 0.0
    %2333 = vmatprep.subr.mxu0 0.0
    %2334 = vmatpush1.msra.mxu0 0.0
    %2335 = vmatprep.subr.mxu0 0.0
    %2336 = vmatpush1.msra.mxu0 0.0
    %2337 = vmatprep.subr.mxu0 0.0
    %2338 = vmatpush1.msra.mxu0 0.0
    %2339 = vmatprep.subr.mxu0 0.0
    %2340 = vmatpush1.msra.mxu0 0.0
    %2341 = vmatprep.subr.mxu0 0.0
    %2342 = vmatpush1.msra.mxu0 0.0
    %2343 = vmatprep.subr.mxu0 0.0
    %2344 = vmatpush1.msra.mxu0 0.0
    %2345 = vmatprep.subr.mxu0 0.0
    %2346 = vmatpush1.msra.mxu0 0.0
    %2347 = vmatprep.subr.mxu0 0.0
    %2348 = vmatpush1.msra.mxu0 0.0
    %2349 = vmatprep.subr.mxu0 0.0
    %2350 = vmatpush1.msra.mxu0 0.0
    %2351 = vmatprep.subr.mxu0 0.0
    %2352 = vmatpush1.msra.mxu0 0.0
    %2353 = vmatprep.subr.mxu0 0.0
    %2354 = vmatpush1.msra.mxu0 0.0
    %2355 = vmatprep.subr.mxu0 0.0
    %2356 = vmatpush1.msra.mxu0 0.0
    %2357 = vmatprep.subr.mxu0 0.0
    %2358 = vmatpush1.msra.mxu0 0.0
    %2359 = vmatprep.mubr.f32.mxu0 0.0
    %2360 = vmatmul.mubr.f32.gmra.mrb[0].mxu0 %v2152
    %v2361 = vpop.f32.mrb[0].mxu0
    %v2362 = vadd.f32 0.0, %v2361
    %v2363 = vpop.f32.mrb[0].mxu0
    %v2364 = vadd.f32 0.0, %v2363
    %2365 = vdwg.mxu0
    %v2366 = vadd.f32 %v2156, %v2291
    %v2367 = vadd.f32 %v2157, %v2293
    %v2368 = vadd.f32 %v2158, %v2362
    %v2369 = vadd.f32 %v2159, %v2364
    %v2370 = vxor.u32 %v2366, 2147483648
    %v2371 = vmul.f32 %v2370, 1.442695
    %v2372 = vpow.pop %v2371
    %v2373 = vadd.f32 %v2372, 1.0
    %v2374 = vrcp.pop %v2373
    %v2375 = vmul.f32 1.0, %v2374
    %v2376 = vxor.u32 %v2367, 2147483648
    %v2377 = vmul.f32 %v2376, 1.442695
    %v2378 = vpow.pop %v2377
    %v2379 = vadd.f32 %v2378, 1.0
    %v2380 = vrcp.pop %v2379
    %v2381 = vmul.f32 1.0, %v2380
    %v2382 = vtanh.pop %v2368
    %v2383 = vxor.u32 %v2369, 2147483648
    %v2384 = vmul.f32 %v2383, 1.442695
    %v2385 = vpow.pop %v2384
    %v2386 = vadd.f32 %v2385, 1.0
    %v2387 = vrcp.pop %v2386
    %v2388 = vmul.f32 1.0, %v2387
    %v2389 = vmul.f32 %v2381, %v2150
    %v2390 = vmul.f32 %v2375, %v2382
    %v2391 = vadd.f32 %v2389, %v2390
    %v2392 = vtanh.pop %v2391
    %v2393 = vmul.f32 %v2388, %v2392
    %s2394 = scalar_lea.vmem [#allocation2], 56
    %2395 = vst [vmem:[%s2394] sm:$0xff] %v2393
    %2396 = vst [vmem:[#allocation16] sm:$0xff] %v2393
    %2397 = vst [vmem:[#allocation18] sm:$0xff] %v2391
    %v2398 = vld [vmem:[#allocation2] sm:$0xff]
    %v2399 = vld [vmem:[#allocation2 + $0x8] sm:$0xff]
    %v2400 = vld [vmem:[#allocation2 + $0x10] sm:$0xff]
    %v2401 = vld [vmem:[#allocation2 + $0x18] sm:$0xff]
    %v2402 = vld [vmem:[#allocation2 + $0x20] sm:$0xff]
    %v2403 = vld [vmem:[#allocation2 + $0x28] sm:$0xff]
    %v2404 = vld [vmem:[#allocation2 + $0x30] sm:$0xff]
    %v2405 = vld [vmem:[#allocation2 + $0x38] sm:$0xff]
    %s2406 = scalar_lea.vmem [#allocation7], 512
    %v2407 = vld [vmem:[%s2406] sm:$0xff]
    %v2408 = vld [vmem:[%s2406 + $0x8] sm:$0xff]
    %v2409 = vld [vmem:[%s2406 + $0x10] sm:$0xff]
    %v2410 = vld [vmem:[%s2406 + $0x18] sm:$0xff]
    %v2411 = vld [vmem:[%s2406 + $0x20] sm:$0xff]
    %v2412 = vld [vmem:[%s2406 + $0x28] sm:$0xff]
    %v2413 = vld [vmem:[%s2406 + $0x30] sm:$0xff]
    %v2414 = vld [vmem:[%s2406 + $0x38] sm:$0xff]
    %v2415 = vld [vmem:[%s2406 + $0x40] sm:$0xff]
    %v2416 = vld [vmem:[%s2406 + $0x48] sm:$0xff]
    %v2417 = vld [vmem:[%s2406 + $0x50] sm:$0xff]
    %v2418 = vld [vmem:[%s2406 + $0x58] sm:$0xff]
    %v2419 = vld [vmem:[%s2406 + $0x60] sm:$0xff]
    %v2420 = vld [vmem:[%s2406 + $0x68] sm:$0xff]
    %v2421 = vld [vmem:[%s2406 + $0x70] sm:$0xff]
    %v2422 = vld [vmem:[%s2406 + $0x78] sm:$0xff]
    %v2423 = vld [vmem:[%s2406 + $0x80] sm:$0xff]
    %v2424 = vld [vmem:[%s2406 + $0x88] sm:$0xff]
    %v2425 = vld [vmem:[%s2406 + $0x90] sm:$0xff]
    %v2426 = vld [vmem:[%s2406 + $0x98] sm:$0xff]
    %v2427 = vld [vmem:[%s2406 + $0xa0] sm:$0xff]
    %v2428 = vld [vmem:[%s2406 + $0xa8] sm:$0xff]
    %v2429 = vld [vmem:[%s2406 + $0xb0] sm:$0xff]
    %v2430 = vld [vmem:[%s2406 + $0xb8] sm:$0xff]
    %v2431 = vld [vmem:[%s2406 + $0xc0] sm:$0xff]
    %v2432 = vld [vmem:[%s2406 + $0xc8] sm:$0xff]
    %v2433 = vld [vmem:[%s2406 + $0xd0] sm:$0xff]
    %v2434 = vld [vmem:[%s2406 + $0xd8] sm:$0xff]
    %v2435 = vld [vmem:[%s2406 + $0xe0] sm:$0xff]
    %v2436 = vld [vmem:[%s2406 + $0xe8] sm:$0xff]
    %v2437 = vld [vmem:[%s2406 + $0xf0] sm:$0xff]
    %v2438 = vld [vmem:[%s2406 + $0xf8] sm:$0xff]
    %v2439 = vld [vmem:[%s2406 + $0x100] sm:$0xff]
    %v2440 = vld [vmem:[%s2406 + $0x108] sm:$0xff]
    %v2441 = vld [vmem:[%s2406 + $0x110] sm:$0xff]
    %v2442 = vld [vmem:[%s2406 + $0x118] sm:$0xff]
    %v2443 = vld [vmem:[%s2406 + $0x120] sm:$0xff]
    %v2444 = vld [vmem:[%s2406 + $0x128] sm:$0xff]
    %v2445 = vld [vmem:[%s2406 + $0x130] sm:$0xff]
    %v2446 = vld [vmem:[%s2406 + $0x138] sm:$0xff]
    %v2447 = vld [vmem:[%s2406 + $0x140] sm:$0xff]
    %v2448 = vld [vmem:[%s2406 + $0x148] sm:$0xff]
    %v2449 = vld [vmem:[%s2406 + $0x150] sm:$0xff]
    %v2450 = vld [vmem:[%s2406 + $0x158] sm:$0xff]
    %v2451 = vld [vmem:[%s2406 + $0x160] sm:$0xff]
    %v2452 = vld [vmem:[%s2406 + $0x168] sm:$0xff]
    %v2453 = vld [vmem:[%s2406 + $0x170] sm:$0xff]
    %v2454 = vld [vmem:[%s2406 + $0x178] sm:$0xff]
    %v2455 = vld [vmem:[%s2406 + $0x180] sm:$0xff]
    %v2456 = vld [vmem:[%s2406 + $0x188] sm:$0xff]
    %v2457 = vld [vmem:[%s2406 + $0x190] sm:$0xff]
    %v2458 = vld [vmem:[%s2406 + $0x198] sm:$0xff]
    %v2459 = vld [vmem:[%s2406 + $0x1a0] sm:$0xff]
    %v2460 = vld [vmem:[%s2406 + $0x1a8] sm:$0xff]
    %v2461 = vld [vmem:[%s2406 + $0x1b0] sm:$0xff]
    %v2462 = vld [vmem:[%s2406 + $0x1b8] sm:$0xff]
    %v2463 = vld [vmem:[%s2406 + $0x1c0] sm:$0xff]
    %v2464 = vld [vmem:[%s2406 + $0x1c8] sm:$0xff]
    %v2465 = vld [vmem:[%s2406 + $0x1d0] sm:$0xff]
    %v2466 = vld [vmem:[%s2406 + $0x1d8] sm:$0xff]
    %v2467 = vld [vmem:[%s2406 + $0x1e0] sm:$0xff]
    %v2468 = vld [vmem:[%s2406 + $0x1e8] sm:$0xff]
    %v2469 = vld [vmem:[%s2406 + $0x1f0] sm:$0xff]
    %v2470 = vld [vmem:[%s2406 + $0x1f8] sm:$0xff]
    %s2471 = scalar_lea.vmem [#allocation10], 4
    %v2472 = vld [vmem:[%s2471] sm:$0xf]
    %v2474 = vlaneseq
    %v2475 = vshrl.u32 %v2474, 7
    %v2476 = vsub.s32 0, %v2475
    %v2477 = vrot.slane %v2472, %v2476
    %v2478 = vlaneseq
    %v2479 = vshrl.u32 %v2478, 7
    %v2480 = vsub.s32 1, %v2479
    %v2481 = vrot.slane %v2472, %v2480
    %v2482 = vlaneseq
    %v2483 = vshrl.u32 %v2482, 7
    %v2484 = vsub.s32 2, %v2483
    %v2485 = vrot.slane %v2472, %v2484
    %v2486 = vlaneseq
    %v2487 = vshrl.u32 %v2486, 7
    %v2488 = vsub.s32 3, %v2487
    %v2489 = vrot.slane %v2472, %v2488
    %2494 = vmatprep.subr.mxu0 %v2408
    %2495 = vmatpush1.msra.mxu0 %v2407
    %2496 = vmatprep.subr.mxu0 %v2412
    %2497 = vmatpush1.msra.mxu0 %v2411
    %2498 = vmatprep.subr.mxu0 %v2416
    %2499 = vmatpush1.msra.mxu0 %v2415
    %2500 = vmatprep.subr.mxu0 %v2420
    %2501 = vmatpush1.msra.mxu0 %v2419
    %2502 = vmatprep.subr.mxu0 %v2424
    %2503 = vmatpush1.msra.mxu0 %v2423
    %2504 = vmatprep.subr.mxu0 %v2428
    %2505 = vmatpush1.msra.mxu0 %v2427
    %2506 = vmatprep.subr.mxu0 %v2432
    %2507 = vmatpush1.msra.mxu0 %v2431
    %2508 = vmatprep.subr.mxu0 %v2436
    %2509 = vmatpush1.msra.mxu0 %v2435
    %2510 = vmatprep.subr.mxu0 %v2440
    %2511 = vmatpush1.msra.mxu0 %v2439
    %2512 = vmatprep.subr.mxu0 %v2444
    %2513 = vmatpush1.msra.mxu0 %v2443
    %2514 = vmatprep.subr.mxu0 %v2448
    %2515 = vmatpush1.msra.mxu0 %v2447
    %2516 = vmatprep.subr.mxu0 %v2452
    %2517 = vmatpush1.msra.mxu0 %v2451
    %2518 = vmatprep.subr.mxu0 %v2456
    %2519 = vmatpush1.msra.mxu0 %v2455
    %2520 = vmatprep.subr.mxu0 %v2460
    %2521 = vmatpush1.msra.mxu0 %v2459
    %2522 = vmatprep.subr.mxu0 %v2464
    %2523 = vmatpush1.msra.mxu0 %v2463
    %2524 = vmatprep.subr.mxu0 %v2468
    %2525 = vmatpush1.msra.mxu0 %v2467
    %2526 = vmatprep.subr.mxu0 0.0
    %2527 = vmatpush1.msra.mxu0 0.0
    %2528 = vmatprep.subr.mxu0 0.0
    %2529 = vmatpush1.msra.mxu0 0.0
    %2530 = vmatprep.subr.mxu0 0.0
    %2531 = vmatpush1.msra.mxu0 0.0
    %2532 = vmatprep.subr.mxu0 0.0
    %2533 = vmatpush1.msra.mxu0 0.0
    %2534 = vmatprep.subr.mxu0 0.0
    %2535 = vmatpush1.msra.mxu0 0.0
    %2536 = vmatprep.subr.mxu0 0.0
    %2537 = vmatpush1.msra.mxu0 0.0
    %2538 = vmatprep.subr.mxu0 0.0
    %2539 = vmatpush1.msra.mxu0 0.0
    %2540 = vmatprep.subr.mxu0 0.0
    %2541 = vmatpush1.msra.mxu0 0.0
    %2542 = vmatprep.subr.mxu0 0.0
    %2543 = vmatpush1.msra.mxu0 0.0
    %2544 = vmatprep.subr.mxu0 0.0
    %2545 = vmatpush1.msra.mxu0 0.0
    %2546 = vmatprep.subr.mxu0 0.0
    %2547 = vmatpush1.msra.mxu0 0.0
    %2548 = vmatprep.subr.mxu0 0.0
    %2549 = vmatpush1.msra.mxu0 0.0
    %2550 = vmatprep.subr.mxu0 0.0
    %2551 = vmatpush1.msra.mxu0 0.0
    %2552 = vmatprep.subr.mxu0 0.0
    %2553 = vmatpush1.msra.mxu0 0.0
    %2554 = vmatprep.subr.mxu0 0.0
    %2555 = vmatpush1.msra.mxu0 0.0
    %2556 = vmatprep.subr.mxu0 0.0
    %2557 = vmatpush1.msra.mxu0 0.0
    %2558 = vmatprep.mubr.f32.mxu0 0.0
    %2559 = vmatmul.mubr.f32.gmra.mrb[0].mxu0 %v2398
    %v2560 = vpop.f32.mrb[0].mxu0
    %v2561 = vadd.f32 %v2477, %v2560
    %v2562 = vpop.f32.mrb[0].mxu0
    %v2563 = vadd.f32 %v2481, %v2562
    %2564 = vmatprep.mubr.f32.mxu0 0.0
    %2565 = vmatmul.mubr.f32.gmra.mrb[0].mxu0 %v2399
    %v2566 = vpop.f32.mrb[0].mxu0
    %v2567 = vadd.f32 %v2477, %v2566
    %v2568 = vpop.f32.mrb[0].mxu0
    %v2569 = vadd.f32 %v2481, %v2568
    %2570 = vmatprep.mubr.f32.mxu0 0.0
    %2571 = vmatmul.mubr.f32.gmra.mrb[0].mxu0 %v2400
    %v2572 = vpop.f32.mrb[0].mxu0
    %v2573 = vadd.f32 %v2477, %v2572
    %v2574 = vpop.f32.mrb[0].mxu0
    %v2575 = vadd.f32 %v2481, %v2574
    %2576 = vmatprep.mubr.f32.mxu0 0.0
    %2577 = vmatmul.mubr.f32.gmra.mrb[0].mxu0 %v2401
    %v2578 = vpop.f32.mrb[0].mxu0
    %v2579 = vadd.f32 %v2477, %v2578
    %v2580 = vpop.f32.mrb[0].mxu0
    %v2581 = vadd.f32 %v2481, %v2580
    %2582 = vmatprep.mubr.f32.mxu0 0.0
    %2583 = vmatmul.mubr.f32.gmra.mrb[0].mxu0 %v2402
    %v2584 = vpop.f32.mrb[0].mxu0
    %v2585 = vadd.f32 %v2477, %v2584
    %v2586 = vpop.f32.mrb[0].mxu0
    %v2587 = vadd.f32 %v2481, %v2586
    %2588 = vmatprep.mubr.f32.mxu0 0.0
    %2589 = vmatmul.mubr.f32.gmra.mrb[0].mxu0 %v2403
    %v2590 = vpop.f32.mrb[0].mxu0
    %v2591 = vadd.f32 %v2477, %v2590
    %v2592 = vpop.f32.mrb[0].mxu0
    %v2593 = vadd.f32 %v2481, %v2592
    %2594 = vmatprep.mubr.f32.mxu0 0.0
    %2595 = vmatmul.mubr.f32.gmra.mrb[0].mxu0 %v2404
    %v2596 = vpop.f32.mrb[0].mxu0
    %v2597 = vadd.f32 %v2477, %v2596
    %v2598 = vpop.f32.mrb[0].mxu0
    %v2599 = vadd.f32 %v2481, %v2598
    %2600 = vmatprep.mubr.f32.mxu0 0.0
    %2601 = vmatmul.mubr.f32.gmra.mrb[0].mxu0 %v2405
    %v2602 = vpop.f32.mrb[0].mxu0
    %v2603 = vadd.f32 %v2477, %v2602
    %v2604 = vpop.f32.mrb[0].mxu0
    %v2605 = vadd.f32 %v2481, %v2604
    %2606 = vdwg.mxu0
    %2607 = vmatprep.subr.mxu0 %v2410
    %2608 = vmatpush1.msra.mxu0 %v2409
    %2609 = vmatprep.subr.mxu0 %v2414
    %2610 = vmatpush1.msra.mxu0 %v2413
    %2611 = vmatprep.subr.mxu0 %v2418
    %2612 = vmatpush1.msra.mxu0 %v2417
    %2613 = vmatprep.subr.mxu0 %v2422
    %2614 = vmatpush1.msra.mxu0 %v2421
    %2615 = vmatprep.subr.mxu0 %v2426
    %2616 = vmatpush1.msra.mxu0 %v2425
    %2617 = vmatprep.subr.mxu0 %v2430
    %2618 = vmatpush1.msra.mxu0 %v2429
    %2619 = vmatprep.subr.mxu0 %v2434
    %2620 = vmatpush1.msra.mxu0 %v2433
    %2621 = vmatprep.subr.mxu0 %v2438
    %2622 = vmatpush1.msra.mxu0 %v2437
    %2623 = vmatprep.subr.mxu0 %v2442
    %2624 = vmatpush1.msra.mxu0 %v2441
    %2625 = vmatprep.subr.mxu0 %v2446
    %2626 = vmatpush1.msra.mxu0 %v2445
    %2627 = vmatprep.subr.mxu0 %v2450
    %2628 = vmatpush1.msra.mxu0 %v2449
    %2629 = vmatprep.subr.mxu0 %v2454
    %2630 = vmatpush1.msra.mxu0 %v2453
    %2631 = vmatprep.subr.mxu0 %v2458
    %2632 = vmatpush1.msra.mxu0 %v2457
    %2633 = vmatprep.subr.mxu0 %v2462
    %2634 = vmatpush1.msra.mxu0 %v2461
    %2635 = vmatprep.subr.mxu0 %v2466
    %2636 = vmatpush1.msra.mxu0 %v2465
    %2637 = vmatprep.subr.mxu0 %v2470
    %2638 = vmatpush1.msra.mxu0 %v2469
    %2639 = vmatprep.subr.mxu0 0.0
    %2640 = vmatpush1.msra.mxu0 0.0
    %2641 = vmatprep.subr.mxu0 0.0
    %2642 = vmatpush1.msra.mxu0 0.0
    %2643 = vmatprep.subr.mxu0 0.0
    %2644 = vmatpush1.msra.mxu0 0.0
    %2645 = vmatprep.subr.mxu0 0.0
    %2646 = vmatpush1.msra.mxu0 0.0
    %2647 = vmatprep.subr.mxu0 0.0
    %2648 = vmatpush1.msra.mxu0 0.0
    %2649 = vmatprep.subr.mxu0 0.0
    %2650 = vmatpush1.msra.mxu0 0.0
    %2651 = vmatprep.subr.mxu0 0.0
    %2652 = vmatpush1.msra.mxu0 0.0
    %2653 = vmatprep.subr.mxu0 0.0
    %2654 = vmatpush1.msra.mxu0 0.0
    %2655 = vmatprep.subr.mxu0 0.0
    %2656 = vmatpush1.msra.mxu0 0.0
    %2657 = vmatprep.subr.mxu0 0.0
    %2658 = vmatpush1.msra.mxu0 0.0
    %2659 = vmatprep.subr.mxu0 0.0
    %2660 = vmatpush1.msra.mxu0 0.0
    %2661 = vmatprep.subr.mxu0 0.0
    %2662 = vmatpush1.msra.mxu0 0.0
    %2663 = vmatprep.subr.mxu0 0.0
    %2664 = vmatpush1.msra.mxu0 0.0
    %2665 = vmatprep.subr.mxu0 0.0
    %2666 = vmatpush1.msra.mxu0 0.0
    %2667 = vmatprep.subr.mxu0 0.0
    %2668 = vmatpush1.msra.mxu0 0.0
    %2669 = vmatprep.subr.mxu0 0.0
    %2670 = vmatpush1.msra.mxu0 0.0
    %2671 = vmatprep.mubr.f32.mxu0 0.0
    %2672 = vmatmul.mubr.f32.gmra.mrb[0].mxu0 %v2398
    %v2673 = vpop.f32.mrb[0].mxu0
    %v2674 = vadd.f32 %v2485, %v2673
    %v2675 = vpop.f32.mrb[0].mxu0
    %v2676 = vadd.f32 %v2489, %v2675
    %2677 = vmatprep.mubr.f32.mxu0 0.0
    %2678 = vmatmul.mubr.f32.gmra.mrb[0].mxu0 %v2399
    %v2679 = vpop.f32.mrb[0].mxu0
    %v2680 = vadd.f32 %v2485, %v2679
    %v2681 = vpop.f32.mrb[0].mxu0
    %v2682 = vadd.f32 %v2489, %v2681
    %2683 = vmatprep.mubr.f32.mxu0 0.0
    %2684 = vmatmul.mubr.f32.gmra.mrb[0].mxu0 %v2400
    %v2685 = vpop.f32.mrb[0].mxu0
    %v2686 = vadd.f32 %v2485, %v2685
    %v2687 = vpop.f32.mrb[0].mxu0
    %v2688 = vadd.f32 %v2489, %v2687
    %2689 = vmatprep.mubr.f32.mxu0 0.0
    %2690 = vmatmul.mubr.f32.gmra.mrb[0].mxu0 %v2401
    %v2691 = vpop.f32.mrb[0].mxu0
    %v2692 = vadd.f32 %v2485, %v2691
    %v2693 = vpop.f32.mrb[0].mxu0
    %v2694 = vadd.f32 %v2489, %v2693
    %2695 = vmatprep.mubr.f32.mxu0 0.0
    %2696 = vmatmul.mubr.f32.gmra.mrb[0].mxu0 %v2402
    %v2697 = vpop.f32.mrb[0].mxu0
    %v2698 = vadd.f32 %v2485, %v2697
    %v2699 = vpop.f32.mrb[0].mxu0
    %v2700 = vadd.f32 %v2489, %v2699
    %2701 = vmatprep.mubr.f32.mxu0 0.0
    %2702 = vmatmul.mubr.f32.gmra.mrb[0].mxu0 %v2403
    %v2703 = vpop.f32.mrb[0].mxu0
    %v2704 = vadd.f32 %v2485, %v2703
    %v2705 = vpop.f32.mrb[0].mxu0
    %v2706 = vadd.f32 %v2489, %v2705
    %2707 = vmatprep.mubr.f32.mxu0 0.0
    %2708 = vmatmul.mubr.f32.gmra.mrb[0].mxu0 %v2404
    %v2709 = vpop.f32.mrb[0].mxu0
    %v2710 = vadd.f32 %v2485, %v2709
    %v2711 = vpop.f32.mrb[0].mxu0
    %v2712 = vadd.f32 %v2489, %v2711
    %2713 = vmatprep.mubr.f32.mxu0 0.0
    %2714 = vmatmul.mubr.f32.gmra.mrb[0].mxu0 %v2405
    %v2715 = vpop.f32.mrb[0].mxu0
    %v2716 = vadd.f32 %v2485, %v2715
    %v2717 = vpop.f32.mrb[0].mxu0
    %v2718 = vadd.f32 %v2489, %v2717
    %2719 = vdwg.mxu0
    %2720 = vst [vmem:[#allocation3] sm:$0xff] %v2561
    %2721 = vst [vmem:[#allocation3 + $0x8] sm:$0xff] %v2563
    %2722 = vst [vmem:[#allocation3 + $0x10] sm:$0xff] %v2674
    %2723 = vst [vmem:[#allocation3 + $0x18] sm:$0xff] %v2676
    %2724 = vst [vmem:[#allocation3 + $0x20] sm:$0xff] %v2567
    %2725 = vst [vmem:[#allocation3 + $0x28] sm:$0xff] %v2569
    %2726 = vst [vmem:[#allocation3 + $0x30] sm:$0xff] %v2680
    %2727 = vst [vmem:[#allocation3 + $0x38] sm:$0xff] %v2682
    %2728 = vst [vmem:[#allocation3 + $0x40] sm:$0xff] %v2573
    %2729 = vst [vmem:[#allocation3 + $0x48] sm:$0xff] %v2575
    %2730 = vst [vmem:[#allocation3 + $0x50] sm:$0xff] %v2686
    %2731 = vst [vmem:[#allocation3 + $0x58] sm:$0xff] %v2688
    %2732 = vst [vmem:[#allocation3 + $0x60] sm:$0xff] %v2579
    %2733 = vst [vmem:[#allocation3 + $0x68] sm:$0xff] %v2581
    %2734 = vst [vmem:[#allocation3 + $0x70] sm:$0xff] %v2692
    %2735 = vst [vmem:[#allocation3 + $0x78] sm:$0xff] %v2694
    %2736 = vst [vmem:[#allocation3 + $0x80] sm:$0xff] %v2585
    %2737 = vst [vmem:[#allocation3 + $0x88] sm:$0xff] %v2587
    %2738 = vst [vmem:[#allocation3 + $0x90] sm:$0xff] %v2698
    %2739 = vst [vmem:[#allocation3 + $0x98] sm:$0xff] %v2700
    %2740 = vst [vmem:[#allocation3 + $0xa0] sm:$0xff] %v2591
    %2741 = vst [vmem:[#allocation3 + $0xa8] sm:$0xff] %v2593
    %2742 = vst [vmem:[#allocation3 + $0xb0] sm:$0xff] %v2704
    %2743 = vst [vmem:[#allocation3 + $0xb8] sm:$0xff] %v2706
    %2744 = vst [vmem:[#allocation3 + $0xc0] sm:$0xff] %v2597
    %2745 = vst [vmem:[#allocation3 + $0xc8] sm:$0xff] %v2599
    %2746 = vst [vmem:[#allocation3 + $0xd0] sm:$0xff] %v2710
    %2747 = vst [vmem:[#allocation3 + $0xd8] sm:$0xff] %v2712
    %2748 = vst [vmem:[#allocation3 + $0xe0] sm:$0xff] %v2603
    %2749 = vst [vmem:[#allocation3 + $0xe8] sm:$0xff] %v2605
    %2750 = vst [vmem:[#allocation3 + $0xf0] sm:$0xff] %v2716
    %2751 = vst [vmem:[#allocation3 + $0xf8] sm:$0xff] %v2718
    %s2752 = scalar_lea.vmem [#allocation12], 8
    %v2753 = vld [vmem:[%s2752] sm:$0xff]
    %s2754 = scalar_lea.vmem %s5, 8
    %v2755 = vld [vmem:[%s2754] sm:$0xff]
    %v2756 = vld [vmem:[#allocation3] sm:$0xff]
    %v2757 = vld [vmem:[#allocation3 + $0x8] sm:$0xff]
    %v2758 = vld [vmem:[#allocation3 + $0x10] sm:$0xff]
    %v2759 = vld [vmem:[#allocation3 + $0x18] sm:$0xff]
    %s2760 = scalar_lea.vmem [#allocation9], 512
    %v2761 = vld [vmem:[%s2760] sm:$0xff]
    %v2762 = vld [vmem:[%s2760 + $0x8] sm:$0xff]
    %v2763 = vld [vmem:[%s2760 + $0x10] sm:$0xff]
    %v2764 = vld [vmem:[%s2760 + $0x18] sm:$0xff]
    %v2765 = vld [vmem:[%s2760 + $0x20] sm:$0xff]
    %v2766 = vld [vmem:[%s2760 + $0x28] sm:$0xff]
    %v2767 = vld [vmem:[%s2760 + $0x30] sm:$0xff]
    %v2768 = vld [vmem:[%s2760 + $0x38] sm:$0xff]
    %v2769 = vld [vmem:[%s2760 + $0x40] sm:$0xff]
    %v2770 = vld [vmem:[%s2760 + $0x48] sm:$0xff]
    %v2771 = vld [vmem:[%s2760 + $0x50] sm:$0xff]
    %v2772 = vld [vmem:[%s2760 + $0x58] sm:$0xff]
    %v2773 = vld [vmem:[%s2760 + $0x60] sm:$0xff]
    %v2774 = vld [vmem:[%s2760 + $0x68] sm:$0xff]
    %v2775 = vld [vmem:[%s2760 + $0x70] sm:$0xff]
    %v2776 = vld [vmem:[%s2760 + $0x78] sm:$0xff]
    %v2777 = vld [vmem:[%s2760 + $0x80] sm:$0xff]
    %v2778 = vld [vmem:[%s2760 + $0x88] sm:$0xff]
    %v2779 = vld [vmem:[%s2760 + $0x90] sm:$0xff]
    %v2780 = vld [vmem:[%s2760 + $0x98] sm:$0xff]
    %v2781 = vld [vmem:[%s2760 + $0xa0] sm:$0xff]
    %v2782 = vld [vmem:[%s2760 + $0xa8] sm:$0xff]
    %v2783 = vld [vmem:[%s2760 + $0xb0] sm:$0xff]
    %v2784 = vld [vmem:[%s2760 + $0xb8] sm:$0xff]
    %v2785 = vld [vmem:[%s2760 + $0xc0] sm:$0xff]
    %v2786 = vld [vmem:[%s2760 + $0xc8] sm:$0xff]
    %v2787 = vld [vmem:[%s2760 + $0xd0] sm:$0xff]
    %v2788 = vld [vmem:[%s2760 + $0xd8] sm:$0xff]
    %v2789 = vld [vmem:[%s2760 + $0xe0] sm:$0xff]
    %v2790 = vld [vmem:[%s2760 + $0xe8] sm:$0xff]
    %v2791 = vld [vmem:[%s2760 + $0xf0] sm:$0xff]
    %v2792 = vld [vmem:[%s2760 + $0xf8] sm:$0xff]
    %v2793 = vld [vmem:[%s2760 + $0x100] sm:$0xff]
    %v2794 = vld [vmem:[%s2760 + $0x108] sm:$0xff]
    %v2795 = vld [vmem:[%s2760 + $0x110] sm:$0xff]
    %v2796 = vld [vmem:[%s2760 + $0x118] sm:$0xff]
    %v2797 = vld [vmem:[%s2760 + $0x120] sm:$0xff]
    %v2798 = vld [vmem:[%s2760 + $0x128] sm:$0xff]
    %v2799 = vld [vmem:[%s2760 + $0x130] sm:$0xff]
    %v2800 = vld [vmem:[%s2760 + $0x138] sm:$0xff]
    %v2801 = vld [vmem:[%s2760 + $0x140] sm:$0xff]
    %v2802 = vld [vmem:[%s2760 + $0x148] sm:$0xff]
    %v2803 = vld [vmem:[%s2760 + $0x150] sm:$0xff]
    %v2804 = vld [vmem:[%s2760 + $0x158] sm:$0xff]
    %v2805 = vld [vmem:[%s2760 + $0x160] sm:$0xff]
    %v2806 = vld [vmem:[%s2760 + $0x168] sm:$0xff]
    %v2807 = vld [vmem:[%s2760 + $0x170] sm:$0xff]
    %v2808 = vld [vmem:[%s2760 + $0x178] sm:$0xff]
    %v2809 = vld [vmem:[%s2760 + $0x180] sm:$0xff]
    %v2810 = vld [vmem:[%s2760 + $0x188] sm:$0xff]
    %v2811 = vld [vmem:[%s2760 + $0x190] sm:$0xff]
    %v2812 = vld [vmem:[%s2760 + $0x198] sm:$0xff]
    %v2813 = vld [vmem:[%s2760 + $0x1a0] sm:$0xff]
    %v2814 = vld [vmem:[%s2760 + $0x1a8] sm:$0xff]
    %v2815 = vld [vmem:[%s2760 + $0x1b0] sm:$0xff]
    %v2816 = vld [vmem:[%s2760 + $0x1b8] sm:$0xff]
    %v2817 = vld [vmem:[%s2760 + $0x1c0] sm:$0xff]
    %v2818 = vld [vmem:[%s2760 + $0x1c8] sm:$0xff]
    %v2819 = vld [vmem:[%s2760 + $0x1d0] sm:$0xff]
    %v2820 = vld [vmem:[%s2760 + $0x1d8] sm:$0xff]
    %v2821 = vld [vmem:[%s2760 + $0x1e0] sm:$0xff]
    %v2822 = vld [vmem:[%s2760 + $0x1e8] sm:$0xff]
    %v2823 = vld [vmem:[%s2760 + $0x1f0] sm:$0xff]
    %v2824 = vld [vmem:[%s2760 + $0x1f8] sm:$0xff]
    %2825 = vmatprep.subr.mxu0 %v2762
    %2826 = vmatpush1.msra.mxu0 %v2761
    %2827 = vmatprep.subr.mxu0 %v2766
    %2828 = vmatpush1.msra.mxu0 %v2765
    %2829 = vmatprep.subr.mxu0 %v2770
    %2830 = vmatpush1.msra.mxu0 %v2769
    %2831 = vmatprep.subr.mxu0 %v2774
    %2832 = vmatpush1.msra.mxu0 %v2773
    %2833 = vmatprep.subr.mxu0 %v2778
    %2834 = vmatpush1.msra.mxu0 %v2777
    %2835 = vmatprep.subr.mxu0 %v2782
    %2836 = vmatpush1.msra.mxu0 %v2781
    %2837 = vmatprep.subr.mxu0 %v2786
    %2838 = vmatpush1.msra.mxu0 %v2785
    %2839 = vmatprep.subr.mxu0 %v2790
    %2840 = vmatpush1.msra.mxu0 %v2789
    %2841 = vmatprep.subr.mxu0 %v2794
    %2842 = vmatpush1.msra.mxu0 %v2793
    %2843 = vmatprep.subr.mxu0 %v2798
    %2844 = vmatpush1.msra.mxu0 %v2797
    %2845 = vmatprep.subr.mxu0 %v2802
    %2846 = vmatpush1.msra.mxu0 %v2801
    %2847 = vmatprep.subr.mxu0 %v2806
    %2848 = vmatpush1.msra.mxu0 %v2805
    %2849 = vmatprep.subr.mxu0 %v2810
    %2850 = vmatpush1.msra.mxu0 %v2809
    %2851 = vmatprep.subr.mxu0 %v2814
    %2852 = vmatpush1.msra.mxu0 %v2813
    %2853 = vmatprep.subr.mxu0 %v2818
    %2854 = vmatpush1.msra.mxu0 %v2817
    %2855 = vmatprep.subr.mxu0 %v2822
    %2856 = vmatpush1.msra.mxu0 %v2821
    %2857 = vmatprep.subr.mxu0 0.0
    %2858 = vmatpush1.msra.mxu0 0.0
    %2859 = vmatprep.subr.mxu0 0.0
    %2860 = vmatpush1.msra.mxu0 0.0
    %2861 = vmatprep.subr.mxu0 0.0
    %2862 = vmatpush1.msra.mxu0 0.0
    %2863 = vmatprep.subr.mxu0 0.0
    %2864 = vmatpush1.msra.mxu0 0.0
    %2865 = vmatprep.subr.mxu0 0.0
    %2866 = vmatpush1.msra.mxu0 0.0
    %2867 = vmatprep.subr.mxu0 0.0
    %2868 = vmatpush1.msra.mxu0 0.0
    %2869 = vmatprep.subr.mxu0 0.0
    %2870 = vmatpush1.msra.mxu0 0.0
    %2871 = vmatprep.subr.mxu0 0.0
    %2872 = vmatpush1.msra.mxu0 0.0
    %2873 = vmatprep.subr.mxu0 0.0
    %2874 = vmatpush1.msra.mxu0 0.0
    %2875 = vmatprep.subr.mxu0 0.0
    %2876 = vmatpush1.msra.mxu0 0.0
    %2877 = vmatprep.subr.mxu0 0.0
    %2878 = vmatpush1.msra.mxu0 0.0
    %2879 = vmatprep.subr.mxu0 0.0
    %2880 = vmatpush1.msra.mxu0 0.0
    %2881 = vmatprep.subr.mxu0 0.0
    %2882 = vmatpush1.msra.mxu0 0.0
    %2883 = vmatprep.subr.mxu0 0.0
    %2884 = vmatpush1.msra.mxu0 0.0
    %2885 = vmatprep.subr.mxu0 0.0
    %2886 = vmatpush1.msra.mxu0 0.0
    %2887 = vmatprep.subr.mxu0 0.0
    %2888 = vmatpush1.msra.mxu0 0.0
    %2889 = vmatprep.mubr.f32.mxu0 0.0
    %2890 = vmatmul.mubr.f32.gmra.mrb[0].mxu0 %v2753
    %v2891 = vpop.f32.mrb[0].mxu0
    %v2892 = vadd.f32 0.0, %v2891
    %v2893 = vpop.f32.mrb[0].mxu0
    %v2894 = vadd.f32 0.0, %v2893
    %2895 = vdwg.mxu0
    %2896 = vmatprep.subr.mxu0 %v2764
    %2897 = vmatpush1.msra.mxu0 %v2763
    %2898 = vmatprep.subr.mxu0 %v2768
    %2899 = vmatpush1.msra.mxu0 %v2767
    %2900 = vmatprep.subr.mxu0 %v2772
    %2901 = vmatpush1.msra.mxu0 %v2771
    %2902 = vmatprep.subr.mxu0 %v2776
    %2903 = vmatpush1.msra.mxu0 %v2775
    %2904 = vmatprep.subr.mxu0 %v2780
    %2905 = vmatpush1.msra.mxu0 %v2779
    %2906 = vmatprep.subr.mxu0 %v2784
    %2907 = vmatpush1.msra.mxu0 %v2783
    %2908 = vmatprep.subr.mxu0 %v2788
    %2909 = vmatpush1.msra.mxu0 %v2787
    %2910 = vmatprep.subr.mxu0 %v2792
    %2911 = vmatpush1.msra.mxu0 %v2791
    %2912 = vmatprep.subr.mxu0 %v2796
    %2913 = vmatpush1.msra.mxu0 %v2795
    %2914 = vmatprep.subr.mxu0 %v2800
    %2915 = vmatpush1.msra.mxu0 %v2799
    %2916 = vmatprep.subr.mxu0 %v2804
    %2917 = vmatpush1.msra.mxu0 %v2803
    %2918 = vmatprep.subr.mxu0 %v2808
    %2919 = vmatpush1.msra.mxu0 %v2807
    %2920 = vmatprep.subr.mxu0 %v2812
    %2921 = vmatpush1.msra.mxu0 %v2811
    %2922 = vmatprep.subr.mxu0 %v2816
    %2923 = vmatpush1.msra.mxu0 %v2815
    %2924 = vmatprep.subr.mxu0 %v2820
    %2925 = vmatpush1.msra.mxu0 %v2819
    %2926 = vmatprep.subr.mxu0 %v2824
    %2927 = vmatpush1.msra.mxu0 %v2823
    %2928 = vmatprep.subr.mxu0 0.0
    %2929 = vmatpush1.msra.mxu0 0.0
    %2930 = vmatprep.subr.mxu0 0.0
    %2931 = vmatpush1.msra.mxu0 0.0
    %2932 = vmatprep.subr.mxu0 0.0
    %2933 = vmatpush1.msra.mxu0 0.0
    %2934 = vmatprep.subr.mxu0 0.0
    %2935 = vmatpush1.msra.mxu0 0.0
    %2936 = vmatprep.subr.mxu0 0.0
    %2937 = vmatpush1.msra.mxu0 0.0
    %2938 = vmatprep.subr.mxu0 0.0
    %2939 = vmatpush1.msra.mxu0 0.0
    %2940 = vmatprep.subr.mxu0 0.0
    %2941 = vmatpush1.msra.mxu0 0.0
    %2942 = vmatprep.subr.mxu0 0.0
    %2943 = vmatpush1.msra.mxu0 0.0
    %2944 = vmatprep.subr.mxu0 0.0
    %2945 = vmatpush1.msra.mxu0 0.0
    %2946 = vmatprep.subr.mxu0 0.0
    %2947 = vmatpush1.msra.mxu0 0.0
    %2948 = vmatprep.subr.mxu0 0.0
    %2949 = vmatpush1.msra.mxu0 0.0
    %2950 = vmatprep.subr.mxu0 0.0
    %2951 = vmatpush1.msra.mxu0 0.0
    %2952 = vmatprep.subr.mxu0 0.0
    %2953 = vmatpush1.msra.mxu0 0.0
    %2954 = vmatprep.subr.mxu0 0.0
    %2955 = vmatpush1.msra.mxu0 0.0
    %2956 = vmatprep.subr.mxu0 0.0
    %2957 = vmatpush1.msra.mxu0 0.0
    %2958 = vmatprep.subr.mxu0 0.0
    %2959 = vmatpush1.msra.mxu0 0.0
    %2960 = vmatprep.mubr.f32.mxu0 0.0
    %2961 = vmatmul.mubr.f32.gmra.mrb[0].mxu0 %v2753
    %v2962 = vpop.f32.mrb[0].mxu0
    %v2963 = vadd.f32 0.0, %v2962
    %v2964 = vpop.f32.mrb[0].mxu0
    %v2965 = vadd.f32 0.0, %v2964
    %2966 = vdwg.mxu0
    %v2967 = vadd.f32 %v2756, %v2892
    %v2968 = vadd.f32 %v2757, %v2894
    %v2969 = vadd.f32 %v2758, %v2963
    %v2970 = vadd.f32 %v2759, %v2965
    %v2971 = vxor.u32 %v2967, 2147483648
    %v2972 = vmul.f32 %v2971, 1.442695
    %v2973 = vpow.pop %v2972
    %v2974 = vadd.f32 %v2973, 1.0
    %v2975 = vrcp.pop %v2974
    %v2976 = vmul.f32 1.0, %v2975
    %v2977 = vxor.u32 %v2968, 2147483648
    %v2978 = vmul.f32 %v2977, 1.442695
    %v2979 = vpow.pop %v2978
    %v2980 = vadd.f32 %v2979, 1.0
    %v2981 = vrcp.pop %v2980
    %v2982 = vmul.f32 1.0, %v2981
    %v2983 = vtanh.pop %v2969
    %v2984 = vxor.u32 %v2970, 2147483648
    %v2985 = vmul.f32 %v2984, 1.442695
    %v2986 = vpow.pop %v2985
    %v2987 = vadd.f32 %v2986, 1.0
    %v2988 = vrcp.pop %v2987
    %v2989 = vmul.f32 1.0, %v2988
    %v2990 = vmul.f32 %v2982, %v2755
    %v2991 = vmul.f32 %v2976, %v2983
    %v2992 = vadd.f32 %v2990, %v2991
    %v2993 = vtanh.pop %v2992
    %v2994 = vmul.f32 %v2989, %v2993
    %2995 = vst [vmem:[#allocation2] sm:$0xff] %v2994
    %v2996 = vld [vmem:[%s709] sm:$0xff]
    %v2997 = vld [vmem:[%s709 + $0x8] sm:$0xff]
    %v2998 = vld [vmem:[%s709 + $0x10] sm:$0xff]
    %v2999 = vld [vmem:[%s709 + $0x18] sm:$0xff]
    %v3000 = vld [vmem:[%s2760] sm:$0xff]
    %v3001 = vld [vmem:[%s2760 + $0x8] sm:$0xff]
    %v3002 = vld [vmem:[%s2760 + $0x10] sm:$0xff]
    %v3003 = vld [vmem:[%s2760 + $0x18] sm:$0xff]
    %v3004 = vld [vmem:[%s2760 + $0x20] sm:$0xff]
    %v3005 = vld [vmem:[%s2760 + $0x28] sm:$0xff]
    %v3006 = vld [vmem:[%s2760 + $0x30] sm:$0xff]
    %v3007 = vld [vmem:[%s2760 + $0x38] sm:$0xff]
    %v3008 = vld [vmem:[%s2760 + $0x40] sm:$0xff]
    %v3009 = vld [vmem:[%s2760 + $0x48] sm:$0xff]
    %v3010 = vld [vmem:[%s2760 + $0x50] sm:$0xff]
    %v3011 = vld [vmem:[%s2760 + $0x58] sm:$0xff]
    %v3012 = vld [vmem:[%s2760 + $0x60] sm:$0xff]
    %v3013 = vld [vmem:[%s2760 + $0x68] sm:$0xff]
    %v3014 = vld [vmem:[%s2760 + $0x70] sm:$0xff]
    %v3015 = vld [vmem:[%s2760 + $0x78] sm:$0xff]
    %v3016 = vld [vmem:[%s2760 + $0x80] sm:$0xff]
    %v3017 = vld [vmem:[%s2760 + $0x88] sm:$0xff]
    %v3018 = vld [vmem:[%s2760 + $0x90] sm:$0xff]
    %v3019 = vld [vmem:[%s2760 + $0x98] sm:$0xff]
    %v3020 = vld [vmem:[%s2760 + $0xa0] sm:$0xff]
    %v3021 = vld [vmem:[%s2760 + $0xa8] sm:$0xff]
    %v3022 = vld [vmem:[%s2760 + $0xb0] sm:$0xff]
    %v3023 = vld [vmem:[%s2760 + $0xb8] sm:$0xff]
    %v3024 = vld [vmem:[%s2760 + $0xc0] sm:$0xff]
    %v3025 = vld [vmem:[%s2760 + $0xc8] sm:$0xff]
    %v3026 = vld [vmem:[%s2760 + $0xd0] sm:$0xff]
    %v3027 = vld [vmem:[%s2760 + $0xd8] sm:$0xff]
    %v3028 = vld [vmem:[%s2760 + $0xe0] sm:$0xff]
    %v3029 = vld [vmem:[%s2760 + $0xe8] sm:$0xff]
    %v3030 = vld [vmem:[%s2760 + $0xf0] sm:$0xff]
    %v3031 = vld [vmem:[%s2760 + $0xf8] sm:$0xff]
    %v3032 = vld [vmem:[%s2760 + $0x100] sm:$0xff]
    %v3033 = vld [vmem:[%s2760 + $0x108] sm:$0xff]
    %v3034 = vld [vmem:[%s2760 + $0x110] sm:$0xff]
    %v3035 = vld [vmem:[%s2760 + $0x118] sm:$0xff]
    %v3036 = vld [vmem:[%s2760 + $0x120] sm:$0xff]
    %v3037 = vld [vmem:[%s2760 + $0x128] sm:$0xff]
    %v3038 = vld [vmem:[%s2760 + $0x130] sm:$0xff]
    %v3039 = vld [vmem:[%s2760 + $0x138] sm:$0xff]
    %v3040 = vld [vmem:[%s2760 + $0x140] sm:$0xff]
    %v3041 = vld [vmem:[%s2760 + $0x148] sm:$0xff]
    %v3042 = vld [vmem:[%s2760 + $0x150] sm:$0xff]
    %v3043 = vld [vmem:[%s2760 + $0x158] sm:$0xff]
    %v3044 = vld [vmem:[%s2760 + $0x160] sm:$0xff]
    %v3045 = vld [vmem:[%s2760 + $0x168] sm:$0xff]
    %v3046 = vld [vmem:[%s2760 + $0x170] sm:$0xff]
    %v3047 = vld [vmem:[%s2760 + $0x178] sm:$0xff]
    %v3048 = vld [vmem:[%s2760 + $0x180] sm:$0xff]
    %v3049 = vld [vmem:[%s2760 + $0x188] sm:$0xff]
    %v3050 = vld [vmem:[%s2760 + $0x190] sm:$0xff]
    %v3051 = vld [vmem:[%s2760 + $0x198] sm:$0xff]
    %v3052 = vld [vmem:[%s2760 + $0x1a0] sm:$0xff]
    %v3053 = vld [vmem:[%s2760 + $0x1a8] sm:$0xff]
    %v3054 = vld [vmem:[%s2760 + $0x1b0] sm:$0xff]
    %v3055 = vld [vmem:[%s2760 + $0x1b8] sm:$0xff]
    %v3056 = vld [vmem:[%s2760 + $0x1c0] sm:$0xff]
    %v3057 = vld [vmem:[%s2760 + $0x1c8] sm:$0xff]
    %v3058 = vld [vmem:[%s2760 + $0x1d0] sm:$0xff]
    %v3059 = vld [vmem:[%s2760 + $0x1d8] sm:$0xff]
    %v3060 = vld [vmem:[%s2760 + $0x1e0] sm:$0xff]
    %v3061 = vld [vmem:[%s2760 + $0x1e8] sm:$0xff]
    %v3062 = vld [vmem:[%s2760 + $0x1f0] sm:$0xff]
    %v3063 = vld [vmem:[%s2760 + $0x1f8] sm:$0xff]
    %3064 = vmatprep.subr.mxu0 %v3001
    %3065 = vmatpush1.msra.mxu0 %v3000
    %3066 = vmatprep.subr.mxu0 %v3005
    %3067 = vmatpush1.msra.mxu0 %v3004
    %3068 = vmatprep.subr.mxu0 %v3009
    %3069 = vmatpush1.msra.mxu0 %v3008
    %3070 = vmatprep.subr.mxu0 %v3013
    %3071 = vmatpush1.msra.mxu0 %v3012
    %3072 = vmatprep.subr.mxu0 %v3017
    %3073 = vmatpush1.msra.mxu0 %v3016
    %3074 = vmatprep.subr.mxu0 %v3021
    %3075 = vmatpush1.msra.mxu0 %v3020
    %3076 = vmatprep.subr.mxu0 %v3025
    %3077 = vmatpush1.msra.mxu0 %v3024
    %3078 = vmatprep.subr.mxu0 %v3029
    %3079 = vmatpush1.msra.mxu0 %v3028
    %3080 = vmatprep.subr.mxu0 %v3033
    %3081 = vmatpush1.msra.mxu0 %v3032
    %3082 = vmatprep.subr.mxu0 %v3037
    %3083 = vmatpush1.msra.mxu0 %v3036
    %3084 = vmatprep.subr.mxu0 %v3041
    %3085 = vmatpush1.msra.mxu0 %v3040
    %3086 = vmatprep.subr.mxu0 %v3045
    %3087 = vmatpush1.msra.mxu0 %v3044
    %3088 = vmatprep.subr.mxu0 %v3049
    %3089 = vmatpush1.msra.mxu0 %v3048
    %3090 = vmatprep.subr.mxu0 %v3053
    %3091 = vmatpush1.msra.mxu0 %v3052
    %3092 = vmatprep.subr.mxu0 %v3057
    %3093 = vmatpush1.msra.mxu0 %v3056
    %3094 = vmatprep.subr.mxu0 %v3061
    %3095 = vmatpush1.msra.mxu0 %v3060
    %3096 = vmatprep.subr.mxu0 0.0
    %3097 = vmatpush1.msra.mxu0 0.0
    %3098 = vmatprep.subr.mxu0 0.0
    %3099 = vmatpush1.msra.mxu0 0.0
    %3100 = vmatprep.subr.mxu0 0.0
    %3101 = vmatpush1.msra.mxu0 0.0
    %3102 = vmatprep.subr.mxu0 0.0
    %3103 = vmatpush1.msra.mxu0 0.0
    %3104 = vmatprep.subr.mxu0 0.0
    %3105 = vmatpush1.msra.mxu0 0.0
    %3106 = vmatprep.subr.mxu0 0.0
    %3107 = vmatpush1.msra.mxu0 0.0
    %3108 = vmatprep.subr.mxu0 0.0
    %3109 = vmatpush1.msra.mxu0 0.0
    %3110 = vmatprep.subr.mxu0 0.0
    %3111 = vmatpush1.msra.mxu0 0.0
    %3112 = vmatprep.subr.mxu0 0.0
    %3113 = vmatpush1.msra.mxu0 0.0
    %3114 = vmatprep.subr.mxu0 0.0
    %3115 = vmatpush1.msra.mxu0 0.0
    %3116 = vmatprep.subr.mxu0 0.0
    %3117 = vmatpush1.msra.mxu0 0.0
    %3118 = vmatprep.subr.mxu0 0.0
    %3119 = vmatpush1.msra.mxu0 0.0
    %3120 = vmatprep.subr.mxu0 0.0
    %3121 = vmatpush1.msra.mxu0 0.0
    %3122 = vmatprep.subr.mxu0 0.0
    %3123 = vmatpush1.msra.mxu0 0.0
    %3124 = vmatprep.subr.mxu0 0.0
    %3125 = vmatpush1.msra.mxu0 0.0
    %3126 = vmatprep.subr.mxu0 0.0
    %3127 = vmatpush1.msra.mxu0 0.0
    %3128 = vmatprep.mubr.f32.mxu0 0.0
    %3129 = vmatmul.mubr.f32.gmra.mrb[0].mxu0 %v2994
    %v3130 = vpop.f32.mrb[0].mxu0
    %v3131 = vadd.f32 0.0, %v3130
    %v3132 = vpop.f32.mrb[0].mxu0
    %v3133 = vadd.f32 0.0, %v3132
    %3134 = vdwg.mxu0
    %3135 = vmatprep.subr.mxu0 %v3003
    %3136 = vmatpush1.msra.mxu0 %v3002
    %3137 = vmatprep.subr.mxu0 %v3007
    %3138 = vmatpush1.msra.mxu0 %v3006
    %3139 = vmatprep.subr.mxu0 %v3011
    %3140 = vmatpush1.msra.mxu0 %v3010
    %3141 = vmatprep.subr.mxu0 %v3015
    %3142 = vmatpush1.msra.mxu0 %v3014
    %3143 = vmatprep.subr.mxu0 %v3019
    %3144 = vmatpush1.msra.mxu0 %v3018
    %3145 = vmatprep.subr.mxu0 %v3023
    %3146 = vmatpush1.msra.mxu0 %v3022
    %3147 = vmatprep.subr.mxu0 %v3027
    %3148 = vmatpush1.msra.mxu0 %v3026
    %3149 = vmatprep.subr.mxu0 %v3031
    %3150 = vmatpush1.msra.mxu0 %v3030
    %3151 = vmatprep.subr.mxu0 %v3035
    %3152 = vmatpush1.msra.mxu0 %v3034
    %3153 = vmatprep.subr.mxu0 %v3039
    %3154 = vmatpush1.msra.mxu0 %v3038
    %3155 = vmatprep.subr.mxu0 %v3043
    %3156 = vmatpush1.msra.mxu0 %v3042
    %3157 = vmatprep.subr.mxu0 %v3047
    %3158 = vmatpush1.msra.mxu0 %v3046
    %3159 = vmatprep.subr.mxu0 %v3051
    %3160 = vmatpush1.msra.mxu0 %v3050
    %3161 = vmatprep.subr.mxu0 %v3055
    %3162 = vmatpush1.msra.mxu0 %v3054
    %3163 = vmatprep.subr.mxu0 %v3059
    %3164 = vmatpush1.msra.mxu0 %v3058
    %3165 = vmatprep.subr.mxu0 %v3063
    %3166 = vmatpush1.msra.mxu0 %v3062
    %3167 = vmatprep.subr.mxu0 0.0
    %3168 = vmatpush1.msra.mxu0 0.0
    %3169 = vmatprep.subr.mxu0 0.0
    %3170 = vmatpush1.msra.mxu0 0.0
    %3171 = vmatprep.subr.mxu0 0.0
    %3172 = vmatpush1.msra.mxu0 0.0
    %3173 = vmatprep.subr.mxu0 0.0
    %3174 = vmatpush1.msra.mxu0 0.0
    %3175 = vmatprep.subr.mxu0 0.0
    %3176 = vmatpush1.msra.mxu0 0.0
    %3177 = vmatprep.subr.mxu0 0.0
    %3178 = vmatpush1.msra.mxu0 0.0
    %3179 = vmatprep.subr.mxu0 0.0
    %3180 = vmatpush1.msra.mxu0 0.0
    %3181 = vmatprep.subr.mxu0 0.0
    %3182 = vmatpush1.msra.mxu0 0.0
    %3183 = vmatprep.subr.mxu0 0.0
    %3184 = vmatpush1.msra.mxu0 0.0
    %3185 = vmatprep.subr.mxu0 0.0
    %3186 = vmatpush1.msra.mxu0 0.0
    %3187 = vmatprep.subr.mxu0 0.0
    %3188 = vmatpush1.msra.mxu0 0.0
    %3189 = vmatprep.subr.mxu0 0.0
    %3190 = vmatpush1.msra.mxu0 0.0
    %3191 = vmatprep.subr.mxu0 0.0
    %3192 = vmatpush1.msra.mxu0 0.0
    %3193 = vmatprep.subr.mxu0 0.0
    %3194 = vmatpush1.msra.mxu0 0.0
    %3195 = vmatprep.subr.mxu0 0.0
    %3196 = vmatpush1.msra.mxu0 0.0
    %3197 = vmatprep.subr.mxu0 0.0
    %3198 = vmatpush1.msra.mxu0 0.0
    %3199 = vmatprep.mubr.f32.mxu0 0.0
    %3200 = vmatmul.mubr.f32.gmra.mrb[0].mxu0 %v2994
    %v3201 = vpop.f32.mrb[0].mxu0
    %v3202 = vadd.f32 0.0, %v3201
    %v3203 = vpop.f32.mrb[0].mxu0
    %v3204 = vadd.f32 0.0, %v3203
    %3205 = vdwg.mxu0
    %v3206 = vadd.f32 %v2996, %v3131
    %v3207 = vadd.f32 %v2997, %v3133
    %v3208 = vadd.f32 %v2998, %v3202
    %v3209 = vadd.f32 %v2999, %v3204
    %v3210 = vxor.u32 %v3206, 2147483648
    %v3211 = vmul.f32 %v3210, 1.442695
    %v3212 = vpow.pop %v3211
    %v3213 = vadd.f32 %v3212, 1.0
    %v3214 = vrcp.pop %v3213
    %v3215 = vmul.f32 1.0, %v3214
    %v3216 = vxor.u32 %v3207, 2147483648
    %v3217 = vmul.f32 %v3216, 1.442695
    %v3218 = vpow.pop %v3217
    %v3219 = vadd.f32 %v3218, 1.0
    %v3220 = vrcp.pop %v3219
    %v3221 = vmul.f32 1.0, %v3220
    %v3222 = vtanh.pop %v3208
    %v3223 = vxor.u32 %v3209, 2147483648
    %v3224 = vmul.f32 %v3223, 1.442695
    %v3225 = vpow.pop %v3224
    %v3226 = vadd.f32 %v3225, 1.0
    %v3227 = vrcp.pop %v3226
    %v3228 = vmul.f32 1.0, %v3227
    %v3229 = vmul.f32 %v3221, %v2992
    %v3230 = vmul.f32 %v3215, %v3222
    %v3231 = vadd.f32 %v3229, %v3230
    %v3232 = vtanh.pop %v3231
    %v3233 = vmul.f32 %v3228, %v3232
    %3234 = vst [vmem:[%s948] sm:$0xff] %v3233
    %v3235 = vld [vmem:[%s950] sm:$0xff]
    %v3236 = vld [vmem:[%s950 + $0x8] sm:$0xff]
    %v3237 = vld [vmem:[%s950 + $0x10] sm:$0xff]
    %v3238 = vld [vmem:[%s950 + $0x18] sm:$0xff]
    %v3239 = vld [vmem:[%s2760] sm:$0xff]
    %v3240 = vld [vmem:[%s2760 + $0x8] sm:$0xff]
    %v3241 = vld [vmem:[%s2760 + $0x10] sm:$0xff]
    %v3242 = vld [vmem:[%s2760 + $0x18] sm:$0xff]
    %v3243 = vld [vmem:[%s2760 + $0x20] sm:$0xff]
    %v3244 = vld [vmem:[%s2760 + $0x28] sm:$0xff]
    %v3245 = vld [vmem:[%s2760 + $0x30] sm:$0xff]
    %v3246 = vld [vmem:[%s2760 + $0x38] sm:$0xff]
    %v3247 = vld [vmem:[%s2760 + $0x40] sm:$0xff]
    %v3248 = vld [vmem:[%s2760 + $0x48] sm:$0xff]
    %v3249 = vld [vmem:[%s2760 + $0x50] sm:$0xff]
    %v3250 = vld [vmem:[%s2760 + $0x58] sm:$0xff]
    %v3251 = vld [vmem:[%s2760 + $0x60] sm:$0xff]
    %v3252 = vld [vmem:[%s2760 + $0x68] sm:$0xff]
    %v3253 = vld [vmem:[%s2760 + $0x70] sm:$0xff]
    %v3254 = vld [vmem:[%s2760 + $0x78] sm:$0xff]
    %v3255 = vld [vmem:[%s2760 + $0x80] sm:$0xff]
    %v3256 = vld [vmem:[%s2760 + $0x88] sm:$0xff]
    %v3257 = vld [vmem:[%s2760 + $0x90] sm:$0xff]
    %v3258 = vld [vmem:[%s2760 + $0x98] sm:$0xff]
    %v3259 = vld [vmem:[%s2760 + $0xa0] sm:$0xff]
    %v3260 = vld [vmem:[%s2760 + $0xa8] sm:$0xff]
    %v3261 = vld [vmem:[%s2760 + $0xb0] sm:$0xff]
    %v3262 = vld [vmem:[%s2760 + $0xb8] sm:$0xff]
    %v3263 = vld [vmem:[%s2760 + $0xc0] sm:$0xff]
    %v3264 = vld [vmem:[%s2760 + $0xc8] sm:$0xff]
    %v3265 = vld [vmem:[%s2760 + $0xd0] sm:$0xff]
    %v3266 = vld [vmem:[%s2760 + $0xd8] sm:$0xff]
    %v3267 = vld [vmem:[%s2760 + $0xe0] sm:$0xff]
    %v3268 = vld [vmem:[%s2760 + $0xe8] sm:$0xff]
    %v3269 = vld [vmem:[%s2760 + $0xf0] sm:$0xff]
    %v3270 = vld [vmem:[%s2760 + $0xf8] sm:$0xff]
    %v3271 = vld [vmem:[%s2760 + $0x100] sm:$0xff]
    %v3272 = vld [vmem:[%s2760 + $0x108] sm:$0xff]
    %v3273 = vld [vmem:[%s2760 + $0x110] sm:$0xff]
    %v3274 = vld [vmem:[%s2760 + $0x118] sm:$0xff]
    %v3275 = vld [vmem:[%s2760 + $0x120] sm:$0xff]
    %v3276 = vld [vmem:[%s2760 + $0x128] sm:$0xff]
    %v3277 = vld [vmem:[%s2760 + $0x130] sm:$0xff]
    %v3278 = vld [vmem:[%s2760 + $0x138] sm:$0xff]
    %v3279 = vld [vmem:[%s2760 + $0x140] sm:$0xff]
    %v3280 = vld [vmem:[%s2760 + $0x148] sm:$0xff]
    %v3281 = vld [vmem:[%s2760 + $0x150] sm:$0xff]
    %v3282 = vld [vmem:[%s2760 + $0x158] sm:$0xff]
    %v3283 = vld [vmem:[%s2760 + $0x160] sm:$0xff]
    %v3284 = vld [vmem:[%s2760 + $0x168] sm:$0xff]
    %v3285 = vld [vmem:[%s2760 + $0x170] sm:$0xff]
    %v3286 = vld [vmem:[%s2760 + $0x178] sm:$0xff]
    %v3287 = vld [vmem:[%s2760 + $0x180] sm:$0xff]
    %v3288 = vld [vmem:[%s2760 + $0x188] sm:$0xff]
    %v3289 = vld [vmem:[%s2760 + $0x190] sm:$0xff]
    %v3290 = vld [vmem:[%s2760 + $0x198] sm:$0xff]
    %v3291 = vld [vmem:[%s2760 + $0x1a0] sm:$0xff]
    %v3292 = vld [vmem:[%s2760 + $0x1a8] sm:$0xff]
    %v3293 = vld [vmem:[%s2760 + $0x1b0] sm:$0xff]
    %v3294 = vld [vmem:[%s2760 + $0x1b8] sm:$0xff]
    %v3295 = vld [vmem:[%s2760 + $0x1c0] sm:$0xff]
    %v3296 = vld [vmem:[%s2760 + $0x1c8] sm:$0xff]
    %v3297 = vld [vmem:[%s2760 + $0x1d0] sm:$0xff]
    %v3298 = vld [vmem:[%s2760 + $0x1d8] sm:$0xff]
    %v3299 = vld [vmem:[%s2760 + $0x1e0] sm:$0xff]
    %v3300 = vld [vmem:[%s2760 + $0x1e8] sm:$0xff]
    %v3301 = vld [vmem:[%s2760 + $0x1f0] sm:$0xff]
    %v3302 = vld [vmem:[%s2760 + $0x1f8] sm:$0xff]
    %3303 = vmatprep.subr.mxu0 %v3240
    %3304 = vmatpush1.msra.mxu0 %v3239
    %3305 = vmatprep.subr.mxu0 %v3244
    %3306 = vmatpush1.msra.mxu0 %v3243
    %3307 = vmatprep.subr.mxu0 %v3248
    %3308 = vmatpush1.msra.mxu0 %v3247
    %3309 = vmatprep.subr.mxu0 %v3252
    %3310 = vmatpush1.msra.mxu0 %v3251
    %3311 = vmatprep.subr.mxu0 %v3256
    %3312 = vmatpush1.msra.mxu0 %v3255
    %3313 = vmatprep.subr.mxu0 %v3260
    %3314 = vmatpush1.msra.mxu0 %v3259
    %3315 = vmatprep.subr.mxu0 %v3264
    %3316 = vmatpush1.msra.mxu0 %v3263
    %3317 = vmatprep.subr.mxu0 %v3268
    %3318 = vmatpush1.msra.mxu0 %v3267
    %3319 = vmatprep.subr.mxu0 %v3272
    %3320 = vmatpush1.msra.mxu0 %v3271
    %3321 = vmatprep.subr.mxu0 %v3276
    %3322 = vmatpush1.msra.mxu0 %v3275
    %3323 = vmatprep.subr.mxu0 %v3280
    %3324 = vmatpush1.msra.mxu0 %v3279
    %3325 = vmatprep.subr.mxu0 %v3284
    %3326 = vmatpush1.msra.mxu0 %v3283
    %3327 = vmatprep.subr.mxu0 %v3288
    %3328 = vmatpush1.msra.mxu0 %v3287
    %3329 = vmatprep.subr.mxu0 %v3292
    %3330 = vmatpush1.msra.mxu0 %v3291
    %3331 = vmatprep.subr.mxu0 %v3296
    %3332 = vmatpush1.msra.mxu0 %v3295
    %3333 = vmatprep.subr.mxu0 %v3300
    %3334 = vmatpush1.msra.mxu0 %v3299
    %3335 = vmatprep.subr.mxu0 0.0
    %3336 = vmatpush1.msra.mxu0 0.0
    %3337 = vmatprep.subr.mxu0 0.0
    %3338 = vmatpush1.msra.mxu0 0.0
    %3339 = vmatprep.subr.mxu0 0.0
    %3340 = vmatpush1.msra.mxu0 0.0
    %3341 = vmatprep.subr.mxu0 0.0
    %3342 = vmatpush1.msra.mxu0 0.0
    %3343 = vmatprep.subr.mxu0 0.0
    %3344 = vmatpush1.msra.mxu0 0.0
    %3345 = vmatprep.subr.mxu0 0.0
    %3346 = vmatpush1.msra.mxu0 0.0
    %3347 = vmatprep.subr.mxu0 0.0
    %3348 = vmatpush1.msra.mxu0 0.0
    %3349 = vmatprep.subr.mxu0 0.0
    %3350 = vmatpush1.msra.mxu0 0.0
    %3351 = vmatprep.subr.mxu0 0.0
    %3352 = vmatpush1.msra.mxu0 0.0
    %3353 = vmatprep.subr.mxu0 0.0
    %3354 = vmatpush1.msra.mxu0 0.0
    %3355 = vmatprep.subr.mxu0 0.0
    %3356 = vmatpush1.msra.mxu0 0.0
    %3357 = vmatprep.subr.mxu0 0.0
    %3358 = vmatpush1.msra.mxu0 0.0
    %3359 = vmatprep.subr.mxu0 0.0
    %3360 = vmatpush1.msra.mxu0 0.0
    %3361 = vmatprep.subr.mxu0 0.0
    %3362 = vmatpush1.msra.mxu0 0.0
    %3363 = vmatprep.subr.mxu0 0.0
    %3364 = vmatpush1.msra.mxu0 0.0
    %3365 = vmatprep.subr.mxu0 0.0
    %3366 = vmatpush1.msra.mxu0 0.0
    %3367 = vmatprep.mubr.f32.mxu0 0.0
    %3368 = vmatmul.mubr.f32.gmra.mrb[0].mxu0 %v3233
    %v3369 = vpop.f32.mrb[0].mxu0
    %v3370 = vadd.f32 0.0, %v3369
    %v3371 = vpop.f32.mrb[0].mxu0
    %v3372 = vadd.f32 0.0, %v3371
    %3373 = vdwg.mxu0
    %3374 = vmatprep.subr.mxu0 %v3242
    %3375 = vmatpush1.msra.mxu0 %v3241
    %3376 = vmatprep.subr.mxu0 %v3246
    %3377 = vmatpush1.msra.mxu0 %v3245
    %3378 = vmatprep.subr.mxu0 %v3250
    %3379 = vmatpush1.msra.mxu0 %v3249
    %3380 = vmatprep.subr.mxu0 %v3254
    %3381 = vmatpush1.msra.mxu0 %v3253
    %3382 = vmatprep.subr.mxu0 %v3258
    %3383 = vmatpush1.msra.mxu0 %v3257
    %3384 = vmatprep.subr.mxu0 %v3262
    %3385 = vmatpush1.msra.mxu0 %v3261
    %3386 = vmatprep.subr.mxu0 %v3266
    %3387 = vmatpush1.msra.mxu0 %v3265
    %3388 = vmatprep.subr.mxu0 %v3270
    %3389 = vmatpush1.msra.mxu0 %v3269
    %3390 = vmatprep.subr.mxu0 %v3274
    %3391 = vmatpush1.msra.mxu0 %v3273
    %3392 = vmatprep.subr.mxu0 %v3278
    %3393 = vmatpush1.msra.mxu0 %v3277
    %3394 = vmatprep.subr.mxu0 %v3282
    %3395 = vmatpush1.msra.mxu0 %v3281
    %3396 = vmatprep.subr.mxu0 %v3286
    %3397 = vmatpush1.msra.mxu0 %v3285
    %3398 = vmatprep.subr.mxu0 %v3290
    %3399 = vmatpush1.msra.mxu0 %v3289
    %3400 = vmatprep.subr.mxu0 %v3294
    %3401 = vmatpush1.msra.mxu0 %v3293
    %3402 = vmatprep.subr.mxu0 %v3298
    %3403 = vmatpush1.msra.mxu0 %v3297
    %3404 = vmatprep.subr.mxu0 %v3302
    %3405 = vmatpush1.msra.mxu0 %v3301
    %3406 = vmatprep.subr.mxu0 0.0
    %3407 = vmatpush1.msra.mxu0 0.0
    %3408 = vmatprep.subr.mxu0 0.0
    %3409 = vmatpush1.msra.mxu0 0.0
    %3410 = vmatprep.subr.mxu0 0.0
    %3411 = vmatpush1.msra.mxu0 0.0
    %3412 = vmatprep.subr.mxu0 0.0
    %3413 = vmatpush1.msra.mxu0 0.0
    %3414 = vmatprep.subr.mxu0 0.0
    %3415 = vmatpush1.msra.mxu0 0.0
    %3416 = vmatprep.subr.mxu0 0.0
    %3417 = vmatpush1.msra.mxu0 0.0
    %3418 = vmatprep.subr.mxu0 0.0
    %3419 = vmatpush1.msra.mxu0 0.0
    %3420 = vmatprep.subr.mxu0 0.0
    %3421 = vmatpush1.msra.mxu0 0.0
    %3422 = vmatprep.subr.mxu0 0.0
    %3423 = vmatpush1.msra.mxu0 0.0
    %3424 = vmatprep.subr.mxu0 0.0
    %3425 = vmatpush1.msra.mxu0 0.0
    %3426 = vmatprep.subr.mxu0 0.0
    %3427 = vmatpush1.msra.mxu0 0.0
    %3428 = vmatprep.subr.mxu0 0.0
    %3429 = vmatpush1.msra.mxu0 0.0
    %3430 = vmatprep.subr.mxu0 0.0
    %3431 = vmatpush1.msra.mxu0 0.0
    %3432 = vmatprep.subr.mxu0 0.0
    %3433 = vmatpush1.msra.mxu0 0.0
    %3434 = vmatprep.subr.mxu0 0.0
    %3435 = vmatpush1.msra.mxu0 0.0
    %3436 = vmatprep.subr.mxu0 0.0
    %3437 = vmatpush1.msra.mxu0 0.0
    %3438 = vmatprep.mubr.f32.mxu0 0.0
    %3439 = vmatmul.mubr.f32.gmra.mrb[0].mxu0 %v3233
    %v3440 = vpop.f32.mrb[0].mxu0
    %v3441 = vadd.f32 0.0, %v3440
    %v3442 = vpop.f32.mrb[0].mxu0
    %v3443 = vadd.f32 0.0, %v3442
    %3444 = vdwg.mxu0
    %v3445 = vadd.f32 %v3235, %v3370
    %v3446 = vadd.f32 %v3236, %v3372
    %v3447 = vadd.f32 %v3237, %v3441
    %v3448 = vadd.f32 %v3238, %v3443
    %v3449 = vxor.u32 %v3445, 2147483648
    %v3450 = vmul.f32 %v3449, 1.442695
    %v3451 = vpow.pop %v3450
    %v3452 = vadd.f32 %v3451, 1.0
    %v3453 = vrcp.pop %v3452
    %v3454 = vmul.f32 1.0, %v3453
    %v3455 = vxor.u32 %v3446, 2147483648
    %v3456 = vmul.f32 %v3455, 1.442695
    %v3457 = vpow.pop %v3456
    %v3458 = vadd.f32 %v3457, 1.0
    %v3459 = vrcp.pop %v3458
    %v3460 = vmul.f32 1.0, %v3459
    %v3461 = vtanh.pop %v3447
    %v3462 = vxor.u32 %v3448, 2147483648
    %v3463 = vmul.f32 %v3462, 1.442695
    %v3464 = vpow.pop %v3463
    %v3465 = vadd.f32 %v3464, 1.0
    %v3466 = vrcp.pop %v3465
    %v3467 = vmul.f32 1.0, %v3466
    %v3468 = vmul.f32 %v3460, %v3231
    %v3469 = vmul.f32 %v3454, %v3461
    %v3470 = vadd.f32 %v3468, %v3469
    %v3471 = vtanh.pop %v3470
    %v3472 = vmul.f32 %v3467, %v3471
    %3473 = vst [vmem:[%s1189] sm:$0xff] %v3472
    %v3474 = vld [vmem:[%s1191] sm:$0xff]
    %v3475 = vld [vmem:[%s1191 + $0x8] sm:$0xff]
    %v3476 = vld [vmem:[%s1191 + $0x10] sm:$0xff]
    %v3477 = vld [vmem:[%s1191 + $0x18] sm:$0xff]
    %v3478 = vld [vmem:[%s2760] sm:$0xff]
    %v3479 = vld [vmem:[%s2760 + $0x8] sm:$0xff]
    %v3480 = vld [vmem:[%s2760 + $0x10] sm:$0xff]
    %v3481 = vld [vmem:[%s2760 + $0x18] sm:$0xff]
    %v3482 = vld [vmem:[%s2760 + $0x20] sm:$0xff]
    %v3483 = vld [vmem:[%s2760 + $0x28] sm:$0xff]
    %v3484 = vld [vmem:[%s2760 + $0x30] sm:$0xff]
    %v3485 = vld [vmem:[%s2760 + $0x38] sm:$0xff]
    %v3486 = vld [vmem:[%s2760 + $0x40] sm:$0xff]
    %v3487 = vld [vmem:[%s2760 + $0x48] sm:$0xff]
    %v3488 = vld [vmem:[%s2760 + $0x50] sm:$0xff]
    %v3489 = vld [vmem:[%s2760 + $0x58] sm:$0xff]
    %v3490 = vld [vmem:[%s2760 + $0x60] sm:$0xff]
    %v3491 = vld [vmem:[%s2760 + $0x68] sm:$0xff]
    %v3492 = vld [vmem:[%s2760 + $0x70] sm:$0xff]
    %v3493 = vld [vmem:[%s2760 + $0x78] sm:$0xff]
    %v3494 = vld [vmem:[%s2760 + $0x80] sm:$0xff]
    %v3495 = vld [vmem:[%s2760 + $0x88] sm:$0xff]
    %v3496 = vld [vmem:[%s2760 + $0x90] sm:$0xff]
    %v3497 = vld [vmem:[%s2760 + $0x98] sm:$0xff]
    %v3498 = vld [vmem:[%s2760 + $0xa0] sm:$0xff]
    %v3499 = vld [vmem:[%s2760 + $0xa8] sm:$0xff]
    %v3500 = vld [vmem:[%s2760 + $0xb0] sm:$0xff]
    %v3501 = vld [vmem:[%s2760 + $0xb8] sm:$0xff]
    %v3502 = vld [vmem:[%s2760 + $0xc0] sm:$0xff]
    %v3503 = vld [vmem:[%s2760 + $0xc8] sm:$0xff]
    %v3504 = vld [vmem:[%s2760 + $0xd0] sm:$0xff]
    %v3505 = vld [vmem:[%s2760 + $0xd8] sm:$0xff]
    %v3506 = vld [vmem:[%s2760 + $0xe0] sm:$0xff]
    %v3507 = vld [vmem:[%s2760 + $0xe8] sm:$0xff]
    %v3508 = vld [vmem:[%s2760 + $0xf0] sm:$0xff]
    %v3509 = vld [vmem:[%s2760 + $0xf8] sm:$0xff]
    %v3510 = vld [vmem:[%s2760 + $0x100] sm:$0xff]
    %v3511 = vld [vmem:[%s2760 + $0x108] sm:$0xff]
    %v3512 = vld [vmem:[%s2760 + $0x110] sm:$0xff]
    %v3513 = vld [vmem:[%s2760 + $0x118] sm:$0xff]
    %v3514 = vld [vmem:[%s2760 + $0x120] sm:$0xff]
    %v3515 = vld [vmem:[%s2760 + $0x128] sm:$0xff]
    %v3516 = vld [vmem:[%s2760 + $0x130] sm:$0xff]
    %v3517 = vld [vmem:[%s2760 + $0x138] sm:$0xff]
    %v3518 = vld [vmem:[%s2760 + $0x140] sm:$0xff]
    %v3519 = vld [vmem:[%s2760 + $0x148] sm:$0xff]
    %v3520 = vld [vmem:[%s2760 + $0x150] sm:$0xff]
    %v3521 = vld [vmem:[%s2760 + $0x158] sm:$0xff]
    %v3522 = vld [vmem:[%s2760 + $0x160] sm:$0xff]
    %v3523 = vld [vmem:[%s2760 + $0x168] sm:$0xff]
    %v3524 = vld [vmem:[%s2760 + $0x170] sm:$0xff]
    %v3525 = vld [vmem:[%s2760 + $0x178] sm:$0xff]
    %v3526 = vld [vmem:[%s2760 + $0x180] sm:$0xff]
    %v3527 = vld [vmem:[%s2760 + $0x188] sm:$0xff]
    %v3528 = vld [vmem:[%s2760 + $0x190] sm:$0xff]
    %v3529 = vld [vmem:[%s2760 + $0x198] sm:$0xff]
    %v3530 = vld [vmem:[%s2760 + $0x1a0] sm:$0xff]
    %v3531 = vld [vmem:[%s2760 + $0x1a8] sm:$0xff]
    %v3532 = vld [vmem:[%s2760 + $0x1b0] sm:$0xff]
    %v3533 = vld [vmem:[%s2760 + $0x1b8] sm:$0xff]
    %v3534 = vld [vmem:[%s2760 + $0x1c0] sm:$0xff]
    %v3535 = vld [vmem:[%s2760 + $0x1c8] sm:$0xff]
    %v3536 = vld [vmem:[%s2760 + $0x1d0] sm:$0xff]
    %v3537 = vld [vmem:[%s2760 + $0x1d8] sm:$0xff]
    %v3538 = vld [vmem:[%s2760 + $0x1e0] sm:$0xff]
    %v3539 = vld [vmem:[%s2760 + $0x1e8] sm:$0xff]
    %v3540 = vld [vmem:[%s2760 + $0x1f0] sm:$0xff]
    %v3541 = vld [vmem:[%s2760 + $0x1f8] sm:$0xff]
    %3542 = vmatprep.subr.mxu0 %v3479
    %3543 = vmatpush1.msra.mxu0 %v3478
    %3544 = vmatprep.subr.mxu0 %v3483
    %3545 = vmatpush1.msra.mxu0 %v3482
    %3546 = vmatprep.subr.mxu0 %v3487
    %3547 = vmatpush1.msra.mxu0 %v3486
    %3548 = vmatprep.subr.mxu0 %v3491
    %3549 = vmatpush1.msra.mxu0 %v3490
    %3550 = vmatprep.subr.mxu0 %v3495
    %3551 = vmatpush1.msra.mxu0 %v3494
    %3552 = vmatprep.subr.mxu0 %v3499
    %3553 = vmatpush1.msra.mxu0 %v3498
    %3554 = vmatprep.subr.mxu0 %v3503
    %3555 = vmatpush1.msra.mxu0 %v3502
    %3556 = vmatprep.subr.mxu0 %v3507
    %3557 = vmatpush1.msra.mxu0 %v3506
    %3558 = vmatprep.subr.mxu0 %v3511
    %3559 = vmatpush1.msra.mxu0 %v3510
    %3560 = vmatprep.subr.mxu0 %v3515
    %3561 = vmatpush1.msra.mxu0 %v3514
    %3562 = vmatprep.subr.mxu0 %v3519
    %3563 = vmatpush1.msra.mxu0 %v3518
    %3564 = vmatprep.subr.mxu0 %v3523
    %3565 = vmatpush1.msra.mxu0 %v3522
    %3566 = vmatprep.subr.mxu0 %v3527
    %3567 = vmatpush1.msra.mxu0 %v3526
    %3568 = vmatprep.subr.mxu0 %v3531
    %3569 = vmatpush1.msra.mxu0 %v3530
    %3570 = vmatprep.subr.mxu0 %v3535
    %3571 = vmatpush1.msra.mxu0 %v3534
    %3572 = vmatprep.subr.mxu0 %v3539
    %3573 = vmatpush1.msra.mxu0 %v3538
    %3574 = vmatprep.subr.mxu0 0.0
    %3575 = vmatpush1.msra.mxu0 0.0
    %3576 = vmatprep.subr.mxu0 0.0
    %3577 = vmatpush1.msra.mxu0 0.0
    %3578 = vmatprep.subr.mxu0 0.0
    %3579 = vmatpush1.msra.mxu0 0.0
    %3580 = vmatprep.subr.mxu0 0.0
    %3581 = vmatpush1.msra.mxu0 0.0
    %3582 = vmatprep.subr.mxu0 0.0
    %3583 = vmatpush1.msra.mxu0 0.0
    %3584 = vmatprep.subr.mxu0 0.0
    %3585 = vmatpush1.msra.mxu0 0.0
    %3586 = vmatprep.subr.mxu0 0.0
    %3587 = vmatpush1.msra.mxu0 0.0
    %3588 = vmatprep.subr.mxu0 0.0
    %3589 = vmatpush1.msra.mxu0 0.0
    %3590 = vmatprep.subr.mxu0 0.0
    %3591 = vmatpush1.msra.mxu0 0.0
    %3592 = vmatprep.subr.mxu0 0.0
    %3593 = vmatpush1.msra.mxu0 0.0
    %3594 = vmatprep.subr.mxu0 0.0
    %3595 = vmatpush1.msra.mxu0 0.0
    %3596 = vmatprep.subr.mxu0 0.0
    %3597 = vmatpush1.msra.mxu0 0.0
    %3598 = vmatprep.subr.mxu0 0.0
    %3599 = vmatpush1.msra.mxu0 0.0
    %3600 = vmatprep.subr.mxu0 0.0
    %3601 = vmatpush1.msra.mxu0 0.0
    %3602 = vmatprep.subr.mxu0 0.0
    %3603 = vmatpush1.msra.mxu0 0.0
    %3604 = vmatprep.subr.mxu0 0.0
    %3605 = vmatpush1.msra.mxu0 0.0
    %3606 = vmatprep.mubr.f32.mxu0 0.0
    %3607 = vmatmul.mubr.f32.gmra.mrb[0].mxu0 %v3472
    %v3608 = vpop.f32.mrb[0].mxu0
    %v3609 = vadd.f32 0.0, %v3608
    %v3610 = vpop.f32.mrb[0].mxu0
    %v3611 = vadd.f32 0.0, %v3610
    %3612 = vdwg.mxu0
    %3613 = vmatprep.subr.mxu0 %v3481
    %3614 = vmatpush1.msra.mxu0 %v3480
    %3615 = vmatprep.subr.mxu0 %v3485
    %3616 = vmatpush1.msra.mxu0 %v3484
    %3617 = vmatprep.subr.mxu0 %v3489
    %3618 = vmatpush1.msra.mxu0 %v3488
    %3619 = vmatprep.subr.mxu0 %v3493
    %3620 = vmatpush1.msra.mxu0 %v3492
    %3621 = vmatprep.subr.mxu0 %v3497
    %3622 = vmatpush1.msra.mxu0 %v3496
    %3623 = vmatprep.subr.mxu0 %v3501
    %3624 = vmatpush1.msra.mxu0 %v3500
    %3625 = vmatprep.subr.mxu0 %v3505
    %3626 = vmatpush1.msra.mxu0 %v3504
    %3627 = vmatprep.subr.mxu0 %v3509
    %3628 = vmatpush1.msra.mxu0 %v3508
    %3629 = vmatprep.subr.mxu0 %v3513
    %3630 = vmatpush1.msra.mxu0 %v3512
    %3631 = vmatprep.subr.mxu0 %v3517
    %3632 = vmatpush1.msra.mxu0 %v3516
    %3633 = vmatprep.subr.mxu0 %v3521
    %3634 = vmatpush1.msra.mxu0 %v3520
    %3635 = vmatprep.subr.mxu0 %v3525
    %3636 = vmatpush1.msra.mxu0 %v3524
    %3637 = vmatprep.subr.mxu0 %v3529
    %3638 = vmatpush1.msra.mxu0 %v3528
    %3639 = vmatprep.subr.mxu0 %v3533
    %3640 = vmatpush1.msra.mxu0 %v3532
    %3641 = vmatprep.subr.mxu0 %v3537
    %3642 = vmatpush1.msra.mxu0 %v3536
    %3643 = vmatprep.subr.mxu0 %v3541
    %3644 = vmatpush1.msra.mxu0 %v3540
    %3645 = vmatprep.subr.mxu0 0.0
    %3646 = vmatpush1.msra.mxu0 0.0
    %3647 = vmatprep.subr.mxu0 0.0
    %3648 = vmatpush1.msra.mxu0 0.0
    %3649 = vmatprep.subr.mxu0 0.0
    %3650 = vmatpush1.msra.mxu0 0.0
    %3651 = vmatprep.subr.mxu0 0.0
    %3652 = vmatpush1.msra.mxu0 0.0
    %3653 = vmatprep.subr.mxu0 0.0
    %3654 = vmatpush1.msra.mxu0 0.0
    %3655 = vmatprep.subr.mxu0 0.0
    %3656 = vmatpush1.msra.mxu0 0.0
    %3657 = vmatprep.subr.mxu0 0.0
    %3658 = vmatpush1.msra.mxu0 0.0
    %3659 = vmatprep.subr.mxu0 0.0
    %3660 = vmatpush1.msra.mxu0 0.0
    %3661 = vmatprep.subr.mxu0 0.0
    %3662 = vmatpush1.msra.mxu0 0.0
    %3663 = vmatprep.subr.mxu0 0.0
    %3664 = vmatpush1.msra.mxu0 0.0
    %3665 = vmatprep.subr.mxu0 0.0
    %3666 = vmatpush1.msra.mxu0 0.0
    %3667 = vmatprep.subr.mxu0 0.0
    %3668 = vmatpush1.msra.mxu0 0.0
    %3669 = vmatprep.subr.mxu0 0.0
    %3670 = vmatpush1.msra.mxu0 0.0
    %3671 = vmatprep.subr.mxu0 0.0
    %3672 = vmatpush1.msra.mxu0 0.0
    %3673 = vmatprep.subr.mxu0 0.0
    %3674 = vmatpush1.msra.mxu0 0.0
    %3675 = vmatprep.subr.mxu0 0.0
    %3676 = vmatpush1.msra.mxu0 0.0
    %3677 = vmatprep.mubr.f32.mxu0 0.0
    %3678 = vmatmul.mubr.f32.gmra.mrb[0].mxu0 %v3472
    %v3679 = vpop.f32.mrb[0].mxu0
    %v3680 = vadd.f32 0.0, %v3679
    %v3681 = vpop.f32.mrb[0].mxu0
    %v3682 = vadd.f32 0.0, %v3681
    %3683 = vdwg.mxu0
    %v3684 = vadd.f32 %v3474, %v3609
    %v3685 = vadd.f32 %v3475, %v3611
    %v3686 = vadd.f32 %v3476, %v3680
    %v3687 = vadd.f32 %v3477, %v3682
    %v3688 = vxor.u32 %v3684, 2147483648
    %v3689 = vmul.f32 %v3688, 1.442695
    %v3690 = vpow.pop %v3689
    %v3691 = vadd.f32 %v3690, 1.0
    %v3692 = vrcp.pop %v3691
    %v3693 = vmul.f32 1.0, %v3692
    %v3694 = vxor.u32 %v3685, 2147483648
    %v3695 = vmul.f32 %v3694, 1.442695
    %v3696 = vpow.pop %v3695
    %v3697 = vadd.f32 %v3696, 1.0
    %v3698 = vrcp.pop %v3697
    %v3699 = vmul.f32 1.0, %v3698
    %v3700 = vtanh.pop %v3686
    %v3701 = vxor.u32 %v3687, 2147483648
    %v3702 = vmul.f32 %v3701, 1.442695
    %v3703 = vpow.pop %v3702
    %v3704 = vadd.f32 %v3703, 1.0
    %v3705 = vrcp.pop %v3704
    %v3706 = vmul.f32 1.0, %v3705
    %v3707 = vmul.f32 %v3699, %v3470
    %v3708 = vmul.f32 %v3693, %v3700
    %v3709 = vadd.f32 %v3707, %v3708
    %v3710 = vtanh.pop %v3709
    %v3711 = vmul.f32 %v3706, %v3710
    %3712 = vst [vmem:[%s1430] sm:$0xff] %v3711
    %v3713 = vld [vmem:[%s1432] sm:$0xff]
    %v3714 = vld [vmem:[%s1432 + $0x8] sm:$0xff]
    %v3715 = vld [vmem:[%s1432 + $0x10] sm:$0xff]
    %v3716 = vld [vmem:[%s1432 + $0x18] sm:$0xff]
    %v3717 = vld [vmem:[%s2760] sm:$0xff]
    %v3718 = vld [vmem:[%s2760 + $0x8] sm:$0xff]
    %v3719 = vld [vmem:[%s2760 + $0x10] sm:$0xff]
    %v3720 = vld [vmem:[%s2760 + $0x18] sm:$0xff]
    %v3721 = vld [vmem:[%s2760 + $0x20] sm:$0xff]
    %v3722 = vld [vmem:[%s2760 + $0x28] sm:$0xff]
    %v3723 = vld [vmem:[%s2760 + $0x30] sm:$0xff]
    %v3724 = vld [vmem:[%s2760 + $0x38] sm:$0xff]
    %v3725 = vld [vmem:[%s2760 + $0x40] sm:$0xff]
    %v3726 = vld [vmem:[%s2760 + $0x48] sm:$0xff]
    %v3727 = vld [vmem:[%s2760 + $0x50] sm:$0xff]
    %v3728 = vld [vmem:[%s2760 + $0x58] sm:$0xff]
    %v3729 = vld [vmem:[%s2760 + $0x60] sm:$0xff]
    %v3730 = vld [vmem:[%s2760 + $0x68] sm:$0xff]
    %v3731 = vld [vmem:[%s2760 + $0x70] sm:$0xff]
    %v3732 = vld [vmem:[%s2760 + $0x78] sm:$0xff]
    %v3733 = vld [vmem:[%s2760 + $0x80] sm:$0xff]
    %v3734 = vld [vmem:[%s2760 + $0x88] sm:$0xff]
    %v3735 = vld [vmem:[%s2760 + $0x90] sm:$0xff]
    %v3736 = vld [vmem:[%s2760 + $0x98] sm:$0xff]
    %v3737 = vld [vmem:[%s2760 + $0xa0] sm:$0xff]
    %v3738 = vld [vmem:[%s2760 + $0xa8] sm:$0xff]
    %v3739 = vld [vmem:[%s2760 + $0xb0] sm:$0xff]
    %v3740 = vld [vmem:[%s2760 + $0xb8] sm:$0xff]
    %v3741 = vld [vmem:[%s2760 + $0xc0] sm:$0xff]
    %v3742 = vld [vmem:[%s2760 + $0xc8] sm:$0xff]
    %v3743 = vld [vmem:[%s2760 + $0xd0] sm:$0xff]
    %v3744 = vld [vmem:[%s2760 + $0xd8] sm:$0xff]
    %v3745 = vld [vmem:[%s2760 + $0xe0] sm:$0xff]
    %v3746 = vld [vmem:[%s2760 + $0xe8] sm:$0xff]
    %v3747 = vld [vmem:[%s2760 + $0xf0] sm:$0xff]
    %v3748 = vld [vmem:[%s2760 + $0xf8] sm:$0xff]
    %v3749 = vld [vmem:[%s2760 + $0x100] sm:$0xff]
    %v3750 = vld [vmem:[%s2760 + $0x108] sm:$0xff]
    %v3751 = vld [vmem:[%s2760 + $0x110] sm:$0xff]
    %v3752 = vld [vmem:[%s2760 + $0x118] sm:$0xff]
    %v3753 = vld [vmem:[%s2760 + $0x120] sm:$0xff]
    %v3754 = vld [vmem:[%s2760 + $0x128] sm:$0xff]
    %v3755 = vld [vmem:[%s2760 + $0x130] sm:$0xff]
    %v3756 = vld [vmem:[%s2760 + $0x138] sm:$0xff]
    %v3757 = vld [vmem:[%s2760 + $0x140] sm:$0xff]
    %v3758 = vld [vmem:[%s2760 + $0x148] sm:$0xff]
    %v3759 = vld [vmem:[%s2760 + $0x150] sm:$0xff]
    %v3760 = vld [vmem:[%s2760 + $0x158] sm:$0xff]
    %v3761 = vld [vmem:[%s2760 + $0x160] sm:$0xff]
    %v3762 = vld [vmem:[%s2760 + $0x168] sm:$0xff]
    %v3763 = vld [vmem:[%s2760 + $0x170] sm:$0xff]
    %v3764 = vld [vmem:[%s2760 + $0x178] sm:$0xff]
    %v3765 = vld [vmem:[%s2760 + $0x180] sm:$0xff]
    %v3766 = vld [vmem:[%s2760 + $0x188] sm:$0xff]
    %v3767 = vld [vmem:[%s2760 + $0x190] sm:$0xff]
    %v3768 = vld [vmem:[%s2760 + $0x198] sm:$0xff]
    %v3769 = vld [vmem:[%s2760 + $0x1a0] sm:$0xff]
    %v3770 = vld [vmem:[%s2760 + $0x1a8] sm:$0xff]
    %v3771 = vld [vmem:[%s2760 + $0x1b0] sm:$0xff]
    %v3772 = vld [vmem:[%s2760 + $0x1b8] sm:$0xff]
    %v3773 = vld [vmem:[%s2760 + $0x1c0] sm:$0xff]
    %v3774 = vld [vmem:[%s2760 + $0x1c8] sm:$0xff]
    %v3775 = vld [vmem:[%s2760 + $0x1d0] sm:$0xff]
    %v3776 = vld [vmem:[%s2760 + $0x1d8] sm:$0xff]
    %v3777 = vld [vmem:[%s2760 + $0x1e0] sm:$0xff]
    %v3778 = vld [vmem:[%s2760 + $0x1e8] sm:$0xff]
    %v3779 = vld [vmem:[%s2760 + $0x1f0] sm:$0xff]
    %v3780 = vld [vmem:[%s2760 + $0x1f8] sm:$0xff]
    %3781 = vmatprep.subr.mxu0 %v3718
    %3782 = vmatpush1.msra.mxu0 %v3717
    %3783 = vmatprep.subr.mxu0 %v3722
    %3784 = vmatpush1.msra.mxu0 %v3721
    %3785 = vmatprep.subr.mxu0 %v3726
    %3786 = vmatpush1.msra.mxu0 %v3725
    %3787 = vmatprep.subr.mxu0 %v3730
    %3788 = vmatpush1.msra.mxu0 %v3729
    %3789 = vmatprep.subr.mxu0 %v3734
    %3790 = vmatpush1.msra.mxu0 %v3733
    %3791 = vmatprep.subr.mxu0 %v3738
    %3792 = vmatpush1.msra.mxu0 %v3737
    %3793 = vmatprep.subr.mxu0 %v3742
    %3794 = vmatpush1.msra.mxu0 %v3741
    %3795 = vmatprep.subr.mxu0 %v3746
    %3796 = vmatpush1.msra.mxu0 %v3745
    %3797 = vmatprep.subr.mxu0 %v3750
    %3798 = vmatpush1.msra.mxu0 %v3749
    %3799 = vmatprep.subr.mxu0 %v3754
    %3800 = vmatpush1.msra.mxu0 %v3753
    %3801 = vmatprep.subr.mxu0 %v3758
    %3802 = vmatpush1.msra.mxu0 %v3757
    %3803 = vmatprep.subr.mxu0 %v3762
    %3804 = vmatpush1.msra.mxu0 %v3761
    %3805 = vmatprep.subr.mxu0 %v3766
    %3806 = vmatpush1.msra.mxu0 %v3765
    %3807 = vmatprep.subr.mxu0 %v3770
    %3808 = vmatpush1.msra.mxu0 %v3769
    %3809 = vmatprep.subr.mxu0 %v3774
    %3810 = vmatpush1.msra.mxu0 %v3773
    %3811 = vmatprep.subr.mxu0 %v3778
    %3812 = vmatpush1.msra.mxu0 %v3777
    %3813 = vmatprep.subr.mxu0 0.0
    %3814 = vmatpush1.msra.mxu0 0.0
    %3815 = vmatprep.subr.mxu0 0.0
    %3816 = vmatpush1.msra.mxu0 0.0
    %3817 = vmatprep.subr.mxu0 0.0
    %3818 = vmatpush1.msra.mxu0 0.0
    %3819 = vmatprep.subr.mxu0 0.0
    %3820 = vmatpush1.msra.mxu0 0.0
    %3821 = vmatprep.subr.mxu0 0.0
    %3822 = vmatpush1.msra.mxu0 0.0
    %3823 = vmatprep.subr.mxu0 0.0
    %3824 = vmatpush1.msra.mxu0 0.0
    %3825 = vmatprep.subr.mxu0 0.0
    %3826 = vmatpush1.msra.mxu0 0.0
    %3827 = vmatprep.subr.mxu0 0.0
    %3828 = vmatpush1.msra.mxu0 0.0
    %3829 = vmatprep.subr.mxu0 0.0
    %3830 = vmatpush1.msra.mxu0 0.0
    %3831 = vmatprep.subr.mxu0 0.0
    %3832 = vmatpush1.msra.mxu0 0.0
    %3833 = vmatprep.subr.mxu0 0.0
    %3834 = vmatpush1.msra.mxu0 0.0
    %3835 = vmatprep.subr.mxu0 0.0
    %3836 = vmatpush1.msra.mxu0 0.0
    %3837 = vmatprep.subr.mxu0 0.0
    %3838 = vmatpush1.msra.mxu0 0.0
    %3839 = vmatprep.subr.mxu0 0.0
    %3840 = vmatpush1.msra.mxu0 0.0
    %3841 = vmatprep.subr.mxu0 0.0
    %3842 = vmatpush1.msra.mxu0 0.0
    %3843 = vmatprep.subr.mxu0 0.0
    %3844 = vmatpush1.msra.mxu0 0.0
    %3845 = vmatprep.mubr.f32.mxu0 0.0
    %3846 = vmatmul.mubr.f32.gmra.mrb[0].mxu0 %v3711
    %v3847 = vpop.f32.mrb[0].mxu0
    %v3848 = vadd.f32 0.0, %v3847
    %v3849 = vpop.f32.mrb[0].mxu0
    %v3850 = vadd.f32 0.0, %v3849
    %3851 = vdwg.mxu0
    %3852 = vmatprep.subr.mxu0 %v3720
    %3853 = vmatpush1.msra.mxu0 %v3719
    %3854 = vmatprep.subr.mxu0 %v3724
    %3855 = vmatpush1.msra.mxu0 %v3723
    %3856 = vmatprep.subr.mxu0 %v3728
    %3857 = vmatpush1.msra.mxu0 %v3727
    %3858 = vmatprep.subr.mxu0 %v3732
    %3859 = vmatpush1.msra.mxu0 %v3731
    %3860 = vmatprep.subr.mxu0 %v3736
    %3861 = vmatpush1.msra.mxu0 %v3735
    %3862 = vmatprep.subr.mxu0 %v3740
    %3863 = vmatpush1.msra.mxu0 %v3739
    %3864 = vmatprep.subr.mxu0 %v3744
    %3865 = vmatpush1.msra.mxu0 %v3743
    %3866 = vmatprep.subr.mxu0 %v3748
    %3867 = vmatpush1.msra.mxu0 %v3747
    %3868 = vmatprep.subr.mxu0 %v3752
    %3869 = vmatpush1.msra.mxu0 %v3751
    %3870 = vmatprep.subr.mxu0 %v3756
    %3871 = vmatpush1.msra.mxu0 %v3755
    %3872 = vmatprep.subr.mxu0 %v3760
    %3873 = vmatpush1.msra.mxu0 %v3759
    %3874 = vmatprep.subr.mxu0 %v3764
    %3875 = vmatpush1.msra.mxu0 %v3763
    %3876 = vmatprep.subr.mxu0 %v3768
    %3877 = vmatpush1.msra.mxu0 %v3767
    %3878 = vmatprep.subr.mxu0 %v3772
    %3879 = vmatpush1.msra.mxu0 %v3771
    %3880 = vmatprep.subr.mxu0 %v3776
    %3881 = vmatpush1.msra.mxu0 %v3775
    %3882 = vmatprep.subr.mxu0 %v3780
    %3883 = vmatpush1.msra.mxu0 %v3779
    %3884 = vmatprep.subr.mxu0 0.0
    %3885 = vmatpush1.msra.mxu0 0.0
    %3886 = vmatprep.subr.mxu0 0.0
    %3887 = vmatpush1.msra.mxu0 0.0
    %3888 = vmatprep.subr.mxu0 0.0
    %3889 = vmatpush1.msra.mxu0 0.0
    %3890 = vmatprep.subr.mxu0 0.0
    %3891 = vmatpush1.msra.mxu0 0.0
    %3892 = vmatprep.subr.mxu0 0.0
    %3893 = vmatpush1.msra.mxu0 0.0
    %3894 = vmatprep.subr.mxu0 0.0
    %3895 = vmatpush1.msra.mxu0 0.0
    %3896 = vmatprep.subr.mxu0 0.0
    %3897 = vmatpush1.msra.mxu0 0.0
    %3898 = vmatprep.subr.mxu0 0.0
    %3899 = vmatpush1.msra.mxu0 0.0
    %3900 = vmatprep.subr.mxu0 0.0
    %3901 = vmatpush1.msra.mxu0 0.0
    %3902 = vmatprep.subr.mxu0 0.0
    %3903 = vmatpush1.msra.mxu0 0.0
    %3904 = vmatprep.subr.mxu0 0.0
    %3905 = vmatpush1.msra.mxu0 0.0
    %3906 = vmatprep.subr.mxu0 0.0
    %3907 = vmatpush1.msra.mxu0 0.0
    %3908 = vmatprep.subr.mxu0 0.0
    %3909 = vmatpush1.msra.mxu0 0.0
    %3910 = vmatprep.subr.mxu0 0.0
    %3911 = vmatpush1.msra.mxu0 0.0
    %3912 = vmatprep.subr.mxu0 0.0
    %3913 = vmatpush1.msra.mxu0 0.0
    %3914 = vmatprep.subr.mxu0 0.0
    %3915 = vmatpush1.msra.mxu0 0.0
    %3916 = vmatprep.mubr.f32.mxu0 0.0
    %3917 = vmatmul.mubr.f32.gmra.mrb[0].mxu0 %v3711
    %v3918 = vpop.f32.mrb[0].mxu0
    %v3919 = vadd.f32 0.0, %v3918
    %v3920 = vpop.f32.mrb[0].mxu0
    %v3921 = vadd.f32 0.0, %v3920
    %3922 = vdwg.mxu0
    %v3923 = vadd.f32 %v3713, %v3848
    %v3924 = vadd.f32 %v3714, %v3850
    %v3925 = vadd.f32 %v3715, %v3919
    %v3926 = vadd.f32 %v3716, %v3921
    %v3927 = vxor.u32 %v3923, 2147483648
    %v3928 = vmul.f32 %v3927, 1.442695
    %v3929 = vpow.pop %v3928
    %v3930 = vadd.f32 %v3929, 1.0
    %v3931 = vrcp.pop %v3930
    %v3932 = vmul.f32 1.0, %v3931
    %v3933 = vxor.u32 %v3924, 2147483648
    %v3934 = vmul.f32 %v3933, 1.442695
    %v3935 = vpow.pop %v3934
    %v3936 = vadd.f32 %v3935, 1.0
    %v3937 = vrcp.pop %v3936
    %v3938 = vmul.f32 1.0, %v3937
    %v3939 = vtanh.pop %v3925
    %v3940 = vxor.u32 %v3926, 2147483648
    %v3941 = vmul.f32 %v3940, 1.442695
    %v3942 = vpow.pop %v3941
    %v3943 = vadd.f32 %v3942, 1.0
    %v3944 = vrcp.pop %v3943
    %v3945 = vmul.f32 1.0, %v3944
    %v3946 = vmul.f32 %v3938, %v3709
    %v3947 = vmul.f32 %v3932, %v3939
    %v3948 = vadd.f32 %v3946, %v3947
    %v3949 = vtanh.pop %v3948
    %v3950 = vmul.f32 %v3945, %v3949
    %3951 = vst [vmem:[%s1671] sm:$0xff] %v3950
    %v3952 = vld [vmem:[%s1673] sm:$0xff]
    %v3953 = vld [vmem:[%s1673 + $0x8] sm:$0xff]
    %v3954 = vld [vmem:[%s1673 + $0x10] sm:$0xff]
    %v3955 = vld [vmem:[%s1673 + $0x18] sm:$0xff]
    %v3956 = vld [vmem:[%s2760] sm:$0xff]
    %v3957 = vld [vmem:[%s2760 + $0x8] sm:$0xff]
    %v3958 = vld [vmem:[%s2760 + $0x10] sm:$0xff]
    %v3959 = vld [vmem:[%s2760 + $0x18] sm:$0xff]
    %v3960 = vld [vmem:[%s2760 + $0x20] sm:$0xff]
    %v3961 = vld [vmem:[%s2760 + $0x28] sm:$0xff]
    %v3962 = vld [vmem:[%s2760 + $0x30] sm:$0xff]
    %v3963 = vld [vmem:[%s2760 + $0x38] sm:$0xff]
    %v3964 = vld [vmem:[%s2760 + $0x40] sm:$0xff]
    %v3965 = vld [vmem:[%s2760 + $0x48] sm:$0xff]
    %v3966 = vld [vmem:[%s2760 + $0x50] sm:$0xff]
    %v3967 = vld [vmem:[%s2760 + $0x58] sm:$0xff]
    %v3968 = vld [vmem:[%s2760 + $0x60] sm:$0xff]
    %v3969 = vld [vmem:[%s2760 + $0x68] sm:$0xff]
    %v3970 = vld [vmem:[%s2760 + $0x70] sm:$0xff]
    %v3971 = vld [vmem:[%s2760 + $0x78] sm:$0xff]
    %v3972 = vld [vmem:[%s2760 + $0x80] sm:$0xff]
    %v3973 = vld [vmem:[%s2760 + $0x88] sm:$0xff]
    %v3974 = vld [vmem:[%s2760 + $0x90] sm:$0xff]
    %v3975 = vld [vmem:[%s2760 + $0x98] sm:$0xff]
    %v3976 = vld [vmem:[%s2760 + $0xa0] sm:$0xff]
    %v3977 = vld [vmem:[%s2760 + $0xa8] sm:$0xff]
    %v3978 = vld [vmem:[%s2760 + $0xb0] sm:$0xff]
    %v3979 = vld [vmem:[%s2760 + $0xb8] sm:$0xff]
    %v3980 = vld [vmem:[%s2760 + $0xc0] sm:$0xff]
    %v3981 = vld [vmem:[%s2760 + $0xc8] sm:$0xff]
    %v3982 = vld [vmem:[%s2760 + $0xd0] sm:$0xff]
    %v3983 = vld [vmem:[%s2760 + $0xd8] sm:$0xff]
    %v3984 = vld [vmem:[%s2760 + $0xe0] sm:$0xff]
    %v3985 = vld [vmem:[%s2760 + $0xe8] sm:$0xff]
    %v3986 = vld [vmem:[%s2760 + $0xf0] sm:$0xff]
    %v3987 = vld [vmem:[%s2760 + $0xf8] sm:$0xff]
    %v3988 = vld [vmem:[%s2760 + $0x100] sm:$0xff]
    %v3989 = vld [vmem:[%s2760 + $0x108] sm:$0xff]
    %v3990 = vld [vmem:[%s2760 + $0x110] sm:$0xff]
    %v3991 = vld [vmem:[%s2760 + $0x118] sm:$0xff]
    %v3992 = vld [vmem:[%s2760 + $0x120] sm:$0xff]
    %v3993 = vld [vmem:[%s2760 + $0x128] sm:$0xff]
    %v3994 = vld [vmem:[%s2760 + $0x130] sm:$0xff]
    %v3995 = vld [vmem:[%s2760 + $0x138] sm:$0xff]
    %v3996 = vld [vmem:[%s2760 + $0x140] sm:$0xff]
    %v3997 = vld [vmem:[%s2760 + $0x148] sm:$0xff]
    %v3998 = vld [vmem:[%s2760 + $0x150] sm:$0xff]
    %v3999 = vld [vmem:[%s2760 + $0x158] sm:$0xff]
    %v4000 = vld [vmem:[%s2760 + $0x160] sm:$0xff]
    %v4001 = vld [vmem:[%s2760 + $0x168] sm:$0xff]
    %v4002 = vld [vmem:[%s2760 + $0x170] sm:$0xff]
    %v4003 = vld [vmem:[%s2760 + $0x178] sm:$0xff]
    %v4004 = vld [vmem:[%s2760 + $0x180] sm:$0xff]
    %v4005 = vld [vmem:[%s2760 + $0x188] sm:$0xff]
    %v4006 = vld [vmem:[%s2760 + $0x190] sm:$0xff]
    %v4007 = vld [vmem:[%s2760 + $0x198] sm:$0xff]
    %v4008 = vld [vmem:[%s2760 + $0x1a0] sm:$0xff]
    %v4009 = vld [vmem:[%s2760 + $0x1a8] sm:$0xff]
    %v4010 = vld [vmem:[%s2760 + $0x1b0] sm:$0xff]
    %v4011 = vld [vmem:[%s2760 + $0x1b8] sm:$0xff]
    %v4012 = vld [vmem:[%s2760 + $0x1c0] sm:$0xff]
    %v4013 = vld [vmem:[%s2760 + $0x1c8] sm:$0xff]
    %v4014 = vld [vmem:[%s2760 + $0x1d0] sm:$0xff]
    %v4015 = vld [vmem:[%s2760 + $0x1d8] sm:$0xff]
    %v4016 = vld [vmem:[%s2760 + $0x1e0] sm:$0xff]
    %v4017 = vld [vmem:[%s2760 + $0x1e8] sm:$0xff]
    %v4018 = vld [vmem:[%s2760 + $0x1f0] sm:$0xff]
    %v4019 = vld [vmem:[%s2760 + $0x1f8] sm:$0xff]
    %4020 = vmatprep.subr.mxu0 %v3957
    %4021 = vmatpush1.msra.mxu0 %v3956
    %4022 = vmatprep.subr.mxu0 %v3961
    %4023 = vmatpush1.msra.mxu0 %v3960
    %4024 = vmatprep.subr.mxu0 %v3965
    %4025 = vmatpush1.msra.mxu0 %v3964
    %4026 = vmatprep.subr.mxu0 %v3969
    %4027 = vmatpush1.msra.mxu0 %v3968
    %4028 = vmatprep.subr.mxu0 %v3973
    %4029 = vmatpush1.msra.mxu0 %v3972
    %4030 = vmatprep.subr.mxu0 %v3977
    %4031 = vmatpush1.msra.mxu0 %v3976
    %4032 = vmatprep.subr.mxu0 %v3981
    %4033 = vmatpush1.msra.mxu0 %v3980
    %4034 = vmatprep.subr.mxu0 %v3985
    %4035 = vmatpush1.msra.mxu0 %v3984
    %4036 = vmatprep.subr.mxu0 %v3989
    %4037 = vmatpush1.msra.mxu0 %v3988
    %4038 = vmatprep.subr.mxu0 %v3993
    %4039 = vmatpush1.msra.mxu0 %v3992
    %4040 = vmatprep.subr.mxu0 %v3997
    %4041 = vmatpush1.msra.mxu0 %v3996
    %4042 = vmatprep.subr.mxu0 %v4001
    %4043 = vmatpush1.msra.mxu0 %v4000
    %4044 = vmatprep.subr.mxu0 %v4005
    %4045 = vmatpush1.msra.mxu0 %v4004
    %4046 = vmatprep.subr.mxu0 %v4009
    %4047 = vmatpush1.msra.mxu0 %v4008
    %4048 = vmatprep.subr.mxu0 %v4013
    %4049 = vmatpush1.msra.mxu0 %v4012
    %4050 = vmatprep.subr.mxu0 %v4017
    %4051 = vmatpush1.msra.mxu0 %v4016
    %4052 = vmatprep.subr.mxu0 0.0
    %4053 = vmatpush1.msra.mxu0 0.0
    %4054 = vmatprep.subr.mxu0 0.0
    %4055 = vmatpush1.msra.mxu0 0.0
    %4056 = vmatprep.subr.mxu0 0.0
    %4057 = vmatpush1.msra.mxu0 0.0
    %4058 = vmatprep.subr.mxu0 0.0
    %4059 = vmatpush1.msra.mxu0 0.0
    %4060 = vmatprep.subr.mxu0 0.0
    %4061 = vmatpush1.msra.mxu0 0.0
    %4062 = vmatprep.subr.mxu0 0.0
    %4063 = vmatpush1.msra.mxu0 0.0
    %4064 = vmatprep.subr.mxu0 0.0
    %4065 = vmatpush1.msra.mxu0 0.0
    %4066 = vmatprep.subr.mxu0 0.0
    %4067 = vmatpush1.msra.mxu0 0.0
    %4068 = vmatprep.subr.mxu0 0.0
    %4069 = vmatpush1.msra.mxu0 0.0
    %4070 = vmatprep.subr.mxu0 0.0
    %4071 = vmatpush1.msra.mxu0 0.0
    %4072 = vmatprep.subr.mxu0 0.0
    %4073 = vmatpush1.msra.mxu0 0.0
    %4074 = vmatprep.subr.mxu0 0.0
    %4075 = vmatpush1.msra.mxu0 0.0
    %4076 = vmatprep.subr.mxu0 0.0
    %4077 = vmatpush1.msra.mxu0 0.0
    %4078 = vmatprep.subr.mxu0 0.0
    %4079 = vmatpush1.msra.mxu0 0.0
    %4080 = vmatprep.subr.mxu0 0.0
    %4081 = vmatpush1.msra.mxu0 0.0
    %4082 = vmatprep.subr.mxu0 0.0
    %4083 = vmatpush1.msra.mxu0 0.0
    %4084 = vmatprep.mubr.f32.mxu0 0.0
    %4085 = vmatmul.mubr.f32.gmra.mrb[0].mxu0 %v3950
    %v4086 = vpop.f32.mrb[0].mxu0
    %v4087 = vadd.f32 0.0, %v4086
    %v4088 = vpop.f32.mrb[0].mxu0
    %v4089 = vadd.f32 0.0, %v4088
    %4090 = vdwg.mxu0
    %4091 = vmatprep.subr.mxu0 %v3959
    %4092 = vmatpush1.msra.mxu0 %v3958
    %4093 = vmatprep.subr.mxu0 %v3963
    %4094 = vmatpush1.msra.mxu0 %v3962
    %4095 = vmatprep.subr.mxu0 %v3967
    %4096 = vmatpush1.msra.mxu0 %v3966
    %4097 = vmatprep.subr.mxu0 %v3971
    %4098 = vmatpush1.msra.mxu0 %v3970
    %4099 = vmatprep.subr.mxu0 %v3975
    %4100 = vmatpush1.msra.mxu0 %v3974
    %4101 = vmatprep.subr.mxu0 %v3979
    %4102 = vmatpush1.msra.mxu0 %v3978
    %4103 = vmatprep.subr.mxu0 %v3983
    %4104 = vmatpush1.msra.mxu0 %v3982
    %4105 = vmatprep.subr.mxu0 %v3987
    %4106 = vmatpush1.msra.mxu0 %v3986
    %4107 = vmatprep.subr.mxu0 %v3991
    %4108 = vmatpush1.msra.mxu0 %v3990
    %4109 = vmatprep.subr.mxu0 %v3995
    %4110 = vmatpush1.msra.mxu0 %v3994
    %4111 = vmatprep.subr.mxu0 %v3999
    %4112 = vmatpush1.msra.mxu0 %v3998
    %4113 = vmatprep.subr.mxu0 %v4003
    %4114 = vmatpush1.msra.mxu0 %v4002
    %4115 = vmatprep.subr.mxu0 %v4007
    %4116 = vmatpush1.msra.mxu0 %v4006
    %4117 = vmatprep.subr.mxu0 %v4011
    %4118 = vmatpush1.msra.mxu0 %v4010
    %4119 = vmatprep.subr.mxu0 %v4015
    %4120 = vmatpush1.msra.mxu0 %v4014
    %4121 = vmatprep.subr.mxu0 %v4019
    %4122 = vmatpush1.msra.mxu0 %v4018
    %4123 = vmatprep.subr.mxu0 0.0
    %4124 = vmatpush1.msra.mxu0 0.0
    %4125 = vmatprep.subr.mxu0 0.0
    %4126 = vmatpush1.msra.mxu0 0.0
    %4127 = vmatprep.subr.mxu0 0.0
    %4128 = vmatpush1.msra.mxu0 0.0
    %4129 = vmatprep.subr.mxu0 0.0
    %4130 = vmatpush1.msra.mxu0 0.0
    %4131 = vmatprep.subr.mxu0 0.0
    %4132 = vmatpush1.msra.mxu0 0.0
    %4133 = vmatprep.subr.mxu0 0.0
    %4134 = vmatpush1.msra.mxu0 0.0
    %4135 = vmatprep.subr.mxu0 0.0
    %4136 = vmatpush1.msra.mxu0 0.0
    %4137 = vmatprep.subr.mxu0 0.0
    %4138 = vmatpush1.msra.mxu0 0.0
    %4139 = vmatprep.subr.mxu0 0.0
    %4140 = vmatpush1.msra.mxu0 0.0
    %4141 = vmatprep.subr.mxu0 0.0
    %4142 = vmatpush1.msra.mxu0 0.0
    %4143 = vmatprep.subr.mxu0 0.0
    %4144 = vmatpush1.msra.mxu0 0.0
    %4145 = vmatprep.subr.mxu0 0.0
    %4146 = vmatpush1.msra.mxu0 0.0
    %4147 = vmatprep.subr.mxu0 0.0
    %4148 = vmatpush1.msra.mxu0 0.0
    %4149 = vmatprep.subr.mxu0 0.0
    %4150 = vmatpush1.msra.mxu0 0.0
    %4151 = vmatprep.subr.mxu0 0.0
    %4152 = vmatpush1.msra.mxu0 0.0
    %4153 = vmatprep.subr.mxu0 0.0
    %4154 = vmatpush1.msra.mxu0 0.0
    %4155 = vmatprep.mubr.f32.mxu0 0.0
    %4156 = vmatmul.mubr.f32.gmra.mrb[0].mxu0 %v3950
    %v4157 = vpop.f32.mrb[0].mxu0
    %v4158 = vadd.f32 0.0, %v4157
    %v4159 = vpop.f32.mrb[0].mxu0
    %v4160 = vadd.f32 0.0, %v4159
    %4161 = vdwg.mxu0
    %v4162 = vadd.f32 %v3952, %v4087
    %v4163 = vadd.f32 %v3953, %v4089
    %v4164 = vadd.f32 %v3954, %v4158
    %v4165 = vadd.f32 %v3955, %v4160
    %v4166 = vxor.u32 %v4162, 2147483648
    %v4167 = vmul.f32 %v4166, 1.442695
    %v4168 = vpow.pop %v4167
    %v4169 = vadd.f32 %v4168, 1.0
    %v4170 = vrcp.pop %v4169
    %v4171 = vmul.f32 1.0, %v4170
    %v4172 = vxor.u32 %v4163, 2147483648
    %v4173 = vmul.f32 %v4172, 1.442695
    %v4174 = vpow.pop %v4173
    %v4175 = vadd.f32 %v4174, 1.0
    %v4176 = vrcp.pop %v4175
    %v4177 = vmul.f32 1.0, %v4176
    %v4178 = vtanh.pop %v4164
    %v4179 = vxor.u32 %v4165, 2147483648
    %v4180 = vmul.f32 %v4179, 1.442695
    %v4181 = vpow.pop %v4180
    %v4182 = vadd.f32 %v4181, 1.0
    %v4183 = vrcp.pop %v4182
    %v4184 = vmul.f32 1.0, %v4183
    %v4185 = vmul.f32 %v4177, %v3948
    %v4186 = vmul.f32 %v4171, %v4178
    %v4187 = vadd.f32 %v4185, %v4186
    %v4188 = vtanh.pop %v4187
    %v4189 = vmul.f32 %v4184, %v4188
    %4190 = vst [vmem:[%s1912] sm:$0xff] %v4189
    %v4191 = vld [vmem:[%s1914] sm:$0xff]
    %v4192 = vld [vmem:[%s1914 + $0x8] sm:$0xff]
    %v4193 = vld [vmem:[%s1914 + $0x10] sm:$0xff]
    %v4194 = vld [vmem:[%s1914 + $0x18] sm:$0xff]
    %v4195 = vld [vmem:[%s2760] sm:$0xff]
    %v4196 = vld [vmem:[%s2760 + $0x8] sm:$0xff]
    %v4197 = vld [vmem:[%s2760 + $0x10] sm:$0xff]
    %v4198 = vld [vmem:[%s2760 + $0x18] sm:$0xff]
    %v4199 = vld [vmem:[%s2760 + $0x20] sm:$0xff]
    %v4200 = vld [vmem:[%s2760 + $0x28] sm:$0xff]
    %v4201 = vld [vmem:[%s2760 + $0x30] sm:$0xff]
    %v4202 = vld [vmem:[%s2760 + $0x38] sm:$0xff]
    %v4203 = vld [vmem:[%s2760 + $0x40] sm:$0xff]
    %v4204 = vld [vmem:[%s2760 + $0x48] sm:$0xff]
    %v4205 = vld [vmem:[%s2760 + $0x50] sm:$0xff]
    %v4206 = vld [vmem:[%s2760 + $0x58] sm:$0xff]
    %v4207 = vld [vmem:[%s2760 + $0x60] sm:$0xff]
    %v4208 = vld [vmem:[%s2760 + $0x68] sm:$0xff]
    %v4209 = vld [vmem:[%s2760 + $0x70] sm:$0xff]
    %v4210 = vld [vmem:[%s2760 + $0x78] sm:$0xff]
    %v4211 = vld [vmem:[%s2760 + $0x80] sm:$0xff]
    %v4212 = vld [vmem:[%s2760 + $0x88] sm:$0xff]
    %v4213 = vld [vmem:[%s2760 + $0x90] sm:$0xff]
    %v4214 = vld [vmem:[%s2760 + $0x98] sm:$0xff]
    %v4215 = vld [vmem:[%s2760 + $0xa0] sm:$0xff]
    %v4216 = vld [vmem:[%s2760 + $0xa8] sm:$0xff]
    %v4217 = vld [vmem:[%s2760 + $0xb0] sm:$0xff]
    %v4218 = vld [vmem:[%s2760 + $0xb8] sm:$0xff]
    %v4219 = vld [vmem:[%s2760 + $0xc0] sm:$0xff]
    %v4220 = vld [vmem:[%s2760 + $0xc8] sm:$0xff]
    %v4221 = vld [vmem:[%s2760 + $0xd0] sm:$0xff]
    %v4222 = vld [vmem:[%s2760 + $0xd8] sm:$0xff]
    %v4223 = vld [vmem:[%s2760 + $0xe0] sm:$0xff]
    %v4224 = vld [vmem:[%s2760 + $0xe8] sm:$0xff]
    %v4225 = vld [vmem:[%s2760 + $0xf0] sm:$0xff]
    %v4226 = vld [vmem:[%s2760 + $0xf8] sm:$0xff]
    %v4227 = vld [vmem:[%s2760 + $0x100] sm:$0xff]
    %v4228 = vld [vmem:[%s2760 + $0x108] sm:$0xff]
    %v4229 = vld [vmem:[%s2760 + $0x110] sm:$0xff]
    %v4230 = vld [vmem:[%s2760 + $0x118] sm:$0xff]
    %v4231 = vld [vmem:[%s2760 + $0x120] sm:$0xff]
    %v4232 = vld [vmem:[%s2760 + $0x128] sm:$0xff]
    %v4233 = vld [vmem:[%s2760 + $0x130] sm:$0xff]
    %v4234 = vld [vmem:[%s2760 + $0x138] sm:$0xff]
    %v4235 = vld [vmem:[%s2760 + $0x140] sm:$0xff]
    %v4236 = vld [vmem:[%s2760 + $0x148] sm:$0xff]
    %v4237 = vld [vmem:[%s2760 + $0x150] sm:$0xff]
    %v4238 = vld [vmem:[%s2760 + $0x158] sm:$0xff]
    %v4239 = vld [vmem:[%s2760 + $0x160] sm:$0xff]
    %v4240 = vld [vmem:[%s2760 + $0x168] sm:$0xff]
    %v4241 = vld [vmem:[%s2760 + $0x170] sm:$0xff]
    %v4242 = vld [vmem:[%s2760 + $0x178] sm:$0xff]
    %v4243 = vld [vmem:[%s2760 + $0x180] sm:$0xff]
    %v4244 = vld [vmem:[%s2760 + $0x188] sm:$0xff]
    %v4245 = vld [vmem:[%s2760 + $0x190] sm:$0xff]
    %v4246 = vld [vmem:[%s2760 + $0x198] sm:$0xff]
    %v4247 = vld [vmem:[%s2760 + $0x1a0] sm:$0xff]
    %v4248 = vld [vmem:[%s2760 + $0x1a8] sm:$0xff]
    %v4249 = vld [vmem:[%s2760 + $0x1b0] sm:$0xff]
    %v4250 = vld [vmem:[%s2760 + $0x1b8] sm:$0xff]
    %v4251 = vld [vmem:[%s2760 + $0x1c0] sm:$0xff]
    %v4252 = vld [vmem:[%s2760 + $0x1c8] sm:$0xff]
    %v4253 = vld [vmem:[%s2760 + $0x1d0] sm:$0xff]
    %v4254 = vld [vmem:[%s2760 + $0x1d8] sm:$0xff]
    %v4255 = vld [vmem:[%s2760 + $0x1e0] sm:$0xff]
    %v4256 = vld [vmem:[%s2760 + $0x1e8] sm:$0xff]
    %v4257 = vld [vmem:[%s2760 + $0x1f0] sm:$0xff]
    %v4258 = vld [vmem:[%s2760 + $0x1f8] sm:$0xff]
    %4259 = vmatprep.subr.mxu0 %v4196
    %4260 = vmatpush1.msra.mxu0 %v4195
    %4261 = vmatprep.subr.mxu0 %v4200
    %4262 = vmatpush1.msra.mxu0 %v4199
    %4263 = vmatprep.subr.mxu0 %v4204
    %4264 = vmatpush1.msra.mxu0 %v4203
    %4265 = vmatprep.subr.mxu0 %v4208
    %4266 = vmatpush1.msra.mxu0 %v4207
    %4267 = vmatprep.subr.mxu0 %v4212
    %4268 = vmatpush1.msra.mxu0 %v4211
    %4269 = vmatprep.subr.mxu0 %v4216
    %4270 = vmatpush1.msra.mxu0 %v4215
    %4271 = vmatprep.subr.mxu0 %v4220
    %4272 = vmatpush1.msra.mxu0 %v4219
    %4273 = vmatprep.subr.mxu0 %v4224
    %4274 = vmatpush1.msra.mxu0 %v4223
    %4275 = vmatprep.subr.mxu0 %v4228
    %4276 = vmatpush1.msra.mxu0 %v4227
    %4277 = vmatprep.subr.mxu0 %v4232
    %4278 = vmatpush1.msra.mxu0 %v4231
    %4279 = vmatprep.subr.mxu0 %v4236
    %4280 = vmatpush1.msra.mxu0 %v4235
    %4281 = vmatprep.subr.mxu0 %v4240
    %4282 = vmatpush1.msra.mxu0 %v4239
    %4283 = vmatprep.subr.mxu0 %v4244
    %4284 = vmatpush1.msra.mxu0 %v4243
    %4285 = vmatprep.subr.mxu0 %v4248
    %4286 = vmatpush1.msra.mxu0 %v4247
    %4287 = vmatprep.subr.mxu0 %v4252
    %4288 = vmatpush1.msra.mxu0 %v4251
    %4289 = vmatprep.subr.mxu0 %v4256
    %4290 = vmatpush1.msra.mxu0 %v4255
    %4291 = vmatprep.subr.mxu0 0.0
    %4292 = vmatpush1.msra.mxu0 0.0
    %4293 = vmatprep.subr.mxu0 0.0
    %4294 = vmatpush1.msra.mxu0 0.0
    %4295 = vmatprep.subr.mxu0 0.0
    %4296 = vmatpush1.msra.mxu0 0.0
    %4297 = vmatprep.subr.mxu0 0.0
    %4298 = vmatpush1.msra.mxu0 0.0
    %4299 = vmatprep.subr.mxu0 0.0
    %4300 = vmatpush1.msra.mxu0 0.0
    %4301 = vmatprep.subr.mxu0 0.0
    %4302 = vmatpush1.msra.mxu0 0.0
    %4303 = vmatprep.subr.mxu0 0.0
    %4304 = vmatpush1.msra.mxu0 0.0
    %4305 = vmatprep.subr.mxu0 0.0
    %4306 = vmatpush1.msra.mxu0 0.0
    %4307 = vmatprep.subr.mxu0 0.0
    %4308 = vmatpush1.msra.mxu0 0.0
    %4309 = vmatprep.subr.mxu0 0.0
    %4310 = vmatpush1.msra.mxu0 0.0
    %4311 = vmatprep.subr.mxu0 0.0
    %4312 = vmatpush1.msra.mxu0 0.0
    %4313 = vmatprep.subr.mxu0 0.0
    %4314 = vmatpush1.msra.mxu0 0.0
    %4315 = vmatprep.subr.mxu0 0.0
    %4316 = vmatpush1.msra.mxu0 0.0
    %4317 = vmatprep.subr.mxu0 0.0
    %4318 = vmatpush1.msra.mxu0 0.0
    %4319 = vmatprep.subr.mxu0 0.0
    %4320 = vmatpush1.msra.mxu0 0.0
    %4321 = vmatprep.subr.mxu0 0.0
    %4322 = vmatpush1.msra.mxu0 0.0
    %4323 = vmatprep.mubr.f32.mxu0 0.0
    %4324 = vmatmul.mubr.f32.gmra.mrb[0].mxu0 %v4189
    %v4325 = vpop.f32.mrb[0].mxu0
    %v4326 = vadd.f32 0.0, %v4325
    %v4327 = vpop.f32.mrb[0].mxu0
    %v4328 = vadd.f32 0.0, %v4327
    %4329 = vdwg.mxu0
    %4330 = vmatprep.subr.mxu0 %v4198
    %4331 = vmatpush1.msra.mxu0 %v4197
    %4332 = vmatprep.subr.mxu0 %v4202
    %4333 = vmatpush1.msra.mxu0 %v4201
    %4334 = vmatprep.subr.mxu0 %v4206
    %4335 = vmatpush1.msra.mxu0 %v4205
    %4336 = vmatprep.subr.mxu0 %v4210
    %4337 = vmatpush1.msra.mxu0 %v4209
    %4338 = vmatprep.subr.mxu0 %v4214
    %4339 = vmatpush1.msra.mxu0 %v4213
    %4340 = vmatprep.subr.mxu0 %v4218
    %4341 = vmatpush1.msra.mxu0 %v4217
    %4342 = vmatprep.subr.mxu0 %v4222
    %4343 = vmatpush1.msra.mxu0 %v4221
    %4344 = vmatprep.subr.mxu0 %v4226
    %4345 = vmatpush1.msra.mxu0 %v4225
    %4346 = vmatprep.subr.mxu0 %v4230
    %4347 = vmatpush1.msra.mxu0 %v4229
    %4348 = vmatprep.subr.mxu0 %v4234
    %4349 = vmatpush1.msra.mxu0 %v4233
    %4350 = vmatprep.subr.mxu0 %v4238
    %4351 = vmatpush1.msra.mxu0 %v4237
    %4352 = vmatprep.subr.mxu0 %v4242
    %4353 = vmatpush1.msra.mxu0 %v4241
    %4354 = vmatprep.subr.mxu0 %v4246
    %4355 = vmatpush1.msra.mxu0 %v4245
    %4356 = vmatprep.subr.mxu0 %v4250
    %4357 = vmatpush1.msra.mxu0 %v4249
    %4358 = vmatprep.subr.mxu0 %v4254
    %4359 = vmatpush1.msra.mxu0 %v4253
    %4360 = vmatprep.subr.mxu0 %v4258
    %4361 = vmatpush1.msra.mxu0 %v4257
    %4362 = vmatprep.subr.mxu0 0.0
    %4363 = vmatpush1.msra.mxu0 0.0
    %4364 = vmatprep.subr.mxu0 0.0
    %4365 = vmatpush1.msra.mxu0 0.0
    %4366 = vmatprep.subr.mxu0 0.0
    %4367 = vmatpush1.msra.mxu0 0.0
    %4368 = vmatprep.subr.mxu0 0.0
    %4369 = vmatpush1.msra.mxu0 0.0
    %4370 = vmatprep.subr.mxu0 0.0
    %4371 = vmatpush1.msra.mxu0 0.0
    %4372 = vmatprep.subr.mxu0 0.0
    %4373 = vmatpush1.msra.mxu0 0.0
    %4374 = vmatprep.subr.mxu0 0.0
    %4375 = vmatpush1.msra.mxu0 0.0
    %4376 = vmatprep.subr.mxu0 0.0
    %4377 = vmatpush1.msra.mxu0 0.0
    %4378 = vmatprep.subr.mxu0 0.0
    %4379 = vmatpush1.msra.mxu0 0.0
    %4380 = vmatprep.subr.mxu0 0.0
    %4381 = vmatpush1.msra.mxu0 0.0
    %4382 = vmatprep.subr.mxu0 0.0
    %4383 = vmatpush1.msra.mxu0 0.0
    %4384 = vmatprep.subr.mxu0 0.0
    %4385 = vmatpush1.msra.mxu0 0.0
    %4386 = vmatprep.subr.mxu0 0.0
    %4387 = vmatpush1.msra.mxu0 0.0
    %4388 = vmatprep.subr.mxu0 0.0
    %4389 = vmatpush1.msra.mxu0 0.0
    %4390 = vmatprep.subr.mxu0 0.0
    %4391 = vmatpush1.msra.mxu0 0.0
    %4392 = vmatprep.subr.mxu0 0.0
    %4393 = vmatpush1.msra.mxu0 0.0
    %4394 = vmatprep.mubr.f32.mxu0 0.0
    %4395 = vmatmul.mubr.f32.gmra.mrb[0].mxu0 %v4189
    %v4396 = vpop.f32.mrb[0].mxu0
    %v4397 = vadd.f32 0.0, %v4396
    %v4398 = vpop.f32.mrb[0].mxu0
    %v4399 = vadd.f32 0.0, %v4398
    %4400 = vdwg.mxu0
    %v4401 = vadd.f32 %v4191, %v4326
    %v4402 = vadd.f32 %v4192, %v4328
    %v4403 = vadd.f32 %v4193, %v4397
    %v4404 = vadd.f32 %v4194, %v4399
    %v4405 = vxor.u32 %v4401, 2147483648
    %v4406 = vmul.f32 %v4405, 1.442695
    %v4407 = vpow.pop %v4406
    %v4408 = vadd.f32 %v4407, 1.0
    %v4409 = vrcp.pop %v4408
    %v4410 = vmul.f32 1.0, %v4409
    %v4411 = vxor.u32 %v4402, 2147483648
    %v4412 = vmul.f32 %v4411, 1.442695
    %v4413 = vpow.pop %v4412
    %v4414 = vadd.f32 %v4413, 1.0
    %v4415 = vrcp.pop %v4414
    %v4416 = vmul.f32 1.0, %v4415
    %v4417 = vtanh.pop %v4403
    %v4418 = vxor.u32 %v4404, 2147483648
    %v4419 = vmul.f32 %v4418, 1.442695
    %v4420 = vpow.pop %v4419
    %v4421 = vadd.f32 %v4420, 1.0
    %v4422 = vrcp.pop %v4421
    %v4423 = vmul.f32 1.0, %v4422
    %v4424 = vmul.f32 %v4416, %v4187
    %v4425 = vmul.f32 %v4410, %v4417
    %v4426 = vadd.f32 %v4424, %v4425
    %v4427 = vtanh.pop %v4426
    %v4428 = vmul.f32 %v4423, %v4427
    %4429 = vst [vmem:[%s2153] sm:$0xff] %v4428
    %v4430 = vld [vmem:[%s2155] sm:$0xff]
    %v4431 = vld [vmem:[%s2155 + $0x8] sm:$0xff]
    %v4432 = vld [vmem:[%s2155 + $0x10] sm:$0xff]
    %v4433 = vld [vmem:[%s2155 + $0x18] sm:$0xff]
    %v4434 = vld [vmem:[%s2760] sm:$0xff]
    %v4435 = vld [vmem:[%s2760 + $0x8] sm:$0xff]
    %v4436 = vld [vmem:[%s2760 + $0x10] sm:$0xff]
    %v4437 = vld [vmem:[%s2760 + $0x18] sm:$0xff]
    %v4438 = vld [vmem:[%s2760 + $0x20] sm:$0xff]
    %v4439 = vld [vmem:[%s2760 + $0x28] sm:$0xff]
    %v4440 = vld [vmem:[%s2760 + $0x30] sm:$0xff]
    %v4441 = vld [vmem:[%s2760 + $0x38] sm:$0xff]
    %v4442 = vld [vmem:[%s2760 + $0x40] sm:$0xff]
    %v4443 = vld [vmem:[%s2760 + $0x48] sm:$0xff]
    %v4444 = vld [vmem:[%s2760 + $0x50] sm:$0xff]
    %v4445 = vld [vmem:[%s2760 + $0x58] sm:$0xff]
    %v4446 = vld [vmem:[%s2760 + $0x60] sm:$0xff]
    %v4447 = vld [vmem:[%s2760 + $0x68] sm:$0xff]
    %v4448 = vld [vmem:[%s2760 + $0x70] sm:$0xff]
    %v4449 = vld [vmem:[%s2760 + $0x78] sm:$0xff]
    %v4450 = vld [vmem:[%s2760 + $0x80] sm:$0xff]
    %v4451 = vld [vmem:[%s2760 + $0x88] sm:$0xff]
    %v4452 = vld [vmem:[%s2760 + $0x90] sm:$0xff]
    %v4453 = vld [vmem:[%s2760 + $0x98] sm:$0xff]
    %v4454 = vld [vmem:[%s2760 + $0xa0] sm:$0xff]
    %v4455 = vld [vmem:[%s2760 + $0xa8] sm:$0xff]
    %v4456 = vld [vmem:[%s2760 + $0xb0] sm:$0xff]
    %v4457 = vld [vmem:[%s2760 + $0xb8] sm:$0xff]
    %v4458 = vld [vmem:[%s2760 + $0xc0] sm:$0xff]
    %v4459 = vld [vmem:[%s2760 + $0xc8] sm:$0xff]
    %v4460 = vld [vmem:[%s2760 + $0xd0] sm:$0xff]
    %v4461 = vld [vmem:[%s2760 + $0xd8] sm:$0xff]
    %v4462 = vld [vmem:[%s2760 + $0xe0] sm:$0xff]
    %v4463 = vld [vmem:[%s2760 + $0xe8] sm:$0xff]
    %v4464 = vld [vmem:[%s2760 + $0xf0] sm:$0xff]
    %v4465 = vld [vmem:[%s2760 + $0xf8] sm:$0xff]
    %v4466 = vld [vmem:[%s2760 + $0x100] sm:$0xff]
    %v4467 = vld [vmem:[%s2760 + $0x108] sm:$0xff]
    %v4468 = vld [vmem:[%s2760 + $0x110] sm:$0xff]
    %v4469 = vld [vmem:[%s2760 + $0x118] sm:$0xff]
    %v4470 = vld [vmem:[%s2760 + $0x120] sm:$0xff]
    %v4471 = vld [vmem:[%s2760 + $0x128] sm:$0xff]
    %v4472 = vld [vmem:[%s2760 + $0x130] sm:$0xff]
    %v4473 = vld [vmem:[%s2760 + $0x138] sm:$0xff]
    %v4474 = vld [vmem:[%s2760 + $0x140] sm:$0xff]
    %v4475 = vld [vmem:[%s2760 + $0x148] sm:$0xff]
    %v4476 = vld [vmem:[%s2760 + $0x150] sm:$0xff]
    %v4477 = vld [vmem:[%s2760 + $0x158] sm:$0xff]
    %v4478 = vld [vmem:[%s2760 + $0x160] sm:$0xff]
    %v4479 = vld [vmem:[%s2760 + $0x168] sm:$0xff]
    %v4480 = vld [vmem:[%s2760 + $0x170] sm:$0xff]
    %v4481 = vld [vmem:[%s2760 + $0x178] sm:$0xff]
    %v4482 = vld [vmem:[%s2760 + $0x180] sm:$0xff]
    %v4483 = vld [vmem:[%s2760 + $0x188] sm:$0xff]
    %v4484 = vld [vmem:[%s2760 + $0x190] sm:$0xff]
    %v4485 = vld [vmem:[%s2760 + $0x198] sm:$0xff]
    %v4486 = vld [vmem:[%s2760 + $0x1a0] sm:$0xff]
    %v4487 = vld [vmem:[%s2760 + $0x1a8] sm:$0xff]
    %v4488 = vld [vmem:[%s2760 + $0x1b0] sm:$0xff]
    %v4489 = vld [vmem:[%s2760 + $0x1b8] sm:$0xff]
    %v4490 = vld [vmem:[%s2760 + $0x1c0] sm:$0xff]
    %v4491 = vld [vmem:[%s2760 + $0x1c8] sm:$0xff]
    %v4492 = vld [vmem:[%s2760 + $0x1d0] sm:$0xff]
    %v4493 = vld [vmem:[%s2760 + $0x1d8] sm:$0xff]
    %v4494 = vld [vmem:[%s2760 + $0x1e0] sm:$0xff]
    %v4495 = vld [vmem:[%s2760 + $0x1e8] sm:$0xff]
    %v4496 = vld [vmem:[%s2760 + $0x1f0] sm:$0xff]
    %v4497 = vld [vmem:[%s2760 + $0x1f8] sm:$0xff]
    %4498 = vmatprep.subr.mxu0 %v4435
    %4499 = vmatpush1.msra.mxu0 %v4434
    %4500 = vmatprep.subr.mxu0 %v4439
    %4501 = vmatpush1.msra.mxu0 %v4438
    %4502 = vmatprep.subr.mxu0 %v4443
    %4503 = vmatpush1.msra.mxu0 %v4442
    %4504 = vmatprep.subr.mxu0 %v4447
    %4505 = vmatpush1.msra.mxu0 %v4446
    %4506 = vmatprep.subr.mxu0 %v4451
    %4507 = vmatpush1.msra.mxu0 %v4450
    %4508 = vmatprep.subr.mxu0 %v4455
    %4509 = vmatpush1.msra.mxu0 %v4454
    %4510 = vmatprep.subr.mxu0 %v4459
    %4511 = vmatpush1.msra.mxu0 %v4458
    %4512 = vmatprep.subr.mxu0 %v4463
    %4513 = vmatpush1.msra.mxu0 %v4462
    %4514 = vmatprep.subr.mxu0 %v4467
    %4515 = vmatpush1.msra.mxu0 %v4466
    %4516 = vmatprep.subr.mxu0 %v4471
    %4517 = vmatpush1.msra.mxu0 %v4470
    %4518 = vmatprep.subr.mxu0 %v4475
    %4519 = vmatpush1.msra.mxu0 %v4474
    %4520 = vmatprep.subr.mxu0 %v4479
    %4521 = vmatpush1.msra.mxu0 %v4478
    %4522 = vmatprep.subr.mxu0 %v4483
    %4523 = vmatpush1.msra.mxu0 %v4482
    %4524 = vmatprep.subr.mxu0 %v4487
    %4525 = vmatpush1.msra.mxu0 %v4486
    %4526 = vmatprep.subr.mxu0 %v4491
    %4527 = vmatpush1.msra.mxu0 %v4490
    %4528 = vmatprep.subr.mxu0 %v4495
    %4529 = vmatpush1.msra.mxu0 %v4494
    %4530 = vmatprep.subr.mxu0 0.0
    %4531 = vmatpush1.msra.mxu0 0.0
    %4532 = vmatprep.subr.mxu0 0.0
    %4533 = vmatpush1.msra.mxu0 0.0
    %4534 = vmatprep.subr.mxu0 0.0
    %4535 = vmatpush1.msra.mxu0 0.0
    %4536 = vmatprep.subr.mxu0 0.0
    %4537 = vmatpush1.msra.mxu0 0.0
    %4538 = vmatprep.subr.mxu0 0.0
    %4539 = vmatpush1.msra.mxu0 0.0
    %4540 = vmatprep.subr.mxu0 0.0
    %4541 = vmatpush1.msra.mxu0 0.0
    %4542 = vmatprep.subr.mxu0 0.0
    %4543 = vmatpush1.msra.mxu0 0.0
    %4544 = vmatprep.subr.mxu0 0.0
    %4545 = vmatpush1.msra.mxu0 0.0
    %4546 = vmatprep.subr.mxu0 0.0
    %4547 = vmatpush1.msra.mxu0 0.0
    %4548 = vmatprep.subr.mxu0 0.0
    %4549 = vmatpush1.msra.mxu0 0.0
    %4550 = vmatprep.subr.mxu0 0.0
    %4551 = vmatpush1.msra.mxu0 0.0
    %4552 = vmatprep.subr.mxu0 0.0
    %4553 = vmatpush1.msra.mxu0 0.0
    %4554 = vmatprep.subr.mxu0 0.0
    %4555 = vmatpush1.msra.mxu0 0.0
    %4556 = vmatprep.subr.mxu0 0.0
    %4557 = vmatpush1.msra.mxu0 0.0
    %4558 = vmatprep.subr.mxu0 0.0
    %4559 = vmatpush1.msra.mxu0 0.0
    %4560 = vmatprep.subr.mxu0 0.0
    %4561 = vmatpush1.msra.mxu0 0.0
    %4562 = vmatprep.mubr.f32.mxu0 0.0
    %4563 = vmatmul.mubr.f32.gmra.mrb[0].mxu0 %v4428
    %v4564 = vpop.f32.mrb[0].mxu0
    %v4565 = vadd.f32 0.0, %v4564
    %v4566 = vpop.f32.mrb[0].mxu0
    %v4567 = vadd.f32 0.0, %v4566
    %4568 = vdwg.mxu0
    %4569 = vmatprep.subr.mxu0 %v4437
    %4570 = vmatpush1.msra.mxu0 %v4436
    %4571 = vmatprep.subr.mxu0 %v4441
    %4572 = vmatpush1.msra.mxu0 %v4440
    %4573 = vmatprep.subr.mxu0 %v4445
    %4574 = vmatpush1.msra.mxu0 %v4444
    %4575 = vmatprep.subr.mxu0 %v4449
    %4576 = vmatpush1.msra.mxu0 %v4448
    %4577 = vmatprep.subr.mxu0 %v4453
    %4578 = vmatpush1.msra.mxu0 %v4452
    %4579 = vmatprep.subr.mxu0 %v4457
    %4580 = vmatpush1.msra.mxu0 %v4456
    %4581 = vmatprep.subr.mxu0 %v4461
    %4582 = vmatpush1.msra.mxu0 %v4460
    %4583 = vmatprep.subr.mxu0 %v4465
    %4584 = vmatpush1.msra.mxu0 %v4464
    %4585 = vmatprep.subr.mxu0 %v4469
    %4586 = vmatpush1.msra.mxu0 %v4468
    %4587 = vmatprep.subr.mxu0 %v4473
    %4588 = vmatpush1.msra.mxu0 %v4472
    %4589 = vmatprep.subr.mxu0 %v4477
    %4590 = vmatpush1.msra.mxu0 %v4476
    %4591 = vmatprep.subr.mxu0 %v4481
    %4592 = vmatpush1.msra.mxu0 %v4480
    %4593 = vmatprep.subr.mxu0 %v4485
    %4594 = vmatpush1.msra.mxu0 %v4484
    %4595 = vmatprep.subr.mxu0 %v4489
    %4596 = vmatpush1.msra.mxu0 %v4488
    %4597 = vmatprep.subr.mxu0 %v4493
    %4598 = vmatpush1.msra.mxu0 %v4492
    %4599 = vmatprep.subr.mxu0 %v4497
    %4600 = vmatpush1.msra.mxu0 %v4496
    %4601 = vmatprep.subr.mxu0 0.0
    %4602 = vmatpush1.msra.mxu0 0.0
    %4603 = vmatprep.subr.mxu0 0.0
    %4604 = vmatpush1.msra.mxu0 0.0
    %4605 = vmatprep.subr.mxu0 0.0
    %4606 = vmatpush1.msra.mxu0 0.0
    %4607 = vmatprep.subr.mxu0 0.0
    %4608 = vmatpush1.msra.mxu0 0.0
    %4609 = vmatprep.subr.mxu0 0.0
    %4610 = vmatpush1.msra.mxu0 0.0
    %4611 = vmatprep.subr.mxu0 0.0
    %4612 = vmatpush1.msra.mxu0 0.0
    %4613 = vmatprep.subr.mxu0 0.0
    %4614 = vmatpush1.msra.mxu0 0.0
    %4615 = vmatprep.subr.mxu0 0.0
    %4616 = vmatpush1.msra.mxu0 0.0
    %4617 = vmatprep.subr.mxu0 0.0
    %4618 = vmatpush1.msra.mxu0 0.0
    %4619 = vmatprep.subr.mxu0 0.0
    %4620 = vmatpush1.msra.mxu0 0.0
    %4621 = vmatprep.subr.mxu0 0.0
    %4622 = vmatpush1.msra.mxu0 0.0
    %4623 = vmatprep.subr.mxu0 0.0
    %4624 = vmatpush1.msra.mxu0 0.0
    %4625 = vmatprep.subr.mxu0 0.0
    %4626 = vmatpush1.msra.mxu0 0.0
    %4627 = vmatprep.subr.mxu0 0.0
    %4628 = vmatpush1.msra.mxu0 0.0
    %4629 = vmatprep.subr.mxu0 0.0
    %4630 = vmatpush1.msra.mxu0 0.0
    %4631 = vmatprep.subr.mxu0 0.0
    %4632 = vmatpush1.msra.mxu0 0.0
    %4633 = vmatprep.mubr.f32.mxu0 0.0
    %4634 = vmatmul.mubr.f32.gmra.mrb[0].mxu0 %v4428
    %v4635 = vpop.f32.mrb[0].mxu0
    %v4636 = vadd.f32 0.0, %v4635
    %v4637 = vpop.f32.mrb[0].mxu0
    %v4638 = vadd.f32 0.0, %v4637
    %4639 = vdwg.mxu0
    %v4640 = vadd.f32 %v4430, %v4565
    %v4641 = vadd.f32 %v4431, %v4567
    %v4642 = vadd.f32 %v4432, %v4636
    %v4643 = vadd.f32 %v4433, %v4638
    %v4644 = vxor.u32 %v4640, 2147483648
    %v4645 = vmul.f32 %v4644, 1.442695
    %v4646 = vpow.pop %v4645
    %v4647 = vadd.f32 %v4646, 1.0
    %v4648 = vrcp.pop %v4647
    %v4649 = vmul.f32 1.0, %v4648
    %v4650 = vxor.u32 %v4641, 2147483648
    %v4651 = vmul.f32 %v4650, 1.442695
    %v4652 = vpow.pop %v4651
    %v4653 = vadd.f32 %v4652, 1.0
    %v4654 = vrcp.pop %v4653
    %v4655 = vmul.f32 1.0, %v4654
    %v4656 = vtanh.pop %v4642
    %v4657 = vxor.u32 %v4643, 2147483648
    %v4658 = vmul.f32 %v4657, 1.442695
    %v4659 = vpow.pop %v4658
    %v4660 = vadd.f32 %v4659, 1.0
    %v4661 = vrcp.pop %v4660
    %v4662 = vmul.f32 1.0, %v4661
    %v4663 = vmul.f32 %v4655, %v4426
    %v4664 = vmul.f32 %v4649, %v4656
    %v4665 = vadd.f32 %v4663, %v4664
    %v4666 = vtanh.pop %v4665
    %v4667 = vmul.f32 %v4662, %v4666
    %4668 = vst [vmem:[%s2394] sm:$0xff] %v4667
    %s4669 = scalar_lea.vmem [#allocation16], 8
    %4670 = vst [vmem:[%s4669] sm:$0xff] %v4667
    %s4671 = scalar_lea.vmem [#allocation18], 8
    %4672 = vst [vmem:[%s4671] sm:$0xff] %v4665
    %v4673 = vld [vmem:[#allocation2] sm:$0xff]
    %v4674 = vld [vmem:[#allocation2 + $0x8] sm:$0xff]
    %v4675 = vld [vmem:[#allocation2 + $0x10] sm:$0xff]
    %v4676 = vld [vmem:[#allocation2 + $0x18] sm:$0xff]
    %v4677 = vld [vmem:[#allocation2 + $0x20] sm:$0xff]
    %v4678 = vld [vmem:[#allocation2 + $0x28] sm:$0xff]
    %v4679 = vld [vmem:[#allocation2 + $0x30] sm:$0xff]
    %v4680 = vld [vmem:[#allocation2 + $0x38] sm:$0xff]
    %v4681 = vld [vmem:[#allocation13] sm:$0xff]
    %v4682 = vld [vmem:[#allocation13 + $0x8] sm:$0xff]
    %v4683 = vld [vmem:[#allocation13 + $0x10] sm:$0xff]
    %v4684 = vld [vmem:[#allocation13 + $0x18] sm:$0xff]
    %v4685 = vld [vmem:[#allocation13 + $0x20] sm:$0xff]
    %v4686 = vld [vmem:[#allocation13 + $0x28] sm:$0xff]
    %v4687 = vld [vmem:[#allocation13 + $0x30] sm:$0xff]
    %v4688 = vld [vmem:[#allocation13 + $0x38] sm:$0xff]
    %v4689 = vld [vmem:[#allocation13 + $0x40] sm:$0xff]
    %v4690 = vld [vmem:[#allocation13 + $0x48] sm:$0xff]
    %v4691 = vld [vmem:[#allocation13 + $0x50] sm:$0xff]
    %v4692 = vld [vmem:[#allocation13 + $0x58] sm:$0xff]
    %v4693 = vld [vmem:[#allocation13 + $0x60] sm:$0xff]
    %v4694 = vld [vmem:[#allocation13 + $0x68] sm:$0xff]
    %v4695 = vld [vmem:[#allocation13 + $0x70] sm:$0xff]
    %v4696 = vld [vmem:[#allocation13 + $0x78] sm:$0xff]
    %v4697 = vld [vmem:[%s7] sm:$0x1]
    %v4699 = vlaneseq
    %v4700 = vshrl.u32 %v4699, 7
    %v4701 = vsub.s32 0, %v4700
    %v4702 = vrot.slane %v4697, %v4701
    %4704 = vmatprep.subr.mxu0 0.0
    %4705 = vmatpush1.msra.mxu0 %v4681
    %4706 = vmatprep.subr.mxu0 0.0
    %4707 = vmatpush1.msra.mxu0 %v4682
    %4708 = vmatprep.subr.mxu0 0.0
    %4709 = vmatpush1.msra.mxu0 %v4683
    %4710 = vmatprep.subr.mxu0 0.0
    %4711 = vmatpush1.msra.mxu0 %v4684
    %4712 = vmatprep.subr.mxu0 0.0
    %4713 = vmatpush1.msra.mxu0 %v4685
    %4714 = vmatprep.subr.mxu0 0.0
    %4715 = vmatpush1.msra.mxu0 %v4686
    %4716 = vmatprep.subr.mxu0 0.0
    %4717 = vmatpush1.msra.mxu0 %v4687
    %4718 = vmatprep.subr.mxu0 0.0
    %4719 = vmatpush1.msra.mxu0 %v4688
    %4720 = vmatprep.subr.mxu0 0.0
    %4721 = vmatpush1.msra.mxu0 %v4689
    %4722 = vmatprep.subr.mxu0 0.0
    %4723 = vmatpush1.msra.mxu0 %v4690
    %4724 = vmatprep.subr.mxu0 0.0
    %4725 = vmatpush1.msra.mxu0 %v4691
    %4726 = vmatprep.subr.mxu0 0.0
    %4727 = vmatpush1.msra.mxu0 %v4692
    %4728 = vmatprep.subr.mxu0 0.0
    %4729 = vmatpush1.msra.mxu0 %v4693
    %4730 = vmatprep.subr.mxu0 0.0
    %4731 = vmatpush1.msra.mxu0 %v4694
    %4732 = vmatprep.subr.mxu0 0.0
    %4733 = vmatpush1.msra.mxu0 %v4695
    %4734 = vmatprep.subr.mxu0 0.0
    %4735 = vmatpush1.msra.mxu0 %v4696
    %4736 = vmatprep.subr.mxu0 0.0
    %4737 = vmatpush1.msra.mxu0 0.0
    %4738 = vmatprep.subr.mxu0 0.0
    %4739 = vmatpush1.msra.mxu0 0.0
    %4740 = vmatprep.subr.mxu0 0.0
    %4741 = vmatpush1.msra.mxu0 0.0
    %4742 = vmatprep.subr.mxu0 0.0
    %4743 = vmatpush1.msra.mxu0 0.0
    %4744 = vmatprep.subr.mxu0 0.0
    %4745 = vmatpush1.msra.mxu0 0.0
    %4746 = vmatprep.subr.mxu0 0.0
    %4747 = vmatpush1.msra.mxu0 0.0
    %4748 = vmatprep.subr.mxu0 0.0
    %4749 = vmatpush1.msra.mxu0 0.0
    %4750 = vmatprep.subr.mxu0 0.0
    %4751 = vmatpush1.msra.mxu0 0.0
    %4752 = vmatprep.subr.mxu0 0.0
    %4753 = vmatpush1.msra.mxu0 0.0
    %4754 = vmatprep.subr.mxu0 0.0
    %4755 = vmatpush1.msra.mxu0 0.0
    %4756 = vmatprep.subr.mxu0 0.0
    %4757 = vmatpush1.msra.mxu0 0.0
    %4758 = vmatprep.subr.mxu0 0.0
    %4759 = vmatpush1.msra.mxu0 0.0
    %4760 = vmatprep.subr.mxu0 0.0
    %4761 = vmatpush1.msra.mxu0 0.0
    %4762 = vmatprep.subr.mxu0 0.0
    %4763 = vmatpush1.msra.mxu0 0.0
    %4764 = vmatprep.subr.mxu0 0.0
    %4765 = vmatpush1.msra.mxu0 0.0
    %4766 = vmatprep.subr.mxu0 0.0
    %4767 = vmatpush1.msra.mxu0 0.0
    %4768 = vmatprep.mubr.f32.mxu0 0.0
    %4769 = vmatmul.mubr.f32.gmra.mrb[0].mxu0 %v4673
    %v4770 = vpop.f32.mrb[0].mxu0
    %v4771 = vadd.f32 %v4702, %v4770
    %v4772 = vpop.f32.mrb[0].mxu0
    %4773 = vmatprep.mubr.f32.mxu0 0.0
    %4774 = vmatmul.mubr.f32.gmra.mrb[0].mxu0 %v4674
    %v4775 = vpop.f32.mrb[0].mxu0
    %v4776 = vadd.f32 %v4702, %v4775
    %v4777 = vpop.f32.mrb[0].mxu0
    %4778 = vmatprep.mubr.f32.mxu0 0.0
    %4779 = vmatmul.mubr.f32.gmra.mrb[0].mxu0 %v4675
    %v4780 = vpop.f32.mrb[0].mxu0
    %v4781 = vadd.f32 %v4702, %v4780
    %v4782 = vpop.f32.mrb[0].mxu0
    %4783 = vmatprep.mubr.f32.mxu0 0.0
    %4784 = vmatmul.mubr.f32.gmra.mrb[0].mxu0 %v4676
    %v4785 = vpop.f32.mrb[0].mxu0
    %v4786 = vadd.f32 %v4702, %v4785
    %v4787 = vpop.f32.mrb[0].mxu0
    %4788 = vmatprep.mubr.f32.mxu0 0.0
    %4789 = vmatmul.mubr.f32.gmra.mrb[0].mxu0 %v4677
    %v4790 = vpop.f32.mrb[0].mxu0
    %v4791 = vadd.f32 %v4702, %v4790
    %v4792 = vpop.f32.mrb[0].mxu0
    %4793 = vmatprep.mubr.f32.mxu0 0.0
    %4794 = vmatmul.mubr.f32.gmra.mrb[0].mxu0 %v4678
    %v4795 = vpop.f32.mrb[0].mxu0
    %v4796 = vadd.f32 %v4702, %v4795
    %v4797 = vpop.f32.mrb[0].mxu0
    %4798 = vmatprep.mubr.f32.mxu0 0.0
    %4799 = vmatmul.mubr.f32.gmra.mrb[0].mxu0 %v4679
    %v4800 = vpop.f32.mrb[0].mxu0
    %v4801 = vadd.f32 %v4702, %v4800
    %v4802 = vpop.f32.mrb[0].mxu0
    %4803 = vmatprep.mubr.f32.mxu0 0.0
    %4804 = vmatmul.mubr.f32.gmra.mrb[0].mxu0 %v4680
    %v4805 = vpop.f32.mrb[0].mxu0
    %v4806 = vadd.f32 %v4702, %v4805
    %v4807 = vpop.f32.mrb[0].mxu0
    %4808 = vdwg.mxu0
    %v4810 = vcombine.high %v4771, %v4771
    %v4812 = vunpack.c.l.s4 1966171168
    %v4813 = vunpack.c.0.s8 %v4812
    %v4814 = vlaneseq
    %v4815 = vshrl.u32 %v4814, 7
    %v4816 = vsub.s32 %v4813, %v4815
    %v4817 = vrot.slane %v4771, %v4816
    %v4819 = vunpack.c.l.s4 1966171168
    %v4820 = vunpack.c.0.s8 %v4819
    %v4821 = vlaneseq
    %v4822 = vshrl.u32 %v4821, 7
    %v4823 = vsub.s32 %v4820, %v4822
    %v4824 = vrot.slane %v4810, %v4823
    %v4825 = vcombine.high %v4817, %v4817
    %v4826 = vcombine.high %v4824, %v4824
    %v4828 = vunpack.c.l.s4 1966171168
    %v4829 = vunpack.c.0.s8 %v4828
    %v4830 = vlaneseq
    %v4831 = vshrl.u32 %v4830, 7
    %v4832 = vsub.s32 %v4829, %v4831
    %v4833 = vrot.slane %v4817, %v4832
    %v4835 = vunpack.c.l.s4 1966171168
    %v4836 = vunpack.c.0.s8 %v4835
    %v4837 = vlaneseq
    %v4838 = vshrl.u32 %v4837, 7
    %v4839 = vsub.s32 %v4836, %v4838
    %v4840 = vrot.slane %v4824, %v4839
    %v4842 = vunpack.c.l.s4 1966171168
    %v4843 = vunpack.c.0.s8 %v4842
    %v4844 = vlaneseq
    %v4845 = vshrl.u32 %v4844, 7
    %v4846 = vsub.s32 %v4843, %v4845
    %v4847 = vrot.slane %v4825, %v4846
    %v4849 = vunpack.c.l.s4 1966171168
    %v4850 = vunpack.c.0.s8 %v4849
    %v4851 = vlaneseq
    %v4852 = vshrl.u32 %v4851, 7
    %v4853 = vsub.s32 %v4850, %v4852
    %v4854 = vrot.slane %v4826, %v4853
    %v4855 = vcombine.high %v4833, %v4833
    %v4856 = vcombine.high %v4840, %v4840
    %v4857 = vcombine.high %v4847, %v4847
    %v4858 = vcombine.high %v4854, %v4854
    %4867 = vst [vmem:[#allocation15] sm:$0x1] %v4833
    %4868 = vst [vmem:[#allocation15 + $0x8] sm:$0x1] %v4847
    %4869 = vst [vmem:[#allocation15 + $0x10] sm:$0x1] %v4855
    %4870 = vst [vmem:[#allocation15 + $0x18] sm:$0x1] %v4857
    %4871 = vst [vmem:[#allocation15 + $0x20] sm:$0x1] %v4840
    %4872 = vst [vmem:[#allocation15 + $0x28] sm:$0x1] %v4854
    %4873 = vst [vmem:[#allocation15 + $0x30] sm:$0x1] %v4856
    %4874 = vst [vmem:[#allocation15 + $0x38] sm:$0x1] %v4858
    %v4876 = vcombine.high %v4776, %v4776
    %v4878 = vunpack.c.l.s4 1966171168
    %v4879 = vunpack.c.0.s8 %v4878
    %v4880 = vlaneseq
    %v4881 = vshrl.u32 %v4880, 7
    %v4882 = vsub.s32 %v4879, %v4881
    %v4883 = vrot.slane %v4776, %v4882
    %v4885 = vunpack.c.l.s4 1966171168
    %v4886 = vunpack.c.0.s8 %v4885
    %v4887 = vlaneseq
    %v4888 = vshrl.u32 %v4887, 7
    %v4889 = vsub.s32 %v4886, %v4888
    %v4890 = vrot.slane %v4876, %v4889
    %v4891 = vcombine.high %v4883, %v4883
    %v4892 = vcombine.high %v4890, %v4890
    %v4894 = vunpack.c.l.s4 1966171168
    %v4895 = vunpack.c.0.s8 %v4894
    %v4896 = vlaneseq
    %v4897 = vshrl.u32 %v4896, 7
    %v4898 = vsub.s32 %v4895, %v4897
    %v4899 = vrot.slane %v4883, %v4898
    %v4901 = vunpack.c.l.s4 1966171168
    %v4902 = vunpack.c.0.s8 %v4901
    %v4903 = vlaneseq
    %v4904 = vshrl.u32 %v4903, 7
    %v4905 = vsub.s32 %v4902, %v4904
    %v4906 = vrot.slane %v4890, %v4905
    %v4908 = vunpack.c.l.s4 1966171168
    %v4909 = vunpack.c.0.s8 %v4908
    %v4910 = vlaneseq
    %v4911 = vshrl.u32 %v4910, 7
    %v4912 = vsub.s32 %v4909, %v4911
    %v4913 = vrot.slane %v4891, %v4912
    %v4915 = vunpack.c.l.s4 1966171168
    %v4916 = vunpack.c.0.s8 %v4915
    %v4917 = vlaneseq
    %v4918 = vshrl.u32 %v4917, 7
    %v4919 = vsub.s32 %v4916, %v4918
    %v4920 = vrot.slane %v4892, %v4919
    %v4921 = vcombine.high %v4899, %v4899
    %v4922 = vcombine.high %v4906, %v4906
    %v4923 = vcombine.high %v4913, %v4913
    %v4924 = vcombine.high %v4920, %v4920
    %4933 = vst [vmem:[#allocation15 + $0x1] sm:$0x1] %v4899
    %4934 = vst [vmem:[#allocation15 + $0x9] sm:$0x1] %v4913
    %4935 = vst [vmem:[#allocation15 + $0x11] sm:$0x1] %v4921
    %4936 = vst [vmem:[#allocation15 + $0x19] sm:$0x1] %v4923
    %4937 = vst [vmem:[#allocation15 + $0x21] sm:$0x1] %v4906
    %4938 = vst [vmem:[#allocation15 + $0x29] sm:$0x1] %v4920
    %4939 = vst [vmem:[#allocation15 + $0x31] sm:$0x1] %v4922
    %4940 = vst [vmem:[#allocation15 + $0x39] sm:$0x1] %v4924
    %v4942 = vcombine.high %v4781, %v4781
    %v4944 = vunpack.c.l.s4 1966171168
    %v4945 = vunpack.c.0.s8 %v4944
    %v4946 = vlaneseq
    %v4947 = vshrl.u32 %v4946, 7
    %v4948 = vsub.s32 %v4945, %v4947
    %v4949 = vrot.slane %v4781, %v4948
    %v4951 = vunpack.c.l.s4 1966171168
    %v4952 = vunpack.c.0.s8 %v4951
    %v4953 = vlaneseq
    %v4954 = vshrl.u32 %v4953, 7
    %v4955 = vsub.s32 %v4952, %v4954
    %v4956 = vrot.slane %v4942, %v4955
    %v4957 = vcombine.high %v4949, %v4949
    %v4958 = vcombine.high %v4956, %v4956
    %v4960 = vunpack.c.l.s4 1966171168
    %v4961 = vunpack.c.0.s8 %v4960
    %v4962 = vlaneseq
    %v4963 = vshrl.u32 %v4962, 7
    %v4964 = vsub.s32 %v4961, %v4963
    %v4965 = vrot.slane %v4949, %v4964
    %v4967 = vunpack.c.l.s4 1966171168
    %v4968 = vunpack.c.0.s8 %v4967
    %v4969 = vlaneseq
    %v4970 = vshrl.u32 %v4969, 7
    %v4971 = vsub.s32 %v4968, %v4970
    %v4972 = vrot.slane %v4956, %v4971
    %v4974 = vunpack.c.l.s4 1966171168
    %v4975 = vunpack.c.0.s8 %v4974
    %v4976 = vlaneseq
    %v4977 = vshrl.u32 %v4976, 7
    %v4978 = vsub.s32 %v4975, %v4977
    %v4979 = vrot.slane %v4957, %v4978
    %v4981 = vunpack.c.l.s4 1966171168
    %v4982 = vunpack.c.0.s8 %v4981
    %v4983 = vlaneseq
    %v4984 = vshrl.u32 %v4983, 7
    %v4985 = vsub.s32 %v4982, %v4984
    %v4986 = vrot.slane %v4958, %v4985
    %v4987 = vcombine.high %v4965, %v4965
    %v4988 = vcombine.high %v4972, %v4972
    %v4989 = vcombine.high %v4979, %v4979
    %v4990 = vcombine.high %v4986, %v4986
    %4999 = vst [vmem:[#allocation15 + $0x2] sm:$0x1] %v4965
    %5000 = vst [vmem:[#allocation15 + $0xa] sm:$0x1] %v4979
    %5001 = vst [vmem:[#allocation15 + $0x12] sm:$0x1] %v4987
    %5002 = vst [vmem:[#allocation15 + $0x1a] sm:$0x1] %v4989
    %5003 = vst [vmem:[#allocation15 + $0x22] sm:$0x1] %v4972
    %5004 = vst [vmem:[#allocation15 + $0x2a] sm:$0x1] %v4986
    %5005 = vst [vmem:[#allocation15 + $0x32] sm:$0x1] %v4988
    %5006 = vst [vmem:[#allocation15 + $0x3a] sm:$0x1] %v4990
    %v5008 = vcombine.high %v4786, %v4786
    %v5010 = vunpack.c.l.s4 1966171168
    %v5011 = vunpack.c.0.s8 %v5010
    %v5012 = vlaneseq
    %v5013 = vshrl.u32 %v5012, 7
    %v5014 = vsub.s32 %v5011, %v5013
    %v5015 = vrot.slane %v4786, %v5014
    %v5017 = vunpack.c.l.s4 1966171168
    %v5018 = vunpack.c.0.s8 %v5017
    %v5019 = vlaneseq
    %v5020 = vshrl.u32 %v5019, 7
    %v5021 = vsub.s32 %v5018, %v5020
    %v5022 = vrot.slane %v5008, %v5021
    %v5023 = vcombine.high %v5015, %v5015
    %v5024 = vcombine.high %v5022, %v5022
    %v5026 = vunpack.c.l.s4 1966171168
    %v5027 = vunpack.c.0.s8 %v5026
    %v5028 = vlaneseq
    %v5029 = vshrl.u32 %v5028, 7
    %v5030 = vsub.s32 %v5027, %v5029
    %v5031 = vrot.slane %v5015, %v5030
    %v5033 = vunpack.c.l.s4 1966171168
    %v5034 = vunpack.c.0.s8 %v5033
    %v5035 = vlaneseq
    %v5036 = vshrl.u32 %v5035, 7
    %v5037 = vsub.s32 %v5034, %v5036
    %v5038 = vrot.slane %v5022, %v5037
    %v5040 = vunpack.c.l.s4 1966171168
    %v5041 = vunpack.c.0.s8 %v5040
    %v5042 = vlaneseq
    %v5043 = vshrl.u32 %v5042, 7
    %v5044 = vsub.s32 %v5041, %v5043
    %v5045 = vrot.slane %v5023, %v5044
    %v5047 = vunpack.c.l.s4 1966171168
    %v5048 = vunpack.c.0.s8 %v5047
    %v5049 = vlaneseq
    %v5050 = vshrl.u32 %v5049, 7
    %v5051 = vsub.s32 %v5048, %v5050
    %v5052 = vrot.slane %v5024, %v5051
    %v5053 = vcombine.high %v5031, %v5031
    %v5054 = vcombine.high %v5038, %v5038
    %v5055 = vcombine.high %v5045, %v5045
    %v5056 = vcombine.high %v5052, %v5052
    %5065 = vst [vmem:[#allocation15 + $0x3] sm:$0x1] %v5031
    %5066 = vst [vmem:[#allocation15 + $0xb] sm:$0x1] %v5045
    %5067 = vst [vmem:[#allocation15 + $0x13] sm:$0x1] %v5053
    %5068 = vst [vmem:[#allocation15 + $0x1b] sm:$0x1] %v5055
    %5069 = vst [vmem:[#allocation15 + $0x23] sm:$0x1] %v5038
    %5070 = vst [vmem:[#allocation15 + $0x2b] sm:$0x1] %v5052
    %5071 = vst [vmem:[#allocation15 + $0x33] sm:$0x1] %v5054
    %5072 = vst [vmem:[#allocation15 + $0x3b] sm:$0x1] %v5056
    %v5074 = vcombine.high %v4791, %v4791
    %v5076 = vunpack.c.l.s4 1966171168
    %v5077 = vunpack.c.0.s8 %v5076
    %v5078 = vlaneseq
    %v5079 = vshrl.u32 %v5078, 7
    %v5080 = vsub.s32 %v5077, %v5079
    %v5081 = vrot.slane %v4791, %v5080
    %v5083 = vunpack.c.l.s4 1966171168
    %v5084 = vunpack.c.0.s8 %v5083
    %v5085 = vlaneseq
    %v5086 = vshrl.u32 %v5085, 7
    %v5087 = vsub.s32 %v5084, %v5086
    %v5088 = vrot.slane %v5074, %v5087
    %v5089 = vcombine.high %v5081, %v5081
    %v5090 = vcombine.high %v5088, %v5088
    %v5092 = vunpack.c.l.s4 1966171168
    %v5093 = vunpack.c.0.s8 %v5092
    %v5094 = vlaneseq
    %v5095 = vshrl.u32 %v5094, 7
    %v5096 = vsub.s32 %v5093, %v5095
    %v5097 = vrot.slane %v5081, %v5096
    %v5099 = vunpack.c.l.s4 1966171168
    %v5100 = vunpack.c.0.s8 %v5099
    %v5101 = vlaneseq
    %v5102 = vshrl.u32 %v5101, 7
    %v5103 = vsub.s32 %v5100, %v5102
    %v5104 = vrot.slane %v5088, %v5103
    %v5106 = vunpack.c.l.s4 1966171168
    %v5107 = vunpack.c.0.s8 %v5106
    %v5108 = vlaneseq
    %v5109 = vshrl.u32 %v5108, 7
    %v5110 = vsub.s32 %v5107, %v5109
    %v5111 = vrot.slane %v5089, %v5110
    %v5113 = vunpack.c.l.s4 1966171168
    %v5114 = vunpack.c.0.s8 %v5113
    %v5115 = vlaneseq
    %v5116 = vshrl.u32 %v5115, 7
    %v5117 = vsub.s32 %v5114, %v5116
    %v5118 = vrot.slane %v5090, %v5117
    %v5119 = vcombine.high %v5097, %v5097
    %v5120 = vcombine.high %v5104, %v5104
    %v5121 = vcombine.high %v5111, %v5111
    %v5122 = vcombine.high %v5118, %v5118
    %5131 = vst [vmem:[#allocation15 + $0x4] sm:$0x1] %v5097
    %5132 = vst [vmem:[#allocation15 + $0xc] sm:$0x1] %v5111
    %5133 = vst [vmem:[#allocation15 + $0x14] sm:$0x1] %v5119
    %5134 = vst [vmem:[#allocation15 + $0x1c] sm:$0x1] %v5121
    %5135 = vst [vmem:[#allocation15 + $0x24] sm:$0x1] %v5104
    %5136 = vst [vmem:[#allocation15 + $0x2c] sm:$0x1] %v5118
    %5137 = vst [vmem:[#allocation15 + $0x34] sm:$0x1] %v5120
    %5138 = vst [vmem:[#allocation15 + $0x3c] sm:$0x1] %v5122
    %v5140 = vcombine.high %v4796, %v4796
    %v5142 = vunpack.c.l.s4 1966171168
    %v5143 = vunpack.c.0.s8 %v5142
    %v5144 = vlaneseq
    %v5145 = vshrl.u32 %v5144, 7
    %v5146 = vsub.s32 %v5143, %v5145
    %v5147 = vrot.slane %v4796, %v5146
    %v5149 = vunpack.c.l.s4 1966171168
    %v5150 = vunpack.c.0.s8 %v5149
    %v5151 = vlaneseq
    %v5152 = vshrl.u32 %v5151, 7
    %v5153 = vsub.s32 %v5150, %v5152
    %v5154 = vrot.slane %v5140, %v5153
    %v5155 = vcombine.high %v5147, %v5147
    %v5156 = vcombine.high %v5154, %v5154
    %v5158 = vunpack.c.l.s4 1966171168
    %v5159 = vunpack.c.0.s8 %v5158
    %v5160 = vlaneseq
    %v5161 = vshrl.u32 %v5160, 7
    %v5162 = vsub.s32 %v5159, %v5161
    %v5163 = vrot.slane %v5147, %v5162
    %v5165 = vunpack.c.l.s4 1966171168
    %v5166 = vunpack.c.0.s8 %v5165
    %v5167 = vlaneseq
    %v5168 = vshrl.u32 %v5167, 7
    %v5169 = vsub.s32 %v5166, %v5168
    %v5170 = vrot.slane %v5154, %v5169
    %v5172 = vunpack.c.l.s4 1966171168
    %v5173 = vunpack.c.0.s8 %v5172
    %v5174 = vlaneseq
    %v5175 = vshrl.u32 %v5174, 7
    %v5176 = vsub.s32 %v5173, %v5175
    %v5177 = vrot.slane %v5155, %v5176
    %v5179 = vunpack.c.l.s4 1966171168
    %v5180 = vunpack.c.0.s8 %v5179
    %v5181 = vlaneseq
    %v5182 = vshrl.u32 %v5181, 7
    %v5183 = vsub.s32 %v5180, %v5182
    %v5184 = vrot.slane %v5156, %v5183
    %v5185 = vcombine.high %v5163, %v5163
    %v5186 = vcombine.high %v5170, %v5170
    %v5187 = vcombine.high %v5177, %v5177
    %v5188 = vcombine.high %v5184, %v5184
    %5197 = vst [vmem:[#allocation15 + $0x5] sm:$0x1] %v5163
    %5198 = vst [vmem:[#allocation15 + $0xd] sm:$0x1] %v5177
    %5199 = vst [vmem:[#allocation15 + $0x15] sm:$0x1] %v5185
    %5200 = vst [vmem:[#allocation15 + $0x1d] sm:$0x1] %v5187
    %5201 = vst [vmem:[#allocation15 + $0x25] sm:$0x1] %v5170
    %5202 = vst [vmem:[#allocation15 + $0x2d] sm:$0x1] %v5184
    %5203 = vst [vmem:[#allocation15 + $0x35] sm:$0x1] %v5186
    %5204 = vst [vmem:[#allocation15 + $0x3d] sm:$0x1] %v5188
    %v5206 = vcombine.high %v4801, %v4801
    %v5208 = vunpack.c.l.s4 1966171168
    %v5209 = vunpack.c.0.s8 %v5208
    %v5210 = vlaneseq
    %v5211 = vshrl.u32 %v5210, 7
    %v5212 = vsub.s32 %v5209, %v5211
    %v5213 = vrot.slane %v4801, %v5212
    %v5215 = vunpack.c.l.s4 1966171168
    %v5216 = vunpack.c.0.s8 %v5215
    %v5217 = vlaneseq
    %v5218 = vshrl.u32 %v5217, 7
    %v5219 = vsub.s32 %v5216, %v5218
    %v5220 = vrot.slane %v5206, %v5219
    %v5221 = vcombine.high %v5213, %v5213
    %v5222 = vcombine.high %v5220, %v5220
    %v5224 = vunpack.c.l.s4 1966171168
    %v5225 = vunpack.c.0.s8 %v5224
    %v5226 = vlaneseq
    %v5227 = vshrl.u32 %v5226, 7
    %v5228 = vsub.s32 %v5225, %v5227
    %v5229 = vrot.slane %v5213, %v5228
    %v5231 = vunpack.c.l.s4 1966171168
    %v5232 = vunpack.c.0.s8 %v5231
    %v5233 = vlaneseq
    %v5234 = vshrl.u32 %v5233, 7
    %v5235 = vsub.s32 %v5232, %v5234
    %v5236 = vrot.slane %v5220, %v5235
    %v5238 = vunpack.c.l.s4 1966171168
    %v5239 = vunpack.c.0.s8 %v5238
    %v5240 = vlaneseq
    %v5241 = vshrl.u32 %v5240, 7
    %v5242 = vsub.s32 %v5239, %v5241
    %v5243 = vrot.slane %v5221, %v5242
    %v5245 = vunpack.c.l.s4 1966171168
    %v5246 = vunpack.c.0.s8 %v5245
    %v5247 = vlaneseq
    %v5248 = vshrl.u32 %v5247, 7
    %v5249 = vsub.s32 %v5246, %v5248
    %v5250 = vrot.slane %v5222, %v5249
    %v5251 = vcombine.high %v5229, %v5229
    %v5252 = vcombine.high %v5236, %v5236
    %v5253 = vcombine.high %v5243, %v5243
    %v5254 = vcombine.high %v5250, %v5250
    %5263 = vst [vmem:[#allocation15 + $0x6] sm:$0x1] %v5229
    %5264 = vst [vmem:[#allocation15 + $0xe] sm:$0x1] %v5243
    %5265 = vst [vmem:[#allocation15 + $0x16] sm:$0x1] %v5251
    %5266 = vst [vmem:[#allocation15 + $0x1e] sm:$0x1] %v5253
    %5267 = vst [vmem:[#allocation15 + $0x26] sm:$0x1] %v5236
    %5268 = vst [vmem:[#allocation15 + $0x2e] sm:$0x1] %v5250
    %5269 = vst [vmem:[#allocation15 + $0x36] sm:$0x1] %v5252
    %5270 = vst [vmem:[#allocation15 + $0x3e] sm:$0x1] %v5254
    %v5272 = vcombine.high %v4806, %v4806
    %v5274 = vunpack.c.l.s4 1966171168
    %v5275 = vunpack.c.0.s8 %v5274
    %v5276 = vlaneseq
    %v5277 = vshrl.u32 %v5276, 7
    %v5278 = vsub.s32 %v5275, %v5277
    %v5279 = vrot.slane %v4806, %v5278
    %v5281 = vunpack.c.l.s4 1966171168
    %v5282 = vunpack.c.0.s8 %v5281
    %v5283 = vlaneseq
    %v5284 = vshrl.u32 %v5283, 7
    %v5285 = vsub.s32 %v5282, %v5284
    %v5286 = vrot.slane %v5272, %v5285
    %v5287 = vcombine.high %v5279, %v5279
    %v5288 = vcombine.high %v5286, %v5286
    %v5290 = vunpack.c.l.s4 1966171168
    %v5291 = vunpack.c.0.s8 %v5290
    %v5292 = vlaneseq
    %v5293 = vshrl.u32 %v5292, 7
    %v5294 = vsub.s32 %v5291, %v5293
    %v5295 = vrot.slane %v5279, %v5294
    %v5297 = vunpack.c.l.s4 1966171168
    %v5298 = vunpack.c.0.s8 %v5297
    %v5299 = vlaneseq
    %v5300 = vshrl.u32 %v5299, 7
    %v5301 = vsub.s32 %v5298, %v5300
    %v5302 = vrot.slane %v5286, %v5301
    %v5304 = vunpack.c.l.s4 1966171168
    %v5305 = vunpack.c.0.s8 %v5304
    %v5306 = vlaneseq
    %v5307 = vshrl.u32 %v5306, 7
    %v5308 = vsub.s32 %v5305, %v5307
    %v5309 = vrot.slane %v5287, %v5308
    %v5311 = vunpack.c.l.s4 1966171168
    %v5312 = vunpack.c.0.s8 %v5311
    %v5313 = vlaneseq
    %v5314 = vshrl.u32 %v5313, 7
    %v5315 = vsub.s32 %v5312, %v5314
    %v5316 = vrot.slane %v5288, %v5315
    %v5317 = vcombine.high %v5295, %v5295
    %v5318 = vcombine.high %v5302, %v5302
    %v5319 = vcombine.high %v5309, %v5309
    %v5320 = vcombine.high %v5316, %v5316
    %5329 = vst [vmem:[#allocation15 + $0x7] sm:$0x1] %v5295
    %5330 = vst [vmem:[#allocation15 + $0xf] sm:$0x1] %v5309
    %5331 = vst [vmem:[#allocation15 + $0x17] sm:$0x1] %v5317
    %5332 = vst [vmem:[#allocation15 + $0x1f] sm:$0x1] %v5319
    %5333 = vst [vmem:[#allocation15 + $0x27] sm:$0x1] %v5302
    %5334 = vst [vmem:[#allocation15 + $0x2f] sm:$0x1] %v5316
    %5335 = vst [vmem:[#allocation15 + $0x37] sm:$0x1] %v5318
    %5336 = vst [vmem:[#allocation15 + $0x3f] sm:$0x1] %v5320
    // Predicated region
    $region58: #{tpu_custom_call.1} parent=1 // pred_check
      _
    $region59: #{tpu_custom_call.1} parent=1 // pred_check_branch
      %5338 = sbr.rel (0) target = $region61
    $region60: #{tpu_custom_call.1} parent=1 // pred_region
      %s5340 = ssub.s32 1024, 1024
      %5341 = vsyncadd [#allocation6], %s5340
      %s5342 = sshll.u32 [#allocation15], 4
      %s5343 = int_to_ptr.vmem [resolvable:$true] %s5342
      %5348 = dma.vmem_to_hbm [thread:$0]  %s5343, 1024, %s8, [#allocation6], 128, 128, 8
    $region61: #{tpu_custom_call.1} parent=1 // pred_fallthru
      _
    // Predicated region
    $region62: #{tpu_custom_call.1} parent=1 // pred_check
      _
    $region63: #{tpu_custom_call.1} parent=1 // pred_check_branch
      %5350 = sbr.rel (0) target = $region65
    $region64: #{tpu_custom_call.1} parent=1 // pred_region
      %s5352 = ssub.s32 256, 256
      %5353 = vsyncadd [#allocation17], %s5352
      %s5354 = sshll.u32 [#allocation16], 4
      %s5355 = int_to_ptr.vmem [resolvable:$true] %s5354
      %5360 = dma.vmem_to_hbm [thread:$0]  %s5355, 256, %s9, [#allocation17], 128, 128, 8
    $region65: #{tpu_custom_call.1} parent=1 // pred_fallthru
      _
    // Predicated region
    $region66: #{tpu_custom_call.1} parent=1 // pred_check
      _
    $region67: #{tpu_custom_call.1} parent=1 // pred_check_branch
      %5362 = sbr.rel (0) target = $region69
    $region68: #{tpu_custom_call.1} parent=1 // pred_region
      %s5364 = ssub.s32 256, 256
      %5365 = vsyncadd [#allocation17], %s5364
      %s5366 = sshll.u32 [#allocation18], 4
      %s5367 = int_to_ptr.vmem [resolvable:$true] %s5366
      %5372 = dma.vmem_to_hbm [thread:$0]  %s5367, 256, %s10, [#allocation17], 128, 128, 8
    $region69: #{tpu_custom_call.1} parent=1 // pred_fallthru
      _
    // Predicated region
    $region70: #{tpu_custom_call.1} parent=1 // pred_check
      _
    $region71: #{tpu_custom_call.1} parent=1 // pred_check_branch
      %5374 = sbr.rel (0) target = $region73
    $region72: #{tpu_custom_call.1} parent=1 // pred_region
      %5375 = dma.done [#allocation6], 1024
    $region73: #{tpu_custom_call.1} parent=1 // pred_fallthru
      _
    // Predicated region
    $region74: #{tpu_custom_call.1} parent=1 // pred_check
      _
    $region75: #{tpu_custom_call.1} parent=1 // pred_check_branch
      %5377 = sbr.rel (0) target = $region77
    $region76: #{tpu_custom_call.1} parent=1 // pred_region
      %5378 = dma.done [#allocation17], 256
    $region77: #{tpu_custom_call.1} parent=1 // pred_fallthru
      _
    // Predicated region
    $region78: #{tpu_custom_call.1} parent=1 // pred_check
      _
    $region79: #{tpu_custom_call.1} parent=1 // pred_check_branch
      %5380 = sbr.rel (0) target = $region81
    $region80: #{tpu_custom_call.1} parent=1 // pred_region
      %5381 = dma.done [#allocation17], 256
    $region81: #{tpu_custom_call.1} parent=1 // pred_fallthru
      _
    %5382 = vsyncpa [#allocation5], 1
    %5383 = vsyncpa [#allocation8], 1
    %5384 = vsyncpa [#allocation11], 1
    %5385 = vsyncpa [#allocation14], 1
    %5386 = vsyncpa [#allocation6], 1
    %5387 = vsyncpa [#allocation17], 1

</llo_original>
